<compile_context>
chip_gen: v7x
topology: tpu7x:2x2x1
jax: 0.10.0
libtpu: 0.0.40
codegen_flags: <defaults>
</compile_context>

<pallas_src>
import math
import functools

import jax
import jax.numpy as jnp
import numpy as np
from jax.experimental import pallas as pl
from jax.experimental.pallas import tpu as pltpu

# Full-precision f32 matmul passes everywhere (kernel trace + pure-JAX
# reference) so the 1e-4 comparison is not polluted by default bf16-pass
# matmul precision in the reference.
jax.config.update("jax_default_matmul_precision", "highest")

# ----------------------------- config -------------------------------------
HIDDEN = 32
NUM_HEADS = 4
HEAD_DIM = HIDDEN // NUM_HEADS
INTERMEDIATE = 64
SEQ = 8
BATCH = 2
LN_EPS = 1e-6            # VivitConfig.layer_norm_eps default
# VivitConfig.hidden_act default is "gelu_fast" (tanh-approx GELU)

# Reviewer-suggested bf16 MXU operands (f32 accumulate).  Default off: the
# review itself flags it as needing re-validation against the 1e-4 tolerance.
USE_BF16_MATMUL = False


def _mx(x):
    """Cast a matmul operand for the MXU (elementwise math always stays f32)."""
    return x.astype(jnp.bfloat16) if USE_BF16_MATMUL else x


def _gelu_fast(x):
    # HF FastGELUActivation: 0.5*x*(1+tanh(x*0.7978845608*(1+0.044715*x*x)))
    return 0.5 * x * (1.0 + jnp.tanh(x * 0.7978845608028654 * (1.0 + 0.044715 * x * x)))


def _layer_norm(x, gamma, beta, eps):
    mean = jnp.mean(x, axis=-1, keepdims=True)
    var = jnp.mean((x - mean) ** 2, axis=-1, keepdims=True)
    return (x - mean) * jax.lax.rsqrt(var + eps) * gamma + beta


# --------------------------- Pallas kernel ---------------------------------
def vivit_layer_kernel(
    hs_ref,      # (Bblk, S, H)   hidden states for this grid step
    wqkv_ref,    # (H, 3H)        fused [Wq*scale | Wk | Wv]
    bqkv_ref,    # (1, 3H)        fused [bq*scale | bk | bv]
    wo_ref,      # (H, H)         attention output dense
    wi_ref,      # (H, I)         intermediate dense
    wout_ref,    # (I, H)         output dense
    vecs_ref,    # (6, H)         [ln1_g, ln1_b, ln2_g, ln2_b, bo, bout]
    bi_ref,      # (1, I)         intermediate bias
    out_ref,     # (Bblk, S, H)
    *, num_heads, head_dim, eps,
):
    Bb, S, H = hs_ref.shape
    nh, dh = num_heads, head_dim
    M = Bb * S

    # Fold the batch into the row (sublane) axis: every dense matmul below
    # operates on all Bb*S rows in a single MXU issue.
    x = hs_ref[...].reshape(M, H)

    vec = vecs_ref[...]                       # (6, H); keep 2-D (1, H) slices
    ln1_g, ln1_b = vec[0:1], vec[1:2]
    ln2_g, ln2_b = vec[2:3], vec[3:4]
    bo, bout = vec[4:5], vec[5:6]

    # ---- layernorm_before ----
    h_ln = _layer_norm(x, ln1_g, ln1_b, eps)

    # ---- fused QKV projection (one matmul; Q columns pre-scaled) ----
    qkv = jnp.dot(_mx(h_ln), _mx(wqkv_ref[...]),
                  preferred_element_type=jnp.float32) + bqkv_ref[...]     # (M, 3H)

    # ---- multi-head self-attention ----
    # Per-head Q/K/V come straight from lane slices of `qkv` (no stacked
    # intermediate); each head's score / context matmuls are batched over the
    # folded batch axis (single-batch-dim einsum).
    ctx_heads = []
    for h in range(nh):
        lo = h * dh
        q_h = qkv[:, lo:lo + dh].reshape(Bb, S, dh)              # scaled already
        k_h = qkv[:, H + lo:H + lo + dh].reshape(Bb, S, dh)
        v_h = qkv[:, 2 * H + lo:2 * H + lo + dh].reshape(Bb, S, dh)

        s_h = jnp.einsum("bqd,bkd->bqk", _mx(q_h), _mx(k_h),
                         preferred_element_type=jnp.float32)     # (Bb, S, S)
        s_h = s_h - jnp.max(s_h, axis=-1, keepdims=True)
        e_h = jnp.exp(s_h)
        p_h = e_h * pl.reciprocal(jnp.sum(e_h, axis=-1, keepdims=True),
                                  approx=True)
        ctx_h = jnp.einsum("bqk,bkd->bqd", _mx(p_h), _mx(v_h),
                           preferred_element_type=jnp.float32)   # (Bb, S, dh)
        ctx_heads.append(ctx_h.reshape(M, dh))

    # ---- attention output dense: ONE (M,H)x(H,H) dot on reassembled ctx ----
    ctx = jnp.concatenate(ctx_heads, axis=-1)                    # (M, H)
    attn_out = jnp.dot(_mx(ctx), _mx(wo_ref[...]),
                       preferred_element_type=jnp.float32) + bo
    hs1 = attn_out + x                                           # first residual

    # ---- layernorm_after -> intermediate (gelu_fast) -> output + residual ----
    h_ln2 = _layer_norm(hs1, ln2_g, ln2_b, eps)
    inter = jnp.dot(_mx(h_ln2), _mx(wi_ref[...]),
                    preferred_element_type=jnp.float32) + bi_ref[...]
    inter = _gelu_fast(inter)
    y = jnp.dot(_mx(inter), _mx(wout_ref[...]),
                preferred_element_type=jnp.float32) + bout + hs1

    out_ref[...] = y.reshape(Bb, S, H).astype(out_ref.dtype)


# ------------------------------ wrapper ------------------------------------
def _num_batch_blocks(batch):
    """Grid size along the batch axis: 1 (batch fully folded) on single-TC
    chips (v5e/v6e); 2 (one batch element per TensorCore) on v7x."""
    try:
        kind = jax.devices()[0].device_kind.lower()
    except Exception:
        kind = ""
    if "v7" in kind and batch % 2 == 0:
        return 2
    return 1


def vivit_layer(hidden_states, p, *, batch_blocks=None):
    """VivitLayer.forward (layer_output only).  hidden_states: (B, S, H) f32."""
    B, S, H = hidden_states.shape
    nh, dh, inter = NUM_HEADS, HEAD_DIM, INTERMEDIATE
    scale = 1.0 / math.sqrt(dh)

    # ---- pack parameters once, outside the kernel ----
    # 1/sqrt(head_dim) folded into the Q columns / bias of the fused QKV.
    w_qkv = jnp.concatenate([p["wq"] * scale, p["wk"], p["wv"]], axis=1)    # (H, 3H)
    b_qkv = jnp.concatenate([p["bq"] * scale, p["bk"], p["bv"]])[None, :]   # (1, 3H)
    vecs = jnp.stack([p["ln1_g"], p["ln1_b"], p["ln2_g"],
                      p["ln2_b"], p["bo"], p["bout"]])                      # (6, H)
    bi = p["bi"][None, :]                                                   # (1, I)

    if batch_blocks is None:
        batch_blocks = _num_batch_blocks(B)
    assert B % batch_blocks == 0
    b_blk = B // batch_blocks

    kernel = functools.partial(vivit_layer_kernel,
                               num_heads=nh, head_dim=dh, eps=LN_EPS)

    def _const(shape):
        # Constant index map: weights are DMA'd once and stay VMEM-resident.
        return pl.BlockSpec(shape, lambda b: (0,) * len(shape))

    in_specs = [
        pl.BlockSpec((b_blk, S, H), lambda b: (b, 0, 0)),   # hidden states
        _const((H, 3 * H)),                                 # fused QKV weight
        _const((1, 3 * H)),                                 # fused QKV bias
        _const((H, H)),                                     # wo
        _const((H, inter)),                                 # wi
        _const((inter, H)),                                 # wout
        _const((6, H)),                                     # LN params + bo/bout
        _const((1, inter)),                                 # bi
    ]

    return pl.pallas_call(
        kernel,
        out_shape=jax.ShapeDtypeStruct((B, S, H), jnp.float32),
        grid=(batch_blocks,),
        in_specs=in_specs,
        out_specs=pl.BlockSpec((b_blk, S, H), lambda b: (b, 0, 0)),
        compiler_params=pltpu.CompilerParams(
            dimension_semantics=("parallel",)),
    )(hidden_states, w_qkv, b_qkv, p["wo"], p["wi"], p["wout"], vecs, bi)


# --------------------------- reference (pure JAX) ---------------------------
def _reference_layer(x, p):
    h_ln = _layer_norm(x, p["ln1_g"], p["ln1_b"], LN_EPS)
    q = h_ln @ p["wq"] + p["bq"]
    k = h_ln @ p["wk"] + p["bk"]
    v = h_ln @ p["wv"] + p["bv"]
    B, S, H = x.shape
    q = q.reshape(B, S, NUM_HEADS, HEAD_DIM).transpose(0, 2, 1, 3)
    k = k.reshape(B, S, NUM_HEADS, HEAD_DIM).transpose(0, 2, 1, 3)
    v = v.reshape(B, S, NUM_HEADS, HEAD_DIM).transpose(0, 2, 1, 3)
    scores = jnp.einsum("bhqd,bhkd->bhqk", q, k) / math.sqrt(HEAD_DIM)
    probs = jax.nn.softmax(scores, axis=-1)
    ctx = jnp.einsum("bhqk,bhkd->bhqd", probs, v).transpose(0, 2, 1, 3).reshape(B, S, H)
    attn_out = ctx @ p["wo"] + p["bo"]
    hs1 = attn_out + x
    h_ln2 = _layer_norm(hs1, p["ln2_g"], p["ln2_b"], LN_EPS)
    inter = _gelu_fast(h_ln2 @ p["wi"] + p["bi"])
    return inter @ p["wout"] + p["bout"] + hs1


# ------------------------------- main ---------------------------------------
def _init_params(key):
    ks = jax.random.split(key, 12)
    w_scale, b_scale = 0.02, 0.02

    def lin(k, n_in, n_out):
        # PyTorch nn.Linear weight is (out, in); we store the transpose (in, out).
        return w_scale * jax.random.normal(k, (n_in, n_out), jnp.float32)

    def vec(k, n):
        return b_scale * jax.random.normal(k, (n,), jnp.float32)

    return {
        "ln1_g": jnp.ones((HIDDEN,), jnp.float32),
        "ln1_b": jnp.zeros((HIDDEN,), jnp.float32),
        "wq": lin(ks[0], HIDDEN, HIDDEN), "bq": vec(ks[6], HIDDEN),
        "wk": lin(ks[1], HIDDEN, HIDDEN), "bk": vec(ks[7], HIDDEN),
        "wv": lin(ks[2], HIDDEN, HIDDEN), "bv": vec(ks[8], HIDDEN),
        "wo": lin(ks[3], HIDDEN, HIDDEN), "bo": vec(ks[9], HIDDEN),
        "ln2_g": jnp.ones((HIDDEN,), jnp.float32),
        "ln2_b": jnp.zeros((HIDDEN,), jnp.float32),
        "wi": lin(ks[4], HIDDEN, INTERMEDIATE), "bi": vec(ks[10], INTERMEDIATE),
        "wout": lin(ks[5], INTERMEDIATE, HIDDEN), "bout": vec(ks[11], HIDDEN),
    }


if __name__ == "__main__":
    root = jax.random.PRNGKey(0)
    k_x, k_p = jax.random.split(root)

    hidden_states = jax.random.normal(k_x, (BATCH, SEQ, HIDDEN), jnp.float32)
    params = _init_params(k_p)

    out = jax.block_until_ready(vivit_layer(hidden_states, params))
    ref = jax.block_until_ready(_reference_layer(hidden_states, params))

    np.testing.assert_allclose(np.asarray(out), np.asarray(ref),
                               atol=1e-4, rtol=1e-4)
    print("KERNEL_OK")
</pallas_src>

<mosaic_0001>
module attributes {stable_mosaic.version = 11 : i64} {
  func.func @vivit_layer_kernel(%arg0: i32, %arg1: memref<2x8x32xf32, #tpu.memory_space<vmem>>, %arg2: memref<32x96xf32, #tpu.memory_space<vmem>>, %arg3: memref<1x96xf32, #tpu.memory_space<vmem>>, %arg4: memref<32x32xf32, #tpu.memory_space<vmem>>, %arg5: memref<32x64xf32, #tpu.memory_space<vmem>>, %arg6: memref<64x32xf32, #tpu.memory_space<vmem>>, %arg7: memref<6x32xf32, #tpu.memory_space<vmem>>, %arg8: memref<1x64xf32, #tpu.memory_space<vmem>>, %arg9: memref<2x8x32xf32, #tpu.memory_space<vmem>>) attributes {dimension_semantics = [#tpu.dimension_semantics<parallel>], iteration_bounds = array<i64: 1>, scalar_prefetch = 0 : i64, scratch_operands = 0 : i64, tpu.core_type = #tpu.core_type<tc>, window_params = [{transform_indices = @transform_0, window_bounds = array<i64: 2, 8, 32>}, {pipeline_mode = #tpu.pipeline_mode<synchronous>, transform_indices = @transform_1, window_bounds = array<i64: 32, 96>}, {pipeline_mode = #tpu.pipeline_mode<synchronous>, transform_indices = @transform_2, window_bounds = array<i64: 1, 96>}, {pipeline_mode = #tpu.pipeline_mode<synchronous>, transform_indices = @transform_3, window_bounds = array<i64: 32, 32>}, {pipeline_mode = #tpu.pipeline_mode<synchronous>, transform_indices = @transform_4, window_bounds = array<i64: 32, 64>}, {pipeline_mode = #tpu.pipeline_mode<synchronous>, transform_indices = @transform_5, window_bounds = array<i64: 64, 32>}, {pipeline_mode = #tpu.pipeline_mode<synchronous>, transform_indices = @transform_6, window_bounds = array<i64: 6, 32>}, {pipeline_mode = #tpu.pipeline_mode<synchronous>, transform_indices = @transform_7, window_bounds = array<i64: 1, 64>}, {transform_indices = @transform_8, window_bounds = array<i64: 2, 8, 32>}]} {
    %c0 = arith.constant 0 : index
    %c0_0 = arith.constant 0 : index
    %c0_1 = arith.constant 0 : index
    %0 = vector.load %arg1[%c0, %c0_0, %c0_1] : memref<2x8x32xf32, #tpu.memory_space<vmem>>, vector<2x8x32xf32>
    %1 = vector.shape_cast %0 : vector<2x8x32xf32> to vector<16x32xf32>
    %c0_2 = arith.constant 0 : index
    %c0_3 = arith.constant 0 : index
    %2 = vector.load %arg7[%c0_2, %c0_3] : memref<6x32xf32, #tpu.memory_space<vmem>>, vector<6x32xf32>
    %3 = vector.extract_strided_slice %2 {offsets = [0, 0], sizes = [1, 32], strides = [1, 1]} : vector<6x32xf32> to vector<1x32xf32>
    %4 = vector.extract_strided_slice %2 {offsets = [1, 0], sizes = [1, 32], strides = [1, 1]} : vector<6x32xf32> to vector<1x32xf32>
    %5 = vector.extract_strided_slice %2 {offsets = [2, 0], sizes = [1, 32], strides = [1, 1]} : vector<6x32xf32> to vector<1x32xf32>
    %6 = vector.extract_strided_slice %2 {offsets = [3, 0], sizes = [1, 32], strides = [1, 1]} : vector<6x32xf32> to vector<1x32xf32>
    %7 = vector.extract_strided_slice %2 {offsets = [4, 0], sizes = [1, 32], strides = [1, 1]} : vector<6x32xf32> to vector<1x32xf32>
    %8 = vector.extract_strided_slice %2 {offsets = [5, 0], sizes = [1, 32], strides = [1, 1]} : vector<6x32xf32> to vector<1x32xf32>
    %cst = arith.constant dense<0.000000e+00> : vector<16xf32>
    %9 = vector.multi_reduction <add>, %1, %cst [1] : vector<16x32xf32> to vector<16xf32>
    %10 = vector.shape_cast %9 : vector<16xf32> to vector<16x1xf32>
    %cst_4 = arith.constant 3.200000e+01 : f32
    %11 = vector.broadcast %cst_4 : f32 to vector<16x1xf32>
    %12 = arith.divf %10, %11 : vector<16x1xf32>
    %13 = vector.broadcast %12 : vector<16x1xf32> to vector<16x32xf32>
    %14 = arith.subf %1, %13 : vector<16x32xf32>
    %15 = arith.mulf %14, %14 : vector<16x32xf32>
    %cst_5 = arith.constant dense<0.000000e+00> : vector<16xf32>
    %16 = vector.multi_reduction <add>, %15, %cst_5 [1] : vector<16x32xf32> to vector<16xf32>
    %17 = vector.shape_cast %16 : vector<16xf32> to vector<16x1xf32>
    %cst_6 = arith.constant 3.200000e+01 : f32
    %18 = vector.broadcast %cst_6 : f32 to vector<16x1xf32>
    %19 = arith.divf %17, %18 : vector<16x1xf32>
    %20 = vector.broadcast %12 : vector<16x1xf32> to vector<16x32xf32>
    %21 = arith.subf %1, %20 : vector<16x32xf32>
    %cst_7 = arith.constant 9.99999997E-7 : f32
    %22 = vector.broadcast %cst_7 : f32 to vector<16x1xf32>
    %23 = arith.addf %19, %22 : vector<16x1xf32>
    %24 = math.rsqrt %23 : vector<16x1xf32>
    %25 = vector.broadcast %24 : vector<16x1xf32> to vector<16x32xf32>
    %26 = arith.mulf %21, %25 : vector<16x32xf32>
    %27 = vector.broadcast %3 : vector<1x32xf32> to vector<16x32xf32>
    %28 = arith.mulf %26, %27 : vector<16x32xf32>
    %29 = vector.broadcast %4 : vector<1x32xf32> to vector<16x32xf32>
    %30 = arith.addf %28, %29 : vector<16x32xf32>
    %c0_8 = arith.constant 0 : index
    %c0_9 = arith.constant 0 : index
    %31 = vector.load %arg2[%c0_8, %c0_9] : memref<32x96xf32, #tpu.memory_space<vmem>>, vector<32x96xf32>
    %cst_10 = arith.constant dense<0.000000e+00> : vector<16x96xf32>
    %32 = tpu.matmul %30, %31, %cst_10 {dimension_numbers = #tpu.dot_dimension_numbers<[1], [0], [0], [1], [0, 0, 1, 1], [], []>, precision = #tpu.contract_precision<fp32>} : vector<16x32xf32>, vector<32x96xf32>, vector<16x96xf32> -> vector<16x96xf32>
    %c0_11 = arith.constant 0 : index
    %c0_12 = arith.constant 0 : index
    %33 = vector.load %arg3[%c0_11, %c0_12] : memref<1x96xf32, #tpu.memory_space<vmem>>, vector<1x96xf32>
    %34 = vector.broadcast %33 : vector<1x96xf32> to vector<16x96xf32>
    %35 = arith.addf %32, %34 : vector<16x96xf32>
    %36 = vector.extract_strided_slice %35 {offsets = [0, 0], sizes = [16, 8], strides = [1, 1]} : vector<16x96xf32> to vector<16x8xf32>
    %37 = vector.shape_cast %36 : vector<16x8xf32> to vector<2x8x8xf32>
    %38 = vector.extract_strided_slice %35 {offsets = [0, 32], sizes = [16, 8], strides = [1, 1]} : vector<16x96xf32> to vector<16x8xf32>
    %39 = vector.shape_cast %38 : vector<16x8xf32> to vector<2x8x8xf32>
    %40 = vector.extract_strided_slice %35 {offsets = [0, 64], sizes = [16, 8], strides = [1, 1]} : vector<16x96xf32> to vector<16x8xf32>
    %41 = vector.shape_cast %40 : vector<16x8xf32> to vector<2x8x8xf32>
    "tpu.trace_start"() <{level = 10 : i32, message = "bqd,bkd->bqk"}> : () -> ()
    %cst_13 = arith.constant dense<0.000000e+00> : vector<2x8x8xf32>
    %42 = tpu.matmul %37, %39, %cst_13 {dimension_numbers = #tpu.dot_dimension_numbers<[2], [2], [1], [1], [0, 0, 0, 1, 1, 1], [0], [0]>, precision = #tpu.contract_precision<fp32>} : vector<2x8x8xf32>, vector<2x8x8xf32>, vector<2x8x8xf32> -> vector<2x8x8xf32>
    "tpu.trace_stop"() : () -> ()
    %cst_14 = arith.constant dense<0xFF800000> : vector<2x8xf32>
    %43 = vector.multi_reduction <maximumf>, %42, %cst_14 [2] : vector<2x8x8xf32> to vector<2x8xf32>
    %44 = vector.shape_cast %43 : vector<2x8xf32> to vector<2x8x1xf32>
    %45 = vector.broadcast %44 : vector<2x8x1xf32> to vector<2x8x8xf32>
    %46 = arith.subf %42, %45 : vector<2x8x8xf32>
    %47 = math.exp %46 : vector<2x8x8xf32>
    %cst_15 = arith.constant dense<0.000000e+00> : vector<2x8xf32>
    %48 = vector.multi_reduction <add>, %47, %cst_15 [2] : vector<2x8x8xf32> to vector<2x8xf32>
    %49 = vector.shape_cast %48 : vector<2x8xf32> to vector<2x8x1xf32>
    %50 = tpu.reciprocal %49 {approx = true} : vector<2x8x1xf32> -> vector<2x8x1xf32>
    %51 = vector.broadcast %50 : vector<2x8x1xf32> to vector<2x8x8xf32>
    %52 = arith.mulf %47, %51 : vector<2x8x8xf32>
    "tpu.trace_start"() <{level = 10 : i32, message = "bqk,bkd->bqd"}> : () -> ()
    %cst_16 = arith.constant dense<0.000000e+00> : vector<2x8x8xf32>
    %53 = tpu.matmul %52, %41, %cst_16 {dimension_numbers = #tpu.dot_dimension_numbers<[2], [1], [1], [2], [0, 0, 0, 1, 1, 2], [0], [0]>, precision = #tpu.contract_precision<fp32>} : vector<2x8x8xf32>, vector<2x8x8xf32>, vector<2x8x8xf32> -> vector<2x8x8xf32>
    "tpu.trace_stop"() : () -> ()
    %54 = vector.shape_cast %53 : vector<2x8x8xf32> to vector<16x8xf32>
    %55 = vector.extract_strided_slice %35 {offsets = [0, 8], sizes = [16, 8], strides = [1, 1]} : vector<16x96xf32> to vector<16x8xf32>
    %56 = vector.shape_cast %55 : vector<16x8xf32> to vector<2x8x8xf32>
    %57 = vector.extract_strided_slice %35 {offsets = [0, 40], sizes = [16, 8], strides = [1, 1]} : vector<16x96xf32> to vector<16x8xf32>
    %58 = vector.shape_cast %57 : vector<16x8xf32> to vector<2x8x8xf32>
    %59 = vector.extract_strided_slice %35 {offsets = [0, 72], sizes = [16, 8], strides = [1, 1]} : vector<16x96xf32> to vector<16x8xf32>
    %60 = vector.shape_cast %59 : vector<16x8xf32> to vector<2x8x8xf32>
    "tpu.trace_start"() <{level = 10 : i32, message = "bqd,bkd->bqk"}> : () -> ()
    %cst_17 = arith.constant dense<0.000000e+00> : vector<2x8x8xf32>
    %61 = tpu.matmul %56, %58, %cst_17 {dimension_numbers = #tpu.dot_dimension_numbers<[2], [2], [1], [1], [0, 0, 0, 1, 1, 1], [0], [0]>, precision = #tpu.contract_precision<fp32>} : vector<2x8x8xf32>, vector<2x8x8xf32>, vector<2x8x8xf32> -> vector<2x8x8xf32>
    "tpu.trace_stop"() : () -> ()
    %cst_18 = arith.constant dense<0xFF800000> : vector<2x8xf32>
    %62 = vector.multi_reduction <maximumf>, %61, %cst_18 [2] : vector<2x8x8xf32> to vector<2x8xf32>
    %63 = vector.shape_cast %62 : vector<2x8xf32> to vector<2x8x1xf32>
    %64 = vector.broadcast %63 : vector<2x8x1xf32> to vector<2x8x8xf32>
    %65 = arith.subf %61, %64 : vector<2x8x8xf32>
    %66 = math.exp %65 : vector<2x8x8xf32>
    %cst_19 = arith.constant dense<0.000000e+00> : vector<2x8xf32>
    %67 = vector.multi_reduction <add>, %66, %cst_19 [2] : vector<2x8x8xf32> to vector<2x8xf32>
    %68 = vector.shape_cast %67 : vector<2x8xf32> to vector<2x8x1xf32>
    %69 = tpu.reciprocal %68 {approx = true} : vector<2x8x1xf32> -> vector<2x8x1xf32>
    %70 = vector.broadcast %69 : vector<2x8x1xf32> to vector<2x8x8xf32>
    %71 = arith.mulf %66, %70 : vector<2x8x8xf32>
    "tpu.trace_start"() <{level = 10 : i32, message = "bqk,bkd->bqd"}> : () -> ()
    %cst_20 = arith.constant dense<0.000000e+00> : vector<2x8x8xf32>
    %72 = tpu.matmul %71, %60, %cst_20 {dimension_numbers = #tpu.dot_dimension_numbers<[2], [1], [1], [2], [0, 0, 0, 1, 1, 2], [0], [0]>, precision = #tpu.contract_precision<fp32>} : vector<2x8x8xf32>, vector<2x8x8xf32>, vector<2x8x8xf32> -> vector<2x8x8xf32>
    "tpu.trace_stop"() : () -> ()
    %73 = vector.shape_cast %72 : vector<2x8x8xf32> to vector<16x8xf32>
    %74 = vector.extract_strided_slice %35 {offsets = [0, 16], sizes = [16, 8], strides = [1, 1]} : vector<16x96xf32> to vector<16x8xf32>
    %75 = vector.shape_cast %74 : vector<16x8xf32> to vector<2x8x8xf32>
    %76 = vector.extract_strided_slice %35 {offsets = [0, 48], sizes = [16, 8], strides = [1, 1]} : vector<16x96xf32> to vector<16x8xf32>
    %77 = vector.shape_cast %76 : vector<16x8xf32> to vector<2x8x8xf32>
    %78 = vector.extract_strided_slice %35 {offsets = [0, 80], sizes = [16, 8], strides = [1, 1]} : vector<16x96xf32> to vector<16x8xf32>
    %79 = vector.shape_cast %78 : vector<16x8xf32> to vector<2x8x8xf32>
    "tpu.trace_start"() <{level = 10 : i32, message = "bqd,bkd->bqk"}> : () -> ()
    %cst_21 = arith.constant dense<0.000000e+00> : vector<2x8x8xf32>
    %80 = tpu.matmul %75, %77, %cst_21 {dimension_numbers = #tpu.dot_dimension_numbers<[2], [2], [1], [1], [0, 0, 0, 1, 1, 1], [0], [0]>, precision = #tpu.contract_precision<fp32>} : vector<2x8x8xf32>, vector<2x8x8xf32>, vector<2x8x8xf32> -> vector<2x8x8xf32>
    "tpu.trace_stop"() : () -> ()
    %cst_22 = arith.constant dense<0xFF800000> : vector<2x8xf32>
    %81 = vector.multi_reduction <maximumf>, %80, %cst_22 [2] : vector<2x8x8xf32> to vector<2x8xf32>
    %82 = vector.shape_cast %81 : vector<2x8xf32> to vector<2x8x1xf32>
    %83 = vector.broadcast %82 : vector<2x8x1xf32> to vector<2x8x8xf32>
    %84 = arith.subf %80, %83 : vector<2x8x8xf32>
    %85 = math.exp %84 : vector<2x8x8xf32>
    %cst_23 = arith.constant dense<0.000000e+00> : vector<2x8xf32>
    %86 = vector.multi_reduction <add>, %85, %cst_23 [2] : vector<2x8x8xf32> to vector<2x8xf32>
    %87 = vector.shape_cast %86 : vector<2x8xf32> to vector<2x8x1xf32>
    %88 = tpu.reciprocal %87 {approx = true} : vector<2x8x1xf32> -> vector<2x8x1xf32>
    %89 = vector.broadcast %88 : vector<2x8x1xf32> to vector<2x8x8xf32>
    %90 = arith.mulf %85, %89 : vector<2x8x8xf32>
    "tpu.trace_start"() <{level = 10 : i32, message = "bqk,bkd->bqd"}> : () -> ()
    %cst_24 = arith.constant dense<0.000000e+00> : vector<2x8x8xf32>
    %91 = tpu.matmul %90, %79, %cst_24 {dimension_numbers = #tpu.dot_dimension_numbers<[2], [1], [1], [2], [0, 0, 0, 1, 1, 2], [0], [0]>, precision = #tpu.contract_precision<fp32>} : vector<2x8x8xf32>, vector<2x8x8xf32>, vector<2x8x8xf32> -> vector<2x8x8xf32>
    "tpu.trace_stop"() : () -> ()
    %92 = vector.shape_cast %91 : vector<2x8x8xf32> to vector<16x8xf32>
    %93 = vector.extract_strided_slice %35 {offsets = [0, 24], sizes = [16, 8], strides = [1, 1]} : vector<16x96xf32> to vector<16x8xf32>
    %94 = vector.shape_cast %93 : vector<16x8xf32> to vector<2x8x8xf32>
    %95 = vector.extract_strided_slice %35 {offsets = [0, 56], sizes = [16, 8], strides = [1, 1]} : vector<16x96xf32> to vector<16x8xf32>
    %96 = vector.shape_cast %95 : vector<16x8xf32> to vector<2x8x8xf32>
    %97 = vector.extract_strided_slice %35 {offsets = [0, 88], sizes = [16, 8], strides = [1, 1]} : vector<16x96xf32> to vector<16x8xf32>
    %98 = vector.shape_cast %97 : vector<16x8xf32> to vector<2x8x8xf32>
    "tpu.trace_start"() <{level = 10 : i32, message = "bqd,bkd->bqk"}> : () -> ()
    %cst_25 = arith.constant dense<0.000000e+00> : vector<2x8x8xf32>
    %99 = tpu.matmul %94, %96, %cst_25 {dimension_numbers = #tpu.dot_dimension_numbers<[2], [2], [1], [1], [0, 0, 0, 1, 1, 1], [0], [0]>, precision = #tpu.contract_precision<fp32>} : vector<2x8x8xf32>, vector<2x8x8xf32>, vector<2x8x8xf32> -> vector<2x8x8xf32>
    "tpu.trace_stop"() : () -> ()
    %cst_26 = arith.constant dense<0xFF800000> : vector<2x8xf32>
    %100 = vector.multi_reduction <maximumf>, %99, %cst_26 [2] : vector<2x8x8xf32> to vector<2x8xf32>
    %101 = vector.shape_cast %100 : vector<2x8xf32> to vector<2x8x1xf32>
    %102 = vector.broadcast %101 : vector<2x8x1xf32> to vector<2x8x8xf32>
    %103 = arith.subf %99, %102 : vector<2x8x8xf32>
    %104 = math.exp %103 : vector<2x8x8xf32>
    %cst_27 = arith.constant dense<0.000000e+00> : vector<2x8xf32>
    %105 = vector.multi_reduction <add>, %104, %cst_27 [2] : vector<2x8x8xf32> to vector<2x8xf32>
    %106 = vector.shape_cast %105 : vector<2x8xf32> to vector<2x8x1xf32>
    %107 = tpu.reciprocal %106 {approx = true} : vector<2x8x1xf32> -> vector<2x8x1xf32>
    %108 = vector.broadcast %107 : vector<2x8x1xf32> to vector<2x8x8xf32>
    %109 = arith.mulf %104, %108 : vector<2x8x8xf32>
    "tpu.trace_start"() <{level = 10 : i32, message = "bqk,bkd->bqd"}> : () -> ()
    %cst_28 = arith.constant dense<0.000000e+00> : vector<2x8x8xf32>
    %110 = tpu.matmul %109, %98, %cst_28 {dimension_numbers = #tpu.dot_dimension_numbers<[2], [1], [1], [2], [0, 0, 0, 1, 1, 2], [0], [0]>, precision = #tpu.contract_precision<fp32>} : vector<2x8x8xf32>, vector<2x8x8xf32>, vector<2x8x8xf32> -> vector<2x8x8xf32>
    "tpu.trace_stop"() : () -> ()
    %111 = vector.shape_cast %110 : vector<2x8x8xf32> to vector<16x8xf32>
    %112 = tpu.concatenate %54, %73, %92, %111 in 1 : vector<16x8xf32>, vector<16x8xf32>, vector<16x8xf32>, vector<16x8xf32> -> vector<16x32xf32>
    %c0_29 = arith.constant 0 : index
    %c0_30 = arith.constant 0 : index
    %113 = vector.load %arg4[%c0_29, %c0_30] : memref<32x32xf32, #tpu.memory_space<vmem>>, vector<32x32xf32>
    %cst_31 = arith.constant dense<0.000000e+00> : vector<16x32xf32>
    %114 = tpu.matmul %112, %113, %cst_31 {dimension_numbers = #tpu.dot_dimension_numbers<[1], [0], [0], [1], [0, 0, 1, 1], [], []>, precision = #tpu.contract_precision<fp32>} : vector<16x32xf32>, vector<32x32xf32>, vector<16x32xf32> -> vector<16x32xf32>
    %115 = vector.broadcast %7 : vector<1x32xf32> to vector<16x32xf32>
    %116 = arith.addf %114, %115 : vector<16x32xf32>
    %117 = arith.addf %116, %1 : vector<16x32xf32>
    %cst_32 = arith.constant dense<0.000000e+00> : vector<16xf32>
    %118 = vector.multi_reduction <add>, %117, %cst_32 [1] : vector<16x32xf32> to vector<16xf32>
    %119 = vector.shape_cast %118 : vector<16xf32> to vector<16x1xf32>
    %cst_33 = arith.constant 3.200000e+01 : f32
    %120 = vector.broadcast %cst_33 : f32 to vector<16x1xf32>
    %121 = arith.divf %119, %120 : vector<16x1xf32>
    %122 = vector.broadcast %121 : vector<16x1xf32> to vector<16x32xf32>
    %123 = arith.subf %117, %122 : vector<16x32xf32>
    %124 = arith.mulf %123, %123 : vector<16x32xf32>
    %cst_34 = arith.constant dense<0.000000e+00> : vector<16xf32>
    %125 = vector.multi_reduction <add>, %124, %cst_34 [1] : vector<16x32xf32> to vector<16xf32>
    %126 = vector.shape_cast %125 : vector<16xf32> to vector<16x1xf32>
    %cst_35 = arith.constant 3.200000e+01 : f32
    %127 = vector.broadcast %cst_35 : f32 to vector<16x1xf32>
    %128 = arith.divf %126, %127 : vector<16x1xf32>
    %129 = vector.broadcast %121 : vector<16x1xf32> to vector<16x32xf32>
    %130 = arith.subf %117, %129 : vector<16x32xf32>
    %cst_36 = arith.constant 9.99999997E-7 : f32
    %131 = vector.broadcast %cst_36 : f32 to vector<16x1xf32>
    %132 = arith.addf %128, %131 : vector<16x1xf32>
    %133 = math.rsqrt %132 : vector<16x1xf32>
    %134 = vector.broadcast %133 : vector<16x1xf32> to vector<16x32xf32>
    %135 = arith.mulf %130, %134 : vector<16x32xf32>
    %136 = vector.broadcast %5 : vector<1x32xf32> to vector<16x32xf32>
    %137 = arith.mulf %135, %136 : vector<16x32xf32>
    %138 = vector.broadcast %6 : vector<1x32xf32> to vector<16x32xf32>
    %139 = arith.addf %137, %138 : vector<16x32xf32>
    %c0_37 = arith.constant 0 : index
    %c0_38 = arith.constant 0 : index
    %140 = vector.load %arg5[%c0_37, %c0_38] : memref<32x64xf32, #tpu.memory_space<vmem>>, vector<32x64xf32>
    %cst_39 = arith.constant dense<0.000000e+00> : vector<16x64xf32>
    %141 = tpu.matmul %139, %140, %cst_39 {dimension_numbers = #tpu.dot_dimension_numbers<[1], [0], [0], [1], [0, 0, 1, 1], [], []>, precision = #tpu.contract_precision<fp32>} : vector<16x32xf32>, vector<32x64xf32>, vector<16x64xf32> -> vector<16x64xf32>
    %c0_40 = arith.constant 0 : index
    %c0_41 = arith.constant 0 : index
    %142 = vector.load %arg8[%c0_40, %c0_41] : memref<1x64xf32, #tpu.memory_space<vmem>>, vector<1x64xf32>
    %143 = vector.broadcast %142 : vector<1x64xf32> to vector<16x64xf32>
    %144 = arith.addf %141, %143 : vector<16x64xf32>
    %cst_42 = arith.constant 5.000000e-01 : f32
    %145 = vector.broadcast %cst_42 : f32 to vector<16x64xf32>
    %146 = arith.mulf %145, %144 : vector<16x64xf32>
    %cst_43 = arith.constant 0.797884583 : f32
    %147 = vector.broadcast %cst_43 : f32 to vector<16x64xf32>
    %148 = arith.mulf %144, %147 : vector<16x64xf32>
    %cst_44 = arith.constant 4.471500e-02 : f32
    %149 = vector.broadcast %cst_44 : f32 to vector<16x64xf32>
    %150 = arith.mulf %149, %144 : vector<16x64xf32>
    %151 = arith.mulf %150, %144 : vector<16x64xf32>
    %cst_45 = arith.constant 1.000000e+00 : f32
    %152 = vector.broadcast %cst_45 : f32 to vector<16x64xf32>
    %153 = arith.addf %152, %151 : vector<16x64xf32>
    %154 = arith.mulf %148, %153 : vector<16x64xf32>
    %155 = math.tanh %154 : vector<16x64xf32>
    %cst_46 = arith.constant 1.000000e+00 : f32
    %156 = vector.broadcast %cst_46 : f32 to vector<16x64xf32>
    %157 = arith.addf %156, %155 : vector<16x64xf32>
    %158 = arith.mulf %146, %157 : vector<16x64xf32>
    %c0_47 = arith.constant 0 : index
    %c0_48 = arith.constant 0 : index
    %159 = vector.load %arg6[%c0_47, %c0_48] : memref<64x32xf32, #tpu.memory_space<vmem>>, vector<64x32xf32>
    %cst_49 = arith.constant dense<0.000000e+00> : vector<16x32xf32>
    %160 = tpu.matmul %158, %159, %cst_49 {dimension_numbers = #tpu.dot_dimension_numbers<[1], [0], [0], [1], [0, 0, 1, 1], [], []>, precision = #tpu.contract_precision<fp32>} : vector<16x64xf32>, vector<64x32xf32>, vector<16x32xf32> -> vector<16x32xf32>
    %161 = vector.broadcast %8 : vector<1x32xf32> to vector<16x32xf32>
    %162 = arith.addf %160, %161 : vector<16x32xf32>
    %163 = arith.addf %162, %117 : vector<16x32xf32>
    %164 = vector.shape_cast %163 : vector<16x32xf32> to vector<2x8x32xf32>
    %c0_50 = arith.constant 0 : index
    %c0_51 = arith.constant 0 : index
    %c0_52 = arith.constant 0 : index
    %165 = vector.load %arg9[%c0_50, %c0_51, %c0_52] : memref<2x8x32xf32, #tpu.memory_space<vmem>>, vector<2x8x32xf32>
    tpu.vector_store %arg9[%c0_50, %c0_51, %c0_52], %164 {strides = array<i32>} : memref<2x8x32xf32, #tpu.memory_space<vmem>>, vector<2x8x32xf32>,
    return
  }
  func.func @transform_0(%arg0: i32) -> (i32, i32, i32) {
    %c0_i32 = arith.constant 0 : i32
    %c0_i32_0 = arith.constant 0 : i32
    %c0_i32_1 = arith.constant 0 : i32
    return %arg0, %c0_i32, %c0_i32_0 : i32, i32, i32
  }
  func.func @transform_1(%arg0: i32) -> (i32, i32) {
    %c0_i32 = arith.constant 0 : i32
    %c0_i32_0 = arith.constant 0 : i32
    %c0_i32_1 = arith.constant 0 : i32
    return %c0_i32, %c0_i32_0 : i32, i32
  }
  func.func @transform_2(%arg0: i32) -> (i32, i32) {
    %c0_i32 = arith.constant 0 : i32
    %c0_i32_0 = arith.constant 0 : i32
    %c0_i32_1 = arith.constant 0 : i32
    return %c0_i32, %c0_i32_0 : i32, i32
  }
  func.func @transform_3(%arg0: i32) -> (i32, i32) {
    %c0_i32 = arith.constant 0 : i32
    %c0_i32_0 = arith.constant 0 : i32
    %c0_i32_1 = arith.constant 0 : i32
    return %c0_i32, %c0_i32_0 : i32, i32
  }
  func.func @transform_4(%arg0: i32) -> (i32, i32) {
    %c0_i32 = arith.constant 0 : i32
    %c0_i32_0 = arith.constant 0 : i32
    %c0_i32_1 = arith.constant 0 : i32
    return %c0_i32, %c0_i32_0 : i32, i32
  }
  func.func @transform_5(%arg0: i32) -> (i32, i32) {
    %c0_i32 = arith.constant 0 : i32
    %c0_i32_0 = arith.constant 0 : i32
    %c0_i32_1 = arith.constant 0 : i32
    return %c0_i32, %c0_i32_0 : i32, i32
  }
  func.func @transform_6(%arg0: i32) -> (i32, i32) {
    %c0_i32 = arith.constant 0 : i32
    %c0_i32_0 = arith.constant 0 : i32
    %c0_i32_1 = arith.constant 0 : i32
    return %c0_i32, %c0_i32_0 : i32, i32
  }
  func.func @transform_7(%arg0: i32) -> (i32, i32) {
    %c0_i32 = arith.constant 0 : i32
    %c0_i32_0 = arith.constant 0 : i32
    %c0_i32_1 = arith.constant 0 : i32
    return %c0_i32, %c0_i32_0 : i32, i32
  }
  func.func @transform_8(%arg0: i32) -> (i32, i32, i32) {
    %c0_i32 = arith.constant 0 : i32
    %c0_i32_0 = arith.constant 0 : i32
    %c0_i32_1 = arith.constant 0 : i32
    return %arg0, %c0_i32, %c0_i32_0 : i32, i32, i32
  }
}

</mosaic_0001>

<llo_original>
// kernel: tpu_custom_call.1
$region0: #{tpu_custom_call.1}
  #allocation0 [shape = 'u32[]', space=smem, size = 0x4, offset = 0x4, fixed_abs, tag = 'smem constant byte address 0x4 - core index']
  #allocation1 [shape = 'u32[144,128]{1,0:T(1,128)}', space=vmem, size = 0x12000, scoped, tag = 'internal scratch']
  %s0 = inlined_call_operand.hbm [shape: f32[2,8,32], index: 0, kind: input, shape index: {}]
  %s1 = inlined_call_operand.vmem [shape: f32[32,96], index: 1, kind: input, shape index: {}]
  %s2 = inlined_call_operand.vmem [shape: f32[1,96], index: 2, kind: input, shape index: {}]
  %s3 = inlined_call_operand.vmem [shape: f32[32,32], index: 3, kind: input, shape index: {}]
  %s4 = inlined_call_operand.vmem [shape: f32[32,64], index: 4, kind: input, shape index: {}]
  %s5 = inlined_call_operand.vmem [shape: f32[64,32], index: 5, kind: input, shape index: {}]
  %s6 = inlined_call_operand.vmem [shape: f32[6,32], index: 6, kind: input, shape index: {}]
  %s7 = inlined_call_operand.vmem [shape: f32[1,64], index: 7, kind: input, shape index: {}]
  %s8 = inlined_call_operand.hbm [shape: f32[2,8,32], index: 8, kind: output, shape index: {}]
  %s9 = sld [smem:[#allocation0]]
  $region46: #{tpu_custom_call.1} parent=0
    _
  %s11 = ssub.s32 1, %s9
  %s12 = scalar_select 0, %s11, %s9
  $region1: #{tpu_custom_call.1} parent=0
    #allocation2 [shape = 'u8[8192]{0}', space=vmem, size = 0x2000, scoped, tag = 'input window, operand 0, single buffered']
    #allocation3 [shape = 's32[1]{0}', space=sflag, size = 0x4, scoped, tag = 'scoped memory for tpu_custom_call.1']
    #allocation4 [shape = 's32[1]{0}', space=sflag, size = 0x4, scoped, tag = 'scoped memory for tpu_custom_call.1']
    #allocation5 [shape = 'u8[8192]{0}', space=vmem, size = 0x2000, scoped, tag = 'output window, operand 0, single buffered']
    %13 = vsyncpa [#allocation3], 0
    %14 = vsyncpa [#allocation4], 0
    // Predicated region
    $region2: #{tpu_custom_call.1} parent=1 // pred_check
      _
    $region3: #{tpu_custom_call.1} parent=1 // pred_check_branch
      %16 = sbr.rel (0) target = $region5
    $region4: #{tpu_custom_call.1} parent=1 // pred_region
      %s18 = ssub.s32 256, 256
      %19 = vsyncadd [#allocation3], %s18
      %s20 = sshll.u32 [#allocation2], 4
      %s21 = int_to_ptr.vmem [resolvable:$true] %s20
      %26 = dma.hbm_to_vmem [thread:$0]  %s0, 256, %s21, [#allocation3], 128, 128, 8
    $region5: #{tpu_custom_call.1} parent=1 // pred_fallthru
      _
    // Predicated region
    $region6: #{tpu_custom_call.1} parent=1 // pred_check
      _
    $region7: #{tpu_custom_call.1} parent=1 // pred_check_branch
      %28 = sbr.rel (0) target = $region9
    $region8: #{tpu_custom_call.1} parent=1 // pred_region
      _
    $region9: #{tpu_custom_call.1} parent=1 // pred_fallthru
      _
    // Predicated region
    $region10: #{tpu_custom_call.1} parent=1 // pred_check
      _
    $region11: #{tpu_custom_call.1} parent=1 // pred_check_branch
      %30 = sbr.rel (0) target = $region13
    $region12: #{tpu_custom_call.1} parent=1 // pred_region
      _
    $region13: #{tpu_custom_call.1} parent=1 // pred_fallthru
      _
    // Predicated region
    $region14: #{tpu_custom_call.1} parent=1 // pred_check
      _
    $region15: #{tpu_custom_call.1} parent=1 // pred_check_branch
      %32 = sbr.rel (0) target = $region17
    $region16: #{tpu_custom_call.1} parent=1 // pred_region
      _
    $region17: #{tpu_custom_call.1} parent=1 // pred_fallthru
      _
    // Predicated region
    $region18: #{tpu_custom_call.1} parent=1 // pred_check
      _
    $region19: #{tpu_custom_call.1} parent=1 // pred_check_branch
      %34 = sbr.rel (0) target = $region21
    $region20: #{tpu_custom_call.1} parent=1 // pred_region
      _
    $region21: #{tpu_custom_call.1} parent=1 // pred_fallthru
      _
    // Predicated region
    $region22: #{tpu_custom_call.1} parent=1 // pred_check
      _
    $region23: #{tpu_custom_call.1} parent=1 // pred_check_branch
      %36 = sbr.rel (0) target = $region25
    $region24: #{tpu_custom_call.1} parent=1 // pred_region
      _
    $region25: #{tpu_custom_call.1} parent=1 // pred_fallthru
      _
    // Predicated region
    $region26: #{tpu_custom_call.1} parent=1 // pred_check
      _
    $region27: #{tpu_custom_call.1} parent=1 // pred_check_branch
      %38 = sbr.rel (0) target = $region29
    $region28: #{tpu_custom_call.1} parent=1 // pred_region
      _
    $region29: #{tpu_custom_call.1} parent=1 // pred_fallthru
      _
    // Predicated region
    $region30: #{tpu_custom_call.1} parent=1 // pred_check
      _
    $region31: #{tpu_custom_call.1} parent=1 // pred_check_branch
      %40 = sbr.rel (0) target = $region33
    $region32: #{tpu_custom_call.1} parent=1 // pred_region
      _
    $region33: #{tpu_custom_call.1} parent=1 // pred_fallthru
      _
    // Predicated region
    $region34: #{tpu_custom_call.1} parent=1 // pred_check
      _
    $region35: #{tpu_custom_call.1} parent=1 // pred_check_branch
      %42 = sbr.rel (0) target = $region37
    $region36: #{tpu_custom_call.1} parent=1 // pred_region
      %43 = dma.done [#allocation3], 256
    $region37: #{tpu_custom_call.1} parent=1 // pred_fallthru
      _
    %v44 = vld [vmem:[#allocation2] sm:$0xff]
    %v45 = vld [vmem:[#allocation2 + $0x8] sm:$0xff]
    %v46 = vld [vmem:[%s6] sm:$0x3f]
    %vm47 = vcmask 261120
    %v48 = vsel %vm47, %v44, 0.0
    %49 = vadd.xlane.f32.xlu0 %v48
    %v50 = vpop.xlane.xlu0 %49
    %v51 = vsel %vm47, %v45, 0.0
    %52 = vadd.xlane.f32.xlu0 %v51
    %v53 = vpop.xlane.xlu0 %52
    %v54 = vrcp.pop 32.0
    %v55 = vmul.f32 %v50, %v54
    %v56 = vmul.f32 %v53, %v54
    %v57 = vsub.f32 %v44, %v55
    %v58 = vsub.f32 %v45, %v56
    %v59 = vmul.f32 %v57, %v57
    %v60 = vmul.f32 %v58, %v58
    %v61 = vsel %vm47, %v59, 0.0
    %62 = vadd.xlane.f32.xlu0 %v61
    %v63 = vpop.xlane.xlu0 %62
    %v64 = vsel %vm47, %v60, 0.0
    %65 = vadd.xlane.f32.xlu0 %v64
    %v66 = vpop.xlane.xlu0 %65
    %v67 = vmul.f32 %v63, %v54
    %v68 = vmul.f32 %v66, %v54
    %v69 = vadd.f32 %v67, 1e-06
    %v70 = vadd.f32 %v68, 1e-06
    %v71 = vrsqrt.pop %v69
    %v72 = vrsqrt.pop %v70
    %v73 = vmul.f32 %v57, %v71
    %v74 = vmul.f32 %v58, %v72
    %v75 = vlaneseq
    %v76 = vshrl.u32 %v75, 7
    %v77 = vsub.s32 0, %v76
    %v78 = vrot.slane %v46, %v77
    %v79 = vmul.f32 %v73, %v78
    %v80 = vmul.f32 %v74, %v78
    %v81 = vlaneseq
    %v82 = vshrl.u32 %v81, 7
    %v83 = vsub.s32 1, %v82
    %v84 = vrot.slane %v46, %v83
    %v85 = vadd.f32 %v79, %v84
    %v86 = vadd.f32 %v80, %v84
    %v87 = vld [vmem:[%s1] sm:$0xff]
    %v88 = vld [vmem:[%s1 + $0x8] sm:$0xff]
    %v89 = vld [vmem:[%s1 + $0x10] sm:$0xff]
    %v90 = vld [vmem:[%s1 + $0x18] sm:$0xff]
    %v91 = vld [vmem:[%s2] sm:$0x1]
    %v93 = vlaneseq
    %v94 = vshrl.u32 %v93, 7
    %v95 = vsub.s32 0, %v94
    %v96 = vrot.slane %v91, %v95
    %v99 = vsel %vm47, %v85, 0
    %v102 = vsel %vm47, %v86, 0
    %104 = vmatprep.subr.mxu0 0.0
    %v105 = vand.u32 %v87, 4294901760
    %106 = vmatpush1.msra.mxu0 %v105
    %107 = vmatprep.subr.mxu0 0.0
    %v108 = vand.u32 %v88, 4294901760
    %109 = vmatpush1.msra.mxu0 %v108
    %110 = vmatprep.subr.mxu0 0.0
    %v111 = vand.u32 %v89, 4294901760
    %112 = vmatpush1.msra.mxu0 %v111
    %113 = vmatprep.subr.mxu0 0.0
    %v114 = vand.u32 %v90, 4294901760
    %115 = vmatpush1.msra.mxu0 %v114
    %116 = vmatprep.subr.mxu0 0.0
    %117 = vmatpush1.msra.mxu0 0.0
    %118 = vmatprep.subr.mxu0 0.0
    %119 = vmatpush1.msra.mxu0 0.0
    %120 = vmatprep.subr.mxu0 0.0
    %121 = vmatpush1.msra.mxu0 0.0
    %122 = vmatprep.subr.mxu0 0.0
    %123 = vmatpush1.msra.mxu0 0.0
    %124 = vmatprep.subr.mxu0 0.0
    %125 = vmatpush1.msra.mxu0 0.0
    %126 = vmatprep.subr.mxu0 0.0
    %127 = vmatpush1.msra.mxu0 0.0
    %128 = vmatprep.subr.mxu0 0.0
    %129 = vmatpush1.msra.mxu0 0.0
    %130 = vmatprep.subr.mxu0 0.0
    %131 = vmatpush1.msra.mxu0 0.0
    %132 = vmatprep.subr.mxu0 0.0
    %133 = vmatpush1.msra.mxu0 0.0
    %134 = vmatprep.subr.mxu0 0.0
    %135 = vmatpush1.msra.mxu0 0.0
    %136 = vmatprep.subr.mxu0 0.0
    %137 = vmatpush1.msra.mxu0 0.0
    %138 = vmatprep.subr.mxu0 0.0
    %139 = vmatpush1.msra.mxu0 0.0
    %140 = vmatprep.subr.mxu0 0.0
    %141 = vmatpush1.msra.mxu0 0.0
    %142 = vmatprep.subr.mxu0 0.0
    %143 = vmatpush1.msra.mxu0 0.0
    %144 = vmatprep.subr.mxu0 0.0
    %145 = vmatpush1.msra.mxu0 0.0
    %146 = vmatprep.subr.mxu0 0.0
    %147 = vmatpush1.msra.mxu0 0.0
    %148 = vmatprep.subr.mxu0 0.0
    %149 = vmatpush1.msra.mxu0 0.0
    %150 = vmatprep.subr.mxu0 0.0
    %151 = vmatpush1.msra.mxu0 0.0
    %152 = vmatprep.subr.mxu0 0.0
    %153 = vmatpush1.msra.mxu0 0.0
    %154 = vmatprep.subr.mxu0 0.0
    %155 = vmatpush1.msra.mxu0 0.0
    %156 = vmatprep.subr.mxu0 0.0
    %157 = vmatpush1.msra.mxu0 0.0
    %158 = vmatprep.subr.mxu0 0.0
    %159 = vmatpush1.msra.mxu0 0.0
    %160 = vmatprep.subr.mxu0 0.0
    %161 = vmatpush1.msra.mxu0 0.0
    %162 = vmatprep.subr.mxu0 0.0
    %163 = vmatpush1.msra.mxu0 0.0
    %164 = vmatprep.subr.mxu0 0.0
    %165 = vmatpush1.msra.mxu0 0.0
    %166 = vmatprep.subr.mxu0 0.0
    %167 = vmatpush1.msra.mxu0 0.0
    %168 = vmatprep.subr.mxu0 0.0
    %169 = vmatpush1.msra.mxu0 0.0
    %170 = vmatprep.subr.mxu0 0.0
    %171 = vmatpush1.msra.mxu0 0.0
    %172 = vmatprep.mubr.f32.mxu0 0.0
    %v173 = vand.u32 %v99, 4294901760
    %v174 = vsub.f32 %v99, %v173
    %v175 = vand.u32 %v174, 4294901760
    %v176 = vsub.f32 %v174, %v175
    %v177 = vand.u32 %v176, 4294901760
    %178 = vmatmul.mubr.f32.gmra.mrb[0].mxu0 %v177
    %v179 = vpop.f32.mrb[0].mxu0
    %v180 = vadd.f32 %v96, %v179
    %v181 = vpop.f32.mrb[0].mxu0
    %182 = vmatprep.mubr.f32.mxu0 0.0
    %v183 = vand.u32 %v102, 4294901760
    %v184 = vsub.f32 %v102, %v183
    %v185 = vand.u32 %v184, 4294901760
    %v186 = vsub.f32 %v184, %v185
    %v187 = vand.u32 %v186, 4294901760
    %188 = vmatmul.mubr.f32.gmra.mrb[0].mxu0 %v187
    %v189 = vpop.f32.mrb[0].mxu0
    %v190 = vadd.f32 %v96, %v189
    %v191 = vpop.f32.mrb[0].mxu0
    %192 = vdwg.mxu0
    %193 = vmatprep.subr.mxu0 0.0
    %v194 = vand.u32 %v87, 4294901760
    %v195 = vsub.f32 %v87, %v194
    %v196 = vand.u32 %v195, 4294901760
    %v197 = vsub.f32 %v195, %v196
    %v198 = vand.u32 %v197, 4294901760
    %199 = vmatpush1.msra.mxu0 %v198
    %200 = vmatprep.subr.mxu0 0.0
    %v201 = vand.u32 %v88, 4294901760
    %v202 = vsub.f32 %v88, %v201
    %v203 = vand.u32 %v202, 4294901760
    %v204 = vsub.f32 %v202, %v203
    %v205 = vand.u32 %v204, 4294901760
    %206 = vmatpush1.msra.mxu0 %v205
    %207 = vmatprep.subr.mxu0 0.0
    %v208 = vand.u32 %v89, 4294901760
    %v209 = vsub.f32 %v89, %v208
    %v210 = vand.u32 %v209, 4294901760
    %v211 = vsub.f32 %v209, %v210
    %v212 = vand.u32 %v211, 4294901760
    %213 = vmatpush1.msra.mxu0 %v212
    %214 = vmatprep.subr.mxu0 0.0
    %v215 = vand.u32 %v90, 4294901760
    %v216 = vsub.f32 %v90, %v215
    %v217 = vand.u32 %v216, 4294901760
    %v218 = vsub.f32 %v216, %v217
    %v219 = vand.u32 %v218, 4294901760
    %220 = vmatpush1.msra.mxu0 %v219
    %221 = vmatprep.subr.mxu0 0.0
    %222 = vmatpush1.msra.mxu0 0.0
    %223 = vmatprep.subr.mxu0 0.0
    %224 = vmatpush1.msra.mxu0 0.0
    %225 = vmatprep.subr.mxu0 0.0
    %226 = vmatpush1.msra.mxu0 0.0
    %227 = vmatprep.subr.mxu0 0.0
    %228 = vmatpush1.msra.mxu0 0.0
    %229 = vmatprep.subr.mxu0 0.0
    %230 = vmatpush1.msra.mxu0 0.0
    %231 = vmatprep.subr.mxu0 0.0
    %232 = vmatpush1.msra.mxu0 0.0
    %233 = vmatprep.subr.mxu0 0.0
    %234 = vmatpush1.msra.mxu0 0.0
    %235 = vmatprep.subr.mxu0 0.0
    %236 = vmatpush1.msra.mxu0 0.0
    %237 = vmatprep.subr.mxu0 0.0
    %238 = vmatpush1.msra.mxu0 0.0
    %239 = vmatprep.subr.mxu0 0.0
    %240 = vmatpush1.msra.mxu0 0.0
    %241 = vmatprep.subr.mxu0 0.0
    %242 = vmatpush1.msra.mxu0 0.0
    %243 = vmatprep.subr.mxu0 0.0
    %244 = vmatpush1.msra.mxu0 0.0
    %245 = vmatprep.subr.mxu0 0.0
    %246 = vmatpush1.msra.mxu0 0.0
    %247 = vmatprep.subr.mxu0 0.0
    %248 = vmatpush1.msra.mxu0 0.0
    %249 = vmatprep.subr.mxu0 0.0
    %250 = vmatpush1.msra.mxu0 0.0
    %251 = vmatprep.subr.mxu0 0.0
    %252 = vmatpush1.msra.mxu0 0.0
    %253 = vmatprep.subr.mxu0 0.0
    %254 = vmatpush1.msra.mxu0 0.0
    %255 = vmatprep.subr.mxu0 0.0
    %256 = vmatpush1.msra.mxu0 0.0
    %257 = vmatprep.subr.mxu0 0.0
    %258 = vmatpush1.msra.mxu0 0.0
    %259 = vmatprep.subr.mxu0 0.0
    %260 = vmatpush1.msra.mxu0 0.0
    %261 = vmatprep.subr.mxu0 0.0
    %262 = vmatpush1.msra.mxu0 0.0
    %263 = vmatprep.subr.mxu0 0.0
    %264 = vmatpush1.msra.mxu0 0.0
    %265 = vmatprep.subr.mxu0 0.0
    %266 = vmatpush1.msra.mxu0 0.0
    %267 = vmatprep.subr.mxu0 0.0
    %268 = vmatpush1.msra.mxu0 0.0
    %269 = vmatprep.subr.mxu0 0.0
    %270 = vmatpush1.msra.mxu0 0.0
    %271 = vmatprep.subr.mxu0 0.0
    %272 = vmatpush1.msra.mxu0 0.0
    %273 = vmatprep.subr.mxu0 0.0
    %274 = vmatpush1.msra.mxu0 0.0
    %275 = vmatprep.subr.mxu0 0.0
    %276 = vmatpush1.msra.mxu0 0.0
    %277 = vmatprep.mubr.f32.mxu0 0.0
    %v278 = vand.u32 %v99, 4294901760
    %279 = vmatmul.mubr.f32.gmra.mrb[0].mxu0 %v278
    %v280 = vpop.f32.mrb[0].mxu0
    %v281 = vadd.f32 %v180, %v280
    %v282 = vpop.f32.mrb[0].mxu0
    %283 = vmatprep.mubr.f32.mxu0 0.0
    %v284 = vand.u32 %v102, 4294901760
    %285 = vmatmul.mubr.f32.gmra.mrb[0].mxu0 %v284
    %v286 = vpop.f32.mrb[0].mxu0
    %v287 = vadd.f32 %v190, %v286
    %v288 = vpop.f32.mrb[0].mxu0
    %289 = vdwg.mxu0
    %290 = vmatprep.subr.mxu0 0.0
    %v291 = vand.u32 %v87, 4294901760
    %v292 = vsub.f32 %v87, %v291
    %293 = vmatpush1.msra.mxu0 %v292
    %294 = vmatprep.subr.mxu0 0.0
    %v295 = vand.u32 %v88, 4294901760
    %v296 = vsub.f32 %v88, %v295
    %297 = vmatpush1.msra.mxu0 %v296
    %298 = vmatprep.subr.mxu0 0.0
    %v299 = vand.u32 %v89, 4294901760
    %v300 = vsub.f32 %v89, %v299
    %301 = vmatpush1.msra.mxu0 %v300
    %302 = vmatprep.subr.mxu0 0.0
    %v303 = vand.u32 %v90, 4294901760
    %v304 = vsub.f32 %v90, %v303
    %305 = vmatpush1.msra.mxu0 %v304
    %306 = vmatprep.subr.mxu0 0.0
    %307 = vmatpush1.msra.mxu0 0.0
    %308 = vmatprep.subr.mxu0 0.0
    %309 = vmatpush1.msra.mxu0 0.0
    %310 = vmatprep.subr.mxu0 0.0
    %311 = vmatpush1.msra.mxu0 0.0
    %312 = vmatprep.subr.mxu0 0.0
    %313 = vmatpush1.msra.mxu0 0.0
    %314 = vmatprep.subr.mxu0 0.0
    %315 = vmatpush1.msra.mxu0 0.0
    %316 = vmatprep.subr.mxu0 0.0
    %317 = vmatpush1.msra.mxu0 0.0
    %318 = vmatprep.subr.mxu0 0.0
    %319 = vmatpush1.msra.mxu0 0.0
    %320 = vmatprep.subr.mxu0 0.0
    %321 = vmatpush1.msra.mxu0 0.0
    %322 = vmatprep.subr.mxu0 0.0
    %323 = vmatpush1.msra.mxu0 0.0
    %324 = vmatprep.subr.mxu0 0.0
    %325 = vmatpush1.msra.mxu0 0.0
    %326 = vmatprep.subr.mxu0 0.0
    %327 = vmatpush1.msra.mxu0 0.0
    %328 = vmatprep.subr.mxu0 0.0
    %329 = vmatpush1.msra.mxu0 0.0
    %330 = vmatprep.subr.mxu0 0.0
    %331 = vmatpush1.msra.mxu0 0.0
    %332 = vmatprep.subr.mxu0 0.0
    %333 = vmatpush1.msra.mxu0 0.0
    %334 = vmatprep.subr.mxu0 0.0
    %335 = vmatpush1.msra.mxu0 0.0
    %336 = vmatprep.subr.mxu0 0.0
    %337 = vmatpush1.msra.mxu0 0.0
    %338 = vmatprep.subr.mxu0 0.0
    %339 = vmatpush1.msra.mxu0 0.0
    %340 = vmatprep.subr.mxu0 0.0
    %341 = vmatpush1.msra.mxu0 0.0
    %342 = vmatprep.subr.mxu0 0.0
    %343 = vmatpush1.msra.mxu0 0.0
    %344 = vmatprep.subr.mxu0 0.0
    %345 = vmatpush1.msra.mxu0 0.0
    %346 = vmatprep.subr.mxu0 0.0
    %347 = vmatpush1.msra.mxu0 0.0
    %348 = vmatprep.subr.mxu0 0.0
    %349 = vmatpush1.msra.mxu0 0.0
    %350 = vmatprep.subr.mxu0 0.0
    %351 = vmatpush1.msra.mxu0 0.0
    %352 = vmatprep.subr.mxu0 0.0
    %353 = vmatpush1.msra.mxu0 0.0
    %354 = vmatprep.subr.mxu0 0.0
    %355 = vmatpush1.msra.mxu0 0.0
    %356 = vmatprep.subr.mxu0 0.0
    %357 = vmatpush1.msra.mxu0 0.0
    %358 = vmatprep.subr.mxu0 0.0
    %359 = vmatpush1.msra.mxu0 0.0
    %360 = vmatprep.subr.mxu0 0.0
    %361 = vmatpush1.msra.mxu0 0.0
    %362 = vmatprep.mubr.f32.mxu0 0.0
    %v363 = vand.u32 %v99, 4294901760
    %v364 = vsub.f32 %v99, %v363
    %365 = vmatmul.mubr.f32.gmra.mrb[0].mxu0 %v364
    %v366 = vpop.f32.mrb[0].mxu0
    %v367 = vadd.f32 %v281, %v366
    %v368 = vpop.f32.mrb[0].mxu0
    %369 = vmatprep.mubr.f32.mxu0 0.0
    %v370 = vand.u32 %v102, 4294901760
    %v371 = vsub.f32 %v102, %v370
    %372 = vmatmul.mubr.f32.gmra.mrb[0].mxu0 %v371
    %v373 = vpop.f32.mrb[0].mxu0
    %v374 = vadd.f32 %v287, %v373
    %v375 = vpop.f32.mrb[0].mxu0
    %376 = vdwg.mxu0
    %377 = vmatprep.subr.mxu0 0.0
    %v378 = vand.u32 %v87, 4294901760
    %379 = vmatpush1.msra.mxu0 %v378
    %380 = vmatprep.subr.mxu0 0.0
    %v381 = vand.u32 %v88, 4294901760
    %382 = vmatpush1.msra.mxu0 %v381
    %383 = vmatprep.subr.mxu0 0.0
    %v384 = vand.u32 %v89, 4294901760
    %385 = vmatpush1.msra.mxu0 %v384
    %386 = vmatprep.subr.mxu0 0.0
    %v387 = vand.u32 %v90, 4294901760
    %388 = vmatpush1.msra.mxu0 %v387
    %389 = vmatprep.subr.mxu0 0.0
    %390 = vmatpush1.msra.mxu0 0.0
    %391 = vmatprep.subr.mxu0 0.0
    %392 = vmatpush1.msra.mxu0 0.0
    %393 = vmatprep.subr.mxu0 0.0
    %394 = vmatpush1.msra.mxu0 0.0
    %395 = vmatprep.subr.mxu0 0.0
    %396 = vmatpush1.msra.mxu0 0.0
    %397 = vmatprep.subr.mxu0 0.0
    %398 = vmatpush1.msra.mxu0 0.0
    %399 = vmatprep.subr.mxu0 0.0
    %400 = vmatpush1.msra.mxu0 0.0
    %401 = vmatprep.subr.mxu0 0.0
    %402 = vmatpush1.msra.mxu0 0.0
    %403 = vmatprep.subr.mxu0 0.0
    %404 = vmatpush1.msra.mxu0 0.0
    %405 = vmatprep.subr.mxu0 0.0
    %406 = vmatpush1.msra.mxu0 0.0
    %407 = vmatprep.subr.mxu0 0.0
    %408 = vmatpush1.msra.mxu0 0.0
    %409 = vmatprep.subr.mxu0 0.0
    %410 = vmatpush1.msra.mxu0 0.0
    %411 = vmatprep.subr.mxu0 0.0
    %412 = vmatpush1.msra.mxu0 0.0
    %413 = vmatprep.subr.mxu0 0.0
    %414 = vmatpush1.msra.mxu0 0.0
    %415 = vmatprep.subr.mxu0 0.0
    %416 = vmatpush1.msra.mxu0 0.0
    %417 = vmatprep.subr.mxu0 0.0
    %418 = vmatpush1.msra.mxu0 0.0
    %419 = vmatprep.subr.mxu0 0.0
    %420 = vmatpush1.msra.mxu0 0.0
    %421 = vmatprep.subr.mxu0 0.0
    %422 = vmatpush1.msra.mxu0 0.0
    %423 = vmatprep.subr.mxu0 0.0
    %424 = vmatpush1.msra.mxu0 0.0
    %425 = vmatprep.subr.mxu0 0.0
    %426 = vmatpush1.msra.mxu0 0.0
    %427 = vmatprep.subr.mxu0 0.0
    %428 = vmatpush1.msra.mxu0 0.0
    %429 = vmatprep.subr.mxu0 0.0
    %430 = vmatpush1.msra.mxu0 0.0
    %431 = vmatprep.subr.mxu0 0.0
    %432 = vmatpush1.msra.mxu0 0.0
    %433 = vmatprep.subr.mxu0 0.0
    %434 = vmatpush1.msra.mxu0 0.0
    %435 = vmatprep.subr.mxu0 0.0
    %436 = vmatpush1.msra.mxu0 0.0
    %437 = vmatprep.subr.mxu0 0.0
    %438 = vmatpush1.msra.mxu0 0.0
    %439 = vmatprep.subr.mxu0 0.0
    %440 = vmatpush1.msra.mxu0 0.0
    %441 = vmatprep.subr.mxu0 0.0
    %442 = vmatpush1.msra.mxu0 0.0
    %443 = vmatprep.subr.mxu0 0.0
    %444 = vmatpush1.msra.mxu0 0.0
    %445 = vmatprep.mubr.f32.mxu0 0.0
    %v446 = vand.u32 %v99, 4294901760
    %v447 = vsub.f32 %v99, %v446
    %v448 = vand.u32 %v447, 4294901760
    %449 = vmatmul.mubr.f32.gmra.mrb[0].mxu0 %v448
    %v450 = vpop.f32.mrb[0].mxu0
    %v451 = vadd.f32 %v367, %v450
    %v452 = vpop.f32.mrb[0].mxu0
    %453 = vmatprep.mubr.f32.mxu0 0.0
    %v454 = vand.u32 %v102, 4294901760
    %v455 = vsub.f32 %v102, %v454
    %v456 = vand.u32 %v455, 4294901760
    %457 = vmatmul.mubr.f32.gmra.mrb[0].mxu0 %v456
    %v458 = vpop.f32.mrb[0].mxu0
    %v459 = vadd.f32 %v374, %v458
    %v460 = vpop.f32.mrb[0].mxu0
    %461 = vdwg.mxu0
    %462 = vmatprep.subr.mxu0 0.0
    %v463 = vand.u32 %v87, 4294901760
    %v464 = vsub.f32 %v87, %v463
    %v465 = vand.u32 %v464, 4294901760
    %466 = vmatpush1.msra.mxu0 %v465
    %467 = vmatprep.subr.mxu0 0.0
    %v468 = vand.u32 %v88, 4294901760
    %v469 = vsub.f32 %v88, %v468
    %v470 = vand.u32 %v469, 4294901760
    %471 = vmatpush1.msra.mxu0 %v470
    %472 = vmatprep.subr.mxu0 0.0
    %v473 = vand.u32 %v89, 4294901760
    %v474 = vsub.f32 %v89, %v473
    %v475 = vand.u32 %v474, 4294901760
    %476 = vmatpush1.msra.mxu0 %v475
    %477 = vmatprep.subr.mxu0 0.0
    %v478 = vand.u32 %v90, 4294901760
    %v479 = vsub.f32 %v90, %v478
    %v480 = vand.u32 %v479, 4294901760
    %481 = vmatpush1.msra.mxu0 %v480
    %482 = vmatprep.subr.mxu0 0.0
    %483 = vmatpush1.msra.mxu0 0.0
    %484 = vmatprep.subr.mxu0 0.0
    %485 = vmatpush1.msra.mxu0 0.0
    %486 = vmatprep.subr.mxu0 0.0
    %487 = vmatpush1.msra.mxu0 0.0
    %488 = vmatprep.subr.mxu0 0.0
    %489 = vmatpush1.msra.mxu0 0.0
    %490 = vmatprep.subr.mxu0 0.0
    %491 = vmatpush1.msra.mxu0 0.0
    %492 = vmatprep.subr.mxu0 0.0
    %493 = vmatpush1.msra.mxu0 0.0
    %494 = vmatprep.subr.mxu0 0.0
    %495 = vmatpush1.msra.mxu0 0.0
    %496 = vmatprep.subr.mxu0 0.0
    %497 = vmatpush1.msra.mxu0 0.0
    %498 = vmatprep.subr.mxu0 0.0
    %499 = vmatpush1.msra.mxu0 0.0
    %500 = vmatprep.subr.mxu0 0.0
    %501 = vmatpush1.msra.mxu0 0.0
    %502 = vmatprep.subr.mxu0 0.0
    %503 = vmatpush1.msra.mxu0 0.0
    %504 = vmatprep.subr.mxu0 0.0
    %505 = vmatpush1.msra.mxu0 0.0
    %506 = vmatprep.subr.mxu0 0.0
    %507 = vmatpush1.msra.mxu0 0.0
    %508 = vmatprep.subr.mxu0 0.0
    %509 = vmatpush1.msra.mxu0 0.0
    %510 = vmatprep.subr.mxu0 0.0
    %511 = vmatpush1.msra.mxu0 0.0
    %512 = vmatprep.subr.mxu0 0.0
    %513 = vmatpush1.msra.mxu0 0.0
    %514 = vmatprep.subr.mxu0 0.0
    %515 = vmatpush1.msra.mxu0 0.0
    %516 = vmatprep.subr.mxu0 0.0
    %517 = vmatpush1.msra.mxu0 0.0
    %518 = vmatprep.subr.mxu0 0.0
    %519 = vmatpush1.msra.mxu0 0.0
    %520 = vmatprep.subr.mxu0 0.0
    %521 = vmatpush1.msra.mxu0 0.0
    %522 = vmatprep.subr.mxu0 0.0
    %523 = vmatpush1.msra.mxu0 0.0
    %524 = vmatprep.subr.mxu0 0.0
    %525 = vmatpush1.msra.mxu0 0.0
    %526 = vmatprep.subr.mxu0 0.0
    %527 = vmatpush1.msra.mxu0 0.0
    %528 = vmatprep.subr.mxu0 0.0
    %529 = vmatpush1.msra.mxu0 0.0
    %530 = vmatprep.subr.mxu0 0.0
    %531 = vmatpush1.msra.mxu0 0.0
    %532 = vmatprep.subr.mxu0 0.0
    %533 = vmatpush1.msra.mxu0 0.0
    %534 = vmatprep.subr.mxu0 0.0
    %535 = vmatpush1.msra.mxu0 0.0
    %536 = vmatprep.subr.mxu0 0.0
    %537 = vmatpush1.msra.mxu0 0.0
    %538 = vmatprep.mubr.f32.mxu0 0.0
    %v539 = vand.u32 %v99, 4294901760
    %540 = vmatmul.mubr.f32.gmra.mrb[0].mxu0 %v539
    %v541 = vpop.f32.mrb[0].mxu0
    %v542 = vadd.f32 %v451, %v541
    %v543 = vpop.f32.mrb[0].mxu0
    %544 = vmatprep.mubr.f32.mxu0 0.0
    %v545 = vand.u32 %v102, 4294901760
    %546 = vmatmul.mubr.f32.gmra.mrb[0].mxu0 %v545
    %v547 = vpop.f32.mrb[0].mxu0
    %v548 = vadd.f32 %v459, %v547
    %v549 = vpop.f32.mrb[0].mxu0
    %550 = vdwg.mxu0
    %551 = vmatprep.subr.mxu0 0.0
    %v552 = vand.u32 %v87, 4294901760
    %553 = vmatpush1.msra.mxu0 %v552
    %554 = vmatprep.subr.mxu0 0.0
    %v555 = vand.u32 %v88, 4294901760
    %556 = vmatpush1.msra.mxu0 %v555
    %557 = vmatprep.subr.mxu0 0.0
    %v558 = vand.u32 %v89, 4294901760
    %559 = vmatpush1.msra.mxu0 %v558
    %560 = vmatprep.subr.mxu0 0.0
    %v561 = vand.u32 %v90, 4294901760
    %562 = vmatpush1.msra.mxu0 %v561
    %563 = vmatprep.subr.mxu0 0.0
    %564 = vmatpush1.msra.mxu0 0.0
    %565 = vmatprep.subr.mxu0 0.0
    %566 = vmatpush1.msra.mxu0 0.0
    %567 = vmatprep.subr.mxu0 0.0
    %568 = vmatpush1.msra.mxu0 0.0
    %569 = vmatprep.subr.mxu0 0.0
    %570 = vmatpush1.msra.mxu0 0.0
    %571 = vmatprep.subr.mxu0 0.0
    %572 = vmatpush1.msra.mxu0 0.0
    %573 = vmatprep.subr.mxu0 0.0
    %574 = vmatpush1.msra.mxu0 0.0
    %575 = vmatprep.subr.mxu0 0.0
    %576 = vmatpush1.msra.mxu0 0.0
    %577 = vmatprep.subr.mxu0 0.0
    %578 = vmatpush1.msra.mxu0 0.0
    %579 = vmatprep.subr.mxu0 0.0
    %580 = vmatpush1.msra.mxu0 0.0
    %581 = vmatprep.subr.mxu0 0.0
    %582 = vmatpush1.msra.mxu0 0.0
    %583 = vmatprep.subr.mxu0 0.0
    %584 = vmatpush1.msra.mxu0 0.0
    %585 = vmatprep.subr.mxu0 0.0
    %586 = vmatpush1.msra.mxu0 0.0
    %587 = vmatprep.subr.mxu0 0.0
    %588 = vmatpush1.msra.mxu0 0.0
    %589 = vmatprep.subr.mxu0 0.0
    %590 = vmatpush1.msra.mxu0 0.0
    %591 = vmatprep.subr.mxu0 0.0
    %592 = vmatpush1.msra.mxu0 0.0
    %593 = vmatprep.subr.mxu0 0.0
    %594 = vmatpush1.msra.mxu0 0.0
    %595 = vmatprep.subr.mxu0 0.0
    %596 = vmatpush1.msra.mxu0 0.0
    %597 = vmatprep.subr.mxu0 0.0
    %598 = vmatpush1.msra.mxu0 0.0
    %599 = vmatprep.subr.mxu0 0.0
    %600 = vmatpush1.msra.mxu0 0.0
    %601 = vmatprep.subr.mxu0 0.0
    %602 = vmatpush1.msra.mxu0 0.0
    %603 = vmatprep.subr.mxu0 0.0
    %604 = vmatpush1.msra.mxu0 0.0
    %605 = vmatprep.subr.mxu0 0.0
    %606 = vmatpush1.msra.mxu0 0.0
    %607 = vmatprep.subr.mxu0 0.0
    %608 = vmatpush1.msra.mxu0 0.0
    %609 = vmatprep.subr.mxu0 0.0
    %610 = vmatpush1.msra.mxu0 0.0
    %611 = vmatprep.subr.mxu0 0.0
    %612 = vmatpush1.msra.mxu0 0.0
    %613 = vmatprep.subr.mxu0 0.0
    %614 = vmatpush1.msra.mxu0 0.0
    %615 = vmatprep.subr.mxu0 0.0
    %616 = vmatpush1.msra.mxu0 0.0
    %617 = vmatprep.subr.mxu0 0.0
    %618 = vmatpush1.msra.mxu0 0.0
    %619 = vmatprep.mubr.f32.mxu0 0.0
    %v620 = vand.u32 %v99, 4294901760
    %621 = vmatmul.mubr.f32.gmra.mrb[0].mxu0 %v620
    %v622 = vpop.f32.mrb[0].mxu0
    %v623 = vadd.f32 %v542, %v622
    %v624 = vpop.f32.mrb[0].mxu0
    %625 = vmatprep.mubr.f32.mxu0 0.0
    %v626 = vand.u32 %v102, 4294901760
    %627 = vmatmul.mubr.f32.gmra.mrb[0].mxu0 %v626
    %v628 = vpop.f32.mrb[0].mxu0
    %v629 = vadd.f32 %v548, %v628
    %v630 = vpop.f32.mrb[0].mxu0
    %631 = vdwg.mxu0
    %633 = vrot.lane.b32.xlu0 %v623, 96
    %v634 = vpop.permute.xlu0 %633
    %vm635 = vcmask 64512
    %v636 = vsel %vm635, %v623, 0
    %v638 = vsel %vm635, %v634, 0
    %640 = vmatprep.subr.mxu0 0.0
    %v641 = vand.u32 %v638, 4294901760
    %642 = vmatpush1.xpose.msra.mxu0 %v641
    %643 = vmatprep.subr.mxu0 0.0
    %644 = vmatpush1.xpose.msra.mxu0 0.0
    %645 = vmatprep.subr.mxu0 0.0
    %646 = vmatpush1.xpose.msra.mxu0 0.0
    %647 = vmatprep.subr.mxu0 0.0
    %648 = vmatpush1.xpose.msra.mxu0 0.0
    %649 = vmatprep.subr.mxu0 0.0
    %650 = vmatpush1.xpose.msra.mxu0 0.0
    %651 = vmatprep.subr.mxu0 0.0
    %652 = vmatpush1.xpose.msra.mxu0 0.0
    %653 = vmatprep.subr.mxu0 0.0
    %654 = vmatpush1.xpose.msra.mxu0 0.0
    %655 = vmatprep.subr.mxu0 0.0
    %656 = vmatpush1.xpose.msra.mxu0 0.0
    %657 = vmatprep.subr.mxu0 0.0
    %658 = vmatpush1.xpose.msra.mxu0 0.0
    %659 = vmatprep.subr.mxu0 0.0
    %660 = vmatpush1.xpose.msra.mxu0 0.0
    %661 = vmatprep.subr.mxu0 0.0
    %662 = vmatpush1.xpose.msra.mxu0 0.0
    %663 = vmatprep.subr.mxu0 0.0
    %664 = vmatpush1.xpose.msra.mxu0 0.0
    %665 = vmatprep.subr.mxu0 0.0
    %666 = vmatpush1.xpose.msra.mxu0 0.0
    %667 = vmatprep.subr.mxu0 0.0
    %668 = vmatpush1.xpose.msra.mxu0 0.0
    %669 = vmatprep.subr.mxu0 0.0
    %670 = vmatpush1.xpose.msra.mxu0 0.0
    %671 = vmatprep.subr.mxu0 0.0
    %672 = vmatpush1.xpose.msra.mxu0 0.0
    %673 = vmatprep.subr.mxu0 0.0
    %674 = vmatpush1.xpose.msra.mxu0 0.0
    %675 = vmatprep.subr.mxu0 0.0
    %676 = vmatpush1.xpose.msra.mxu0 0.0
    %677 = vmatprep.subr.mxu0 0.0
    %678 = vmatpush1.xpose.msra.mxu0 0.0
    %679 = vmatprep.subr.mxu0 0.0
    %680 = vmatpush1.xpose.msra.mxu0 0.0
    %681 = vmatprep.subr.mxu0 0.0
    %682 = vmatpush1.xpose.msra.mxu0 0.0
    %683 = vmatprep.subr.mxu0 0.0
    %684 = vmatpush1.xpose.msra.mxu0 0.0
    %685 = vmatprep.subr.mxu0 0.0
    %686 = vmatpush1.xpose.msra.mxu0 0.0
    %687 = vmatprep.subr.mxu0 0.0
    %688 = vmatpush1.xpose.msra.mxu0 0.0
    %689 = vmatprep.subr.mxu0 0.0
    %690 = vmatpush1.xpose.msra.mxu0 0.0
    %691 = vmatprep.subr.mxu0 0.0
    %692 = vmatpush1.xpose.msra.mxu0 0.0
    %693 = vmatprep.subr.mxu0 0.0
    %694 = vmatpush1.xpose.msra.mxu0 0.0
    %695 = vmatprep.subr.mxu0 0.0
    %696 = vmatpush1.xpose.msra.mxu0 0.0
    %697 = vmatprep.subr.mxu0 0.0
    %698 = vmatpush1.xpose.msra.mxu0 0.0
    %699 = vmatprep.subr.mxu0 0.0
    %700 = vmatpush1.xpose.msra.mxu0 0.0
    %701 = vmatprep.subr.mxu0 0.0
    %702 = vmatpush1.xpose.msra.mxu0 0.0
    %703 = vmatprep.subr.mxu0 0.0
    %704 = vmatpush1.xpose.msra.mxu0 0.0
    %705 = vmatprep.mubr.f32.mxu0 0.0
    %v706 = vand.u32 %v636, 4294901760
    %v707 = vsub.f32 %v636, %v706
    %v708 = vand.u32 %v707, 4294901760
    %v709 = vsub.f32 %v707, %v708
    %v710 = vand.u32 %v709, 4294901760
    %711 = vmatmul.mubr.f32.gmra.mrb[0].mxu0 %v710
    %v712 = vpop.f32.mrb[0].mxu0
    %v713 = vadd.f32 0.0, %v712
    %v714 = vpop.f32.mrb[0].mxu0
    %715 = vdwg.mxu0
    %716 = vmatprep.subr.mxu0 0.0
    %v717 = vand.u32 %v638, 4294901760
    %v718 = vsub.f32 %v638, %v717
    %v719 = vand.u32 %v718, 4294901760
    %v720 = vsub.f32 %v718, %v719
    %v721 = vand.u32 %v720, 4294901760
    %722 = vmatpush1.xpose.msra.mxu0 %v721
    %723 = vmatprep.subr.mxu0 0.0
    %724 = vmatpush1.xpose.msra.mxu0 0.0
    %725 = vmatprep.subr.mxu0 0.0
    %726 = vmatpush1.xpose.msra.mxu0 0.0
    %727 = vmatprep.subr.mxu0 0.0
    %728 = vmatpush1.xpose.msra.mxu0 0.0
    %729 = vmatprep.subr.mxu0 0.0
    %730 = vmatpush1.xpose.msra.mxu0 0.0
    %731 = vmatprep.subr.mxu0 0.0
    %732 = vmatpush1.xpose.msra.mxu0 0.0
    %733 = vmatprep.subr.mxu0 0.0
    %734 = vmatpush1.xpose.msra.mxu0 0.0
    %735 = vmatprep.subr.mxu0 0.0
    %736 = vmatpush1.xpose.msra.mxu0 0.0
    %737 = vmatprep.subr.mxu0 0.0
    %738 = vmatpush1.xpose.msra.mxu0 0.0
    %739 = vmatprep.subr.mxu0 0.0
    %740 = vmatpush1.xpose.msra.mxu0 0.0
    %741 = vmatprep.subr.mxu0 0.0
    %742 = vmatpush1.xpose.msra.mxu0 0.0
    %743 = vmatprep.subr.mxu0 0.0
    %744 = vmatpush1.xpose.msra.mxu0 0.0
    %745 = vmatprep.subr.mxu0 0.0
    %746 = vmatpush1.xpose.msra.mxu0 0.0
    %747 = vmatprep.subr.mxu0 0.0
    %748 = vmatpush1.xpose.msra.mxu0 0.0
    %749 = vmatprep.subr.mxu0 0.0
    %750 = vmatpush1.xpose.msra.mxu0 0.0
    %751 = vmatprep.subr.mxu0 0.0
    %752 = vmatpush1.xpose.msra.mxu0 0.0
    %753 = vmatprep.subr.mxu0 0.0
    %754 = vmatpush1.xpose.msra.mxu0 0.0
    %755 = vmatprep.subr.mxu0 0.0
    %756 = vmatpush1.xpose.msra.mxu0 0.0
    %757 = vmatprep.subr.mxu0 0.0
    %758 = vmatpush1.xpose.msra.mxu0 0.0
    %759 = vmatprep.subr.mxu0 0.0
    %760 = vmatpush1.xpose.msra.mxu0 0.0
    %761 = vmatprep.subr.mxu0 0.0
    %762 = vmatpush1.xpose.msra.mxu0 0.0
    %763 = vmatprep.subr.mxu0 0.0
    %764 = vmatpush1.xpose.msra.mxu0 0.0
    %765 = vmatprep.subr.mxu0 0.0
    %766 = vmatpush1.xpose.msra.mxu0 0.0
    %767 = vmatprep.subr.mxu0 0.0
    %768 = vmatpush1.xpose.msra.mxu0 0.0
    %769 = vmatprep.subr.mxu0 0.0
    %770 = vmatpush1.xpose.msra.mxu0 0.0
    %771 = vmatprep.subr.mxu0 0.0
    %772 = vmatpush1.xpose.msra.mxu0 0.0
    %773 = vmatprep.subr.mxu0 0.0
    %774 = vmatpush1.xpose.msra.mxu0 0.0
    %775 = vmatprep.subr.mxu0 0.0
    %776 = vmatpush1.xpose.msra.mxu0 0.0
    %777 = vmatprep.subr.mxu0 0.0
    %778 = vmatpush1.xpose.msra.mxu0 0.0
    %779 = vmatprep.subr.mxu0 0.0
    %780 = vmatpush1.xpose.msra.mxu0 0.0
    %781 = vmatprep.subr.mxu0 0.0
    %782 = vmatpush1.xpose.msra.mxu0 0.0
    %783 = vmatprep.subr.mxu0 0.0
    %784 = vmatpush1.xpose.msra.mxu0 0.0
    %785 = vmatprep.mubr.f32.mxu0 0.0
    %v786 = vand.u32 %v636, 4294901760
    %787 = vmatmul.mubr.f32.gmra.mrb[0].mxu0 %v786
    %v788 = vpop.f32.mrb[0].mxu0
    %v789 = vadd.f32 %v713, %v788
    %v790 = vpop.f32.mrb[0].mxu0
    %791 = vdwg.mxu0
    %792 = vmatprep.subr.mxu0 0.0
    %v793 = vand.u32 %v638, 4294901760
    %v794 = vsub.f32 %v638, %v793
    %795 = vmatpush1.xpose.msra.mxu0 %v794
    %796 = vmatprep.subr.mxu0 0.0
    %797 = vmatpush1.xpose.msra.mxu0 0.0
    %798 = vmatprep.subr.mxu0 0.0
    %799 = vmatpush1.xpose.msra.mxu0 0.0
    %800 = vmatprep.subr.mxu0 0.0
    %801 = vmatpush1.xpose.msra.mxu0 0.0
    %802 = vmatprep.subr.mxu0 0.0
    %803 = vmatpush1.xpose.msra.mxu0 0.0
    %804 = vmatprep.subr.mxu0 0.0
    %805 = vmatpush1.xpose.msra.mxu0 0.0
    %806 = vmatprep.subr.mxu0 0.0
    %807 = vmatpush1.xpose.msra.mxu0 0.0
    %808 = vmatprep.subr.mxu0 0.0
    %809 = vmatpush1.xpose.msra.mxu0 0.0
    %810 = vmatprep.subr.mxu0 0.0
    %811 = vmatpush1.xpose.msra.mxu0 0.0
    %812 = vmatprep.subr.mxu0 0.0
    %813 = vmatpush1.xpose.msra.mxu0 0.0
    %814 = vmatprep.subr.mxu0 0.0
    %815 = vmatpush1.xpose.msra.mxu0 0.0
    %816 = vmatprep.subr.mxu0 0.0
    %817 = vmatpush1.xpose.msra.mxu0 0.0
    %818 = vmatprep.subr.mxu0 0.0
    %819 = vmatpush1.xpose.msra.mxu0 0.0
    %820 = vmatprep.subr.mxu0 0.0
    %821 = vmatpush1.xpose.msra.mxu0 0.0
    %822 = vmatprep.subr.mxu0 0.0
    %823 = vmatpush1.xpose.msra.mxu0 0.0
    %824 = vmatprep.subr.mxu0 0.0
    %825 = vmatpush1.xpose.msra.mxu0 0.0
    %826 = vmatprep.subr.mxu0 0.0
    %827 = vmatpush1.xpose.msra.mxu0 0.0
    %828 = vmatprep.subr.mxu0 0.0
    %829 = vmatpush1.xpose.msra.mxu0 0.0
    %830 = vmatprep.subr.mxu0 0.0
    %831 = vmatpush1.xpose.msra.mxu0 0.0
    %832 = vmatprep.subr.mxu0 0.0
    %833 = vmatpush1.xpose.msra.mxu0 0.0
    %834 = vmatprep.subr.mxu0 0.0
    %835 = vmatpush1.xpose.msra.mxu0 0.0
    %836 = vmatprep.subr.mxu0 0.0
    %837 = vmatpush1.xpose.msra.mxu0 0.0
    %838 = vmatprep.subr.mxu0 0.0
    %839 = vmatpush1.xpose.msra.mxu0 0.0
    %840 = vmatprep.subr.mxu0 0.0
    %841 = vmatpush1.xpose.msra.mxu0 0.0
    %842 = vmatprep.subr.mxu0 0.0
    %843 = vmatpush1.xpose.msra.mxu0 0.0
    %844 = vmatprep.subr.mxu0 0.0
    %845 = vmatpush1.xpose.msra.mxu0 0.0
    %846 = vmatprep.subr.mxu0 0.0
    %847 = vmatpush1.xpose.msra.mxu0 0.0
    %848 = vmatprep.subr.mxu0 0.0
    %849 = vmatpush1.xpose.msra.mxu0 0.0
    %850 = vmatprep.subr.mxu0 0.0
    %851 = vmatpush1.xpose.msra.mxu0 0.0
    %852 = vmatprep.subr.mxu0 0.0
    %853 = vmatpush1.xpose.msra.mxu0 0.0
    %854 = vmatprep.subr.mxu0 0.0
    %855 = vmatpush1.xpose.msra.mxu0 0.0
    %856 = vmatprep.subr.mxu0 0.0
    %857 = vmatpush1.xpose.msra.mxu0 0.0
    %858 = vmatprep.mubr.f32.mxu0 0.0
    %v859 = vand.u32 %v636, 4294901760
    %v860 = vsub.f32 %v636, %v859
    %861 = vmatmul.mubr.f32.gmra.mrb[0].mxu0 %v860
    %v862 = vpop.f32.mrb[0].mxu0
    %v863 = vadd.f32 %v789, %v862
    %v864 = vpop.f32.mrb[0].mxu0
    %865 = vdwg.mxu0
    %866 = vmatprep.subr.mxu0 0.0
    %v867 = vand.u32 %v638, 4294901760
    %868 = vmatpush1.xpose.msra.mxu0 %v867
    %869 = vmatprep.subr.mxu0 0.0
    %870 = vmatpush1.xpose.msra.mxu0 0.0
    %871 = vmatprep.subr.mxu0 0.0
    %872 = vmatpush1.xpose.msra.mxu0 0.0
    %873 = vmatprep.subr.mxu0 0.0
    %874 = vmatpush1.xpose.msra.mxu0 0.0
    %875 = vmatprep.subr.mxu0 0.0
    %876 = vmatpush1.xpose.msra.mxu0 0.0
    %877 = vmatprep.subr.mxu0 0.0
    %878 = vmatpush1.xpose.msra.mxu0 0.0
    %879 = vmatprep.subr.mxu0 0.0
    %880 = vmatpush1.xpose.msra.mxu0 0.0
    %881 = vmatprep.subr.mxu0 0.0
    %882 = vmatpush1.xpose.msra.mxu0 0.0
    %883 = vmatprep.subr.mxu0 0.0
    %884 = vmatpush1.xpose.msra.mxu0 0.0
    %885 = vmatprep.subr.mxu0 0.0
    %886 = vmatpush1.xpose.msra.mxu0 0.0
    %887 = vmatprep.subr.mxu0 0.0
    %888 = vmatpush1.xpose.msra.mxu0 0.0
    %889 = vmatprep.subr.mxu0 0.0
    %890 = vmatpush1.xpose.msra.mxu0 0.0
    %891 = vmatprep.subr.mxu0 0.0
    %892 = vmatpush1.xpose.msra.mxu0 0.0
    %893 = vmatprep.subr.mxu0 0.0
    %894 = vmatpush1.xpose.msra.mxu0 0.0
    %895 = vmatprep.subr.mxu0 0.0
    %896 = vmatpush1.xpose.msra.mxu0 0.0
    %897 = vmatprep.subr.mxu0 0.0
    %898 = vmatpush1.xpose.msra.mxu0 0.0
    %899 = vmatprep.subr.mxu0 0.0
    %900 = vmatpush1.xpose.msra.mxu0 0.0
    %901 = vmatprep.subr.mxu0 0.0
    %902 = vmatpush1.xpose.msra.mxu0 0.0
    %903 = vmatprep.subr.mxu0 0.0
    %904 = vmatpush1.xpose.msra.mxu0 0.0
    %905 = vmatprep.subr.mxu0 0.0
    %906 = vmatpush1.xpose.msra.mxu0 0.0
    %907 = vmatprep.subr.mxu0 0.0
    %908 = vmatpush1.xpose.msra.mxu0 0.0
    %909 = vmatprep.subr.mxu0 0.0
    %910 = vmatpush1.xpose.msra.mxu0 0.0
    %911 = vmatprep.subr.mxu0 0.0
    %912 = vmatpush1.xpose.msra.mxu0 0.0
    %913 = vmatprep.subr.mxu0 0.0
    %914 = vmatpush1.xpose.msra.mxu0 0.0
    %915 = vmatprep.subr.mxu0 0.0
    %916 = vmatpush1.xpose.msra.mxu0 0.0
    %917 = vmatprep.subr.mxu0 0.0
    %918 = vmatpush1.xpose.msra.mxu0 0.0
    %919 = vmatprep.subr.mxu0 0.0
    %920 = vmatpush1.xpose.msra.mxu0 0.0
    %921 = vmatprep.subr.mxu0 0.0
    %922 = vmatpush1.xpose.msra.mxu0 0.0
    %923 = vmatprep.subr.mxu0 0.0
    %924 = vmatpush1.xpose.msra.mxu0 0.0
    %925 = vmatprep.subr.mxu0 0.0
    %926 = vmatpush1.xpose.msra.mxu0 0.0
    %927 = vmatprep.subr.mxu0 0.0
    %928 = vmatpush1.xpose.msra.mxu0 0.0
    %929 = vmatprep.subr.mxu0 0.0
    %930 = vmatpush1.xpose.msra.mxu0 0.0
    %931 = vmatprep.mubr.f32.mxu0 0.0
    %v932 = vand.u32 %v636, 4294901760
    %v933 = vsub.f32 %v636, %v932
    %v934 = vand.u32 %v933, 4294901760
    %935 = vmatmul.mubr.f32.gmra.mrb[0].mxu0 %v934
    %v936 = vpop.f32.mrb[0].mxu0
    %v937 = vadd.f32 %v863, %v936
    %v938 = vpop.f32.mrb[0].mxu0
    %939 = vdwg.mxu0
    %940 = vmatprep.subr.mxu0 0.0
    %v941 = vand.u32 %v638, 4294901760
    %v942 = vsub.f32 %v638, %v941
    %v943 = vand.u32 %v942, 4294901760
    %944 = vmatpush1.xpose.msra.mxu0 %v943
    %945 = vmatprep.subr.mxu0 0.0
    %946 = vmatpush1.xpose.msra.mxu0 0.0
    %947 = vmatprep.subr.mxu0 0.0
    %948 = vmatpush1.xpose.msra.mxu0 0.0
    %949 = vmatprep.subr.mxu0 0.0
    %950 = vmatpush1.xpose.msra.mxu0 0.0
    %951 = vmatprep.subr.mxu0 0.0
    %952 = vmatpush1.xpose.msra.mxu0 0.0
    %953 = vmatprep.subr.mxu0 0.0
    %954 = vmatpush1.xpose.msra.mxu0 0.0
    %955 = vmatprep.subr.mxu0 0.0
    %956 = vmatpush1.xpose.msra.mxu0 0.0
    %957 = vmatprep.subr.mxu0 0.0
    %958 = vmatpush1.xpose.msra.mxu0 0.0
    %959 = vmatprep.subr.mxu0 0.0
    %960 = vmatpush1.xpose.msra.mxu0 0.0
    %961 = vmatprep.subr.mxu0 0.0
    %962 = vmatpush1.xpose.msra.mxu0 0.0
    %963 = vmatprep.subr.mxu0 0.0
    %964 = vmatpush1.xpose.msra.mxu0 0.0
    %965 = vmatprep.subr.mxu0 0.0
    %966 = vmatpush1.xpose.msra.mxu0 0.0
    %967 = vmatprep.subr.mxu0 0.0
    %968 = vmatpush1.xpose.msra.mxu0 0.0
    %969 = vmatprep.subr.mxu0 0.0
    %970 = vmatpush1.xpose.msra.mxu0 0.0
    %971 = vmatprep.subr.mxu0 0.0
    %972 = vmatpush1.xpose.msra.mxu0 0.0
    %973 = vmatprep.subr.mxu0 0.0
    %974 = vmatpush1.xpose.msra.mxu0 0.0
    %975 = vmatprep.subr.mxu0 0.0
    %976 = vmatpush1.xpose.msra.mxu0 0.0
    %977 = vmatprep.subr.mxu0 0.0
    %978 = vmatpush1.xpose.msra.mxu0 0.0
    %979 = vmatprep.subr.mxu0 0.0
    %980 = vmatpush1.xpose.msra.mxu0 0.0
    %981 = vmatprep.subr.mxu0 0.0
    %982 = vmatpush1.xpose.msra.mxu0 0.0
    %983 = vmatprep.subr.mxu0 0.0
    %984 = vmatpush1.xpose.msra.mxu0 0.0
    %985 = vmatprep.subr.mxu0 0.0
    %986 = vmatpush1.xpose.msra.mxu0 0.0
    %987 = vmatprep.subr.mxu0 0.0
    %988 = vmatpush1.xpose.msra.mxu0 0.0
    %989 = vmatprep.subr.mxu0 0.0
    %990 = vmatpush1.xpose.msra.mxu0 0.0
    %991 = vmatprep.subr.mxu0 0.0
    %992 = vmatpush1.xpose.msra.mxu0 0.0
    %993 = vmatprep.subr.mxu0 0.0
    %994 = vmatpush1.xpose.msra.mxu0 0.0
    %995 = vmatprep.subr.mxu0 0.0
    %996 = vmatpush1.xpose.msra.mxu0 0.0
    %997 = vmatprep.subr.mxu0 0.0
    %998 = vmatpush1.xpose.msra.mxu0 0.0
    %999 = vmatprep.subr.mxu0 0.0
    %1000 = vmatpush1.xpose.msra.mxu0 0.0
    %1001 = vmatprep.subr.mxu0 0.0
    %1002 = vmatpush1.xpose.msra.mxu0 0.0
    %1003 = vmatprep.subr.mxu0 0.0
    %1004 = vmatpush1.xpose.msra.mxu0 0.0
    %1005 = vmatprep.subr.mxu0 0.0
    %1006 = vmatpush1.xpose.msra.mxu0 0.0
    %1007 = vmatprep.mubr.f32.mxu0 0.0
    %v1008 = vand.u32 %v636, 4294901760
    %1009 = vmatmul.mubr.f32.gmra.mrb[0].mxu0 %v1008
    %v1010 = vpop.f32.mrb[0].mxu0
    %v1011 = vadd.f32 %v937, %v1010
    %v1012 = vpop.f32.mrb[0].mxu0
    %1013 = vdwg.mxu0
    %1014 = vmatprep.subr.mxu0 0.0
    %v1015 = vand.u32 %v638, 4294901760
    %1016 = vmatpush1.xpose.msra.mxu0 %v1015
    %1017 = vmatprep.subr.mxu0 0.0
    %1018 = vmatpush1.xpose.msra.mxu0 0.0
    %1019 = vmatprep.subr.mxu0 0.0
    %1020 = vmatpush1.xpose.msra.mxu0 0.0
    %1021 = vmatprep.subr.mxu0 0.0
    %1022 = vmatpush1.xpose.msra.mxu0 0.0
    %1023 = vmatprep.subr.mxu0 0.0
    %1024 = vmatpush1.xpose.msra.mxu0 0.0
    %1025 = vmatprep.subr.mxu0 0.0
    %1026 = vmatpush1.xpose.msra.mxu0 0.0
    %1027 = vmatprep.subr.mxu0 0.0
    %1028 = vmatpush1.xpose.msra.mxu0 0.0
    %1029 = vmatprep.subr.mxu0 0.0
    %1030 = vmatpush1.xpose.msra.mxu0 0.0
    %1031 = vmatprep.subr.mxu0 0.0
    %1032 = vmatpush1.xpose.msra.mxu0 0.0
    %1033 = vmatprep.subr.mxu0 0.0
    %1034 = vmatpush1.xpose.msra.mxu0 0.0
    %1035 = vmatprep.subr.mxu0 0.0
    %1036 = vmatpush1.xpose.msra.mxu0 0.0
    %1037 = vmatprep.subr.mxu0 0.0
    %1038 = vmatpush1.xpose.msra.mxu0 0.0
    %1039 = vmatprep.subr.mxu0 0.0
    %1040 = vmatpush1.xpose.msra.mxu0 0.0
    %1041 = vmatprep.subr.mxu0 0.0
    %1042 = vmatpush1.xpose.msra.mxu0 0.0
    %1043 = vmatprep.subr.mxu0 0.0
    %1044 = vmatpush1.xpose.msra.mxu0 0.0
    %1045 = vmatprep.subr.mxu0 0.0
    %1046 = vmatpush1.xpose.msra.mxu0 0.0
    %1047 = vmatprep.subr.mxu0 0.0
    %1048 = vmatpush1.xpose.msra.mxu0 0.0
    %1049 = vmatprep.subr.mxu0 0.0
    %1050 = vmatpush1.xpose.msra.mxu0 0.0
    %1051 = vmatprep.subr.mxu0 0.0
    %1052 = vmatpush1.xpose.msra.mxu0 0.0
    %1053 = vmatprep.subr.mxu0 0.0
    %1054 = vmatpush1.xpose.msra.mxu0 0.0
    %1055 = vmatprep.subr.mxu0 0.0
    %1056 = vmatpush1.xpose.msra.mxu0 0.0
    %1057 = vmatprep.subr.mxu0 0.0
    %1058 = vmatpush1.xpose.msra.mxu0 0.0
    %1059 = vmatprep.subr.mxu0 0.0
    %1060 = vmatpush1.xpose.msra.mxu0 0.0
    %1061 = vmatprep.subr.mxu0 0.0
    %1062 = vmatpush1.xpose.msra.mxu0 0.0
    %1063 = vmatprep.subr.mxu0 0.0
    %1064 = vmatpush1.xpose.msra.mxu0 0.0
    %1065 = vmatprep.subr.mxu0 0.0
    %1066 = vmatpush1.xpose.msra.mxu0 0.0
    %1067 = vmatprep.subr.mxu0 0.0
    %1068 = vmatpush1.xpose.msra.mxu0 0.0
    %1069 = vmatprep.subr.mxu0 0.0
    %1070 = vmatpush1.xpose.msra.mxu0 0.0
    %1071 = vmatprep.subr.mxu0 0.0
    %1072 = vmatpush1.xpose.msra.mxu0 0.0
    %1073 = vmatprep.subr.mxu0 0.0
    %1074 = vmatpush1.xpose.msra.mxu0 0.0
    %1075 = vmatprep.subr.mxu0 0.0
    %1076 = vmatpush1.xpose.msra.mxu0 0.0
    %1077 = vmatprep.subr.mxu0 0.0
    %1078 = vmatpush1.xpose.msra.mxu0 0.0
    %1079 = vmatprep.mubr.f32.mxu0 0.0
    %v1080 = vand.u32 %v636, 4294901760
    %1081 = vmatmul.mubr.f32.gmra.mrb[0].mxu0 %v1080
    %v1082 = vpop.f32.mrb[0].mxu0
    %v1083 = vadd.f32 %v1011, %v1082
    %v1084 = vpop.f32.mrb[0].mxu0
    %1085 = vdwg.mxu0
    %1087 = vrot.lane.b32.xlu0 %v629, 96
    %v1088 = vpop.permute.xlu0 %1087
    %v1089 = vsel %vm635, %v629, 0
    %v1091 = vsel %vm635, %v1088, 0
    %1093 = vmatprep.subr.mxu0 0.0
    %v1094 = vand.u32 %v1091, 4294901760
    %1095 = vmatpush1.xpose.msra.mxu0 %v1094
    %1096 = vmatprep.subr.mxu0 0.0
    %1097 = vmatpush1.xpose.msra.mxu0 0.0
    %1098 = vmatprep.subr.mxu0 0.0
    %1099 = vmatpush1.xpose.msra.mxu0 0.0
    %1100 = vmatprep.subr.mxu0 0.0
    %1101 = vmatpush1.xpose.msra.mxu0 0.0
    %1102 = vmatprep.subr.mxu0 0.0
    %1103 = vmatpush1.xpose.msra.mxu0 0.0
    %1104 = vmatprep.subr.mxu0 0.0
    %1105 = vmatpush1.xpose.msra.mxu0 0.0
    %1106 = vmatprep.subr.mxu0 0.0
    %1107 = vmatpush1.xpose.msra.mxu0 0.0
    %1108 = vmatprep.subr.mxu0 0.0
    %1109 = vmatpush1.xpose.msra.mxu0 0.0
    %1110 = vmatprep.subr.mxu0 0.0
    %1111 = vmatpush1.xpose.msra.mxu0 0.0
    %1112 = vmatprep.subr.mxu0 0.0
    %1113 = vmatpush1.xpose.msra.mxu0 0.0
    %1114 = vmatprep.subr.mxu0 0.0
    %1115 = vmatpush1.xpose.msra.mxu0 0.0
    %1116 = vmatprep.subr.mxu0 0.0
    %1117 = vmatpush1.xpose.msra.mxu0 0.0
    %1118 = vmatprep.subr.mxu0 0.0
    %1119 = vmatpush1.xpose.msra.mxu0 0.0
    %1120 = vmatprep.subr.mxu0 0.0
    %1121 = vmatpush1.xpose.msra.mxu0 0.0
    %1122 = vmatprep.subr.mxu0 0.0
    %1123 = vmatpush1.xpose.msra.mxu0 0.0
    %1124 = vmatprep.subr.mxu0 0.0
    %1125 = vmatpush1.xpose.msra.mxu0 0.0
    %1126 = vmatprep.subr.mxu0 0.0
    %1127 = vmatpush1.xpose.msra.mxu0 0.0
    %1128 = vmatprep.subr.mxu0 0.0
    %1129 = vmatpush1.xpose.msra.mxu0 0.0
    %1130 = vmatprep.subr.mxu0 0.0
    %1131 = vmatpush1.xpose.msra.mxu0 0.0
    %1132 = vmatprep.subr.mxu0 0.0
    %1133 = vmatpush1.xpose.msra.mxu0 0.0
    %1134 = vmatprep.subr.mxu0 0.0
    %1135 = vmatpush1.xpose.msra.mxu0 0.0
    %1136 = vmatprep.subr.mxu0 0.0
    %1137 = vmatpush1.xpose.msra.mxu0 0.0
    %1138 = vmatprep.subr.mxu0 0.0
    %1139 = vmatpush1.xpose.msra.mxu0 0.0
    %1140 = vmatprep.subr.mxu0 0.0
    %1141 = vmatpush1.xpose.msra.mxu0 0.0
    %1142 = vmatprep.subr.mxu0 0.0
    %1143 = vmatpush1.xpose.msra.mxu0 0.0
    %1144 = vmatprep.subr.mxu0 0.0
    %1145 = vmatpush1.xpose.msra.mxu0 0.0
    %1146 = vmatprep.subr.mxu0 0.0
    %1147 = vmatpush1.xpose.msra.mxu0 0.0
    %1148 = vmatprep.subr.mxu0 0.0
    %1149 = vmatpush1.xpose.msra.mxu0 0.0
    %1150 = vmatprep.subr.mxu0 0.0
    %1151 = vmatpush1.xpose.msra.mxu0 0.0
    %1152 = vmatprep.subr.mxu0 0.0
    %1153 = vmatpush1.xpose.msra.mxu0 0.0
    %1154 = vmatprep.subr.mxu0 0.0
    %1155 = vmatpush1.xpose.msra.mxu0 0.0
    %1156 = vmatprep.subr.mxu0 0.0
    %1157 = vmatpush1.xpose.msra.mxu0 0.0
    %1158 = vmatprep.mubr.f32.mxu0 0.0
    %v1159 = vand.u32 %v1089, 4294901760
    %v1160 = vsub.f32 %v1089, %v1159
    %v1161 = vand.u32 %v1160, 4294901760
    %v1162 = vsub.f32 %v1160, %v1161
    %v1163 = vand.u32 %v1162, 4294901760
    %1164 = vmatmul.mubr.f32.gmra.mrb[0].mxu0 %v1163
    %v1165 = vpop.f32.mrb[0].mxu0
    %v1166 = vadd.f32 0.0, %v1165
    %v1167 = vpop.f32.mrb[0].mxu0
    %1168 = vdwg.mxu0
    %1169 = vmatprep.subr.mxu0 0.0
    %v1170 = vand.u32 %v1091, 4294901760
    %v1171 = vsub.f32 %v1091, %v1170
    %v1172 = vand.u32 %v1171, 4294901760
    %v1173 = vsub.f32 %v1171, %v1172
    %v1174 = vand.u32 %v1173, 4294901760
    %1175 = vmatpush1.xpose.msra.mxu0 %v1174
    %1176 = vmatprep.subr.mxu0 0.0
    %1177 = vmatpush1.xpose.msra.mxu0 0.0
    %1178 = vmatprep.subr.mxu0 0.0
    %1179 = vmatpush1.xpose.msra.mxu0 0.0
    %1180 = vmatprep.subr.mxu0 0.0
    %1181 = vmatpush1.xpose.msra.mxu0 0.0
    %1182 = vmatprep.subr.mxu0 0.0
    %1183 = vmatpush1.xpose.msra.mxu0 0.0
    %1184 = vmatprep.subr.mxu0 0.0
    %1185 = vmatpush1.xpose.msra.mxu0 0.0
    %1186 = vmatprep.subr.mxu0 0.0
    %1187 = vmatpush1.xpose.msra.mxu0 0.0
    %1188 = vmatprep.subr.mxu0 0.0
    %1189 = vmatpush1.xpose.msra.mxu0 0.0
    %1190 = vmatprep.subr.mxu0 0.0
    %1191 = vmatpush1.xpose.msra.mxu0 0.0
    %1192 = vmatprep.subr.mxu0 0.0
    %1193 = vmatpush1.xpose.msra.mxu0 0.0
    %1194 = vmatprep.subr.mxu0 0.0
    %1195 = vmatpush1.xpose.msra.mxu0 0.0
    %1196 = vmatprep.subr.mxu0 0.0
    %1197 = vmatpush1.xpose.msra.mxu0 0.0
    %1198 = vmatprep.subr.mxu0 0.0
    %1199 = vmatpush1.xpose.msra.mxu0 0.0
    %1200 = vmatprep.subr.mxu0 0.0
    %1201 = vmatpush1.xpose.msra.mxu0 0.0
    %1202 = vmatprep.subr.mxu0 0.0
    %1203 = vmatpush1.xpose.msra.mxu0 0.0
    %1204 = vmatprep.subr.mxu0 0.0
    %1205 = vmatpush1.xpose.msra.mxu0 0.0
    %1206 = vmatprep.subr.mxu0 0.0
    %1207 = vmatpush1.xpose.msra.mxu0 0.0
    %1208 = vmatprep.subr.mxu0 0.0
    %1209 = vmatpush1.xpose.msra.mxu0 0.0
    %1210 = vmatprep.subr.mxu0 0.0
    %1211 = vmatpush1.xpose.msra.mxu0 0.0
    %1212 = vmatprep.subr.mxu0 0.0
    %1213 = vmatpush1.xpose.msra.mxu0 0.0
    %1214 = vmatprep.subr.mxu0 0.0
    %1215 = vmatpush1.xpose.msra.mxu0 0.0
    %1216 = vmatprep.subr.mxu0 0.0
    %1217 = vmatpush1.xpose.msra.mxu0 0.0
    %1218 = vmatprep.subr.mxu0 0.0
    %1219 = vmatpush1.xpose.msra.mxu0 0.0
    %1220 = vmatprep.subr.mxu0 0.0
    %1221 = vmatpush1.xpose.msra.mxu0 0.0
    %1222 = vmatprep.subr.mxu0 0.0
    %1223 = vmatpush1.xpose.msra.mxu0 0.0
    %1224 = vmatprep.subr.mxu0 0.0
    %1225 = vmatpush1.xpose.msra.mxu0 0.0
    %1226 = vmatprep.subr.mxu0 0.0
    %1227 = vmatpush1.xpose.msra.mxu0 0.0
    %1228 = vmatprep.subr.mxu0 0.0
    %1229 = vmatpush1.xpose.msra.mxu0 0.0
    %1230 = vmatprep.subr.mxu0 0.0
    %1231 = vmatpush1.xpose.msra.mxu0 0.0
    %1232 = vmatprep.subr.mxu0 0.0
    %1233 = vmatpush1.xpose.msra.mxu0 0.0
    %1234 = vmatprep.subr.mxu0 0.0
    %1235 = vmatpush1.xpose.msra.mxu0 0.0
    %1236 = vmatprep.subr.mxu0 0.0
    %1237 = vmatpush1.xpose.msra.mxu0 0.0
    %1238 = vmatprep.mubr.f32.mxu0 0.0
    %v1239 = vand.u32 %v1089, 4294901760
    %1240 = vmatmul.mubr.f32.gmra.mrb[0].mxu0 %v1239
    %v1241 = vpop.f32.mrb[0].mxu0
    %v1242 = vadd.f32 %v1166, %v1241
    %v1243 = vpop.f32.mrb[0].mxu0
    %1244 = vdwg.mxu0
    %1245 = vmatprep.subr.mxu0 0.0
    %v1246 = vand.u32 %v1091, 4294901760
    %v1247 = vsub.f32 %v1091, %v1246
    %1248 = vmatpush1.xpose.msra.mxu0 %v1247
    %1249 = vmatprep.subr.mxu0 0.0
    %1250 = vmatpush1.xpose.msra.mxu0 0.0
    %1251 = vmatprep.subr.mxu0 0.0
    %1252 = vmatpush1.xpose.msra.mxu0 0.0
    %1253 = vmatprep.subr.mxu0 0.0
    %1254 = vmatpush1.xpose.msra.mxu0 0.0
    %1255 = vmatprep.subr.mxu0 0.0
    %1256 = vmatpush1.xpose.msra.mxu0 0.0
    %1257 = vmatprep.subr.mxu0 0.0
    %1258 = vmatpush1.xpose.msra.mxu0 0.0
    %1259 = vmatprep.subr.mxu0 0.0
    %1260 = vmatpush1.xpose.msra.mxu0 0.0
    %1261 = vmatprep.subr.mxu0 0.0
    %1262 = vmatpush1.xpose.msra.mxu0 0.0
    %1263 = vmatprep.subr.mxu0 0.0
    %1264 = vmatpush1.xpose.msra.mxu0 0.0
    %1265 = vmatprep.subr.mxu0 0.0
    %1266 = vmatpush1.xpose.msra.mxu0 0.0
    %1267 = vmatprep.subr.mxu0 0.0
    %1268 = vmatpush1.xpose.msra.mxu0 0.0
    %1269 = vmatprep.subr.mxu0 0.0
    %1270 = vmatpush1.xpose.msra.mxu0 0.0
    %1271 = vmatprep.subr.mxu0 0.0
    %1272 = vmatpush1.xpose.msra.mxu0 0.0
    %1273 = vmatprep.subr.mxu0 0.0
    %1274 = vmatpush1.xpose.msra.mxu0 0.0
    %1275 = vmatprep.subr.mxu0 0.0
    %1276 = vmatpush1.xpose.msra.mxu0 0.0
    %1277 = vmatprep.subr.mxu0 0.0
    %1278 = vmatpush1.xpose.msra.mxu0 0.0
    %1279 = vmatprep.subr.mxu0 0.0
    %1280 = vmatpush1.xpose.msra.mxu0 0.0
    %1281 = vmatprep.subr.mxu0 0.0
    %1282 = vmatpush1.xpose.msra.mxu0 0.0
    %1283 = vmatprep.subr.mxu0 0.0
    %1284 = vmatpush1.xpose.msra.mxu0 0.0
    %1285 = vmatprep.subr.mxu0 0.0
    %1286 = vmatpush1.xpose.msra.mxu0 0.0
    %1287 = vmatprep.subr.mxu0 0.0
    %1288 = vmatpush1.xpose.msra.mxu0 0.0
    %1289 = vmatprep.subr.mxu0 0.0
    %1290 = vmatpush1.xpose.msra.mxu0 0.0
    %1291 = vmatprep.subr.mxu0 0.0
    %1292 = vmatpush1.xpose.msra.mxu0 0.0
    %1293 = vmatprep.subr.mxu0 0.0
    %1294 = vmatpush1.xpose.msra.mxu0 0.0
    %1295 = vmatprep.subr.mxu0 0.0
    %1296 = vmatpush1.xpose.msra.mxu0 0.0
    %1297 = vmatprep.subr.mxu0 0.0
    %1298 = vmatpush1.xpose.msra.mxu0 0.0
    %1299 = vmatprep.subr.mxu0 0.0
    %1300 = vmatpush1.xpose.msra.mxu0 0.0
    %1301 = vmatprep.subr.mxu0 0.0
    %1302 = vmatpush1.xpose.msra.mxu0 0.0
    %1303 = vmatprep.subr.mxu0 0.0
    %1304 = vmatpush1.xpose.msra.mxu0 0.0
    %1305 = vmatprep.subr.mxu0 0.0
    %1306 = vmatpush1.xpose.msra.mxu0 0.0
    %1307 = vmatprep.subr.mxu0 0.0
    %1308 = vmatpush1.xpose.msra.mxu0 0.0
    %1309 = vmatprep.subr.mxu0 0.0
    %1310 = vmatpush1.xpose.msra.mxu0 0.0
    %1311 = vmatprep.mubr.f32.mxu0 0.0
    %v1312 = vand.u32 %v1089, 4294901760
    %v1313 = vsub.f32 %v1089, %v1312
    %1314 = vmatmul.mubr.f32.gmra.mrb[0].mxu0 %v1313
    %v1315 = vpop.f32.mrb[0].mxu0
    %v1316 = vadd.f32 %v1242, %v1315
    %v1317 = vpop.f32.mrb[0].mxu0
    %1318 = vdwg.mxu0
    %1319 = vmatprep.subr.mxu0 0.0
    %v1320 = vand.u32 %v1091, 4294901760
    %1321 = vmatpush1.xpose.msra.mxu0 %v1320
    %1322 = vmatprep.subr.mxu0 0.0
    %1323 = vmatpush1.xpose.msra.mxu0 0.0
    %1324 = vmatprep.subr.mxu0 0.0
    %1325 = vmatpush1.xpose.msra.mxu0 0.0
    %1326 = vmatprep.subr.mxu0 0.0
    %1327 = vmatpush1.xpose.msra.mxu0 0.0
    %1328 = vmatprep.subr.mxu0 0.0
    %1329 = vmatpush1.xpose.msra.mxu0 0.0
    %1330 = vmatprep.subr.mxu0 0.0
    %1331 = vmatpush1.xpose.msra.mxu0 0.0
    %1332 = vmatprep.subr.mxu0 0.0
    %1333 = vmatpush1.xpose.msra.mxu0 0.0
    %1334 = vmatprep.subr.mxu0 0.0
    %1335 = vmatpush1.xpose.msra.mxu0 0.0
    %1336 = vmatprep.subr.mxu0 0.0
    %1337 = vmatpush1.xpose.msra.mxu0 0.0
    %1338 = vmatprep.subr.mxu0 0.0
    %1339 = vmatpush1.xpose.msra.mxu0 0.0
    %1340 = vmatprep.subr.mxu0 0.0
    %1341 = vmatpush1.xpose.msra.mxu0 0.0
    %1342 = vmatprep.subr.mxu0 0.0
    %1343 = vmatpush1.xpose.msra.mxu0 0.0
    %1344 = vmatprep.subr.mxu0 0.0
    %1345 = vmatpush1.xpose.msra.mxu0 0.0
    %1346 = vmatprep.subr.mxu0 0.0
    %1347 = vmatpush1.xpose.msra.mxu0 0.0
    %1348 = vmatprep.subr.mxu0 0.0
    %1349 = vmatpush1.xpose.msra.mxu0 0.0
    %1350 = vmatprep.subr.mxu0 0.0
    %1351 = vmatpush1.xpose.msra.mxu0 0.0
    %1352 = vmatprep.subr.mxu0 0.0
    %1353 = vmatpush1.xpose.msra.mxu0 0.0
    %1354 = vmatprep.subr.mxu0 0.0
    %1355 = vmatpush1.xpose.msra.mxu0 0.0
    %1356 = vmatprep.subr.mxu0 0.0
    %1357 = vmatpush1.xpose.msra.mxu0 0.0
    %1358 = vmatprep.subr.mxu0 0.0
    %1359 = vmatpush1.xpose.msra.mxu0 0.0
    %1360 = vmatprep.subr.mxu0 0.0
    %1361 = vmatpush1.xpose.msra.mxu0 0.0
    %1362 = vmatprep.subr.mxu0 0.0
    %1363 = vmatpush1.xpose.msra.mxu0 0.0
    %1364 = vmatprep.subr.mxu0 0.0
    %1365 = vmatpush1.xpose.msra.mxu0 0.0
    %1366 = vmatprep.subr.mxu0 0.0
    %1367 = vmatpush1.xpose.msra.mxu0 0.0
    %1368 = vmatprep.subr.mxu0 0.0
    %1369 = vmatpush1.xpose.msra.mxu0 0.0
    %1370 = vmatprep.subr.mxu0 0.0
    %1371 = vmatpush1.xpose.msra.mxu0 0.0
    %1372 = vmatprep.subr.mxu0 0.0
    %1373 = vmatpush1.xpose.msra.mxu0 0.0
    %1374 = vmatprep.subr.mxu0 0.0
    %1375 = vmatpush1.xpose.msra.mxu0 0.0
    %1376 = vmatprep.subr.mxu0 0.0
    %1377 = vmatpush1.xpose.msra.mxu0 0.0
    %1378 = vmatprep.subr.mxu0 0.0
    %1379 = vmatpush1.xpose.msra.mxu0 0.0
    %1380 = vmatprep.subr.mxu0 0.0
    %1381 = vmatpush1.xpose.msra.mxu0 0.0
    %1382 = vmatprep.subr.mxu0 0.0
    %1383 = vmatpush1.xpose.msra.mxu0 0.0
    %1384 = vmatprep.mubr.f32.mxu0 0.0
    %v1385 = vand.u32 %v1089, 4294901760
    %v1386 = vsub.f32 %v1089, %v1385
    %v1387 = vand.u32 %v1386, 4294901760
    %1388 = vmatmul.mubr.f32.gmra.mrb[0].mxu0 %v1387
    %v1389 = vpop.f32.mrb[0].mxu0
    %v1390 = vadd.f32 %v1316, %v1389
    %v1391 = vpop.f32.mrb[0].mxu0
    %1392 = vdwg.mxu0
    %1393 = vmatprep.subr.mxu0 0.0
    %v1394 = vand.u32 %v1091, 4294901760
    %v1395 = vsub.f32 %v1091, %v1394
    %v1396 = vand.u32 %v1395, 4294901760
    %1397 = vmatpush1.xpose.msra.mxu0 %v1396
    %1398 = vmatprep.subr.mxu0 0.0
    %1399 = vmatpush1.xpose.msra.mxu0 0.0
    %1400 = vmatprep.subr.mxu0 0.0
    %1401 = vmatpush1.xpose.msra.mxu0 0.0
    %1402 = vmatprep.subr.mxu0 0.0
    %1403 = vmatpush1.xpose.msra.mxu0 0.0
    %1404 = vmatprep.subr.mxu0 0.0
    %1405 = vmatpush1.xpose.msra.mxu0 0.0
    %1406 = vmatprep.subr.mxu0 0.0
    %1407 = vmatpush1.xpose.msra.mxu0 0.0
    %1408 = vmatprep.subr.mxu0 0.0
    %1409 = vmatpush1.xpose.msra.mxu0 0.0
    %1410 = vmatprep.subr.mxu0 0.0
    %1411 = vmatpush1.xpose.msra.mxu0 0.0
    %1412 = vmatprep.subr.mxu0 0.0
    %1413 = vmatpush1.xpose.msra.mxu0 0.0
    %1414 = vmatprep.subr.mxu0 0.0
    %1415 = vmatpush1.xpose.msra.mxu0 0.0
    %1416 = vmatprep.subr.mxu0 0.0
    %1417 = vmatpush1.xpose.msra.mxu0 0.0
    %1418 = vmatprep.subr.mxu0 0.0
    %1419 = vmatpush1.xpose.msra.mxu0 0.0
    %1420 = vmatprep.subr.mxu0 0.0
    %1421 = vmatpush1.xpose.msra.mxu0 0.0
    %1422 = vmatprep.subr.mxu0 0.0
    %1423 = vmatpush1.xpose.msra.mxu0 0.0
    %1424 = vmatprep.subr.mxu0 0.0
    %1425 = vmatpush1.xpose.msra.mxu0 0.0
    %1426 = vmatprep.subr.mxu0 0.0
    %1427 = vmatpush1.xpose.msra.mxu0 0.0
    %1428 = vmatprep.subr.mxu0 0.0
    %1429 = vmatpush1.xpose.msra.mxu0 0.0
    %1430 = vmatprep.subr.mxu0 0.0
    %1431 = vmatpush1.xpose.msra.mxu0 0.0
    %1432 = vmatprep.subr.mxu0 0.0
    %1433 = vmatpush1.xpose.msra.mxu0 0.0
    %1434 = vmatprep.subr.mxu0 0.0
    %1435 = vmatpush1.xpose.msra.mxu0 0.0
    %1436 = vmatprep.subr.mxu0 0.0
    %1437 = vmatpush1.xpose.msra.mxu0 0.0
    %1438 = vmatprep.subr.mxu0 0.0
    %1439 = vmatpush1.xpose.msra.mxu0 0.0
    %1440 = vmatprep.subr.mxu0 0.0
    %1441 = vmatpush1.xpose.msra.mxu0 0.0
    %1442 = vmatprep.subr.mxu0 0.0
    %1443 = vmatpush1.xpose.msra.mxu0 0.0
    %1444 = vmatprep.subr.mxu0 0.0
    %1445 = vmatpush1.xpose.msra.mxu0 0.0
    %1446 = vmatprep.subr.mxu0 0.0
    %1447 = vmatpush1.xpose.msra.mxu0 0.0
    %1448 = vmatprep.subr.mxu0 0.0
    %1449 = vmatpush1.xpose.msra.mxu0 0.0
    %1450 = vmatprep.subr.mxu0 0.0
    %1451 = vmatpush1.xpose.msra.mxu0 0.0
    %1452 = vmatprep.subr.mxu0 0.0
    %1453 = vmatpush1.xpose.msra.mxu0 0.0
    %1454 = vmatprep.subr.mxu0 0.0
    %1455 = vmatpush1.xpose.msra.mxu0 0.0
    %1456 = vmatprep.subr.mxu0 0.0
    %1457 = vmatpush1.xpose.msra.mxu0 0.0
    %1458 = vmatprep.subr.mxu0 0.0
    %1459 = vmatpush1.xpose.msra.mxu0 0.0
    %1460 = vmatprep.mubr.f32.mxu0 0.0
    %v1461 = vand.u32 %v1089, 4294901760
    %1462 = vmatmul.mubr.f32.gmra.mrb[0].mxu0 %v1461
    %v1463 = vpop.f32.mrb[0].mxu0
    %v1464 = vadd.f32 %v1390, %v1463
    %v1465 = vpop.f32.mrb[0].mxu0
    %1466 = vdwg.mxu0
    %1467 = vmatprep.subr.mxu0 0.0
    %v1468 = vand.u32 %v1091, 4294901760
    %1469 = vmatpush1.xpose.msra.mxu0 %v1468
    %1470 = vmatprep.subr.mxu0 0.0
    %1471 = vmatpush1.xpose.msra.mxu0 0.0
    %1472 = vmatprep.subr.mxu0 0.0
    %1473 = vmatpush1.xpose.msra.mxu0 0.0
    %1474 = vmatprep.subr.mxu0 0.0
    %1475 = vmatpush1.xpose.msra.mxu0 0.0
    %1476 = vmatprep.subr.mxu0 0.0
    %1477 = vmatpush1.xpose.msra.mxu0 0.0
    %1478 = vmatprep.subr.mxu0 0.0
    %1479 = vmatpush1.xpose.msra.mxu0 0.0
    %1480 = vmatprep.subr.mxu0 0.0
    %1481 = vmatpush1.xpose.msra.mxu0 0.0
    %1482 = vmatprep.subr.mxu0 0.0
    %1483 = vmatpush1.xpose.msra.mxu0 0.0
    %1484 = vmatprep.subr.mxu0 0.0
    %1485 = vmatpush1.xpose.msra.mxu0 0.0
    %1486 = vmatprep.subr.mxu0 0.0
    %1487 = vmatpush1.xpose.msra.mxu0 0.0
    %1488 = vmatprep.subr.mxu0 0.0
    %1489 = vmatpush1.xpose.msra.mxu0 0.0
    %1490 = vmatprep.subr.mxu0 0.0
    %1491 = vmatpush1.xpose.msra.mxu0 0.0
    %1492 = vmatprep.subr.mxu0 0.0
    %1493 = vmatpush1.xpose.msra.mxu0 0.0
    %1494 = vmatprep.subr.mxu0 0.0
    %1495 = vmatpush1.xpose.msra.mxu0 0.0
    %1496 = vmatprep.subr.mxu0 0.0
    %1497 = vmatpush1.xpose.msra.mxu0 0.0
    %1498 = vmatprep.subr.mxu0 0.0
    %1499 = vmatpush1.xpose.msra.mxu0 0.0
    %1500 = vmatprep.subr.mxu0 0.0
    %1501 = vmatpush1.xpose.msra.mxu0 0.0
    %1502 = vmatprep.subr.mxu0 0.0
    %1503 = vmatpush1.xpose.msra.mxu0 0.0
    %1504 = vmatprep.subr.mxu0 0.0
    %1505 = vmatpush1.xpose.msra.mxu0 0.0
    %1506 = vmatprep.subr.mxu0 0.0
    %1507 = vmatpush1.xpose.msra.mxu0 0.0
    %1508 = vmatprep.subr.mxu0 0.0
    %1509 = vmatpush1.xpose.msra.mxu0 0.0
    %1510 = vmatprep.subr.mxu0 0.0
    %1511 = vmatpush1.xpose.msra.mxu0 0.0
    %1512 = vmatprep.subr.mxu0 0.0
    %1513 = vmatpush1.xpose.msra.mxu0 0.0
    %1514 = vmatprep.subr.mxu0 0.0
    %1515 = vmatpush1.xpose.msra.mxu0 0.0
    %1516 = vmatprep.subr.mxu0 0.0
    %1517 = vmatpush1.xpose.msra.mxu0 0.0
    %1518 = vmatprep.subr.mxu0 0.0
    %1519 = vmatpush1.xpose.msra.mxu0 0.0
    %1520 = vmatprep.subr.mxu0 0.0
    %1521 = vmatpush1.xpose.msra.mxu0 0.0
    %1522 = vmatprep.subr.mxu0 0.0
    %1523 = vmatpush1.xpose.msra.mxu0 0.0
    %1524 = vmatprep.subr.mxu0 0.0
    %1525 = vmatpush1.xpose.msra.mxu0 0.0
    %1526 = vmatprep.subr.mxu0 0.0
    %1527 = vmatpush1.xpose.msra.mxu0 0.0
    %1528 = vmatprep.subr.mxu0 0.0
    %1529 = vmatpush1.xpose.msra.mxu0 0.0
    %1530 = vmatprep.subr.mxu0 0.0
    %1531 = vmatpush1.xpose.msra.mxu0 0.0
    %1532 = vmatprep.mubr.f32.mxu0 0.0
    %v1533 = vand.u32 %v1089, 4294901760
    %1534 = vmatmul.mubr.f32.gmra.mrb[0].mxu0 %v1533
    %v1535 = vpop.f32.mrb[0].mxu0
    %v1536 = vadd.f32 %v1464, %v1535
    %v1537 = vpop.f32.mrb[0].mxu0
    %1538 = vdwg.mxu0
    %v1539 = vsel %vm635, %v1083, -inf
    %1540 = vmax.xlane.f32.xlu0 %v1539
    %v1541 = vpop.xlane.xlu0 %1540
    %v1542 = vsel %vm635, %v1536, -inf
    %1543 = vmax.xlane.f32.xlu0 %v1542
    %v1544 = vpop.xlane.xlu0 %1543
    %v1545 = vsub.f32 %v1083, %v1541
    %v1546 = vsub.f32 %v1536, %v1544
    %v1547 = vmul.f32 %v1545, 1.442695
    %v1548 = vpow.pop %v1547
    %v1549 = vmul.f32 %v1546, 1.442695
    %v1550 = vpow.pop %v1549
    %v1551 = vsel %vm635, %v1548, 0.0
    %1552 = vadd.xlane.f32.xlu0 %v1551
    %v1553 = vpop.xlane.xlu0 %1552
    %v1554 = vsel %vm635, %v1550, 0.0
    %1555 = vadd.xlane.f32.xlu0 %v1554
    %v1556 = vpop.xlane.xlu0 %1555
    %v1557 = vrcp.pop %v1553
    %v1558 = vrcp.pop %v1556
    %v1559 = vmul.f32 %v1548, %v1557
    %v1560 = vmul.f32 %v1550, %v1558
    %1561 = vrot.lane.b32.xlu0 %v623, 64
    %v1562 = vpop.permute.xlu0 %1561
    %v1565 = vsel %vm635, %v1559, 0
    %1567 = vmatprep.subr.mxu0 0.0
    %v1568 = vand.u32 %v1562, 4294901760
    %1569 = vmatpush1.msra.mxu0 %v1568
    %1570 = vmatprep.subr.mxu0 0.0
    %1571 = vmatpush1.msra.mxu0 0.0
    %1572 = vmatprep.subr.mxu0 0.0
    %1573 = vmatpush1.msra.mxu0 0.0
    %1574 = vmatprep.subr.mxu0 0.0
    %1575 = vmatpush1.msra.mxu0 0.0
    %1576 = vmatprep.subr.mxu0 0.0
    %1577 = vmatpush1.msra.mxu0 0.0
    %1578 = vmatprep.subr.mxu0 0.0
    %1579 = vmatpush1.msra.mxu0 0.0
    %1580 = vmatprep.subr.mxu0 0.0
    %1581 = vmatpush1.msra.mxu0 0.0
    %1582 = vmatprep.subr.mxu0 0.0
    %1583 = vmatpush1.msra.mxu0 0.0
    %1584 = vmatprep.subr.mxu0 0.0
    %1585 = vmatpush1.msra.mxu0 0.0
    %1586 = vmatprep.subr.mxu0 0.0
    %1587 = vmatpush1.msra.mxu0 0.0
    %1588 = vmatprep.subr.mxu0 0.0
    %1589 = vmatpush1.msra.mxu0 0.0
    %1590 = vmatprep.subr.mxu0 0.0
    %1591 = vmatpush1.msra.mxu0 0.0
    %1592 = vmatprep.subr.mxu0 0.0
    %1593 = vmatpush1.msra.mxu0 0.0
    %1594 = vmatprep.subr.mxu0 0.0
    %1595 = vmatpush1.msra.mxu0 0.0
    %1596 = vmatprep.subr.mxu0 0.0
    %1597 = vmatpush1.msra.mxu0 0.0
    %1598 = vmatprep.subr.mxu0 0.0
    %1599 = vmatpush1.msra.mxu0 0.0
    %1600 = vmatprep.subr.mxu0 0.0
    %1601 = vmatpush1.msra.mxu0 0.0
    %1602 = vmatprep.subr.mxu0 0.0
    %1603 = vmatpush1.msra.mxu0 0.0
    %1604 = vmatprep.subr.mxu0 0.0
    %1605 = vmatpush1.msra.mxu0 0.0
    %1606 = vmatprep.subr.mxu0 0.0
    %1607 = vmatpush1.msra.mxu0 0.0
    %1608 = vmatprep.subr.mxu0 0.0
    %1609 = vmatpush1.msra.mxu0 0.0
    %1610 = vmatprep.subr.mxu0 0.0
    %1611 = vmatpush1.msra.mxu0 0.0
    %1612 = vmatprep.subr.mxu0 0.0
    %1613 = vmatpush1.msra.mxu0 0.0
    %1614 = vmatprep.subr.mxu0 0.0
    %1615 = vmatpush1.msra.mxu0 0.0
    %1616 = vmatprep.subr.mxu0 0.0
    %1617 = vmatpush1.msra.mxu0 0.0
    %1618 = vmatprep.subr.mxu0 0.0
    %1619 = vmatpush1.msra.mxu0 0.0
    %1620 = vmatprep.subr.mxu0 0.0
    %1621 = vmatpush1.msra.mxu0 0.0
    %1622 = vmatprep.subr.mxu0 0.0
    %1623 = vmatpush1.msra.mxu0 0.0
    %1624 = vmatprep.subr.mxu0 0.0
    %1625 = vmatpush1.msra.mxu0 0.0
    %1626 = vmatprep.subr.mxu0 0.0
    %1627 = vmatpush1.msra.mxu0 0.0
    %1628 = vmatprep.subr.mxu0 0.0
    %1629 = vmatpush1.msra.mxu0 0.0
    %1630 = vmatprep.subr.mxu0 0.0
    %1631 = vmatpush1.msra.mxu0 0.0
    %1632 = vmatprep.mubr.f32.mxu0 0.0
    %v1633 = vand.u32 %v1565, 4294901760
    %v1634 = vsub.f32 %v1565, %v1633
    %v1635 = vand.u32 %v1634, 4294901760
    %v1636 = vsub.f32 %v1634, %v1635
    %v1637 = vand.u32 %v1636, 4294901760
    %1638 = vmatmul.mubr.f32.gmra.mrb[0].mxu0 %v1637
    %v1639 = vpop.f32.mrb[0].mxu0
    %v1640 = vadd.f32 0.0, %v1639
    %v1641 = vpop.f32.mrb[0].mxu0
    %1642 = vdwg.mxu0
    %1643 = vmatprep.subr.mxu0 0.0
    %v1644 = vand.u32 %v1562, 4294901760
    %v1645 = vsub.f32 %v1562, %v1644
    %v1646 = vand.u32 %v1645, 4294901760
    %v1647 = vsub.f32 %v1645, %v1646
    %v1648 = vand.u32 %v1647, 4294901760
    %1649 = vmatpush1.msra.mxu0 %v1648
    %1650 = vmatprep.subr.mxu0 0.0
    %1651 = vmatpush1.msra.mxu0 0.0
    %1652 = vmatprep.subr.mxu0 0.0
    %1653 = vmatpush1.msra.mxu0 0.0
    %1654 = vmatprep.subr.mxu0 0.0
    %1655 = vmatpush1.msra.mxu0 0.0
    %1656 = vmatprep.subr.mxu0 0.0
    %1657 = vmatpush1.msra.mxu0 0.0
    %1658 = vmatprep.subr.mxu0 0.0
    %1659 = vmatpush1.msra.mxu0 0.0
    %1660 = vmatprep.subr.mxu0 0.0
    %1661 = vmatpush1.msra.mxu0 0.0
    %1662 = vmatprep.subr.mxu0 0.0
    %1663 = vmatpush1.msra.mxu0 0.0
    %1664 = vmatprep.subr.mxu0 0.0
    %1665 = vmatpush1.msra.mxu0 0.0
    %1666 = vmatprep.subr.mxu0 0.0
    %1667 = vmatpush1.msra.mxu0 0.0
    %1668 = vmatprep.subr.mxu0 0.0
    %1669 = vmatpush1.msra.mxu0 0.0
    %1670 = vmatprep.subr.mxu0 0.0
    %1671 = vmatpush1.msra.mxu0 0.0
    %1672 = vmatprep.subr.mxu0 0.0
    %1673 = vmatpush1.msra.mxu0 0.0
    %1674 = vmatprep.subr.mxu0 0.0
    %1675 = vmatpush1.msra.mxu0 0.0
    %1676 = vmatprep.subr.mxu0 0.0
    %1677 = vmatpush1.msra.mxu0 0.0
    %1678 = vmatprep.subr.mxu0 0.0
    %1679 = vmatpush1.msra.mxu0 0.0
    %1680 = vmatprep.subr.mxu0 0.0
    %1681 = vmatpush1.msra.mxu0 0.0
    %1682 = vmatprep.subr.mxu0 0.0
    %1683 = vmatpush1.msra.mxu0 0.0
    %1684 = vmatprep.subr.mxu0 0.0
    %1685 = vmatpush1.msra.mxu0 0.0
    %1686 = vmatprep.subr.mxu0 0.0
    %1687 = vmatpush1.msra.mxu0 0.0
    %1688 = vmatprep.subr.mxu0 0.0
    %1689 = vmatpush1.msra.mxu0 0.0
    %1690 = vmatprep.subr.mxu0 0.0
    %1691 = vmatpush1.msra.mxu0 0.0
    %1692 = vmatprep.subr.mxu0 0.0
    %1693 = vmatpush1.msra.mxu0 0.0
    %1694 = vmatprep.subr.mxu0 0.0
    %1695 = vmatpush1.msra.mxu0 0.0
    %1696 = vmatprep.subr.mxu0 0.0
    %1697 = vmatpush1.msra.mxu0 0.0
    %1698 = vmatprep.subr.mxu0 0.0
    %1699 = vmatpush1.msra.mxu0 0.0
    %1700 = vmatprep.subr.mxu0 0.0
    %1701 = vmatpush1.msra.mxu0 0.0
    %1702 = vmatprep.subr.mxu0 0.0
    %1703 = vmatpush1.msra.mxu0 0.0
    %1704 = vmatprep.subr.mxu0 0.0
    %1705 = vmatpush1.msra.mxu0 0.0
    %1706 = vmatprep.subr.mxu0 0.0
    %1707 = vmatpush1.msra.mxu0 0.0
    %1708 = vmatprep.subr.mxu0 0.0
    %1709 = vmatpush1.msra.mxu0 0.0
    %1710 = vmatprep.subr.mxu0 0.0
    %1711 = vmatpush1.msra.mxu0 0.0
    %1712 = vmatprep.mubr.f32.mxu0 0.0
    %v1713 = vand.u32 %v1565, 4294901760
    %1714 = vmatmul.mubr.f32.gmra.mrb[0].mxu0 %v1713
    %v1715 = vpop.f32.mrb[0].mxu0
    %v1716 = vadd.f32 %v1640, %v1715
    %v1717 = vpop.f32.mrb[0].mxu0
    %1718 = vdwg.mxu0
    %1719 = vmatprep.subr.mxu0 0.0
    %v1720 = vand.u32 %v1562, 4294901760
    %v1721 = vsub.f32 %v1562, %v1720
    %1722 = vmatpush1.msra.mxu0 %v1721
    %1723 = vmatprep.subr.mxu0 0.0
    %1724 = vmatpush1.msra.mxu0 0.0
    %1725 = vmatprep.subr.mxu0 0.0
    %1726 = vmatpush1.msra.mxu0 0.0
    %1727 = vmatprep.subr.mxu0 0.0
    %1728 = vmatpush1.msra.mxu0 0.0
    %1729 = vmatprep.subr.mxu0 0.0
    %1730 = vmatpush1.msra.mxu0 0.0
    %1731 = vmatprep.subr.mxu0 0.0
    %1732 = vmatpush1.msra.mxu0 0.0
    %1733 = vmatprep.subr.mxu0 0.0
    %1734 = vmatpush1.msra.mxu0 0.0
    %1735 = vmatprep.subr.mxu0 0.0
    %1736 = vmatpush1.msra.mxu0 0.0
    %1737 = vmatprep.subr.mxu0 0.0
    %1738 = vmatpush1.msra.mxu0 0.0
    %1739 = vmatprep.subr.mxu0 0.0
    %1740 = vmatpush1.msra.mxu0 0.0
    %1741 = vmatprep.subr.mxu0 0.0
    %1742 = vmatpush1.msra.mxu0 0.0
    %1743 = vmatprep.subr.mxu0 0.0
    %1744 = vmatpush1.msra.mxu0 0.0
    %1745 = vmatprep.subr.mxu0 0.0
    %1746 = vmatpush1.msra.mxu0 0.0
    %1747 = vmatprep.subr.mxu0 0.0
    %1748 = vmatpush1.msra.mxu0 0.0
    %1749 = vmatprep.subr.mxu0 0.0
    %1750 = vmatpush1.msra.mxu0 0.0
    %1751 = vmatprep.subr.mxu0 0.0
    %1752 = vmatpush1.msra.mxu0 0.0
    %1753 = vmatprep.subr.mxu0 0.0
    %1754 = vmatpush1.msra.mxu0 0.0
    %1755 = vmatprep.subr.mxu0 0.0
    %1756 = vmatpush1.msra.mxu0 0.0
    %1757 = vmatprep.subr.mxu0 0.0
    %1758 = vmatpush1.msra.mxu0 0.0
    %1759 = vmatprep.subr.mxu0 0.0
    %1760 = vmatpush1.msra.mxu0 0.0
    %1761 = vmatprep.subr.mxu0 0.0
    %1762 = vmatpush1.msra.mxu0 0.0
    %1763 = vmatprep.subr.mxu0 0.0
    %1764 = vmatpush1.msra.mxu0 0.0
    %1765 = vmatprep.subr.mxu0 0.0
    %1766 = vmatpush1.msra.mxu0 0.0
    %1767 = vmatprep.subr.mxu0 0.0
    %1768 = vmatpush1.msra.mxu0 0.0
    %1769 = vmatprep.subr.mxu0 0.0
    %1770 = vmatpush1.msra.mxu0 0.0
    %1771 = vmatprep.subr.mxu0 0.0
    %1772 = vmatpush1.msra.mxu0 0.0
    %1773 = vmatprep.subr.mxu0 0.0
    %1774 = vmatpush1.msra.mxu0 0.0
    %1775 = vmatprep.subr.mxu0 0.0
    %1776 = vmatpush1.msra.mxu0 0.0
    %1777 = vmatprep.subr.mxu0 0.0
    %1778 = vmatpush1.msra.mxu0 0.0
    %1779 = vmatprep.subr.mxu0 0.0
    %1780 = vmatpush1.msra.mxu0 0.0
    %1781 = vmatprep.subr.mxu0 0.0
    %1782 = vmatpush1.msra.mxu0 0.0
    %1783 = vmatprep.subr.mxu0 0.0
    %1784 = vmatpush1.msra.mxu0 0.0
    %1785 = vmatprep.mubr.f32.mxu0 0.0
    %v1786 = vand.u32 %v1565, 4294901760
    %v1787 = vsub.f32 %v1565, %v1786
    %1788 = vmatmul.mubr.f32.gmra.mrb[0].mxu0 %v1787
    %v1789 = vpop.f32.mrb[0].mxu0
    %v1790 = vadd.f32 %v1716, %v1789
    %v1791 = vpop.f32.mrb[0].mxu0
    %1792 = vdwg.mxu0
    %1793 = vmatprep.subr.mxu0 0.0
    %v1794 = vand.u32 %v1562, 4294901760
    %1795 = vmatpush1.msra.mxu0 %v1794
    %1796 = vmatprep.subr.mxu0 0.0
    %1797 = vmatpush1.msra.mxu0 0.0
    %1798 = vmatprep.subr.mxu0 0.0
    %1799 = vmatpush1.msra.mxu0 0.0
    %1800 = vmatprep.subr.mxu0 0.0
    %1801 = vmatpush1.msra.mxu0 0.0
    %1802 = vmatprep.subr.mxu0 0.0
    %1803 = vmatpush1.msra.mxu0 0.0
    %1804 = vmatprep.subr.mxu0 0.0
    %1805 = vmatpush1.msra.mxu0 0.0
    %1806 = vmatprep.subr.mxu0 0.0
    %1807 = vmatpush1.msra.mxu0 0.0
    %1808 = vmatprep.subr.mxu0 0.0
    %1809 = vmatpush1.msra.mxu0 0.0
    %1810 = vmatprep.subr.mxu0 0.0
    %1811 = vmatpush1.msra.mxu0 0.0
    %1812 = vmatprep.subr.mxu0 0.0
    %1813 = vmatpush1.msra.mxu0 0.0
    %1814 = vmatprep.subr.mxu0 0.0
    %1815 = vmatpush1.msra.mxu0 0.0
    %1816 = vmatprep.subr.mxu0 0.0
    %1817 = vmatpush1.msra.mxu0 0.0
    %1818 = vmatprep.subr.mxu0 0.0
    %1819 = vmatpush1.msra.mxu0 0.0
    %1820 = vmatprep.subr.mxu0 0.0
    %1821 = vmatpush1.msra.mxu0 0.0
    %1822 = vmatprep.subr.mxu0 0.0
    %1823 = vmatpush1.msra.mxu0 0.0
    %1824 = vmatprep.subr.mxu0 0.0
    %1825 = vmatpush1.msra.mxu0 0.0
    %1826 = vmatprep.subr.mxu0 0.0
    %1827 = vmatpush1.msra.mxu0 0.0
    %1828 = vmatprep.subr.mxu0 0.0
    %1829 = vmatpush1.msra.mxu0 0.0
    %1830 = vmatprep.subr.mxu0 0.0
    %1831 = vmatpush1.msra.mxu0 0.0
    %1832 = vmatprep.subr.mxu0 0.0
    %1833 = vmatpush1.msra.mxu0 0.0
    %1834 = vmatprep.subr.mxu0 0.0
    %1835 = vmatpush1.msra.mxu0 0.0
    %1836 = vmatprep.subr.mxu0 0.0
    %1837 = vmatpush1.msra.mxu0 0.0
    %1838 = vmatprep.subr.mxu0 0.0
    %1839 = vmatpush1.msra.mxu0 0.0
    %1840 = vmatprep.subr.mxu0 0.0
    %1841 = vmatpush1.msra.mxu0 0.0
    %1842 = vmatprep.subr.mxu0 0.0
    %1843 = vmatpush1.msra.mxu0 0.0
    %1844 = vmatprep.subr.mxu0 0.0
    %1845 = vmatpush1.msra.mxu0 0.0
    %1846 = vmatprep.subr.mxu0 0.0
    %1847 = vmatpush1.msra.mxu0 0.0
    %1848 = vmatprep.subr.mxu0 0.0
    %1849 = vmatpush1.msra.mxu0 0.0
    %1850 = vmatprep.subr.mxu0 0.0
    %1851 = vmatpush1.msra.mxu0 0.0
    %1852 = vmatprep.subr.mxu0 0.0
    %1853 = vmatpush1.msra.mxu0 0.0
    %1854 = vmatprep.subr.mxu0 0.0
    %1855 = vmatpush1.msra.mxu0 0.0
    %1856 = vmatprep.subr.mxu0 0.0
    %1857 = vmatpush1.msra.mxu0 0.0
    %1858 = vmatprep.mubr.f32.mxu0 0.0
    %v1859 = vand.u32 %v1565, 4294901760
    %v1860 = vsub.f32 %v1565, %v1859
    %v1861 = vand.u32 %v1860, 4294901760
    %1862 = vmatmul.mubr.f32.gmra.mrb[0].mxu0 %v1861
    %v1863 = vpop.f32.mrb[0].mxu0
    %v1864 = vadd.f32 %v1790, %v1863
    %v1865 = vpop.f32.mrb[0].mxu0
    %1866 = vdwg.mxu0
    %1867 = vmatprep.subr.mxu0 0.0
    %v1868 = vand.u32 %v1562, 4294901760
    %v1869 = vsub.f32 %v1562, %v1868
    %v1870 = vand.u32 %v1869, 4294901760
    %1871 = vmatpush1.msra.mxu0 %v1870
    %1872 = vmatprep.subr.mxu0 0.0
    %1873 = vmatpush1.msra.mxu0 0.0
    %1874 = vmatprep.subr.mxu0 0.0
    %1875 = vmatpush1.msra.mxu0 0.0
    %1876 = vmatprep.subr.mxu0 0.0
    %1877 = vmatpush1.msra.mxu0 0.0
    %1878 = vmatprep.subr.mxu0 0.0
    %1879 = vmatpush1.msra.mxu0 0.0
    %1880 = vmatprep.subr.mxu0 0.0
    %1881 = vmatpush1.msra.mxu0 0.0
    %1882 = vmatprep.subr.mxu0 0.0
    %1883 = vmatpush1.msra.mxu0 0.0
    %1884 = vmatprep.subr.mxu0 0.0
    %1885 = vmatpush1.msra.mxu0 0.0
    %1886 = vmatprep.subr.mxu0 0.0
    %1887 = vmatpush1.msra.mxu0 0.0
    %1888 = vmatprep.subr.mxu0 0.0
    %1889 = vmatpush1.msra.mxu0 0.0
    %1890 = vmatprep.subr.mxu0 0.0
    %1891 = vmatpush1.msra.mxu0 0.0
    %1892 = vmatprep.subr.mxu0 0.0
    %1893 = vmatpush1.msra.mxu0 0.0
    %1894 = vmatprep.subr.mxu0 0.0
    %1895 = vmatpush1.msra.mxu0 0.0
    %1896 = vmatprep.subr.mxu0 0.0
    %1897 = vmatpush1.msra.mxu0 0.0
    %1898 = vmatprep.subr.mxu0 0.0
    %1899 = vmatpush1.msra.mxu0 0.0
    %1900 = vmatprep.subr.mxu0 0.0
    %1901 = vmatpush1.msra.mxu0 0.0
    %1902 = vmatprep.subr.mxu0 0.0
    %1903 = vmatpush1.msra.mxu0 0.0
    %1904 = vmatprep.subr.mxu0 0.0
    %1905 = vmatpush1.msra.mxu0 0.0
    %1906 = vmatprep.subr.mxu0 0.0
    %1907 = vmatpush1.msra.mxu0 0.0
    %1908 = vmatprep.subr.mxu0 0.0
    %1909 = vmatpush1.msra.mxu0 0.0
    %1910 = vmatprep.subr.mxu0 0.0
    %1911 = vmatpush1.msra.mxu0 0.0
    %1912 = vmatprep.subr.mxu0 0.0
    %1913 = vmatpush1.msra.mxu0 0.0
    %1914 = vmatprep.subr.mxu0 0.0
    %1915 = vmatpush1.msra.mxu0 0.0
    %1916 = vmatprep.subr.mxu0 0.0
    %1917 = vmatpush1.msra.mxu0 0.0
    %1918 = vmatprep.subr.mxu0 0.0
    %1919 = vmatpush1.msra.mxu0 0.0
    %1920 = vmatprep.subr.mxu0 0.0
    %1921 = vmatpush1.msra.mxu0 0.0
    %1922 = vmatprep.subr.mxu0 0.0
    %1923 = vmatpush1.msra.mxu0 0.0
    %1924 = vmatprep.subr.mxu0 0.0
    %1925 = vmatpush1.msra.mxu0 0.0
    %1926 = vmatprep.subr.mxu0 0.0
    %1927 = vmatpush1.msra.mxu0 0.0
    %1928 = vmatprep.subr.mxu0 0.0
    %1929 = vmatpush1.msra.mxu0 0.0
    %1930 = vmatprep.subr.mxu0 0.0
    %1931 = vmatpush1.msra.mxu0 0.0
    %1932 = vmatprep.subr.mxu0 0.0
    %1933 = vmatpush1.msra.mxu0 0.0
    %1934 = vmatprep.mubr.f32.mxu0 0.0
    %v1935 = vand.u32 %v1565, 4294901760
    %1936 = vmatmul.mubr.f32.gmra.mrb[0].mxu0 %v1935
    %v1937 = vpop.f32.mrb[0].mxu0
    %v1938 = vadd.f32 %v1864, %v1937
    %v1939 = vpop.f32.mrb[0].mxu0
    %1940 = vdwg.mxu0
    %1941 = vmatprep.subr.mxu0 0.0
    %v1942 = vand.u32 %v1562, 4294901760
    %1943 = vmatpush1.msra.mxu0 %v1942
    %1944 = vmatprep.subr.mxu0 0.0
    %1945 = vmatpush1.msra.mxu0 0.0
    %1946 = vmatprep.subr.mxu0 0.0
    %1947 = vmatpush1.msra.mxu0 0.0
    %1948 = vmatprep.subr.mxu0 0.0
    %1949 = vmatpush1.msra.mxu0 0.0
    %1950 = vmatprep.subr.mxu0 0.0
    %1951 = vmatpush1.msra.mxu0 0.0
    %1952 = vmatprep.subr.mxu0 0.0
    %1953 = vmatpush1.msra.mxu0 0.0
    %1954 = vmatprep.subr.mxu0 0.0
    %1955 = vmatpush1.msra.mxu0 0.0
    %1956 = vmatprep.subr.mxu0 0.0
    %1957 = vmatpush1.msra.mxu0 0.0
    %1958 = vmatprep.subr.mxu0 0.0
    %1959 = vmatpush1.msra.mxu0 0.0
    %1960 = vmatprep.subr.mxu0 0.0
    %1961 = vmatpush1.msra.mxu0 0.0
    %1962 = vmatprep.subr.mxu0 0.0
    %1963 = vmatpush1.msra.mxu0 0.0
    %1964 = vmatprep.subr.mxu0 0.0
    %1965 = vmatpush1.msra.mxu0 0.0
    %1966 = vmatprep.subr.mxu0 0.0
    %1967 = vmatpush1.msra.mxu0 0.0
    %1968 = vmatprep.subr.mxu0 0.0
    %1969 = vmatpush1.msra.mxu0 0.0
    %1970 = vmatprep.subr.mxu0 0.0
    %1971 = vmatpush1.msra.mxu0 0.0
    %1972 = vmatprep.subr.mxu0 0.0
    %1973 = vmatpush1.msra.mxu0 0.0
    %1974 = vmatprep.subr.mxu0 0.0
    %1975 = vmatpush1.msra.mxu0 0.0
    %1976 = vmatprep.subr.mxu0 0.0
    %1977 = vmatpush1.msra.mxu0 0.0
    %1978 = vmatprep.subr.mxu0 0.0
    %1979 = vmatpush1.msra.mxu0 0.0
    %1980 = vmatprep.subr.mxu0 0.0
    %1981 = vmatpush1.msra.mxu0 0.0
    %1982 = vmatprep.subr.mxu0 0.0
    %1983 = vmatpush1.msra.mxu0 0.0
    %1984 = vmatprep.subr.mxu0 0.0
    %1985 = vmatpush1.msra.mxu0 0.0
    %1986 = vmatprep.subr.mxu0 0.0
    %1987 = vmatpush1.msra.mxu0 0.0
    %1988 = vmatprep.subr.mxu0 0.0
    %1989 = vmatpush1.msra.mxu0 0.0
    %1990 = vmatprep.subr.mxu0 0.0
    %1991 = vmatpush1.msra.mxu0 0.0
    %1992 = vmatprep.subr.mxu0 0.0
    %1993 = vmatpush1.msra.mxu0 0.0
    %1994 = vmatprep.subr.mxu0 0.0
    %1995 = vmatpush1.msra.mxu0 0.0
    %1996 = vmatprep.subr.mxu0 0.0
    %1997 = vmatpush1.msra.mxu0 0.0
    %1998 = vmatprep.subr.mxu0 0.0
    %1999 = vmatpush1.msra.mxu0 0.0
    %2000 = vmatprep.subr.mxu0 0.0
    %2001 = vmatpush1.msra.mxu0 0.0
    %2002 = vmatprep.subr.mxu0 0.0
    %2003 = vmatpush1.msra.mxu0 0.0
    %2004 = vmatprep.subr.mxu0 0.0
    %2005 = vmatpush1.msra.mxu0 0.0
    %2006 = vmatprep.mubr.f32.mxu0 0.0
    %v2007 = vand.u32 %v1565, 4294901760
    %2008 = vmatmul.mubr.f32.gmra.mrb[0].mxu0 %v2007
    %v2009 = vpop.f32.mrb[0].mxu0
    %v2010 = vadd.f32 %v1938, %v2009
    %v2011 = vpop.f32.mrb[0].mxu0
    %2012 = vdwg.mxu0
    %2013 = vrot.lane.b32.xlu0 %v629, 64
    %v2014 = vpop.permute.xlu0 %2013
    %v2017 = vsel %vm635, %v1560, 0
    %2019 = vmatprep.subr.mxu0 0.0
    %v2020 = vand.u32 %v2014, 4294901760
    %2021 = vmatpush1.msra.mxu0 %v2020
    %2022 = vmatprep.subr.mxu0 0.0
    %2023 = vmatpush1.msra.mxu0 0.0
    %2024 = vmatprep.subr.mxu0 0.0
    %2025 = vmatpush1.msra.mxu0 0.0
    %2026 = vmatprep.subr.mxu0 0.0
    %2027 = vmatpush1.msra.mxu0 0.0
    %2028 = vmatprep.subr.mxu0 0.0
    %2029 = vmatpush1.msra.mxu0 0.0
    %2030 = vmatprep.subr.mxu0 0.0
    %2031 = vmatpush1.msra.mxu0 0.0
    %2032 = vmatprep.subr.mxu0 0.0
    %2033 = vmatpush1.msra.mxu0 0.0
    %2034 = vmatprep.subr.mxu0 0.0
    %2035 = vmatpush1.msra.mxu0 0.0
    %2036 = vmatprep.subr.mxu0 0.0
    %2037 = vmatpush1.msra.mxu0 0.0
    %2038 = vmatprep.subr.mxu0 0.0
    %2039 = vmatpush1.msra.mxu0 0.0
    %2040 = vmatprep.subr.mxu0 0.0
    %2041 = vmatpush1.msra.mxu0 0.0
    %2042 = vmatprep.subr.mxu0 0.0
    %2043 = vmatpush1.msra.mxu0 0.0
    %2044 = vmatprep.subr.mxu0 0.0
    %2045 = vmatpush1.msra.mxu0 0.0
    %2046 = vmatprep.subr.mxu0 0.0
    %2047 = vmatpush1.msra.mxu0 0.0
    %2048 = vmatprep.subr.mxu0 0.0
    %2049 = vmatpush1.msra.mxu0 0.0
    %2050 = vmatprep.subr.mxu0 0.0
    %2051 = vmatpush1.msra.mxu0 0.0
    %2052 = vmatprep.subr.mxu0 0.0
    %2053 = vmatpush1.msra.mxu0 0.0
    %2054 = vmatprep.subr.mxu0 0.0
    %2055 = vmatpush1.msra.mxu0 0.0
    %2056 = vmatprep.subr.mxu0 0.0
    %2057 = vmatpush1.msra.mxu0 0.0
    %2058 = vmatprep.subr.mxu0 0.0
    %2059 = vmatpush1.msra.mxu0 0.0
    %2060 = vmatprep.subr.mxu0 0.0
    %2061 = vmatpush1.msra.mxu0 0.0
    %2062 = vmatprep.subr.mxu0 0.0
    %2063 = vmatpush1.msra.mxu0 0.0
    %2064 = vmatprep.subr.mxu0 0.0
    %2065 = vmatpush1.msra.mxu0 0.0
    %2066 = vmatprep.subr.mxu0 0.0
    %2067 = vmatpush1.msra.mxu0 0.0
    %2068 = vmatprep.subr.mxu0 0.0
    %2069 = vmatpush1.msra.mxu0 0.0
    %2070 = vmatprep.subr.mxu0 0.0
    %2071 = vmatpush1.msra.mxu0 0.0
    %2072 = vmatprep.subr.mxu0 0.0
    %2073 = vmatpush1.msra.mxu0 0.0
    %2074 = vmatprep.subr.mxu0 0.0
    %2075 = vmatpush1.msra.mxu0 0.0
    %2076 = vmatprep.subr.mxu0 0.0
    %2077 = vmatpush1.msra.mxu0 0.0
    %2078 = vmatprep.subr.mxu0 0.0
    %2079 = vmatpush1.msra.mxu0 0.0
    %2080 = vmatprep.subr.mxu0 0.0
    %2081 = vmatpush1.msra.mxu0 0.0
    %2082 = vmatprep.subr.mxu0 0.0
    %2083 = vmatpush1.msra.mxu0 0.0
    %2084 = vmatprep.mubr.f32.mxu0 0.0
    %v2085 = vand.u32 %v2017, 4294901760
    %v2086 = vsub.f32 %v2017, %v2085
    %v2087 = vand.u32 %v2086, 4294901760
    %v2088 = vsub.f32 %v2086, %v2087
    %v2089 = vand.u32 %v2088, 4294901760
    %2090 = vmatmul.mubr.f32.gmra.mrb[0].mxu0 %v2089
    %v2091 = vpop.f32.mrb[0].mxu0
    %v2092 = vadd.f32 0.0, %v2091
    %v2093 = vpop.f32.mrb[0].mxu0
    %2094 = vdwg.mxu0
    %2095 = vmatprep.subr.mxu0 0.0
    %v2096 = vand.u32 %v2014, 4294901760
    %v2097 = vsub.f32 %v2014, %v2096
    %v2098 = vand.u32 %v2097, 4294901760
    %v2099 = vsub.f32 %v2097, %v2098
    %v2100 = vand.u32 %v2099, 4294901760
    %2101 = vmatpush1.msra.mxu0 %v2100
    %2102 = vmatprep.subr.mxu0 0.0
    %2103 = vmatpush1.msra.mxu0 0.0
    %2104 = vmatprep.subr.mxu0 0.0
    %2105 = vmatpush1.msra.mxu0 0.0
    %2106 = vmatprep.subr.mxu0 0.0
    %2107 = vmatpush1.msra.mxu0 0.0
    %2108 = vmatprep.subr.mxu0 0.0
    %2109 = vmatpush1.msra.mxu0 0.0
    %2110 = vmatprep.subr.mxu0 0.0
    %2111 = vmatpush1.msra.mxu0 0.0
    %2112 = vmatprep.subr.mxu0 0.0
    %2113 = vmatpush1.msra.mxu0 0.0
    %2114 = vmatprep.subr.mxu0 0.0
    %2115 = vmatpush1.msra.mxu0 0.0
    %2116 = vmatprep.subr.mxu0 0.0
    %2117 = vmatpush1.msra.mxu0 0.0
    %2118 = vmatprep.subr.mxu0 0.0
    %2119 = vmatpush1.msra.mxu0 0.0
    %2120 = vmatprep.subr.mxu0 0.0
    %2121 = vmatpush1.msra.mxu0 0.0
    %2122 = vmatprep.subr.mxu0 0.0
    %2123 = vmatpush1.msra.mxu0 0.0
    %2124 = vmatprep.subr.mxu0 0.0
    %2125 = vmatpush1.msra.mxu0 0.0
    %2126 = vmatprep.subr.mxu0 0.0
    %2127 = vmatpush1.msra.mxu0 0.0
    %2128 = vmatprep.subr.mxu0 0.0
    %2129 = vmatpush1.msra.mxu0 0.0
    %2130 = vmatprep.subr.mxu0 0.0
    %2131 = vmatpush1.msra.mxu0 0.0
    %2132 = vmatprep.subr.mxu0 0.0
    %2133 = vmatpush1.msra.mxu0 0.0
    %2134 = vmatprep.subr.mxu0 0.0
    %2135 = vmatpush1.msra.mxu0 0.0
    %2136 = vmatprep.subr.mxu0 0.0
    %2137 = vmatpush1.msra.mxu0 0.0
    %2138 = vmatprep.subr.mxu0 0.0
    %2139 = vmatpush1.msra.mxu0 0.0
    %2140 = vmatprep.subr.mxu0 0.0
    %2141 = vmatpush1.msra.mxu0 0.0
    %2142 = vmatprep.subr.mxu0 0.0
    %2143 = vmatpush1.msra.mxu0 0.0
    %2144 = vmatprep.subr.mxu0 0.0
    %2145 = vmatpush1.msra.mxu0 0.0
    %2146 = vmatprep.subr.mxu0 0.0
    %2147 = vmatpush1.msra.mxu0 0.0
    %2148 = vmatprep.subr.mxu0 0.0
    %2149 = vmatpush1.msra.mxu0 0.0
    %2150 = vmatprep.subr.mxu0 0.0
    %2151 = vmatpush1.msra.mxu0 0.0
    %2152 = vmatprep.subr.mxu0 0.0
    %2153 = vmatpush1.msra.mxu0 0.0
    %2154 = vmatprep.subr.mxu0 0.0
    %2155 = vmatpush1.msra.mxu0 0.0
    %2156 = vmatprep.subr.mxu0 0.0
    %2157 = vmatpush1.msra.mxu0 0.0
    %2158 = vmatprep.subr.mxu0 0.0
    %2159 = vmatpush1.msra.mxu0 0.0
    %2160 = vmatprep.subr.mxu0 0.0
    %2161 = vmatpush1.msra.mxu0 0.0
    %2162 = vmatprep.subr.mxu0 0.0
    %2163 = vmatpush1.msra.mxu0 0.0
    %2164 = vmatprep.mubr.f32.mxu0 0.0
    %v2165 = vand.u32 %v2017, 4294901760
    %2166 = vmatmul.mubr.f32.gmra.mrb[0].mxu0 %v2165
    %v2167 = vpop.f32.mrb[0].mxu0
    %v2168 = vadd.f32 %v2092, %v2167
    %v2169 = vpop.f32.mrb[0].mxu0
    %2170 = vdwg.mxu0
    %2171 = vmatprep.subr.mxu0 0.0
    %v2172 = vand.u32 %v2014, 4294901760
    %v2173 = vsub.f32 %v2014, %v2172
    %2174 = vmatpush1.msra.mxu0 %v2173
    %2175 = vmatprep.subr.mxu0 0.0
    %2176 = vmatpush1.msra.mxu0 0.0
    %2177 = vmatprep.subr.mxu0 0.0
    %2178 = vmatpush1.msra.mxu0 0.0
    %2179 = vmatprep.subr.mxu0 0.0
    %2180 = vmatpush1.msra.mxu0 0.0
    %2181 = vmatprep.subr.mxu0 0.0
    %2182 = vmatpush1.msra.mxu0 0.0
    %2183 = vmatprep.subr.mxu0 0.0
    %2184 = vmatpush1.msra.mxu0 0.0
    %2185 = vmatprep.subr.mxu0 0.0
    %2186 = vmatpush1.msra.mxu0 0.0
    %2187 = vmatprep.subr.mxu0 0.0
    %2188 = vmatpush1.msra.mxu0 0.0
    %2189 = vmatprep.subr.mxu0 0.0
    %2190 = vmatpush1.msra.mxu0 0.0
    %2191 = vmatprep.subr.mxu0 0.0
    %2192 = vmatpush1.msra.mxu0 0.0
    %2193 = vmatprep.subr.mxu0 0.0
    %2194 = vmatpush1.msra.mxu0 0.0
    %2195 = vmatprep.subr.mxu0 0.0
    %2196 = vmatpush1.msra.mxu0 0.0
    %2197 = vmatprep.subr.mxu0 0.0
    %2198 = vmatpush1.msra.mxu0 0.0
    %2199 = vmatprep.subr.mxu0 0.0
    %2200 = vmatpush1.msra.mxu0 0.0
    %2201 = vmatprep.subr.mxu0 0.0
    %2202 = vmatpush1.msra.mxu0 0.0
    %2203 = vmatprep.subr.mxu0 0.0
    %2204 = vmatpush1.msra.mxu0 0.0
    %2205 = vmatprep.subr.mxu0 0.0
    %2206 = vmatpush1.msra.mxu0 0.0
    %2207 = vmatprep.subr.mxu0 0.0
    %2208 = vmatpush1.msra.mxu0 0.0
    %2209 = vmatprep.subr.mxu0 0.0
    %2210 = vmatpush1.msra.mxu0 0.0
    %2211 = vmatprep.subr.mxu0 0.0
    %2212 = vmatpush1.msra.mxu0 0.0
    %2213 = vmatprep.subr.mxu0 0.0
    %2214 = vmatpush1.msra.mxu0 0.0
    %2215 = vmatprep.subr.mxu0 0.0
    %2216 = vmatpush1.msra.mxu0 0.0
    %2217 = vmatprep.subr.mxu0 0.0
    %2218 = vmatpush1.msra.mxu0 0.0
    %2219 = vmatprep.subr.mxu0 0.0
    %2220 = vmatpush1.msra.mxu0 0.0
    %2221 = vmatprep.subr.mxu0 0.0
    %2222 = vmatpush1.msra.mxu0 0.0
    %2223 = vmatprep.subr.mxu0 0.0
    %2224 = vmatpush1.msra.mxu0 0.0
    %2225 = vmatprep.subr.mxu0 0.0
    %2226 = vmatpush1.msra.mxu0 0.0
    %2227 = vmatprep.subr.mxu0 0.0
    %2228 = vmatpush1.msra.mxu0 0.0
    %2229 = vmatprep.subr.mxu0 0.0
    %2230 = vmatpush1.msra.mxu0 0.0
    %2231 = vmatprep.subr.mxu0 0.0
    %2232 = vmatpush1.msra.mxu0 0.0
    %2233 = vmatprep.subr.mxu0 0.0
    %2234 = vmatpush1.msra.mxu0 0.0
    %2235 = vmatprep.subr.mxu0 0.0
    %2236 = vmatpush1.msra.mxu0 0.0
    %2237 = vmatprep.mubr.f32.mxu0 0.0
    %v2238 = vand.u32 %v2017, 4294901760
    %v2239 = vsub.f32 %v2017, %v2238
    %2240 = vmatmul.mubr.f32.gmra.mrb[0].mxu0 %v2239
    %v2241 = vpop.f32.mrb[0].mxu0
    %v2242 = vadd.f32 %v2168, %v2241
    %v2243 = vpop.f32.mrb[0].mxu0
    %2244 = vdwg.mxu0
    %2245 = vmatprep.subr.mxu0 0.0
    %v2246 = vand.u32 %v2014, 4294901760
    %2247 = vmatpush1.msra.mxu0 %v2246
    %2248 = vmatprep.subr.mxu0 0.0
    %2249 = vmatpush1.msra.mxu0 0.0
    %2250 = vmatprep.subr.mxu0 0.0
    %2251 = vmatpush1.msra.mxu0 0.0
    %2252 = vmatprep.subr.mxu0 0.0
    %2253 = vmatpush1.msra.mxu0 0.0
    %2254 = vmatprep.subr.mxu0 0.0
    %2255 = vmatpush1.msra.mxu0 0.0
    %2256 = vmatprep.subr.mxu0 0.0
    %2257 = vmatpush1.msra.mxu0 0.0
    %2258 = vmatprep.subr.mxu0 0.0
    %2259 = vmatpush1.msra.mxu0 0.0
    %2260 = vmatprep.subr.mxu0 0.0
    %2261 = vmatpush1.msra.mxu0 0.0
    %2262 = vmatprep.subr.mxu0 0.0
    %2263 = vmatpush1.msra.mxu0 0.0
    %2264 = vmatprep.subr.mxu0 0.0
    %2265 = vmatpush1.msra.mxu0 0.0
    %2266 = vmatprep.subr.mxu0 0.0
    %2267 = vmatpush1.msra.mxu0 0.0
    %2268 = vmatprep.subr.mxu0 0.0
    %2269 = vmatpush1.msra.mxu0 0.0
    %2270 = vmatprep.subr.mxu0 0.0
    %2271 = vmatpush1.msra.mxu0 0.0
    %2272 = vmatprep.subr.mxu0 0.0
    %2273 = vmatpush1.msra.mxu0 0.0
    %2274 = vmatprep.subr.mxu0 0.0
    %2275 = vmatpush1.msra.mxu0 0.0
    %2276 = vmatprep.subr.mxu0 0.0
    %2277 = vmatpush1.msra.mxu0 0.0
    %2278 = vmatprep.subr.mxu0 0.0
    %2279 = vmatpush1.msra.mxu0 0.0
    %2280 = vmatprep.subr.mxu0 0.0
    %2281 = vmatpush1.msra.mxu0 0.0
    %2282 = vmatprep.subr.mxu0 0.0
    %2283 = vmatpush1.msra.mxu0 0.0
    %2284 = vmatprep.subr.mxu0 0.0
    %2285 = vmatpush1.msra.mxu0 0.0
    %2286 = vmatprep.subr.mxu0 0.0
    %2287 = vmatpush1.msra.mxu0 0.0
    %2288 = vmatprep.subr.mxu0 0.0
    %2289 = vmatpush1.msra.mxu0 0.0
    %2290 = vmatprep.subr.mxu0 0.0
    %2291 = vmatpush1.msra.mxu0 0.0
    %2292 = vmatprep.subr.mxu0 0.0
    %2293 = vmatpush1.msra.mxu0 0.0
    %2294 = vmatprep.subr.mxu0 0.0
    %2295 = vmatpush1.msra.mxu0 0.0
    %2296 = vmatprep.subr.mxu0 0.0
    %2297 = vmatpush1.msra.mxu0 0.0
    %2298 = vmatprep.subr.mxu0 0.0
    %2299 = vmatpush1.msra.mxu0 0.0
    %2300 = vmatprep.subr.mxu0 0.0
    %2301 = vmatpush1.msra.mxu0 0.0
    %2302 = vmatprep.subr.mxu0 0.0
    %2303 = vmatpush1.msra.mxu0 0.0
    %2304 = vmatprep.subr.mxu0 0.0
    %2305 = vmatpush1.msra.mxu0 0.0
    %2306 = vmatprep.subr.mxu0 0.0
    %2307 = vmatpush1.msra.mxu0 0.0
    %2308 = vmatprep.subr.mxu0 0.0
    %2309 = vmatpush1.msra.mxu0 0.0
    %2310 = vmatprep.mubr.f32.mxu0 0.0
    %v2311 = vand.u32 %v2017, 4294901760
    %v2312 = vsub.f32 %v2017, %v2311
    %v2313 = vand.u32 %v2312, 4294901760
    %2314 = vmatmul.mubr.f32.gmra.mrb[0].mxu0 %v2313
    %v2315 = vpop.f32.mrb[0].mxu0
    %v2316 = vadd.f32 %v2242, %v2315
    %v2317 = vpop.f32.mrb[0].mxu0
    %2318 = vdwg.mxu0
    %2319 = vmatprep.subr.mxu0 0.0
    %v2320 = vand.u32 %v2014, 4294901760
    %v2321 = vsub.f32 %v2014, %v2320
    %v2322 = vand.u32 %v2321, 4294901760
    %2323 = vmatpush1.msra.mxu0 %v2322
    %2324 = vmatprep.subr.mxu0 0.0
    %2325 = vmatpush1.msra.mxu0 0.0
    %2326 = vmatprep.subr.mxu0 0.0
    %2327 = vmatpush1.msra.mxu0 0.0
    %2328 = vmatprep.subr.mxu0 0.0
    %2329 = vmatpush1.msra.mxu0 0.0
    %2330 = vmatprep.subr.mxu0 0.0
    %2331 = vmatpush1.msra.mxu0 0.0
    %2332 = vmatprep.subr.mxu0 0.0
    %2333 = vmatpush1.msra.mxu0 0.0
    %2334 = vmatprep.subr.mxu0 0.0
    %2335 = vmatpush1.msra.mxu0 0.0
    %2336 = vmatprep.subr.mxu0 0.0
    %2337 = vmatpush1.msra.mxu0 0.0
    %2338 = vmatprep.subr.mxu0 0.0
    %2339 = vmatpush1.msra.mxu0 0.0
    %2340 = vmatprep.subr.mxu0 0.0
    %2341 = vmatpush1.msra.mxu0 0.0
    %2342 = vmatprep.subr.mxu0 0.0
    %2343 = vmatpush1.msra.mxu0 0.0
    %2344 = vmatprep.subr.mxu0 0.0
    %2345 = vmatpush1.msra.mxu0 0.0
    %2346 = vmatprep.subr.mxu0 0.0
    %2347 = vmatpush1.msra.mxu0 0.0
    %2348 = vmatprep.subr.mxu0 0.0
    %2349 = vmatpush1.msra.mxu0 0.0
    %2350 = vmatprep.subr.mxu0 0.0
    %2351 = vmatpush1.msra.mxu0 0.0
    %2352 = vmatprep.subr.mxu0 0.0
    %2353 = vmatpush1.msra.mxu0 0.0
    %2354 = vmatprep.subr.mxu0 0.0
    %2355 = vmatpush1.msra.mxu0 0.0
    %2356 = vmatprep.subr.mxu0 0.0
    %2357 = vmatpush1.msra.mxu0 0.0
    %2358 = vmatprep.subr.mxu0 0.0
    %2359 = vmatpush1.msra.mxu0 0.0
    %2360 = vmatprep.subr.mxu0 0.0
    %2361 = vmatpush1.msra.mxu0 0.0
    %2362 = vmatprep.subr.mxu0 0.0
    %2363 = vmatpush1.msra.mxu0 0.0
    %2364 = vmatprep.subr.mxu0 0.0
    %2365 = vmatpush1.msra.mxu0 0.0
    %2366 = vmatprep.subr.mxu0 0.0
    %2367 = vmatpush1.msra.mxu0 0.0
    %2368 = vmatprep.subr.mxu0 0.0
    %2369 = vmatpush1.msra.mxu0 0.0
    %2370 = vmatprep.subr.mxu0 0.0
    %2371 = vmatpush1.msra.mxu0 0.0
    %2372 = vmatprep.subr.mxu0 0.0
    %2373 = vmatpush1.msra.mxu0 0.0
    %2374 = vmatprep.subr.mxu0 0.0
    %2375 = vmatpush1.msra.mxu0 0.0
    %2376 = vmatprep.subr.mxu0 0.0
    %2377 = vmatpush1.msra.mxu0 0.0
    %2378 = vmatprep.subr.mxu0 0.0
    %2379 = vmatpush1.msra.mxu0 0.0
    %2380 = vmatprep.subr.mxu0 0.0
    %2381 = vmatpush1.msra.mxu0 0.0
    %2382 = vmatprep.subr.mxu0 0.0
    %2383 = vmatpush1.msra.mxu0 0.0
    %2384 = vmatprep.subr.mxu0 0.0
    %2385 = vmatpush1.msra.mxu0 0.0
    %2386 = vmatprep.mubr.f32.mxu0 0.0
    %v2387 = vand.u32 %v2017, 4294901760
    %2388 = vmatmul.mubr.f32.gmra.mrb[0].mxu0 %v2387
    %v2389 = vpop.f32.mrb[0].mxu0
    %v2390 = vadd.f32 %v2316, %v2389
    %v2391 = vpop.f32.mrb[0].mxu0
    %2392 = vdwg.mxu0
    %2393 = vmatprep.subr.mxu0 0.0
    %v2394 = vand.u32 %v2014, 4294901760
    %2395 = vmatpush1.msra.mxu0 %v2394
    %2396 = vmatprep.subr.mxu0 0.0
    %2397 = vmatpush1.msra.mxu0 0.0
    %2398 = vmatprep.subr.mxu0 0.0
    %2399 = vmatpush1.msra.mxu0 0.0
    %2400 = vmatprep.subr.mxu0 0.0
    %2401 = vmatpush1.msra.mxu0 0.0
    %2402 = vmatprep.subr.mxu0 0.0
    %2403 = vmatpush1.msra.mxu0 0.0
    %2404 = vmatprep.subr.mxu0 0.0
    %2405 = vmatpush1.msra.mxu0 0.0
    %2406 = vmatprep.subr.mxu0 0.0
    %2407 = vmatpush1.msra.mxu0 0.0
    %2408 = vmatprep.subr.mxu0 0.0
    %2409 = vmatpush1.msra.mxu0 0.0
    %2410 = vmatprep.subr.mxu0 0.0
    %2411 = vmatpush1.msra.mxu0 0.0
    %2412 = vmatprep.subr.mxu0 0.0
    %2413 = vmatpush1.msra.mxu0 0.0
    %2414 = vmatprep.subr.mxu0 0.0
    %2415 = vmatpush1.msra.mxu0 0.0
    %2416 = vmatprep.subr.mxu0 0.0
    %2417 = vmatpush1.msra.mxu0 0.0
    %2418 = vmatprep.subr.mxu0 0.0
    %2419 = vmatpush1.msra.mxu0 0.0
    %2420 = vmatprep.subr.mxu0 0.0
    %2421 = vmatpush1.msra.mxu0 0.0
    %2422 = vmatprep.subr.mxu0 0.0
    %2423 = vmatpush1.msra.mxu0 0.0
    %2424 = vmatprep.subr.mxu0 0.0
    %2425 = vmatpush1.msra.mxu0 0.0
    %2426 = vmatprep.subr.mxu0 0.0
    %2427 = vmatpush1.msra.mxu0 0.0
    %2428 = vmatprep.subr.mxu0 0.0
    %2429 = vmatpush1.msra.mxu0 0.0
    %2430 = vmatprep.subr.mxu0 0.0
    %2431 = vmatpush1.msra.mxu0 0.0
    %2432 = vmatprep.subr.mxu0 0.0
    %2433 = vmatpush1.msra.mxu0 0.0
    %2434 = vmatprep.subr.mxu0 0.0
    %2435 = vmatpush1.msra.mxu0 0.0
    %2436 = vmatprep.subr.mxu0 0.0
    %2437 = vmatpush1.msra.mxu0 0.0
    %2438 = vmatprep.subr.mxu0 0.0
    %2439 = vmatpush1.msra.mxu0 0.0
    %2440 = vmatprep.subr.mxu0 0.0
    %2441 = vmatpush1.msra.mxu0 0.0
    %2442 = vmatprep.subr.mxu0 0.0
    %2443 = vmatpush1.msra.mxu0 0.0
    %2444 = vmatprep.subr.mxu0 0.0
    %2445 = vmatpush1.msra.mxu0 0.0
    %2446 = vmatprep.subr.mxu0 0.0
    %2447 = vmatpush1.msra.mxu0 0.0
    %2448 = vmatprep.subr.mxu0 0.0
    %2449 = vmatpush1.msra.mxu0 0.0
    %2450 = vmatprep.subr.mxu0 0.0
    %2451 = vmatpush1.msra.mxu0 0.0
    %2452 = vmatprep.subr.mxu0 0.0
    %2453 = vmatpush1.msra.mxu0 0.0
    %2454 = vmatprep.subr.mxu0 0.0
    %2455 = vmatpush1.msra.mxu0 0.0
    %2456 = vmatprep.subr.mxu0 0.0
    %2457 = vmatpush1.msra.mxu0 0.0
    %2458 = vmatprep.mubr.f32.mxu0 0.0
    %v2459 = vand.u32 %v2017, 4294901760
    %2460 = vmatmul.mubr.f32.gmra.mrb[0].mxu0 %v2459
    %v2461 = vpop.f32.mrb[0].mxu0
    %v2462 = vadd.f32 %v2390, %v2461
    %v2463 = vpop.f32.mrb[0].mxu0
    %2464 = vdwg.mxu0
    %2465 = vrot.lane.b32.xlu0 %v623, 120
    %v2466 = vpop.permute.xlu0 %2465
    %2467 = vrot.lane.b32.xlu0 %v623, 88
    %v2468 = vpop.permute.xlu0 %2467
    %v2469 = vsel %vm635, %v2466, 0
    %v2471 = vsel %vm635, %v2468, 0
    %2473 = vmatprep.subr.mxu0 0.0
    %v2474 = vand.u32 %v2471, 4294901760
    %2475 = vmatpush1.xpose.msra.mxu0 %v2474
    %2476 = vmatprep.subr.mxu0 0.0
    %2477 = vmatpush1.xpose.msra.mxu0 0.0
    %2478 = vmatprep.subr.mxu0 0.0
    %2479 = vmatpush1.xpose.msra.mxu0 0.0
    %2480 = vmatprep.subr.mxu0 0.0
    %2481 = vmatpush1.xpose.msra.mxu0 0.0
    %2482 = vmatprep.subr.mxu0 0.0
    %2483 = vmatpush1.xpose.msra.mxu0 0.0
    %2484 = vmatprep.subr.mxu0 0.0
    %2485 = vmatpush1.xpose.msra.mxu0 0.0
    %2486 = vmatprep.subr.mxu0 0.0
    %2487 = vmatpush1.xpose.msra.mxu0 0.0
    %2488 = vmatprep.subr.mxu0 0.0
    %2489 = vmatpush1.xpose.msra.mxu0 0.0
    %2490 = vmatprep.subr.mxu0 0.0
    %2491 = vmatpush1.xpose.msra.mxu0 0.0
    %2492 = vmatprep.subr.mxu0 0.0
    %2493 = vmatpush1.xpose.msra.mxu0 0.0
    %2494 = vmatprep.subr.mxu0 0.0
    %2495 = vmatpush1.xpose.msra.mxu0 0.0
    %2496 = vmatprep.subr.mxu0 0.0
    %2497 = vmatpush1.xpose.msra.mxu0 0.0
    %2498 = vmatprep.subr.mxu0 0.0
    %2499 = vmatpush1.xpose.msra.mxu0 0.0
    %2500 = vmatprep.subr.mxu0 0.0
    %2501 = vmatpush1.xpose.msra.mxu0 0.0
    %2502 = vmatprep.subr.mxu0 0.0
    %2503 = vmatpush1.xpose.msra.mxu0 0.0
    %2504 = vmatprep.subr.mxu0 0.0
    %2505 = vmatpush1.xpose.msra.mxu0 0.0
    %2506 = vmatprep.subr.mxu0 0.0
    %2507 = vmatpush1.xpose.msra.mxu0 0.0
    %2508 = vmatprep.subr.mxu0 0.0
    %2509 = vmatpush1.xpose.msra.mxu0 0.0
    %2510 = vmatprep.subr.mxu0 0.0
    %2511 = vmatpush1.xpose.msra.mxu0 0.0
    %2512 = vmatprep.subr.mxu0 0.0
    %2513 = vmatpush1.xpose.msra.mxu0 0.0
    %2514 = vmatprep.subr.mxu0 0.0
    %2515 = vmatpush1.xpose.msra.mxu0 0.0
    %2516 = vmatprep.subr.mxu0 0.0
    %2517 = vmatpush1.xpose.msra.mxu0 0.0
    %2518 = vmatprep.subr.mxu0 0.0
    %2519 = vmatpush1.xpose.msra.mxu0 0.0
    %2520 = vmatprep.subr.mxu0 0.0
    %2521 = vmatpush1.xpose.msra.mxu0 0.0
    %2522 = vmatprep.subr.mxu0 0.0
    %2523 = vmatpush1.xpose.msra.mxu0 0.0
    %2524 = vmatprep.subr.mxu0 0.0
    %2525 = vmatpush1.xpose.msra.mxu0 0.0
    %2526 = vmatprep.subr.mxu0 0.0
    %2527 = vmatpush1.xpose.msra.mxu0 0.0
    %2528 = vmatprep.subr.mxu0 0.0
    %2529 = vmatpush1.xpose.msra.mxu0 0.0
    %2530 = vmatprep.subr.mxu0 0.0
    %2531 = vmatpush1.xpose.msra.mxu0 0.0
    %2532 = vmatprep.subr.mxu0 0.0
    %2533 = vmatpush1.xpose.msra.mxu0 0.0
    %2534 = vmatprep.subr.mxu0 0.0
    %2535 = vmatpush1.xpose.msra.mxu0 0.0
    %2536 = vmatprep.subr.mxu0 0.0
    %2537 = vmatpush1.xpose.msra.mxu0 0.0
    %2538 = vmatprep.mubr.f32.mxu0 0.0
    %v2539 = vand.u32 %v2469, 4294901760
    %v2540 = vsub.f32 %v2469, %v2539
    %v2541 = vand.u32 %v2540, 4294901760
    %v2542 = vsub.f32 %v2540, %v2541
    %v2543 = vand.u32 %v2542, 4294901760
    %2544 = vmatmul.mubr.f32.gmra.mrb[0].mxu0 %v2543
    %v2545 = vpop.f32.mrb[0].mxu0
    %v2546 = vadd.f32 0.0, %v2545
    %v2547 = vpop.f32.mrb[0].mxu0
    %2548 = vdwg.mxu0
    %2549 = vmatprep.subr.mxu0 0.0
    %v2550 = vand.u32 %v2471, 4294901760
    %v2551 = vsub.f32 %v2471, %v2550
    %v2552 = vand.u32 %v2551, 4294901760
    %v2553 = vsub.f32 %v2551, %v2552
    %v2554 = vand.u32 %v2553, 4294901760
    %2555 = vmatpush1.xpose.msra.mxu0 %v2554
    %2556 = vmatprep.subr.mxu0 0.0
    %2557 = vmatpush1.xpose.msra.mxu0 0.0
    %2558 = vmatprep.subr.mxu0 0.0
    %2559 = vmatpush1.xpose.msra.mxu0 0.0
    %2560 = vmatprep.subr.mxu0 0.0
    %2561 = vmatpush1.xpose.msra.mxu0 0.0
    %2562 = vmatprep.subr.mxu0 0.0
    %2563 = vmatpush1.xpose.msra.mxu0 0.0
    %2564 = vmatprep.subr.mxu0 0.0
    %2565 = vmatpush1.xpose.msra.mxu0 0.0
    %2566 = vmatprep.subr.mxu0 0.0
    %2567 = vmatpush1.xpose.msra.mxu0 0.0
    %2568 = vmatprep.subr.mxu0 0.0
    %2569 = vmatpush1.xpose.msra.mxu0 0.0
    %2570 = vmatprep.subr.mxu0 0.0
    %2571 = vmatpush1.xpose.msra.mxu0 0.0
    %2572 = vmatprep.subr.mxu0 0.0
    %2573 = vmatpush1.xpose.msra.mxu0 0.0
    %2574 = vmatprep.subr.mxu0 0.0
    %2575 = vmatpush1.xpose.msra.mxu0 0.0
    %2576 = vmatprep.subr.mxu0 0.0
    %2577 = vmatpush1.xpose.msra.mxu0 0.0
    %2578 = vmatprep.subr.mxu0 0.0
    %2579 = vmatpush1.xpose.msra.mxu0 0.0
    %2580 = vmatprep.subr.mxu0 0.0
    %2581 = vmatpush1.xpose.msra.mxu0 0.0
    %2582 = vmatprep.subr.mxu0 0.0
    %2583 = vmatpush1.xpose.msra.mxu0 0.0
    %2584 = vmatprep.subr.mxu0 0.0
    %2585 = vmatpush1.xpose.msra.mxu0 0.0
    %2586 = vmatprep.subr.mxu0 0.0
    %2587 = vmatpush1.xpose.msra.mxu0 0.0
    %2588 = vmatprep.subr.mxu0 0.0
    %2589 = vmatpush1.xpose.msra.mxu0 0.0
    %2590 = vmatprep.subr.mxu0 0.0
    %2591 = vmatpush1.xpose.msra.mxu0 0.0
    %2592 = vmatprep.subr.mxu0 0.0
    %2593 = vmatpush1.xpose.msra.mxu0 0.0
    %2594 = vmatprep.subr.mxu0 0.0
    %2595 = vmatpush1.xpose.msra.mxu0 0.0
    %2596 = vmatprep.subr.mxu0 0.0
    %2597 = vmatpush1.xpose.msra.mxu0 0.0
    %2598 = vmatprep.subr.mxu0 0.0
    %2599 = vmatpush1.xpose.msra.mxu0 0.0
    %2600 = vmatprep.subr.mxu0 0.0
    %2601 = vmatpush1.xpose.msra.mxu0 0.0
    %2602 = vmatprep.subr.mxu0 0.0
    %2603 = vmatpush1.xpose.msra.mxu0 0.0
    %2604 = vmatprep.subr.mxu0 0.0
    %2605 = vmatpush1.xpose.msra.mxu0 0.0
    %2606 = vmatprep.subr.mxu0 0.0
    %2607 = vmatpush1.xpose.msra.mxu0 0.0
    %2608 = vmatprep.subr.mxu0 0.0
    %2609 = vmatpush1.xpose.msra.mxu0 0.0
    %2610 = vmatprep.subr.mxu0 0.0
    %2611 = vmatpush1.xpose.msra.mxu0 0.0
    %2612 = vmatprep.subr.mxu0 0.0
    %2613 = vmatpush1.xpose.msra.mxu0 0.0
    %2614 = vmatprep.subr.mxu0 0.0
    %2615 = vmatpush1.xpose.msra.mxu0 0.0
    %2616 = vmatprep.subr.mxu0 0.0
    %2617 = vmatpush1.xpose.msra.mxu0 0.0
    %2618 = vmatprep.mubr.f32.mxu0 0.0
    %v2619 = vand.u32 %v2469, 4294901760
    %2620 = vmatmul.mubr.f32.gmra.mrb[0].mxu0 %v2619
    %v2621 = vpop.f32.mrb[0].mxu0
    %v2622 = vadd.f32 %v2546, %v2621
    %v2623 = vpop.f32.mrb[0].mxu0
    %2624 = vdwg.mxu0
    %2625 = vmatprep.subr.mxu0 0.0
    %v2626 = vand.u32 %v2471, 4294901760
    %v2627 = vsub.f32 %v2471, %v2626
    %2628 = vmatpush1.xpose.msra.mxu0 %v2627
    %2629 = vmatprep.subr.mxu0 0.0
    %2630 = vmatpush1.xpose.msra.mxu0 0.0
    %2631 = vmatprep.subr.mxu0 0.0
    %2632 = vmatpush1.xpose.msra.mxu0 0.0
    %2633 = vmatprep.subr.mxu0 0.0
    %2634 = vmatpush1.xpose.msra.mxu0 0.0
    %2635 = vmatprep.subr.mxu0 0.0
    %2636 = vmatpush1.xpose.msra.mxu0 0.0
    %2637 = vmatprep.subr.mxu0 0.0
    %2638 = vmatpush1.xpose.msra.mxu0 0.0
    %2639 = vmatprep.subr.mxu0 0.0
    %2640 = vmatpush1.xpose.msra.mxu0 0.0
    %2641 = vmatprep.subr.mxu0 0.0
    %2642 = vmatpush1.xpose.msra.mxu0 0.0
    %2643 = vmatprep.subr.mxu0 0.0
    %2644 = vmatpush1.xpose.msra.mxu0 0.0
    %2645 = vmatprep.subr.mxu0 0.0
    %2646 = vmatpush1.xpose.msra.mxu0 0.0
    %2647 = vmatprep.subr.mxu0 0.0
    %2648 = vmatpush1.xpose.msra.mxu0 0.0
    %2649 = vmatprep.subr.mxu0 0.0
    %2650 = vmatpush1.xpose.msra.mxu0 0.0
    %2651 = vmatprep.subr.mxu0 0.0
    %2652 = vmatpush1.xpose.msra.mxu0 0.0
    %2653 = vmatprep.subr.mxu0 0.0
    %2654 = vmatpush1.xpose.msra.mxu0 0.0
    %2655 = vmatprep.subr.mxu0 0.0
    %2656 = vmatpush1.xpose.msra.mxu0 0.0
    %2657 = vmatprep.subr.mxu0 0.0
    %2658 = vmatpush1.xpose.msra.mxu0 0.0
    %2659 = vmatprep.subr.mxu0 0.0
    %2660 = vmatpush1.xpose.msra.mxu0 0.0
    %2661 = vmatprep.subr.mxu0 0.0
    %2662 = vmatpush1.xpose.msra.mxu0 0.0
    %2663 = vmatprep.subr.mxu0 0.0
    %2664 = vmatpush1.xpose.msra.mxu0 0.0
    %2665 = vmatprep.subr.mxu0 0.0
    %2666 = vmatpush1.xpose.msra.mxu0 0.0
    %2667 = vmatprep.subr.mxu0 0.0
    %2668 = vmatpush1.xpose.msra.mxu0 0.0
    %2669 = vmatprep.subr.mxu0 0.0
    %2670 = vmatpush1.xpose.msra.mxu0 0.0
    %2671 = vmatprep.subr.mxu0 0.0
    %2672 = vmatpush1.xpose.msra.mxu0 0.0
    %2673 = vmatprep.subr.mxu0 0.0
    %2674 = vmatpush1.xpose.msra.mxu0 0.0
    %2675 = vmatprep.subr.mxu0 0.0
    %2676 = vmatpush1.xpose.msra.mxu0 0.0
    %2677 = vmatprep.subr.mxu0 0.0
    %2678 = vmatpush1.xpose.msra.mxu0 0.0
    %2679 = vmatprep.subr.mxu0 0.0
    %2680 = vmatpush1.xpose.msra.mxu0 0.0
    %2681 = vmatprep.subr.mxu0 0.0
    %2682 = vmatpush1.xpose.msra.mxu0 0.0
    %2683 = vmatprep.subr.mxu0 0.0
    %2684 = vmatpush1.xpose.msra.mxu0 0.0
    %2685 = vmatprep.subr.mxu0 0.0
    %2686 = vmatpush1.xpose.msra.mxu0 0.0
    %2687 = vmatprep.subr.mxu0 0.0
    %2688 = vmatpush1.xpose.msra.mxu0 0.0
    %2689 = vmatprep.subr.mxu0 0.0
    %2690 = vmatpush1.xpose.msra.mxu0 0.0
    %2691 = vmatprep.mubr.f32.mxu0 0.0
    %v2692 = vand.u32 %v2469, 4294901760
    %v2693 = vsub.f32 %v2469, %v2692
    %2694 = vmatmul.mubr.f32.gmra.mrb[0].mxu0 %v2693
    %v2695 = vpop.f32.mrb[0].mxu0
    %v2696 = vadd.f32 %v2622, %v2695
    %v2697 = vpop.f32.mrb[0].mxu0
    %2698 = vdwg.mxu0
    %2699 = vmatprep.subr.mxu0 0.0
    %v2700 = vand.u32 %v2471, 4294901760
    %2701 = vmatpush1.xpose.msra.mxu0 %v2700
    %2702 = vmatprep.subr.mxu0 0.0
    %2703 = vmatpush1.xpose.msra.mxu0 0.0
    %2704 = vmatprep.subr.mxu0 0.0
    %2705 = vmatpush1.xpose.msra.mxu0 0.0
    %2706 = vmatprep.subr.mxu0 0.0
    %2707 = vmatpush1.xpose.msra.mxu0 0.0
    %2708 = vmatprep.subr.mxu0 0.0
    %2709 = vmatpush1.xpose.msra.mxu0 0.0
    %2710 = vmatprep.subr.mxu0 0.0
    %2711 = vmatpush1.xpose.msra.mxu0 0.0
    %2712 = vmatprep.subr.mxu0 0.0
    %2713 = vmatpush1.xpose.msra.mxu0 0.0
    %2714 = vmatprep.subr.mxu0 0.0
    %2715 = vmatpush1.xpose.msra.mxu0 0.0
    %2716 = vmatprep.subr.mxu0 0.0
    %2717 = vmatpush1.xpose.msra.mxu0 0.0
    %2718 = vmatprep.subr.mxu0 0.0
    %2719 = vmatpush1.xpose.msra.mxu0 0.0
    %2720 = vmatprep.subr.mxu0 0.0
    %2721 = vmatpush1.xpose.msra.mxu0 0.0
    %2722 = vmatprep.subr.mxu0 0.0
    %2723 = vmatpush1.xpose.msra.mxu0 0.0
    %2724 = vmatprep.subr.mxu0 0.0
    %2725 = vmatpush1.xpose.msra.mxu0 0.0
    %2726 = vmatprep.subr.mxu0 0.0
    %2727 = vmatpush1.xpose.msra.mxu0 0.0
    %2728 = vmatprep.subr.mxu0 0.0
    %2729 = vmatpush1.xpose.msra.mxu0 0.0
    %2730 = vmatprep.subr.mxu0 0.0
    %2731 = vmatpush1.xpose.msra.mxu0 0.0
    %2732 = vmatprep.subr.mxu0 0.0
    %2733 = vmatpush1.xpose.msra.mxu0 0.0
    %2734 = vmatprep.subr.mxu0 0.0
    %2735 = vmatpush1.xpose.msra.mxu0 0.0
    %2736 = vmatprep.subr.mxu0 0.0
    %2737 = vmatpush1.xpose.msra.mxu0 0.0
    %2738 = vmatprep.subr.mxu0 0.0
    %2739 = vmatpush1.xpose.msra.mxu0 0.0
    %2740 = vmatprep.subr.mxu0 0.0
    %2741 = vmatpush1.xpose.msra.mxu0 0.0
    %2742 = vmatprep.subr.mxu0 0.0
    %2743 = vmatpush1.xpose.msra.mxu0 0.0
    %2744 = vmatprep.subr.mxu0 0.0
    %2745 = vmatpush1.xpose.msra.mxu0 0.0
    %2746 = vmatprep.subr.mxu0 0.0
    %2747 = vmatpush1.xpose.msra.mxu0 0.0
    %2748 = vmatprep.subr.mxu0 0.0
    %2749 = vmatpush1.xpose.msra.mxu0 0.0
    %2750 = vmatprep.subr.mxu0 0.0
    %2751 = vmatpush1.xpose.msra.mxu0 0.0
    %2752 = vmatprep.subr.mxu0 0.0
    %2753 = vmatpush1.xpose.msra.mxu0 0.0
    %2754 = vmatprep.subr.mxu0 0.0
    %2755 = vmatpush1.xpose.msra.mxu0 0.0
    %2756 = vmatprep.subr.mxu0 0.0
    %2757 = vmatpush1.xpose.msra.mxu0 0.0
    %2758 = vmatprep.subr.mxu0 0.0
    %2759 = vmatpush1.xpose.msra.mxu0 0.0
    %2760 = vmatprep.subr.mxu0 0.0
    %2761 = vmatpush1.xpose.msra.mxu0 0.0
    %2762 = vmatprep.subr.mxu0 0.0
    %2763 = vmatpush1.xpose.msra.mxu0 0.0
    %2764 = vmatprep.mubr.f32.mxu0 0.0
    %v2765 = vand.u32 %v2469, 4294901760
    %v2766 = vsub.f32 %v2469, %v2765
    %v2767 = vand.u32 %v2766, 4294901760
    %2768 = vmatmul.mubr.f32.gmra.mrb[0].mxu0 %v2767
    %v2769 = vpop.f32.mrb[0].mxu0
    %v2770 = vadd.f32 %v2696, %v2769
    %v2771 = vpop.f32.mrb[0].mxu0
    %2772 = vdwg.mxu0
    %2773 = vmatprep.subr.mxu0 0.0
    %v2774 = vand.u32 %v2471, 4294901760
    %v2775 = vsub.f32 %v2471, %v2774
    %v2776 = vand.u32 %v2775, 4294901760
    %2777 = vmatpush1.xpose.msra.mxu0 %v2776
    %2778 = vmatprep.subr.mxu0 0.0
    %2779 = vmatpush1.xpose.msra.mxu0 0.0
    %2780 = vmatprep.subr.mxu0 0.0
    %2781 = vmatpush1.xpose.msra.mxu0 0.0
    %2782 = vmatprep.subr.mxu0 0.0
    %2783 = vmatpush1.xpose.msra.mxu0 0.0
    %2784 = vmatprep.subr.mxu0 0.0
    %2785 = vmatpush1.xpose.msra.mxu0 0.0
    %2786 = vmatprep.subr.mxu0 0.0
    %2787 = vmatpush1.xpose.msra.mxu0 0.0
    %2788 = vmatprep.subr.mxu0 0.0
    %2789 = vmatpush1.xpose.msra.mxu0 0.0
    %2790 = vmatprep.subr.mxu0 0.0
    %2791 = vmatpush1.xpose.msra.mxu0 0.0
    %2792 = vmatprep.subr.mxu0 0.0
    %2793 = vmatpush1.xpose.msra.mxu0 0.0
    %2794 = vmatprep.subr.mxu0 0.0
    %2795 = vmatpush1.xpose.msra.mxu0 0.0
    %2796 = vmatprep.subr.mxu0 0.0
    %2797 = vmatpush1.xpose.msra.mxu0 0.0
    %2798 = vmatprep.subr.mxu0 0.0
    %2799 = vmatpush1.xpose.msra.mxu0 0.0
    %2800 = vmatprep.subr.mxu0 0.0
    %2801 = vmatpush1.xpose.msra.mxu0 0.0
    %2802 = vmatprep.subr.mxu0 0.0
    %2803 = vmatpush1.xpose.msra.mxu0 0.0
    %2804 = vmatprep.subr.mxu0 0.0
    %2805 = vmatpush1.xpose.msra.mxu0 0.0
    %2806 = vmatprep.subr.mxu0 0.0
    %2807 = vmatpush1.xpose.msra.mxu0 0.0
    %2808 = vmatprep.subr.mxu0 0.0
    %2809 = vmatpush1.xpose.msra.mxu0 0.0
    %2810 = vmatprep.subr.mxu0 0.0
    %2811 = vmatpush1.xpose.msra.mxu0 0.0
    %2812 = vmatprep.subr.mxu0 0.0
    %2813 = vmatpush1.xpose.msra.mxu0 0.0
    %2814 = vmatprep.subr.mxu0 0.0
    %2815 = vmatpush1.xpose.msra.mxu0 0.0
    %2816 = vmatprep.subr.mxu0 0.0
    %2817 = vmatpush1.xpose.msra.mxu0 0.0
    %2818 = vmatprep.subr.mxu0 0.0
    %2819 = vmatpush1.xpose.msra.mxu0 0.0
    %2820 = vmatprep.subr.mxu0 0.0
    %2821 = vmatpush1.xpose.msra.mxu0 0.0
    %2822 = vmatprep.subr.mxu0 0.0
    %2823 = vmatpush1.xpose.msra.mxu0 0.0
    %2824 = vmatprep.subr.mxu0 0.0
    %2825 = vmatpush1.xpose.msra.mxu0 0.0
    %2826 = vmatprep.subr.mxu0 0.0
    %2827 = vmatpush1.xpose.msra.mxu0 0.0
    %2828 = vmatprep.subr.mxu0 0.0
    %2829 = vmatpush1.xpose.msra.mxu0 0.0
    %2830 = vmatprep.subr.mxu0 0.0
    %2831 = vmatpush1.xpose.msra.mxu0 0.0
    %2832 = vmatprep.subr.mxu0 0.0
    %2833 = vmatpush1.xpose.msra.mxu0 0.0
    %2834 = vmatprep.subr.mxu0 0.0
    %2835 = vmatpush1.xpose.msra.mxu0 0.0
    %2836 = vmatprep.subr.mxu0 0.0
    %2837 = vmatpush1.xpose.msra.mxu0 0.0
    %2838 = vmatprep.subr.mxu0 0.0
    %2839 = vmatpush1.xpose.msra.mxu0 0.0
    %2840 = vmatprep.mubr.f32.mxu0 0.0
    %v2841 = vand.u32 %v2469, 4294901760
    %2842 = vmatmul.mubr.f32.gmra.mrb[0].mxu0 %v2841
    %v2843 = vpop.f32.mrb[0].mxu0
    %v2844 = vadd.f32 %v2770, %v2843
    %v2845 = vpop.f32.mrb[0].mxu0
    %2846 = vdwg.mxu0
    %2847 = vmatprep.subr.mxu0 0.0
    %v2848 = vand.u32 %v2471, 4294901760
    %2849 = vmatpush1.xpose.msra.mxu0 %v2848
    %2850 = vmatprep.subr.mxu0 0.0
    %2851 = vmatpush1.xpose.msra.mxu0 0.0
    %2852 = vmatprep.subr.mxu0 0.0
    %2853 = vmatpush1.xpose.msra.mxu0 0.0
    %2854 = vmatprep.subr.mxu0 0.0
    %2855 = vmatpush1.xpose.msra.mxu0 0.0
    %2856 = vmatprep.subr.mxu0 0.0
    %2857 = vmatpush1.xpose.msra.mxu0 0.0
    %2858 = vmatprep.subr.mxu0 0.0
    %2859 = vmatpush1.xpose.msra.mxu0 0.0
    %2860 = vmatprep.subr.mxu0 0.0
    %2861 = vmatpush1.xpose.msra.mxu0 0.0
    %2862 = vmatprep.subr.mxu0 0.0
    %2863 = vmatpush1.xpose.msra.mxu0 0.0
    %2864 = vmatprep.subr.mxu0 0.0
    %2865 = vmatpush1.xpose.msra.mxu0 0.0
    %2866 = vmatprep.subr.mxu0 0.0
    %2867 = vmatpush1.xpose.msra.mxu0 0.0
    %2868 = vmatprep.subr.mxu0 0.0
    %2869 = vmatpush1.xpose.msra.mxu0 0.0
    %2870 = vmatprep.subr.mxu0 0.0
    %2871 = vmatpush1.xpose.msra.mxu0 0.0
    %2872 = vmatprep.subr.mxu0 0.0
    %2873 = vmatpush1.xpose.msra.mxu0 0.0
    %2874 = vmatprep.subr.mxu0 0.0
    %2875 = vmatpush1.xpose.msra.mxu0 0.0
    %2876 = vmatprep.subr.mxu0 0.0
    %2877 = vmatpush1.xpose.msra.mxu0 0.0
    %2878 = vmatprep.subr.mxu0 0.0
    %2879 = vmatpush1.xpose.msra.mxu0 0.0
    %2880 = vmatprep.subr.mxu0 0.0
    %2881 = vmatpush1.xpose.msra.mxu0 0.0
    %2882 = vmatprep.subr.mxu0 0.0
    %2883 = vmatpush1.xpose.msra.mxu0 0.0
    %2884 = vmatprep.subr.mxu0 0.0
    %2885 = vmatpush1.xpose.msra.mxu0 0.0
    %2886 = vmatprep.subr.mxu0 0.0
    %2887 = vmatpush1.xpose.msra.mxu0 0.0
    %2888 = vmatprep.subr.mxu0 0.0
    %2889 = vmatpush1.xpose.msra.mxu0 0.0
    %2890 = vmatprep.subr.mxu0 0.0
    %2891 = vmatpush1.xpose.msra.mxu0 0.0
    %2892 = vmatprep.subr.mxu0 0.0
    %2893 = vmatpush1.xpose.msra.mxu0 0.0
    %2894 = vmatprep.subr.mxu0 0.0
    %2895 = vmatpush1.xpose.msra.mxu0 0.0
    %2896 = vmatprep.subr.mxu0 0.0
    %2897 = vmatpush1.xpose.msra.mxu0 0.0
    %2898 = vmatprep.subr.mxu0 0.0
    %2899 = vmatpush1.xpose.msra.mxu0 0.0
    %2900 = vmatprep.subr.mxu0 0.0
    %2901 = vmatpush1.xpose.msra.mxu0 0.0
    %2902 = vmatprep.subr.mxu0 0.0
    %2903 = vmatpush1.xpose.msra.mxu0 0.0
    %2904 = vmatprep.subr.mxu0 0.0
    %2905 = vmatpush1.xpose.msra.mxu0 0.0
    %2906 = vmatprep.subr.mxu0 0.0
    %2907 = vmatpush1.xpose.msra.mxu0 0.0
    %2908 = vmatprep.subr.mxu0 0.0
    %2909 = vmatpush1.xpose.msra.mxu0 0.0
    %2910 = vmatprep.subr.mxu0 0.0
    %2911 = vmatpush1.xpose.msra.mxu0 0.0
    %2912 = vmatprep.mubr.f32.mxu0 0.0
    %v2913 = vand.u32 %v2469, 4294901760
    %2914 = vmatmul.mubr.f32.gmra.mrb[0].mxu0 %v2913
    %v2915 = vpop.f32.mrb[0].mxu0
    %v2916 = vadd.f32 %v2844, %v2915
    %v2917 = vpop.f32.mrb[0].mxu0
    %2918 = vdwg.mxu0
    %2919 = vrot.lane.b32.xlu0 %v629, 120
    %v2920 = vpop.permute.xlu0 %2919
    %2921 = vrot.lane.b32.xlu0 %v629, 88
    %v2922 = vpop.permute.xlu0 %2921
    %v2923 = vsel %vm635, %v2920, 0
    %v2925 = vsel %vm635, %v2922, 0
    %2927 = vmatprep.subr.mxu0 0.0
    %v2928 = vand.u32 %v2925, 4294901760
    %2929 = vmatpush1.xpose.msra.mxu0 %v2928
    %2930 = vmatprep.subr.mxu0 0.0
    %2931 = vmatpush1.xpose.msra.mxu0 0.0
    %2932 = vmatprep.subr.mxu0 0.0
    %2933 = vmatpush1.xpose.msra.mxu0 0.0
    %2934 = vmatprep.subr.mxu0 0.0
    %2935 = vmatpush1.xpose.msra.mxu0 0.0
    %2936 = vmatprep.subr.mxu0 0.0
    %2937 = vmatpush1.xpose.msra.mxu0 0.0
    %2938 = vmatprep.subr.mxu0 0.0
    %2939 = vmatpush1.xpose.msra.mxu0 0.0
    %2940 = vmatprep.subr.mxu0 0.0
    %2941 = vmatpush1.xpose.msra.mxu0 0.0
    %2942 = vmatprep.subr.mxu0 0.0
    %2943 = vmatpush1.xpose.msra.mxu0 0.0
    %2944 = vmatprep.subr.mxu0 0.0
    %2945 = vmatpush1.xpose.msra.mxu0 0.0
    %2946 = vmatprep.subr.mxu0 0.0
    %2947 = vmatpush1.xpose.msra.mxu0 0.0
    %2948 = vmatprep.subr.mxu0 0.0
    %2949 = vmatpush1.xpose.msra.mxu0 0.0
    %2950 = vmatprep.subr.mxu0 0.0
    %2951 = vmatpush1.xpose.msra.mxu0 0.0
    %2952 = vmatprep.subr.mxu0 0.0
    %2953 = vmatpush1.xpose.msra.mxu0 0.0
    %2954 = vmatprep.subr.mxu0 0.0
    %2955 = vmatpush1.xpose.msra.mxu0 0.0
    %2956 = vmatprep.subr.mxu0 0.0
    %2957 = vmatpush1.xpose.msra.mxu0 0.0
    %2958 = vmatprep.subr.mxu0 0.0
    %2959 = vmatpush1.xpose.msra.mxu0 0.0
    %2960 = vmatprep.subr.mxu0 0.0
    %2961 = vmatpush1.xpose.msra.mxu0 0.0
    %2962 = vmatprep.subr.mxu0 0.0
    %2963 = vmatpush1.xpose.msra.mxu0 0.0
    %2964 = vmatprep.subr.mxu0 0.0
    %2965 = vmatpush1.xpose.msra.mxu0 0.0
    %2966 = vmatprep.subr.mxu0 0.0
    %2967 = vmatpush1.xpose.msra.mxu0 0.0
    %2968 = vmatprep.subr.mxu0 0.0
    %2969 = vmatpush1.xpose.msra.mxu0 0.0
    %2970 = vmatprep.subr.mxu0 0.0
    %2971 = vmatpush1.xpose.msra.mxu0 0.0
    %2972 = vmatprep.subr.mxu0 0.0
    %2973 = vmatpush1.xpose.msra.mxu0 0.0
    %2974 = vmatprep.subr.mxu0 0.0
    %2975 = vmatpush1.xpose.msra.mxu0 0.0
    %2976 = vmatprep.subr.mxu0 0.0
    %2977 = vmatpush1.xpose.msra.mxu0 0.0
    %2978 = vmatprep.subr.mxu0 0.0
    %2979 = vmatpush1.xpose.msra.mxu0 0.0
    %2980 = vmatprep.subr.mxu0 0.0
    %2981 = vmatpush1.xpose.msra.mxu0 0.0
    %2982 = vmatprep.subr.mxu0 0.0
    %2983 = vmatpush1.xpose.msra.mxu0 0.0
    %2984 = vmatprep.subr.mxu0 0.0
    %2985 = vmatpush1.xpose.msra.mxu0 0.0
    %2986 = vmatprep.subr.mxu0 0.0
    %2987 = vmatpush1.xpose.msra.mxu0 0.0
    %2988 = vmatprep.subr.mxu0 0.0
    %2989 = vmatpush1.xpose.msra.mxu0 0.0
    %2990 = vmatprep.subr.mxu0 0.0
    %2991 = vmatpush1.xpose.msra.mxu0 0.0
    %2992 = vmatprep.mubr.f32.mxu0 0.0
    %v2993 = vand.u32 %v2923, 4294901760
    %v2994 = vsub.f32 %v2923, %v2993
    %v2995 = vand.u32 %v2994, 4294901760
    %v2996 = vsub.f32 %v2994, %v2995
    %v2997 = vand.u32 %v2996, 4294901760
    %2998 = vmatmul.mubr.f32.gmra.mrb[0].mxu0 %v2997
    %v2999 = vpop.f32.mrb[0].mxu0
    %v3000 = vadd.f32 0.0, %v2999
    %v3001 = vpop.f32.mrb[0].mxu0
    %3002 = vdwg.mxu0
    %3003 = vmatprep.subr.mxu0 0.0
    %v3004 = vand.u32 %v2925, 4294901760
    %v3005 = vsub.f32 %v2925, %v3004
    %v3006 = vand.u32 %v3005, 4294901760
    %v3007 = vsub.f32 %v3005, %v3006
    %v3008 = vand.u32 %v3007, 4294901760
    %3009 = vmatpush1.xpose.msra.mxu0 %v3008
    %3010 = vmatprep.subr.mxu0 0.0
    %3011 = vmatpush1.xpose.msra.mxu0 0.0
    %3012 = vmatprep.subr.mxu0 0.0
    %3013 = vmatpush1.xpose.msra.mxu0 0.0
    %3014 = vmatprep.subr.mxu0 0.0
    %3015 = vmatpush1.xpose.msra.mxu0 0.0
    %3016 = vmatprep.subr.mxu0 0.0
    %3017 = vmatpush1.xpose.msra.mxu0 0.0
    %3018 = vmatprep.subr.mxu0 0.0
    %3019 = vmatpush1.xpose.msra.mxu0 0.0
    %3020 = vmatprep.subr.mxu0 0.0
    %3021 = vmatpush1.xpose.msra.mxu0 0.0
    %3022 = vmatprep.subr.mxu0 0.0
    %3023 = vmatpush1.xpose.msra.mxu0 0.0
    %3024 = vmatprep.subr.mxu0 0.0
    %3025 = vmatpush1.xpose.msra.mxu0 0.0
    %3026 = vmatprep.subr.mxu0 0.0
    %3027 = vmatpush1.xpose.msra.mxu0 0.0
    %3028 = vmatprep.subr.mxu0 0.0
    %3029 = vmatpush1.xpose.msra.mxu0 0.0
    %3030 = vmatprep.subr.mxu0 0.0
    %3031 = vmatpush1.xpose.msra.mxu0 0.0
    %3032 = vmatprep.subr.mxu0 0.0
    %3033 = vmatpush1.xpose.msra.mxu0 0.0
    %3034 = vmatprep.subr.mxu0 0.0
    %3035 = vmatpush1.xpose.msra.mxu0 0.0
    %3036 = vmatprep.subr.mxu0 0.0
    %3037 = vmatpush1.xpose.msra.mxu0 0.0
    %3038 = vmatprep.subr.mxu0 0.0
    %3039 = vmatpush1.xpose.msra.mxu0 0.0
    %3040 = vmatprep.subr.mxu0 0.0
    %3041 = vmatpush1.xpose.msra.mxu0 0.0
    %3042 = vmatprep.subr.mxu0 0.0
    %3043 = vmatpush1.xpose.msra.mxu0 0.0
    %3044 = vmatprep.subr.mxu0 0.0
    %3045 = vmatpush1.xpose.msra.mxu0 0.0
    %3046 = vmatprep.subr.mxu0 0.0
    %3047 = vmatpush1.xpose.msra.mxu0 0.0
    %3048 = vmatprep.subr.mxu0 0.0
    %3049 = vmatpush1.xpose.msra.mxu0 0.0
    %3050 = vmatprep.subr.mxu0 0.0
    %3051 = vmatpush1.xpose.msra.mxu0 0.0
    %3052 = vmatprep.subr.mxu0 0.0
    %3053 = vmatpush1.xpose.msra.mxu0 0.0
    %3054 = vmatprep.subr.mxu0 0.0
    %3055 = vmatpush1.xpose.msra.mxu0 0.0
    %3056 = vmatprep.subr.mxu0 0.0
    %3057 = vmatpush1.xpose.msra.mxu0 0.0
    %3058 = vmatprep.subr.mxu0 0.0
    %3059 = vmatpush1.xpose.msra.mxu0 0.0
    %3060 = vmatprep.subr.mxu0 0.0
    %3061 = vmatpush1.xpose.msra.mxu0 0.0
    %3062 = vmatprep.subr.mxu0 0.0
    %3063 = vmatpush1.xpose.msra.mxu0 0.0
    %3064 = vmatprep.subr.mxu0 0.0
    %3065 = vmatpush1.xpose.msra.mxu0 0.0
    %3066 = vmatprep.subr.mxu0 0.0
    %3067 = vmatpush1.xpose.msra.mxu0 0.0
    %3068 = vmatprep.subr.mxu0 0.0
    %3069 = vmatpush1.xpose.msra.mxu0 0.0
    %3070 = vmatprep.subr.mxu0 0.0
    %3071 = vmatpush1.xpose.msra.mxu0 0.0
    %3072 = vmatprep.mubr.f32.mxu0 0.0
    %v3073 = vand.u32 %v2923, 4294901760
    %3074 = vmatmul.mubr.f32.gmra.mrb[0].mxu0 %v3073
    %v3075 = vpop.f32.mrb[0].mxu0
    %v3076 = vadd.f32 %v3000, %v3075
    %v3077 = vpop.f32.mrb[0].mxu0
    %3078 = vdwg.mxu0
    %3079 = vmatprep.subr.mxu0 0.0
    %v3080 = vand.u32 %v2925, 4294901760
    %v3081 = vsub.f32 %v2925, %v3080
    %3082 = vmatpush1.xpose.msra.mxu0 %v3081
    %3083 = vmatprep.subr.mxu0 0.0
    %3084 = vmatpush1.xpose.msra.mxu0 0.0
    %3085 = vmatprep.subr.mxu0 0.0
    %3086 = vmatpush1.xpose.msra.mxu0 0.0
    %3087 = vmatprep.subr.mxu0 0.0
    %3088 = vmatpush1.xpose.msra.mxu0 0.0
    %3089 = vmatprep.subr.mxu0 0.0
    %3090 = vmatpush1.xpose.msra.mxu0 0.0
    %3091 = vmatprep.subr.mxu0 0.0
    %3092 = vmatpush1.xpose.msra.mxu0 0.0
    %3093 = vmatprep.subr.mxu0 0.0
    %3094 = vmatpush1.xpose.msra.mxu0 0.0
    %3095 = vmatprep.subr.mxu0 0.0
    %3096 = vmatpush1.xpose.msra.mxu0 0.0
    %3097 = vmatprep.subr.mxu0 0.0
    %3098 = vmatpush1.xpose.msra.mxu0 0.0
    %3099 = vmatprep.subr.mxu0 0.0
    %3100 = vmatpush1.xpose.msra.mxu0 0.0
    %3101 = vmatprep.subr.mxu0 0.0
    %3102 = vmatpush1.xpose.msra.mxu0 0.0
    %3103 = vmatprep.subr.mxu0 0.0
    %3104 = vmatpush1.xpose.msra.mxu0 0.0
    %3105 = vmatprep.subr.mxu0 0.0
    %3106 = vmatpush1.xpose.msra.mxu0 0.0
    %3107 = vmatprep.subr.mxu0 0.0
    %3108 = vmatpush1.xpose.msra.mxu0 0.0
    %3109 = vmatprep.subr.mxu0 0.0
    %3110 = vmatpush1.xpose.msra.mxu0 0.0
    %3111 = vmatprep.subr.mxu0 0.0
    %3112 = vmatpush1.xpose.msra.mxu0 0.0
    %3113 = vmatprep.subr.mxu0 0.0
    %3114 = vmatpush1.xpose.msra.mxu0 0.0
    %3115 = vmatprep.subr.mxu0 0.0
    %3116 = vmatpush1.xpose.msra.mxu0 0.0
    %3117 = vmatprep.subr.mxu0 0.0
    %3118 = vmatpush1.xpose.msra.mxu0 0.0
    %3119 = vmatprep.subr.mxu0 0.0
    %3120 = vmatpush1.xpose.msra.mxu0 0.0
    %3121 = vmatprep.subr.mxu0 0.0
    %3122 = vmatpush1.xpose.msra.mxu0 0.0
    %3123 = vmatprep.subr.mxu0 0.0
    %3124 = vmatpush1.xpose.msra.mxu0 0.0
    %3125 = vmatprep.subr.mxu0 0.0
    %3126 = vmatpush1.xpose.msra.mxu0 0.0
    %3127 = vmatprep.subr.mxu0 0.0
    %3128 = vmatpush1.xpose.msra.mxu0 0.0
    %3129 = vmatprep.subr.mxu0 0.0
    %3130 = vmatpush1.xpose.msra.mxu0 0.0
    %3131 = vmatprep.subr.mxu0 0.0
    %3132 = vmatpush1.xpose.msra.mxu0 0.0
    %3133 = vmatprep.subr.mxu0 0.0
    %3134 = vmatpush1.xpose.msra.mxu0 0.0
    %3135 = vmatprep.subr.mxu0 0.0
    %3136 = vmatpush1.xpose.msra.mxu0 0.0
    %3137 = vmatprep.subr.mxu0 0.0
    %3138 = vmatpush1.xpose.msra.mxu0 0.0
    %3139 = vmatprep.subr.mxu0 0.0
    %3140 = vmatpush1.xpose.msra.mxu0 0.0
    %3141 = vmatprep.subr.mxu0 0.0
    %3142 = vmatpush1.xpose.msra.mxu0 0.0
    %3143 = vmatprep.subr.mxu0 0.0
    %3144 = vmatpush1.xpose.msra.mxu0 0.0
    %3145 = vmatprep.mubr.f32.mxu0 0.0
    %v3146 = vand.u32 %v2923, 4294901760
    %v3147 = vsub.f32 %v2923, %v3146
    %3148 = vmatmul.mubr.f32.gmra.mrb[0].mxu0 %v3147
    %v3149 = vpop.f32.mrb[0].mxu0
    %v3150 = vadd.f32 %v3076, %v3149
    %v3151 = vpop.f32.mrb[0].mxu0
    %3152 = vdwg.mxu0
    %3153 = vmatprep.subr.mxu0 0.0
    %v3154 = vand.u32 %v2925, 4294901760
    %3155 = vmatpush1.xpose.msra.mxu0 %v3154
    %3156 = vmatprep.subr.mxu0 0.0
    %3157 = vmatpush1.xpose.msra.mxu0 0.0
    %3158 = vmatprep.subr.mxu0 0.0
    %3159 = vmatpush1.xpose.msra.mxu0 0.0
    %3160 = vmatprep.subr.mxu0 0.0
    %3161 = vmatpush1.xpose.msra.mxu0 0.0
    %3162 = vmatprep.subr.mxu0 0.0
    %3163 = vmatpush1.xpose.msra.mxu0 0.0
    %3164 = vmatprep.subr.mxu0 0.0
    %3165 = vmatpush1.xpose.msra.mxu0 0.0
    %3166 = vmatprep.subr.mxu0 0.0
    %3167 = vmatpush1.xpose.msra.mxu0 0.0
    %3168 = vmatprep.subr.mxu0 0.0
    %3169 = vmatpush1.xpose.msra.mxu0 0.0
    %3170 = vmatprep.subr.mxu0 0.0
    %3171 = vmatpush1.xpose.msra.mxu0 0.0
    %3172 = vmatprep.subr.mxu0 0.0
    %3173 = vmatpush1.xpose.msra.mxu0 0.0
    %3174 = vmatprep.subr.mxu0 0.0
    %3175 = vmatpush1.xpose.msra.mxu0 0.0
    %3176 = vmatprep.subr.mxu0 0.0
    %3177 = vmatpush1.xpose.msra.mxu0 0.0
    %3178 = vmatprep.subr.mxu0 0.0
    %3179 = vmatpush1.xpose.msra.mxu0 0.0
    %3180 = vmatprep.subr.mxu0 0.0
    %3181 = vmatpush1.xpose.msra.mxu0 0.0
    %3182 = vmatprep.subr.mxu0 0.0
    %3183 = vmatpush1.xpose.msra.mxu0 0.0
    %3184 = vmatprep.subr.mxu0 0.0
    %3185 = vmatpush1.xpose.msra.mxu0 0.0
    %3186 = vmatprep.subr.mxu0 0.0
    %3187 = vmatpush1.xpose.msra.mxu0 0.0
    %3188 = vmatprep.subr.mxu0 0.0
    %3189 = vmatpush1.xpose.msra.mxu0 0.0
    %3190 = vmatprep.subr.mxu0 0.0
    %3191 = vmatpush1.xpose.msra.mxu0 0.0
    %3192 = vmatprep.subr.mxu0 0.0
    %3193 = vmatpush1.xpose.msra.mxu0 0.0
    %3194 = vmatprep.subr.mxu0 0.0
    %3195 = vmatpush1.xpose.msra.mxu0 0.0
    %3196 = vmatprep.subr.mxu0 0.0
    %3197 = vmatpush1.xpose.msra.mxu0 0.0
    %3198 = vmatprep.subr.mxu0 0.0
    %3199 = vmatpush1.xpose.msra.mxu0 0.0
    %3200 = vmatprep.subr.mxu0 0.0
    %3201 = vmatpush1.xpose.msra.mxu0 0.0
    %3202 = vmatprep.subr.mxu0 0.0
    %3203 = vmatpush1.xpose.msra.mxu0 0.0
    %3204 = vmatprep.subr.mxu0 0.0
    %3205 = vmatpush1.xpose.msra.mxu0 0.0
    %3206 = vmatprep.subr.mxu0 0.0
    %3207 = vmatpush1.xpose.msra.mxu0 0.0
    %3208 = vmatprep.subr.mxu0 0.0
    %3209 = vmatpush1.xpose.msra.mxu0 0.0
    %3210 = vmatprep.subr.mxu0 0.0
    %3211 = vmatpush1.xpose.msra.mxu0 0.0
    %3212 = vmatprep.subr.mxu0 0.0
    %3213 = vmatpush1.xpose.msra.mxu0 0.0
    %3214 = vmatprep.subr.mxu0 0.0
    %3215 = vmatpush1.xpose.msra.mxu0 0.0
    %3216 = vmatprep.subr.mxu0 0.0
    %3217 = vmatpush1.xpose.msra.mxu0 0.0
    %3218 = vmatprep.mubr.f32.mxu0 0.0
    %v3219 = vand.u32 %v2923, 4294901760
    %v3220 = vsub.f32 %v2923, %v3219
    %v3221 = vand.u32 %v3220, 4294901760
    %3222 = vmatmul.mubr.f32.gmra.mrb[0].mxu0 %v3221
    %v3223 = vpop.f32.mrb[0].mxu0
    %v3224 = vadd.f32 %v3150, %v3223
    %v3225 = vpop.f32.mrb[0].mxu0
    %3226 = vdwg.mxu0
    %3227 = vmatprep.subr.mxu0 0.0
    %v3228 = vand.u32 %v2925, 4294901760
    %v3229 = vsub.f32 %v2925, %v3228
    %v3230 = vand.u32 %v3229, 4294901760
    %3231 = vmatpush1.xpose.msra.mxu0 %v3230
    %3232 = vmatprep.subr.mxu0 0.0
    %3233 = vmatpush1.xpose.msra.mxu0 0.0
    %3234 = vmatprep.subr.mxu0 0.0
    %3235 = vmatpush1.xpose.msra.mxu0 0.0
    %3236 = vmatprep.subr.mxu0 0.0
    %3237 = vmatpush1.xpose.msra.mxu0 0.0
    %3238 = vmatprep.subr.mxu0 0.0
    %3239 = vmatpush1.xpose.msra.mxu0 0.0
    %3240 = vmatprep.subr.mxu0 0.0
    %3241 = vmatpush1.xpose.msra.mxu0 0.0
    %3242 = vmatprep.subr.mxu0 0.0
    %3243 = vmatpush1.xpose.msra.mxu0 0.0
    %3244 = vmatprep.subr.mxu0 0.0
    %3245 = vmatpush1.xpose.msra.mxu0 0.0
    %3246 = vmatprep.subr.mxu0 0.0
    %3247 = vmatpush1.xpose.msra.mxu0 0.0
    %3248 = vmatprep.subr.mxu0 0.0
    %3249 = vmatpush1.xpose.msra.mxu0 0.0
    %3250 = vmatprep.subr.mxu0 0.0
    %3251 = vmatpush1.xpose.msra.mxu0 0.0
    %3252 = vmatprep.subr.mxu0 0.0
    %3253 = vmatpush1.xpose.msra.mxu0 0.0
    %3254 = vmatprep.subr.mxu0 0.0
    %3255 = vmatpush1.xpose.msra.mxu0 0.0
    %3256 = vmatprep.subr.mxu0 0.0
    %3257 = vmatpush1.xpose.msra.mxu0 0.0
    %3258 = vmatprep.subr.mxu0 0.0
    %3259 = vmatpush1.xpose.msra.mxu0 0.0
    %3260 = vmatprep.subr.mxu0 0.0
    %3261 = vmatpush1.xpose.msra.mxu0 0.0
    %3262 = vmatprep.subr.mxu0 0.0
    %3263 = vmatpush1.xpose.msra.mxu0 0.0
    %3264 = vmatprep.subr.mxu0 0.0
    %3265 = vmatpush1.xpose.msra.mxu0 0.0
    %3266 = vmatprep.subr.mxu0 0.0
    %3267 = vmatpush1.xpose.msra.mxu0 0.0
    %3268 = vmatprep.subr.mxu0 0.0
    %3269 = vmatpush1.xpose.msra.mxu0 0.0
    %3270 = vmatprep.subr.mxu0 0.0
    %3271 = vmatpush1.xpose.msra.mxu0 0.0
    %3272 = vmatprep.subr.mxu0 0.0
    %3273 = vmatpush1.xpose.msra.mxu0 0.0
    %3274 = vmatprep.subr.mxu0 0.0
    %3275 = vmatpush1.xpose.msra.mxu0 0.0
    %3276 = vmatprep.subr.mxu0 0.0
    %3277 = vmatpush1.xpose.msra.mxu0 0.0
    %3278 = vmatprep.subr.mxu0 0.0
    %3279 = vmatpush1.xpose.msra.mxu0 0.0
    %3280 = vmatprep.subr.mxu0 0.0
    %3281 = vmatpush1.xpose.msra.mxu0 0.0
    %3282 = vmatprep.subr.mxu0 0.0
    %3283 = vmatpush1.xpose.msra.mxu0 0.0
    %3284 = vmatprep.subr.mxu0 0.0
    %3285 = vmatpush1.xpose.msra.mxu0 0.0
    %3286 = vmatprep.subr.mxu0 0.0
    %3287 = vmatpush1.xpose.msra.mxu0 0.0
    %3288 = vmatprep.subr.mxu0 0.0
    %3289 = vmatpush1.xpose.msra.mxu0 0.0
    %3290 = vmatprep.subr.mxu0 0.0
    %3291 = vmatpush1.xpose.msra.mxu0 0.0
    %3292 = vmatprep.subr.mxu0 0.0
    %3293 = vmatpush1.xpose.msra.mxu0 0.0
    %3294 = vmatprep.mubr.f32.mxu0 0.0
    %v3295 = vand.u32 %v2923, 4294901760
    %3296 = vmatmul.mubr.f32.gmra.mrb[0].mxu0 %v3295
    %v3297 = vpop.f32.mrb[0].mxu0
    %v3298 = vadd.f32 %v3224, %v3297
    %v3299 = vpop.f32.mrb[0].mxu0
    %3300 = vdwg.mxu0
    %3301 = vmatprep.subr.mxu0 0.0
    %v3302 = vand.u32 %v2925, 4294901760
    %3303 = vmatpush1.xpose.msra.mxu0 %v3302
    %3304 = vmatprep.subr.mxu0 0.0
    %3305 = vmatpush1.xpose.msra.mxu0 0.0
    %3306 = vmatprep.subr.mxu0 0.0
    %3307 = vmatpush1.xpose.msra.mxu0 0.0
    %3308 = vmatprep.subr.mxu0 0.0
    %3309 = vmatpush1.xpose.msra.mxu0 0.0
    %3310 = vmatprep.subr.mxu0 0.0
    %3311 = vmatpush1.xpose.msra.mxu0 0.0
    %3312 = vmatprep.subr.mxu0 0.0
    %3313 = vmatpush1.xpose.msra.mxu0 0.0
    %3314 = vmatprep.subr.mxu0 0.0
    %3315 = vmatpush1.xpose.msra.mxu0 0.0
    %3316 = vmatprep.subr.mxu0 0.0
    %3317 = vmatpush1.xpose.msra.mxu0 0.0
    %3318 = vmatprep.subr.mxu0 0.0
    %3319 = vmatpush1.xpose.msra.mxu0 0.0
    %3320 = vmatprep.subr.mxu0 0.0
    %3321 = vmatpush1.xpose.msra.mxu0 0.0
    %3322 = vmatprep.subr.mxu0 0.0
    %3323 = vmatpush1.xpose.msra.mxu0 0.0
    %3324 = vmatprep.subr.mxu0 0.0
    %3325 = vmatpush1.xpose.msra.mxu0 0.0
    %3326 = vmatprep.subr.mxu0 0.0
    %3327 = vmatpush1.xpose.msra.mxu0 0.0
    %3328 = vmatprep.subr.mxu0 0.0
    %3329 = vmatpush1.xpose.msra.mxu0 0.0
    %3330 = vmatprep.subr.mxu0 0.0
    %3331 = vmatpush1.xpose.msra.mxu0 0.0
    %3332 = vmatprep.subr.mxu0 0.0
    %3333 = vmatpush1.xpose.msra.mxu0 0.0
    %3334 = vmatprep.subr.mxu0 0.0
    %3335 = vmatpush1.xpose.msra.mxu0 0.0
    %3336 = vmatprep.subr.mxu0 0.0
    %3337 = vmatpush1.xpose.msra.mxu0 0.0
    %3338 = vmatprep.subr.mxu0 0.0
    %3339 = vmatpush1.xpose.msra.mxu0 0.0
    %3340 = vmatprep.subr.mxu0 0.0
    %3341 = vmatpush1.xpose.msra.mxu0 0.0
    %3342 = vmatprep.subr.mxu0 0.0
    %3343 = vmatpush1.xpose.msra.mxu0 0.0
    %3344 = vmatprep.subr.mxu0 0.0
    %3345 = vmatpush1.xpose.msra.mxu0 0.0
    %3346 = vmatprep.subr.mxu0 0.0
    %3347 = vmatpush1.xpose.msra.mxu0 0.0
    %3348 = vmatprep.subr.mxu0 0.0
    %3349 = vmatpush1.xpose.msra.mxu0 0.0
    %3350 = vmatprep.subr.mxu0 0.0
    %3351 = vmatpush1.xpose.msra.mxu0 0.0
    %3352 = vmatprep.subr.mxu0 0.0
    %3353 = vmatpush1.xpose.msra.mxu0 0.0
    %3354 = vmatprep.subr.mxu0 0.0
    %3355 = vmatpush1.xpose.msra.mxu0 0.0
    %3356 = vmatprep.subr.mxu0 0.0
    %3357 = vmatpush1.xpose.msra.mxu0 0.0
    %3358 = vmatprep.subr.mxu0 0.0
    %3359 = vmatpush1.xpose.msra.mxu0 0.0
    %3360 = vmatprep.subr.mxu0 0.0
    %3361 = vmatpush1.xpose.msra.mxu0 0.0
    %3362 = vmatprep.subr.mxu0 0.0
    %3363 = vmatpush1.xpose.msra.mxu0 0.0
    %3364 = vmatprep.subr.mxu0 0.0
    %3365 = vmatpush1.xpose.msra.mxu0 0.0
    %3366 = vmatprep.mubr.f32.mxu0 0.0
    %v3367 = vand.u32 %v2923, 4294901760
    %3368 = vmatmul.mubr.f32.gmra.mrb[0].mxu0 %v3367
    %v3369 = vpop.f32.mrb[0].mxu0
    %v3370 = vadd.f32 %v3298, %v3369
    %v3371 = vpop.f32.mrb[0].mxu0
    %3372 = vdwg.mxu0
    %v3373 = vsel %vm635, %v2916, -inf
    %3374 = vmax.xlane.f32.xlu0 %v3373
    %v3375 = vpop.xlane.xlu0 %3374
    %v3376 = vsel %vm635, %v3370, -inf
    %3377 = vmax.xlane.f32.xlu0 %v3376
    %v3378 = vpop.xlane.xlu0 %3377
    %v3379 = vsub.f32 %v2916, %v3375
    %v3380 = vsub.f32 %v3370, %v3378
    %v3381 = vmul.f32 %v3379, 1.442695
    %v3382 = vpow.pop %v3381
    %v3383 = vmul.f32 %v3380, 1.442695
    %v3384 = vpow.pop %v3383
    %v3385 = vsel %vm635, %v3382, 0.0
    %3386 = vadd.xlane.f32.xlu0 %v3385
    %v3387 = vpop.xlane.xlu0 %3386
    %v3388 = vsel %vm635, %v3384, 0.0
    %3389 = vadd.xlane.f32.xlu0 %v3388
    %v3390 = vpop.xlane.xlu0 %3389
    %v3391 = vrcp.pop %v3387
    %v3392 = vrcp.pop %v3390
    %v3393 = vmul.f32 %v3382, %v3391
    %v3394 = vmul.f32 %v3384, %v3392
    %3395 = vrot.lane.b32.xlu0 %v623, 56
    %v3396 = vpop.permute.xlu0 %3395
    %v3399 = vsel %vm635, %v3393, 0
    %3401 = vmatprep.subr.mxu0 0.0
    %v3402 = vand.u32 %v3396, 4294901760
    %3403 = vmatpush1.msra.mxu0 %v3402
    %3404 = vmatprep.subr.mxu0 0.0
    %3405 = vmatpush1.msra.mxu0 0.0
    %3406 = vmatprep.subr.mxu0 0.0
    %3407 = vmatpush1.msra.mxu0 0.0
    %3408 = vmatprep.subr.mxu0 0.0
    %3409 = vmatpush1.msra.mxu0 0.0
    %3410 = vmatprep.subr.mxu0 0.0
    %3411 = vmatpush1.msra.mxu0 0.0
    %3412 = vmatprep.subr.mxu0 0.0
    %3413 = vmatpush1.msra.mxu0 0.0
    %3414 = vmatprep.subr.mxu0 0.0
    %3415 = vmatpush1.msra.mxu0 0.0
    %3416 = vmatprep.subr.mxu0 0.0
    %3417 = vmatpush1.msra.mxu0 0.0
    %3418 = vmatprep.subr.mxu0 0.0
    %3419 = vmatpush1.msra.mxu0 0.0
    %3420 = vmatprep.subr.mxu0 0.0
    %3421 = vmatpush1.msra.mxu0 0.0
    %3422 = vmatprep.subr.mxu0 0.0
    %3423 = vmatpush1.msra.mxu0 0.0
    %3424 = vmatprep.subr.mxu0 0.0
    %3425 = vmatpush1.msra.mxu0 0.0
    %3426 = vmatprep.subr.mxu0 0.0
    %3427 = vmatpush1.msra.mxu0 0.0
    %3428 = vmatprep.subr.mxu0 0.0
    %3429 = vmatpush1.msra.mxu0 0.0
    %3430 = vmatprep.subr.mxu0 0.0
    %3431 = vmatpush1.msra.mxu0 0.0
    %3432 = vmatprep.subr.mxu0 0.0
    %3433 = vmatpush1.msra.mxu0 0.0
    %3434 = vmatprep.subr.mxu0 0.0
    %3435 = vmatpush1.msra.mxu0 0.0
    %3436 = vmatprep.subr.mxu0 0.0
    %3437 = vmatpush1.msra.mxu0 0.0
    %3438 = vmatprep.subr.mxu0 0.0
    %3439 = vmatpush1.msra.mxu0 0.0
    %3440 = vmatprep.subr.mxu0 0.0
    %3441 = vmatpush1.msra.mxu0 0.0
    %3442 = vmatprep.subr.mxu0 0.0
    %3443 = vmatpush1.msra.mxu0 0.0
    %3444 = vmatprep.subr.mxu0 0.0
    %3445 = vmatpush1.msra.mxu0 0.0
    %3446 = vmatprep.subr.mxu0 0.0
    %3447 = vmatpush1.msra.mxu0 0.0
    %3448 = vmatprep.subr.mxu0 0.0
    %3449 = vmatpush1.msra.mxu0 0.0
    %3450 = vmatprep.subr.mxu0 0.0
    %3451 = vmatpush1.msra.mxu0 0.0
    %3452 = vmatprep.subr.mxu0 0.0
    %3453 = vmatpush1.msra.mxu0 0.0
    %3454 = vmatprep.subr.mxu0 0.0
    %3455 = vmatpush1.msra.mxu0 0.0
    %3456 = vmatprep.subr.mxu0 0.0
    %3457 = vmatpush1.msra.mxu0 0.0
    %3458 = vmatprep.subr.mxu0 0.0
    %3459 = vmatpush1.msra.mxu0 0.0
    %3460 = vmatprep.subr.mxu0 0.0
    %3461 = vmatpush1.msra.mxu0 0.0
    %3462 = vmatprep.subr.mxu0 0.0
    %3463 = vmatpush1.msra.mxu0 0.0
    %3464 = vmatprep.subr.mxu0 0.0
    %3465 = vmatpush1.msra.mxu0 0.0
    %3466 = vmatprep.mubr.f32.mxu0 0.0
    %v3467 = vand.u32 %v3399, 4294901760
    %v3468 = vsub.f32 %v3399, %v3467
    %v3469 = vand.u32 %v3468, 4294901760
    %v3470 = vsub.f32 %v3468, %v3469
    %v3471 = vand.u32 %v3470, 4294901760
    %3472 = vmatmul.mubr.f32.gmra.mrb[0].mxu0 %v3471
    %v3473 = vpop.f32.mrb[0].mxu0
    %v3474 = vadd.f32 0.0, %v3473
    %v3475 = vpop.f32.mrb[0].mxu0
    %3476 = vdwg.mxu0
    %3477 = vmatprep.subr.mxu0 0.0
    %v3478 = vand.u32 %v3396, 4294901760
    %v3479 = vsub.f32 %v3396, %v3478
    %v3480 = vand.u32 %v3479, 4294901760
    %v3481 = vsub.f32 %v3479, %v3480
    %v3482 = vand.u32 %v3481, 4294901760
    %3483 = vmatpush1.msra.mxu0 %v3482
    %3484 = vmatprep.subr.mxu0 0.0
    %3485 = vmatpush1.msra.mxu0 0.0
    %3486 = vmatprep.subr.mxu0 0.0
    %3487 = vmatpush1.msra.mxu0 0.0
    %3488 = vmatprep.subr.mxu0 0.0
    %3489 = vmatpush1.msra.mxu0 0.0
    %3490 = vmatprep.subr.mxu0 0.0
    %3491 = vmatpush1.msra.mxu0 0.0
    %3492 = vmatprep.subr.mxu0 0.0
    %3493 = vmatpush1.msra.mxu0 0.0
    %3494 = vmatprep.subr.mxu0 0.0
    %3495 = vmatpush1.msra.mxu0 0.0
    %3496 = vmatprep.subr.mxu0 0.0
    %3497 = vmatpush1.msra.mxu0 0.0
    %3498 = vmatprep.subr.mxu0 0.0
    %3499 = vmatpush1.msra.mxu0 0.0
    %3500 = vmatprep.subr.mxu0 0.0
    %3501 = vmatpush1.msra.mxu0 0.0
    %3502 = vmatprep.subr.mxu0 0.0
    %3503 = vmatpush1.msra.mxu0 0.0
    %3504 = vmatprep.subr.mxu0 0.0
    %3505 = vmatpush1.msra.mxu0 0.0
    %3506 = vmatprep.subr.mxu0 0.0
    %3507 = vmatpush1.msra.mxu0 0.0
    %3508 = vmatprep.subr.mxu0 0.0
    %3509 = vmatpush1.msra.mxu0 0.0
    %3510 = vmatprep.subr.mxu0 0.0
    %3511 = vmatpush1.msra.mxu0 0.0
    %3512 = vmatprep.subr.mxu0 0.0
    %3513 = vmatpush1.msra.mxu0 0.0
    %3514 = vmatprep.subr.mxu0 0.0
    %3515 = vmatpush1.msra.mxu0 0.0
    %3516 = vmatprep.subr.mxu0 0.0
    %3517 = vmatpush1.msra.mxu0 0.0
    %3518 = vmatprep.subr.mxu0 0.0
    %3519 = vmatpush1.msra.mxu0 0.0
    %3520 = vmatprep.subr.mxu0 0.0
    %3521 = vmatpush1.msra.mxu0 0.0
    %3522 = vmatprep.subr.mxu0 0.0
    %3523 = vmatpush1.msra.mxu0 0.0
    %3524 = vmatprep.subr.mxu0 0.0
    %3525 = vmatpush1.msra.mxu0 0.0
    %3526 = vmatprep.subr.mxu0 0.0
    %3527 = vmatpush1.msra.mxu0 0.0
    %3528 = vmatprep.subr.mxu0 0.0
    %3529 = vmatpush1.msra.mxu0 0.0
    %3530 = vmatprep.subr.mxu0 0.0
    %3531 = vmatpush1.msra.mxu0 0.0
    %3532 = vmatprep.subr.mxu0 0.0
    %3533 = vmatpush1.msra.mxu0 0.0
    %3534 = vmatprep.subr.mxu0 0.0
    %3535 = vmatpush1.msra.mxu0 0.0
    %3536 = vmatprep.subr.mxu0 0.0
    %3537 = vmatpush1.msra.mxu0 0.0
    %3538 = vmatprep.subr.mxu0 0.0
    %3539 = vmatpush1.msra.mxu0 0.0
    %3540 = vmatprep.subr.mxu0 0.0
    %3541 = vmatpush1.msra.mxu0 0.0
    %3542 = vmatprep.subr.mxu0 0.0
    %3543 = vmatpush1.msra.mxu0 0.0
    %3544 = vmatprep.subr.mxu0 0.0
    %3545 = vmatpush1.msra.mxu0 0.0
    %3546 = vmatprep.mubr.f32.mxu0 0.0
    %v3547 = vand.u32 %v3399, 4294901760
    %3548 = vmatmul.mubr.f32.gmra.mrb[0].mxu0 %v3547
    %v3549 = vpop.f32.mrb[0].mxu0
    %v3550 = vadd.f32 %v3474, %v3549
    %v3551 = vpop.f32.mrb[0].mxu0
    %3552 = vdwg.mxu0
    %3553 = vmatprep.subr.mxu0 0.0
    %v3554 = vand.u32 %v3396, 4294901760
    %v3555 = vsub.f32 %v3396, %v3554
    %3556 = vmatpush1.msra.mxu0 %v3555
    %3557 = vmatprep.subr.mxu0 0.0
    %3558 = vmatpush1.msra.mxu0 0.0
    %3559 = vmatprep.subr.mxu0 0.0
    %3560 = vmatpush1.msra.mxu0 0.0
    %3561 = vmatprep.subr.mxu0 0.0
    %3562 = vmatpush1.msra.mxu0 0.0
    %3563 = vmatprep.subr.mxu0 0.0
    %3564 = vmatpush1.msra.mxu0 0.0
    %3565 = vmatprep.subr.mxu0 0.0
    %3566 = vmatpush1.msra.mxu0 0.0
    %3567 = vmatprep.subr.mxu0 0.0
    %3568 = vmatpush1.msra.mxu0 0.0
    %3569 = vmatprep.subr.mxu0 0.0
    %3570 = vmatpush1.msra.mxu0 0.0
    %3571 = vmatprep.subr.mxu0 0.0
    %3572 = vmatpush1.msra.mxu0 0.0
    %3573 = vmatprep.subr.mxu0 0.0
    %3574 = vmatpush1.msra.mxu0 0.0
    %3575 = vmatprep.subr.mxu0 0.0
    %3576 = vmatpush1.msra.mxu0 0.0
    %3577 = vmatprep.subr.mxu0 0.0
    %3578 = vmatpush1.msra.mxu0 0.0
    %3579 = vmatprep.subr.mxu0 0.0
    %3580 = vmatpush1.msra.mxu0 0.0
    %3581 = vmatprep.subr.mxu0 0.0
    %3582 = vmatpush1.msra.mxu0 0.0
    %3583 = vmatprep.subr.mxu0 0.0
    %3584 = vmatpush1.msra.mxu0 0.0
    %3585 = vmatprep.subr.mxu0 0.0
    %3586 = vmatpush1.msra.mxu0 0.0
    %3587 = vmatprep.subr.mxu0 0.0
    %3588 = vmatpush1.msra.mxu0 0.0
    %3589 = vmatprep.subr.mxu0 0.0
    %3590 = vmatpush1.msra.mxu0 0.0
    %3591 = vmatprep.subr.mxu0 0.0
    %3592 = vmatpush1.msra.mxu0 0.0
    %3593 = vmatprep.subr.mxu0 0.0
    %3594 = vmatpush1.msra.mxu0 0.0
    %3595 = vmatprep.subr.mxu0 0.0
    %3596 = vmatpush1.msra.mxu0 0.0
    %3597 = vmatprep.subr.mxu0 0.0
    %3598 = vmatpush1.msra.mxu0 0.0
    %3599 = vmatprep.subr.mxu0 0.0
    %3600 = vmatpush1.msra.mxu0 0.0
    %3601 = vmatprep.subr.mxu0 0.0
    %3602 = vmatpush1.msra.mxu0 0.0
    %3603 = vmatprep.subr.mxu0 0.0
    %3604 = vmatpush1.msra.mxu0 0.0
    %3605 = vmatprep.subr.mxu0 0.0
    %3606 = vmatpush1.msra.mxu0 0.0
    %3607 = vmatprep.subr.mxu0 0.0
    %3608 = vmatpush1.msra.mxu0 0.0
    %3609 = vmatprep.subr.mxu0 0.0
    %3610 = vmatpush1.msra.mxu0 0.0
    %3611 = vmatprep.subr.mxu0 0.0
    %3612 = vmatpush1.msra.mxu0 0.0
    %3613 = vmatprep.subr.mxu0 0.0
    %3614 = vmatpush1.msra.mxu0 0.0
    %3615 = vmatprep.subr.mxu0 0.0
    %3616 = vmatpush1.msra.mxu0 0.0
    %3617 = vmatprep.subr.mxu0 0.0
    %3618 = vmatpush1.msra.mxu0 0.0
    %3619 = vmatprep.mubr.f32.mxu0 0.0
    %v3620 = vand.u32 %v3399, 4294901760
    %v3621 = vsub.f32 %v3399, %v3620
    %3622 = vmatmul.mubr.f32.gmra.mrb[0].mxu0 %v3621
    %v3623 = vpop.f32.mrb[0].mxu0
    %v3624 = vadd.f32 %v3550, %v3623
    %v3625 = vpop.f32.mrb[0].mxu0
    %3626 = vdwg.mxu0
    %3627 = vmatprep.subr.mxu0 0.0
    %v3628 = vand.u32 %v3396, 4294901760
    %3629 = vmatpush1.msra.mxu0 %v3628
    %3630 = vmatprep.subr.mxu0 0.0
    %3631 = vmatpush1.msra.mxu0 0.0
    %3632 = vmatprep.subr.mxu0 0.0
    %3633 = vmatpush1.msra.mxu0 0.0
    %3634 = vmatprep.subr.mxu0 0.0
    %3635 = vmatpush1.msra.mxu0 0.0
    %3636 = vmatprep.subr.mxu0 0.0
    %3637 = vmatpush1.msra.mxu0 0.0
    %3638 = vmatprep.subr.mxu0 0.0
    %3639 = vmatpush1.msra.mxu0 0.0
    %3640 = vmatprep.subr.mxu0 0.0
    %3641 = vmatpush1.msra.mxu0 0.0
    %3642 = vmatprep.subr.mxu0 0.0
    %3643 = vmatpush1.msra.mxu0 0.0
    %3644 = vmatprep.subr.mxu0 0.0
    %3645 = vmatpush1.msra.mxu0 0.0
    %3646 = vmatprep.subr.mxu0 0.0
    %3647 = vmatpush1.msra.mxu0 0.0
    %3648 = vmatprep.subr.mxu0 0.0
    %3649 = vmatpush1.msra.mxu0 0.0
    %3650 = vmatprep.subr.mxu0 0.0
    %3651 = vmatpush1.msra.mxu0 0.0
    %3652 = vmatprep.subr.mxu0 0.0
    %3653 = vmatpush1.msra.mxu0 0.0
    %3654 = vmatprep.subr.mxu0 0.0
    %3655 = vmatpush1.msra.mxu0 0.0
    %3656 = vmatprep.subr.mxu0 0.0
    %3657 = vmatpush1.msra.mxu0 0.0
    %3658 = vmatprep.subr.mxu0 0.0
    %3659 = vmatpush1.msra.mxu0 0.0
    %3660 = vmatprep.subr.mxu0 0.0
    %3661 = vmatpush1.msra.mxu0 0.0
    %3662 = vmatprep.subr.mxu0 0.0
    %3663 = vmatpush1.msra.mxu0 0.0
    %3664 = vmatprep.subr.mxu0 0.0
    %3665 = vmatpush1.msra.mxu0 0.0
    %3666 = vmatprep.subr.mxu0 0.0
    %3667 = vmatpush1.msra.mxu0 0.0
    %3668 = vmatprep.subr.mxu0 0.0
    %3669 = vmatpush1.msra.mxu0 0.0
    %3670 = vmatprep.subr.mxu0 0.0
    %3671 = vmatpush1.msra.mxu0 0.0
    %3672 = vmatprep.subr.mxu0 0.0
    %3673 = vmatpush1.msra.mxu0 0.0
    %3674 = vmatprep.subr.mxu0 0.0
    %3675 = vmatpush1.msra.mxu0 0.0
    %3676 = vmatprep.subr.mxu0 0.0
    %3677 = vmatpush1.msra.mxu0 0.0
    %3678 = vmatprep.subr.mxu0 0.0
    %3679 = vmatpush1.msra.mxu0 0.0
    %3680 = vmatprep.subr.mxu0 0.0
    %3681 = vmatpush1.msra.mxu0 0.0
    %3682 = vmatprep.subr.mxu0 0.0
    %3683 = vmatpush1.msra.mxu0 0.0
    %3684 = vmatprep.subr.mxu0 0.0
    %3685 = vmatpush1.msra.mxu0 0.0
    %3686 = vmatprep.subr.mxu0 0.0
    %3687 = vmatpush1.msra.mxu0 0.0
    %3688 = vmatprep.subr.mxu0 0.0
    %3689 = vmatpush1.msra.mxu0 0.0
    %3690 = vmatprep.subr.mxu0 0.0
    %3691 = vmatpush1.msra.mxu0 0.0
    %3692 = vmatprep.mubr.f32.mxu0 0.0
    %v3693 = vand.u32 %v3399, 4294901760
    %v3694 = vsub.f32 %v3399, %v3693
    %v3695 = vand.u32 %v3694, 4294901760
    %3696 = vmatmul.mubr.f32.gmra.mrb[0].mxu0 %v3695
    %v3697 = vpop.f32.mrb[0].mxu0
    %v3698 = vadd.f32 %v3624, %v3697
    %v3699 = vpop.f32.mrb[0].mxu0
    %3700 = vdwg.mxu0
    %3701 = vmatprep.subr.mxu0 0.0
    %v3702 = vand.u32 %v3396, 4294901760
    %v3703 = vsub.f32 %v3396, %v3702
    %v3704 = vand.u32 %v3703, 4294901760
    %3705 = vmatpush1.msra.mxu0 %v3704
    %3706 = vmatprep.subr.mxu0 0.0
    %3707 = vmatpush1.msra.mxu0 0.0
    %3708 = vmatprep.subr.mxu0 0.0
    %3709 = vmatpush1.msra.mxu0 0.0
    %3710 = vmatprep.subr.mxu0 0.0
    %3711 = vmatpush1.msra.mxu0 0.0
    %3712 = vmatprep.subr.mxu0 0.0
    %3713 = vmatpush1.msra.mxu0 0.0
    %3714 = vmatprep.subr.mxu0 0.0
    %3715 = vmatpush1.msra.mxu0 0.0
    %3716 = vmatprep.subr.mxu0 0.0
    %3717 = vmatpush1.msra.mxu0 0.0
    %3718 = vmatprep.subr.mxu0 0.0
    %3719 = vmatpush1.msra.mxu0 0.0
    %3720 = vmatprep.subr.mxu0 0.0
    %3721 = vmatpush1.msra.mxu0 0.0
    %3722 = vmatprep.subr.mxu0 0.0
    %3723 = vmatpush1.msra.mxu0 0.0
    %3724 = vmatprep.subr.mxu0 0.0
    %3725 = vmatpush1.msra.mxu0 0.0
    %3726 = vmatprep.subr.mxu0 0.0
    %3727 = vmatpush1.msra.mxu0 0.0
    %3728 = vmatprep.subr.mxu0 0.0
    %3729 = vmatpush1.msra.mxu0 0.0
    %3730 = vmatprep.subr.mxu0 0.0
    %3731 = vmatpush1.msra.mxu0 0.0
    %3732 = vmatprep.subr.mxu0 0.0
    %3733 = vmatpush1.msra.mxu0 0.0
    %3734 = vmatprep.subr.mxu0 0.0
    %3735 = vmatpush1.msra.mxu0 0.0
    %3736 = vmatprep.subr.mxu0 0.0
    %3737 = vmatpush1.msra.mxu0 0.0
    %3738 = vmatprep.subr.mxu0 0.0
    %3739 = vmatpush1.msra.mxu0 0.0
    %3740 = vmatprep.subr.mxu0 0.0
    %3741 = vmatpush1.msra.mxu0 0.0
    %3742 = vmatprep.subr.mxu0 0.0
    %3743 = vmatpush1.msra.mxu0 0.0
    %3744 = vmatprep.subr.mxu0 0.0
    %3745 = vmatpush1.msra.mxu0 0.0
    %3746 = vmatprep.subr.mxu0 0.0
    %3747 = vmatpush1.msra.mxu0 0.0
    %3748 = vmatprep.subr.mxu0 0.0
    %3749 = vmatpush1.msra.mxu0 0.0
    %3750 = vmatprep.subr.mxu0 0.0
    %3751 = vmatpush1.msra.mxu0 0.0
    %3752 = vmatprep.subr.mxu0 0.0
    %3753 = vmatpush1.msra.mxu0 0.0
    %3754 = vmatprep.subr.mxu0 0.0
    %3755 = vmatpush1.msra.mxu0 0.0
    %3756 = vmatprep.subr.mxu0 0.0
    %3757 = vmatpush1.msra.mxu0 0.0
    %3758 = vmatprep.subr.mxu0 0.0
    %3759 = vmatpush1.msra.mxu0 0.0
    %3760 = vmatprep.subr.mxu0 0.0
    %3761 = vmatpush1.msra.mxu0 0.0
    %3762 = vmatprep.subr.mxu0 0.0
    %3763 = vmatpush1.msra.mxu0 0.0
    %3764 = vmatprep.subr.mxu0 0.0
    %3765 = vmatpush1.msra.mxu0 0.0
    %3766 = vmatprep.subr.mxu0 0.0
    %3767 = vmatpush1.msra.mxu0 0.0
    %3768 = vmatprep.mubr.f32.mxu0 0.0
    %v3769 = vand.u32 %v3399, 4294901760
    %3770 = vmatmul.mubr.f32.gmra.mrb[0].mxu0 %v3769
    %v3771 = vpop.f32.mrb[0].mxu0
    %v3772 = vadd.f32 %v3698, %v3771
    %v3773 = vpop.f32.mrb[0].mxu0
    %3774 = vdwg.mxu0
    %3775 = vmatprep.subr.mxu0 0.0
    %v3776 = vand.u32 %v3396, 4294901760
    %3777 = vmatpush1.msra.mxu0 %v3776
    %3778 = vmatprep.subr.mxu0 0.0
    %3779 = vmatpush1.msra.mxu0 0.0
    %3780 = vmatprep.subr.mxu0 0.0
    %3781 = vmatpush1.msra.mxu0 0.0
    %3782 = vmatprep.subr.mxu0 0.0
    %3783 = vmatpush1.msra.mxu0 0.0
    %3784 = vmatprep.subr.mxu0 0.0
    %3785 = vmatpush1.msra.mxu0 0.0
    %3786 = vmatprep.subr.mxu0 0.0
    %3787 = vmatpush1.msra.mxu0 0.0
    %3788 = vmatprep.subr.mxu0 0.0
    %3789 = vmatpush1.msra.mxu0 0.0
    %3790 = vmatprep.subr.mxu0 0.0
    %3791 = vmatpush1.msra.mxu0 0.0
    %3792 = vmatprep.subr.mxu0 0.0
    %3793 = vmatpush1.msra.mxu0 0.0
    %3794 = vmatprep.subr.mxu0 0.0
    %3795 = vmatpush1.msra.mxu0 0.0
    %3796 = vmatprep.subr.mxu0 0.0
    %3797 = vmatpush1.msra.mxu0 0.0
    %3798 = vmatprep.subr.mxu0 0.0
    %3799 = vmatpush1.msra.mxu0 0.0
    %3800 = vmatprep.subr.mxu0 0.0
    %3801 = vmatpush1.msra.mxu0 0.0
    %3802 = vmatprep.subr.mxu0 0.0
    %3803 = vmatpush1.msra.mxu0 0.0
    %3804 = vmatprep.subr.mxu0 0.0
    %3805 = vmatpush1.msra.mxu0 0.0
    %3806 = vmatprep.subr.mxu0 0.0
    %3807 = vmatpush1.msra.mxu0 0.0
    %3808 = vmatprep.subr.mxu0 0.0
    %3809 = vmatpush1.msra.mxu0 0.0
    %3810 = vmatprep.subr.mxu0 0.0
    %3811 = vmatpush1.msra.mxu0 0.0
    %3812 = vmatprep.subr.mxu0 0.0
    %3813 = vmatpush1.msra.mxu0 0.0
    %3814 = vmatprep.subr.mxu0 0.0
    %3815 = vmatpush1.msra.mxu0 0.0
    %3816 = vmatprep.subr.mxu0 0.0
    %3817 = vmatpush1.msra.mxu0 0.0
    %3818 = vmatprep.subr.mxu0 0.0
    %3819 = vmatpush1.msra.mxu0 0.0
    %3820 = vmatprep.subr.mxu0 0.0
    %3821 = vmatpush1.msra.mxu0 0.0
    %3822 = vmatprep.subr.mxu0 0.0
    %3823 = vmatpush1.msra.mxu0 0.0
    %3824 = vmatprep.subr.mxu0 0.0
    %3825 = vmatpush1.msra.mxu0 0.0
    %3826 = vmatprep.subr.mxu0 0.0
    %3827 = vmatpush1.msra.mxu0 0.0
    %3828 = vmatprep.subr.mxu0 0.0
    %3829 = vmatpush1.msra.mxu0 0.0
    %3830 = vmatprep.subr.mxu0 0.0
    %3831 = vmatpush1.msra.mxu0 0.0
    %3832 = vmatprep.subr.mxu0 0.0
    %3833 = vmatpush1.msra.mxu0 0.0
    %3834 = vmatprep.subr.mxu0 0.0
    %3835 = vmatpush1.msra.mxu0 0.0
    %3836 = vmatprep.subr.mxu0 0.0
    %3837 = vmatpush1.msra.mxu0 0.0
    %3838 = vmatprep.subr.mxu0 0.0
    %3839 = vmatpush1.msra.mxu0 0.0
    %3840 = vmatprep.mubr.f32.mxu0 0.0
    %v3841 = vand.u32 %v3399, 4294901760
    %3842 = vmatmul.mubr.f32.gmra.mrb[0].mxu0 %v3841
    %v3843 = vpop.f32.mrb[0].mxu0
    %v3844 = vadd.f32 %v3772, %v3843
    %v3845 = vpop.f32.mrb[0].mxu0
    %3846 = vdwg.mxu0
    %3847 = vrot.lane.b32.xlu0 %v629, 56
    %v3848 = vpop.permute.xlu0 %3847
    %v3851 = vsel %vm635, %v3394, 0
    %3853 = vmatprep.subr.mxu0 0.0
    %v3854 = vand.u32 %v3848, 4294901760
    %3855 = vmatpush1.msra.mxu0 %v3854
    %3856 = vmatprep.subr.mxu0 0.0
    %3857 = vmatpush1.msra.mxu0 0.0
    %3858 = vmatprep.subr.mxu0 0.0
    %3859 = vmatpush1.msra.mxu0 0.0
    %3860 = vmatprep.subr.mxu0 0.0
    %3861 = vmatpush1.msra.mxu0 0.0
    %3862 = vmatprep.subr.mxu0 0.0
    %3863 = vmatpush1.msra.mxu0 0.0
    %3864 = vmatprep.subr.mxu0 0.0
    %3865 = vmatpush1.msra.mxu0 0.0
    %3866 = vmatprep.subr.mxu0 0.0
    %3867 = vmatpush1.msra.mxu0 0.0
    %3868 = vmatprep.subr.mxu0 0.0
    %3869 = vmatpush1.msra.mxu0 0.0
    %3870 = vmatprep.subr.mxu0 0.0
    %3871 = vmatpush1.msra.mxu0 0.0
    %3872 = vmatprep.subr.mxu0 0.0
    %3873 = vmatpush1.msra.mxu0 0.0
    %3874 = vmatprep.subr.mxu0 0.0
    %3875 = vmatpush1.msra.mxu0 0.0
    %3876 = vmatprep.subr.mxu0 0.0
    %3877 = vmatpush1.msra.mxu0 0.0
    %3878 = vmatprep.subr.mxu0 0.0
    %3879 = vmatpush1.msra.mxu0 0.0
    %3880 = vmatprep.subr.mxu0 0.0
    %3881 = vmatpush1.msra.mxu0 0.0
    %3882 = vmatprep.subr.mxu0 0.0
    %3883 = vmatpush1.msra.mxu0 0.0
    %3884 = vmatprep.subr.mxu0 0.0
    %3885 = vmatpush1.msra.mxu0 0.0
    %3886 = vmatprep.subr.mxu0 0.0
    %3887 = vmatpush1.msra.mxu0 0.0
    %3888 = vmatprep.subr.mxu0 0.0
    %3889 = vmatpush1.msra.mxu0 0.0
    %3890 = vmatprep.subr.mxu0 0.0
    %3891 = vmatpush1.msra.mxu0 0.0
    %3892 = vmatprep.subr.mxu0 0.0
    %3893 = vmatpush1.msra.mxu0 0.0
    %3894 = vmatprep.subr.mxu0 0.0
    %3895 = vmatpush1.msra.mxu0 0.0
    %3896 = vmatprep.subr.mxu0 0.0
    %3897 = vmatpush1.msra.mxu0 0.0
    %3898 = vmatprep.subr.mxu0 0.0
    %3899 = vmatpush1.msra.mxu0 0.0
    %3900 = vmatprep.subr.mxu0 0.0
    %3901 = vmatpush1.msra.mxu0 0.0
    %3902 = vmatprep.subr.mxu0 0.0
    %3903 = vmatpush1.msra.mxu0 0.0
    %3904 = vmatprep.subr.mxu0 0.0
    %3905 = vmatpush1.msra.mxu0 0.0
    %3906 = vmatprep.subr.mxu0 0.0
    %3907 = vmatpush1.msra.mxu0 0.0
    %3908 = vmatprep.subr.mxu0 0.0
    %3909 = vmatpush1.msra.mxu0 0.0
    %3910 = vmatprep.subr.mxu0 0.0
    %3911 = vmatpush1.msra.mxu0 0.0
    %3912 = vmatprep.subr.mxu0 0.0
    %3913 = vmatpush1.msra.mxu0 0.0
    %3914 = vmatprep.subr.mxu0 0.0
    %3915 = vmatpush1.msra.mxu0 0.0
    %3916 = vmatprep.subr.mxu0 0.0
    %3917 = vmatpush1.msra.mxu0 0.0
    %3918 = vmatprep.mubr.f32.mxu0 0.0
    %v3919 = vand.u32 %v3851, 4294901760
    %v3920 = vsub.f32 %v3851, %v3919
    %v3921 = vand.u32 %v3920, 4294901760
    %v3922 = vsub.f32 %v3920, %v3921
    %v3923 = vand.u32 %v3922, 4294901760
    %3924 = vmatmul.mubr.f32.gmra.mrb[0].mxu0 %v3923
    %v3925 = vpop.f32.mrb[0].mxu0
    %v3926 = vadd.f32 0.0, %v3925
    %v3927 = vpop.f32.mrb[0].mxu0
    %3928 = vdwg.mxu0
    %3929 = vmatprep.subr.mxu0 0.0
    %v3930 = vand.u32 %v3848, 4294901760
    %v3931 = vsub.f32 %v3848, %v3930
    %v3932 = vand.u32 %v3931, 4294901760
    %v3933 = vsub.f32 %v3931, %v3932
    %v3934 = vand.u32 %v3933, 4294901760
    %3935 = vmatpush1.msra.mxu0 %v3934
    %3936 = vmatprep.subr.mxu0 0.0
    %3937 = vmatpush1.msra.mxu0 0.0
    %3938 = vmatprep.subr.mxu0 0.0
    %3939 = vmatpush1.msra.mxu0 0.0
    %3940 = vmatprep.subr.mxu0 0.0
    %3941 = vmatpush1.msra.mxu0 0.0
    %3942 = vmatprep.subr.mxu0 0.0
    %3943 = vmatpush1.msra.mxu0 0.0
    %3944 = vmatprep.subr.mxu0 0.0
    %3945 = vmatpush1.msra.mxu0 0.0
    %3946 = vmatprep.subr.mxu0 0.0
    %3947 = vmatpush1.msra.mxu0 0.0
    %3948 = vmatprep.subr.mxu0 0.0
    %3949 = vmatpush1.msra.mxu0 0.0
    %3950 = vmatprep.subr.mxu0 0.0
    %3951 = vmatpush1.msra.mxu0 0.0
    %3952 = vmatprep.subr.mxu0 0.0
    %3953 = vmatpush1.msra.mxu0 0.0
    %3954 = vmatprep.subr.mxu0 0.0
    %3955 = vmatpush1.msra.mxu0 0.0
    %3956 = vmatprep.subr.mxu0 0.0
    %3957 = vmatpush1.msra.mxu0 0.0
    %3958 = vmatprep.subr.mxu0 0.0
    %3959 = vmatpush1.msra.mxu0 0.0
    %3960 = vmatprep.subr.mxu0 0.0
    %3961 = vmatpush1.msra.mxu0 0.0
    %3962 = vmatprep.subr.mxu0 0.0
    %3963 = vmatpush1.msra.mxu0 0.0
    %3964 = vmatprep.subr.mxu0 0.0
    %3965 = vmatpush1.msra.mxu0 0.0
    %3966 = vmatprep.subr.mxu0 0.0
    %3967 = vmatpush1.msra.mxu0 0.0
    %3968 = vmatprep.subr.mxu0 0.0
    %3969 = vmatpush1.msra.mxu0 0.0
    %3970 = vmatprep.subr.mxu0 0.0
    %3971 = vmatpush1.msra.mxu0 0.0
    %3972 = vmatprep.subr.mxu0 0.0
    %3973 = vmatpush1.msra.mxu0 0.0
    %3974 = vmatprep.subr.mxu0 0.0
    %3975 = vmatpush1.msra.mxu0 0.0
    %3976 = vmatprep.subr.mxu0 0.0
    %3977 = vmatpush1.msra.mxu0 0.0
    %3978 = vmatprep.subr.mxu0 0.0
    %3979 = vmatpush1.msra.mxu0 0.0
    %3980 = vmatprep.subr.mxu0 0.0
    %3981 = vmatpush1.msra.mxu0 0.0
    %3982 = vmatprep.subr.mxu0 0.0
    %3983 = vmatpush1.msra.mxu0 0.0
    %3984 = vmatprep.subr.mxu0 0.0
    %3985 = vmatpush1.msra.mxu0 0.0
    %3986 = vmatprep.subr.mxu0 0.0
    %3987 = vmatpush1.msra.mxu0 0.0
    %3988 = vmatprep.subr.mxu0 0.0
    %3989 = vmatpush1.msra.mxu0 0.0
    %3990 = vmatprep.subr.mxu0 0.0
    %3991 = vmatpush1.msra.mxu0 0.0
    %3992 = vmatprep.subr.mxu0 0.0
    %3993 = vmatpush1.msra.mxu0 0.0
    %3994 = vmatprep.subr.mxu0 0.0
    %3995 = vmatpush1.msra.mxu0 0.0
    %3996 = vmatprep.subr.mxu0 0.0
    %3997 = vmatpush1.msra.mxu0 0.0
    %3998 = vmatprep.mubr.f32.mxu0 0.0
    %v3999 = vand.u32 %v3851, 4294901760
    %4000 = vmatmul.mubr.f32.gmra.mrb[0].mxu0 %v3999
    %v4001 = vpop.f32.mrb[0].mxu0
    %v4002 = vadd.f32 %v3926, %v4001
    %v4003 = vpop.f32.mrb[0].mxu0
    %4004 = vdwg.mxu0
    %4005 = vmatprep.subr.mxu0 0.0
    %v4006 = vand.u32 %v3848, 4294901760
    %v4007 = vsub.f32 %v3848, %v4006
    %4008 = vmatpush1.msra.mxu0 %v4007
    %4009 = vmatprep.subr.mxu0 0.0
    %4010 = vmatpush1.msra.mxu0 0.0
    %4011 = vmatprep.subr.mxu0 0.0
    %4012 = vmatpush1.msra.mxu0 0.0
    %4013 = vmatprep.subr.mxu0 0.0
    %4014 = vmatpush1.msra.mxu0 0.0
    %4015 = vmatprep.subr.mxu0 0.0
    %4016 = vmatpush1.msra.mxu0 0.0
    %4017 = vmatprep.subr.mxu0 0.0
    %4018 = vmatpush1.msra.mxu0 0.0
    %4019 = vmatprep.subr.mxu0 0.0
    %4020 = vmatpush1.msra.mxu0 0.0
    %4021 = vmatprep.subr.mxu0 0.0
    %4022 = vmatpush1.msra.mxu0 0.0
    %4023 = vmatprep.subr.mxu0 0.0
    %4024 = vmatpush1.msra.mxu0 0.0
    %4025 = vmatprep.subr.mxu0 0.0
    %4026 = vmatpush1.msra.mxu0 0.0
    %4027 = vmatprep.subr.mxu0 0.0
    %4028 = vmatpush1.msra.mxu0 0.0
    %4029 = vmatprep.subr.mxu0 0.0
    %4030 = vmatpush1.msra.mxu0 0.0
    %4031 = vmatprep.subr.mxu0 0.0
    %4032 = vmatpush1.msra.mxu0 0.0
    %4033 = vmatprep.subr.mxu0 0.0
    %4034 = vmatpush1.msra.mxu0 0.0
    %4035 = vmatprep.subr.mxu0 0.0
    %4036 = vmatpush1.msra.mxu0 0.0
    %4037 = vmatprep.subr.mxu0 0.0
    %4038 = vmatpush1.msra.mxu0 0.0
    %4039 = vmatprep.subr.mxu0 0.0
    %4040 = vmatpush1.msra.mxu0 0.0
    %4041 = vmatprep.subr.mxu0 0.0
    %4042 = vmatpush1.msra.mxu0 0.0
    %4043 = vmatprep.subr.mxu0 0.0
    %4044 = vmatpush1.msra.mxu0 0.0
    %4045 = vmatprep.subr.mxu0 0.0
    %4046 = vmatpush1.msra.mxu0 0.0
    %4047 = vmatprep.subr.mxu0 0.0
    %4048 = vmatpush1.msra.mxu0 0.0
    %4049 = vmatprep.subr.mxu0 0.0
    %4050 = vmatpush1.msra.mxu0 0.0
    %4051 = vmatprep.subr.mxu0 0.0
    %4052 = vmatpush1.msra.mxu0 0.0
    %4053 = vmatprep.subr.mxu0 0.0
    %4054 = vmatpush1.msra.mxu0 0.0
    %4055 = vmatprep.subr.mxu0 0.0
    %4056 = vmatpush1.msra.mxu0 0.0
    %4057 = vmatprep.subr.mxu0 0.0
    %4058 = vmatpush1.msra.mxu0 0.0
    %4059 = vmatprep.subr.mxu0 0.0
    %4060 = vmatpush1.msra.mxu0 0.0
    %4061 = vmatprep.subr.mxu0 0.0
    %4062 = vmatpush1.msra.mxu0 0.0
    %4063 = vmatprep.subr.mxu0 0.0
    %4064 = vmatpush1.msra.mxu0 0.0
    %4065 = vmatprep.subr.mxu0 0.0
    %4066 = vmatpush1.msra.mxu0 0.0
    %4067 = vmatprep.subr.mxu0 0.0
    %4068 = vmatpush1.msra.mxu0 0.0
    %4069 = vmatprep.subr.mxu0 0.0
    %4070 = vmatpush1.msra.mxu0 0.0
    %4071 = vmatprep.mubr.f32.mxu0 0.0
    %v4072 = vand.u32 %v3851, 4294901760
    %v4073 = vsub.f32 %v3851, %v4072
    %4074 = vmatmul.mubr.f32.gmra.mrb[0].mxu0 %v4073
    %v4075 = vpop.f32.mrb[0].mxu0
    %v4076 = vadd.f32 %v4002, %v4075
    %v4077 = vpop.f32.mrb[0].mxu0
    %4078 = vdwg.mxu0
    %4079 = vmatprep.subr.mxu0 0.0
    %v4080 = vand.u32 %v3848, 4294901760
    %4081 = vmatpush1.msra.mxu0 %v4080
    %4082 = vmatprep.subr.mxu0 0.0
    %4083 = vmatpush1.msra.mxu0 0.0
    %4084 = vmatprep.subr.mxu0 0.0
    %4085 = vmatpush1.msra.mxu0 0.0
    %4086 = vmatprep.subr.mxu0 0.0
    %4087 = vmatpush1.msra.mxu0 0.0
    %4088 = vmatprep.subr.mxu0 0.0
    %4089 = vmatpush1.msra.mxu0 0.0
    %4090 = vmatprep.subr.mxu0 0.0
    %4091 = vmatpush1.msra.mxu0 0.0
    %4092 = vmatprep.subr.mxu0 0.0
    %4093 = vmatpush1.msra.mxu0 0.0
    %4094 = vmatprep.subr.mxu0 0.0
    %4095 = vmatpush1.msra.mxu0 0.0
    %4096 = vmatprep.subr.mxu0 0.0
    %4097 = vmatpush1.msra.mxu0 0.0
    %4098 = vmatprep.subr.mxu0 0.0
    %4099 = vmatpush1.msra.mxu0 0.0
    %4100 = vmatprep.subr.mxu0 0.0
    %4101 = vmatpush1.msra.mxu0 0.0
    %4102 = vmatprep.subr.mxu0 0.0
    %4103 = vmatpush1.msra.mxu0 0.0
    %4104 = vmatprep.subr.mxu0 0.0
    %4105 = vmatpush1.msra.mxu0 0.0
    %4106 = vmatprep.subr.mxu0 0.0
    %4107 = vmatpush1.msra.mxu0 0.0
    %4108 = vmatprep.subr.mxu0 0.0
    %4109 = vmatpush1.msra.mxu0 0.0
    %4110 = vmatprep.subr.mxu0 0.0
    %4111 = vmatpush1.msra.mxu0 0.0
    %4112 = vmatprep.subr.mxu0 0.0
    %4113 = vmatpush1.msra.mxu0 0.0
    %4114 = vmatprep.subr.mxu0 0.0
    %4115 = vmatpush1.msra.mxu0 0.0
    %4116 = vmatprep.subr.mxu0 0.0
    %4117 = vmatpush1.msra.mxu0 0.0
    %4118 = vmatprep.subr.mxu0 0.0
    %4119 = vmatpush1.msra.mxu0 0.0
    %4120 = vmatprep.subr.mxu0 0.0
    %4121 = vmatpush1.msra.mxu0 0.0
    %4122 = vmatprep.subr.mxu0 0.0
    %4123 = vmatpush1.msra.mxu0 0.0
    %4124 = vmatprep.subr.mxu0 0.0
    %4125 = vmatpush1.msra.mxu0 0.0
    %4126 = vmatprep.subr.mxu0 0.0
    %4127 = vmatpush1.msra.mxu0 0.0
    %4128 = vmatprep.subr.mxu0 0.0
    %4129 = vmatpush1.msra.mxu0 0.0
    %4130 = vmatprep.subr.mxu0 0.0
    %4131 = vmatpush1.msra.mxu0 0.0
    %4132 = vmatprep.subr.mxu0 0.0
    %4133 = vmatpush1.msra.mxu0 0.0
    %4134 = vmatprep.subr.mxu0 0.0
    %4135 = vmatpush1.msra.mxu0 0.0
    %4136 = vmatprep.subr.mxu0 0.0
    %4137 = vmatpush1.msra.mxu0 0.0
    %4138 = vmatprep.subr.mxu0 0.0
    %4139 = vmatpush1.msra.mxu0 0.0
    %4140 = vmatprep.subr.mxu0 0.0
    %4141 = vmatpush1.msra.mxu0 0.0
    %4142 = vmatprep.subr.mxu0 0.0
    %4143 = vmatpush1.msra.mxu0 0.0
    %4144 = vmatprep.mubr.f32.mxu0 0.0
    %v4145 = vand.u32 %v3851, 4294901760
    %v4146 = vsub.f32 %v3851, %v4145
    %v4147 = vand.u32 %v4146, 4294901760
    %4148 = vmatmul.mubr.f32.gmra.mrb[0].mxu0 %v4147
    %v4149 = vpop.f32.mrb[0].mxu0
    %v4150 = vadd.f32 %v4076, %v4149
    %v4151 = vpop.f32.mrb[0].mxu0
    %4152 = vdwg.mxu0
    %4153 = vmatprep.subr.mxu0 0.0
    %v4154 = vand.u32 %v3848, 4294901760
    %v4155 = vsub.f32 %v3848, %v4154
    %v4156 = vand.u32 %v4155, 4294901760
    %4157 = vmatpush1.msra.mxu0 %v4156
    %4158 = vmatprep.subr.mxu0 0.0
    %4159 = vmatpush1.msra.mxu0 0.0
    %4160 = vmatprep.subr.mxu0 0.0
    %4161 = vmatpush1.msra.mxu0 0.0
    %4162 = vmatprep.subr.mxu0 0.0
    %4163 = vmatpush1.msra.mxu0 0.0
    %4164 = vmatprep.subr.mxu0 0.0
    %4165 = vmatpush1.msra.mxu0 0.0
    %4166 = vmatprep.subr.mxu0 0.0
    %4167 = vmatpush1.msra.mxu0 0.0
    %4168 = vmatprep.subr.mxu0 0.0
    %4169 = vmatpush1.msra.mxu0 0.0
    %4170 = vmatprep.subr.mxu0 0.0
    %4171 = vmatpush1.msra.mxu0 0.0
    %4172 = vmatprep.subr.mxu0 0.0
    %4173 = vmatpush1.msra.mxu0 0.0
    %4174 = vmatprep.subr.mxu0 0.0
    %4175 = vmatpush1.msra.mxu0 0.0
    %4176 = vmatprep.subr.mxu0 0.0
    %4177 = vmatpush1.msra.mxu0 0.0
    %4178 = vmatprep.subr.mxu0 0.0
    %4179 = vmatpush1.msra.mxu0 0.0
    %4180 = vmatprep.subr.mxu0 0.0
    %4181 = vmatpush1.msra.mxu0 0.0
    %4182 = vmatprep.subr.mxu0 0.0
    %4183 = vmatpush1.msra.mxu0 0.0
    %4184 = vmatprep.subr.mxu0 0.0
    %4185 = vmatpush1.msra.mxu0 0.0
    %4186 = vmatprep.subr.mxu0 0.0
    %4187 = vmatpush1.msra.mxu0 0.0
    %4188 = vmatprep.subr.mxu0 0.0
    %4189 = vmatpush1.msra.mxu0 0.0
    %4190 = vmatprep.subr.mxu0 0.0
    %4191 = vmatpush1.msra.mxu0 0.0
    %4192 = vmatprep.subr.mxu0 0.0
    %4193 = vmatpush1.msra.mxu0 0.0
    %4194 = vmatprep.subr.mxu0 0.0
    %4195 = vmatpush1.msra.mxu0 0.0
    %4196 = vmatprep.subr.mxu0 0.0
    %4197 = vmatpush1.msra.mxu0 0.0
    %4198 = vmatprep.subr.mxu0 0.0
    %4199 = vmatpush1.msra.mxu0 0.0
    %4200 = vmatprep.subr.mxu0 0.0
    %4201 = vmatpush1.msra.mxu0 0.0
    %4202 = vmatprep.subr.mxu0 0.0
    %4203 = vmatpush1.msra.mxu0 0.0
    %4204 = vmatprep.subr.mxu0 0.0
    %4205 = vmatpush1.msra.mxu0 0.0
    %4206 = vmatprep.subr.mxu0 0.0
    %4207 = vmatpush1.msra.mxu0 0.0
    %4208 = vmatprep.subr.mxu0 0.0
    %4209 = vmatpush1.msra.mxu0 0.0
    %4210 = vmatprep.subr.mxu0 0.0
    %4211 = vmatpush1.msra.mxu0 0.0
    %4212 = vmatprep.subr.mxu0 0.0
    %4213 = vmatpush1.msra.mxu0 0.0
    %4214 = vmatprep.subr.mxu0 0.0
    %4215 = vmatpush1.msra.mxu0 0.0
    %4216 = vmatprep.subr.mxu0 0.0
    %4217 = vmatpush1.msra.mxu0 0.0
    %4218 = vmatprep.subr.mxu0 0.0
    %4219 = vmatpush1.msra.mxu0 0.0
    %4220 = vmatprep.mubr.f32.mxu0 0.0
    %v4221 = vand.u32 %v3851, 4294901760
    %4222 = vmatmul.mubr.f32.gmra.mrb[0].mxu0 %v4221
    %v4223 = vpop.f32.mrb[0].mxu0
    %v4224 = vadd.f32 %v4150, %v4223
    %v4225 = vpop.f32.mrb[0].mxu0
    %4226 = vdwg.mxu0
    %4227 = vmatprep.subr.mxu0 0.0
    %v4228 = vand.u32 %v3848, 4294901760
    %4229 = vmatpush1.msra.mxu0 %v4228
    %4230 = vmatprep.subr.mxu0 0.0
    %4231 = vmatpush1.msra.mxu0 0.0
    %4232 = vmatprep.subr.mxu0 0.0
    %4233 = vmatpush1.msra.mxu0 0.0
    %4234 = vmatprep.subr.mxu0 0.0
    %4235 = vmatpush1.msra.mxu0 0.0
    %4236 = vmatprep.subr.mxu0 0.0
    %4237 = vmatpush1.msra.mxu0 0.0
    %4238 = vmatprep.subr.mxu0 0.0
    %4239 = vmatpush1.msra.mxu0 0.0
    %4240 = vmatprep.subr.mxu0 0.0
    %4241 = vmatpush1.msra.mxu0 0.0
    %4242 = vmatprep.subr.mxu0 0.0
    %4243 = vmatpush1.msra.mxu0 0.0
    %4244 = vmatprep.subr.mxu0 0.0
    %4245 = vmatpush1.msra.mxu0 0.0
    %4246 = vmatprep.subr.mxu0 0.0
    %4247 = vmatpush1.msra.mxu0 0.0
    %4248 = vmatprep.subr.mxu0 0.0
    %4249 = vmatpush1.msra.mxu0 0.0
    %4250 = vmatprep.subr.mxu0 0.0
    %4251 = vmatpush1.msra.mxu0 0.0
    %4252 = vmatprep.subr.mxu0 0.0
    %4253 = vmatpush1.msra.mxu0 0.0
    %4254 = vmatprep.subr.mxu0 0.0
    %4255 = vmatpush1.msra.mxu0 0.0
    %4256 = vmatprep.subr.mxu0 0.0
    %4257 = vmatpush1.msra.mxu0 0.0
    %4258 = vmatprep.subr.mxu0 0.0
    %4259 = vmatpush1.msra.mxu0 0.0
    %4260 = vmatprep.subr.mxu0 0.0
    %4261 = vmatpush1.msra.mxu0 0.0
    %4262 = vmatprep.subr.mxu0 0.0
    %4263 = vmatpush1.msra.mxu0 0.0
    %4264 = vmatprep.subr.mxu0 0.0
    %4265 = vmatpush1.msra.mxu0 0.0
    %4266 = vmatprep.subr.mxu0 0.0
    %4267 = vmatpush1.msra.mxu0 0.0
    %4268 = vmatprep.subr.mxu0 0.0
    %4269 = vmatpush1.msra.mxu0 0.0
    %4270 = vmatprep.subr.mxu0 0.0
    %4271 = vmatpush1.msra.mxu0 0.0
    %4272 = vmatprep.subr.mxu0 0.0
    %4273 = vmatpush1.msra.mxu0 0.0
    %4274 = vmatprep.subr.mxu0 0.0
    %4275 = vmatpush1.msra.mxu0 0.0
    %4276 = vmatprep.subr.mxu0 0.0
    %4277 = vmatpush1.msra.mxu0 0.0
    %4278 = vmatprep.subr.mxu0 0.0
    %4279 = vmatpush1.msra.mxu0 0.0
    %4280 = vmatprep.subr.mxu0 0.0
    %4281 = vmatpush1.msra.mxu0 0.0
    %4282 = vmatprep.subr.mxu0 0.0
    %4283 = vmatpush1.msra.mxu0 0.0
    %4284 = vmatprep.subr.mxu0 0.0
    %4285 = vmatpush1.msra.mxu0 0.0
    %4286 = vmatprep.subr.mxu0 0.0
    %4287 = vmatpush1.msra.mxu0 0.0
    %4288 = vmatprep.subr.mxu0 0.0
    %4289 = vmatpush1.msra.mxu0 0.0
    %4290 = vmatprep.subr.mxu0 0.0
    %4291 = vmatpush1.msra.mxu0 0.0
    %4292 = vmatprep.mubr.f32.mxu0 0.0
    %v4293 = vand.u32 %v3851, 4294901760
    %4294 = vmatmul.mubr.f32.gmra.mrb[0].mxu0 %v4293
    %v4295 = vpop.f32.mrb[0].mxu0
    %v4296 = vadd.f32 %v4224, %v4295
    %v4297 = vpop.f32.mrb[0].mxu0
    %4298 = vdwg.mxu0
    %4299 = vrot.lane.b32.xlu0 %v623, 112
    %v4300 = vpop.permute.xlu0 %4299
    %4301 = vrot.lane.b32.xlu0 %v623, 80
    %v4302 = vpop.permute.xlu0 %4301
    %v4303 = vsel %vm635, %v4300, 0
    %v4305 = vsel %vm635, %v4302, 0
    %4307 = vmatprep.subr.mxu0 0.0
    %v4308 = vand.u32 %v4305, 4294901760
    %4309 = vmatpush1.xpose.msra.mxu0 %v4308
    %4310 = vmatprep.subr.mxu0 0.0
    %4311 = vmatpush1.xpose.msra.mxu0 0.0
    %4312 = vmatprep.subr.mxu0 0.0
    %4313 = vmatpush1.xpose.msra.mxu0 0.0
    %4314 = vmatprep.subr.mxu0 0.0
    %4315 = vmatpush1.xpose.msra.mxu0 0.0
    %4316 = vmatprep.subr.mxu0 0.0
    %4317 = vmatpush1.xpose.msra.mxu0 0.0
    %4318 = vmatprep.subr.mxu0 0.0
    %4319 = vmatpush1.xpose.msra.mxu0 0.0
    %4320 = vmatprep.subr.mxu0 0.0
    %4321 = vmatpush1.xpose.msra.mxu0 0.0
    %4322 = vmatprep.subr.mxu0 0.0
    %4323 = vmatpush1.xpose.msra.mxu0 0.0
    %4324 = vmatprep.subr.mxu0 0.0
    %4325 = vmatpush1.xpose.msra.mxu0 0.0
    %4326 = vmatprep.subr.mxu0 0.0
    %4327 = vmatpush1.xpose.msra.mxu0 0.0
    %4328 = vmatprep.subr.mxu0 0.0
    %4329 = vmatpush1.xpose.msra.mxu0 0.0
    %4330 = vmatprep.subr.mxu0 0.0
    %4331 = vmatpush1.xpose.msra.mxu0 0.0
    %4332 = vmatprep.subr.mxu0 0.0
    %4333 = vmatpush1.xpose.msra.mxu0 0.0
    %4334 = vmatprep.subr.mxu0 0.0
    %4335 = vmatpush1.xpose.msra.mxu0 0.0
    %4336 = vmatprep.subr.mxu0 0.0
    %4337 = vmatpush1.xpose.msra.mxu0 0.0
    %4338 = vmatprep.subr.mxu0 0.0
    %4339 = vmatpush1.xpose.msra.mxu0 0.0
    %4340 = vmatprep.subr.mxu0 0.0
    %4341 = vmatpush1.xpose.msra.mxu0 0.0
    %4342 = vmatprep.subr.mxu0 0.0
    %4343 = vmatpush1.xpose.msra.mxu0 0.0
    %4344 = vmatprep.subr.mxu0 0.0
    %4345 = vmatpush1.xpose.msra.mxu0 0.0
    %4346 = vmatprep.subr.mxu0 0.0
    %4347 = vmatpush1.xpose.msra.mxu0 0.0
    %4348 = vmatprep.subr.mxu0 0.0
    %4349 = vmatpush1.xpose.msra.mxu0 0.0
    %4350 = vmatprep.subr.mxu0 0.0
    %4351 = vmatpush1.xpose.msra.mxu0 0.0
    %4352 = vmatprep.subr.mxu0 0.0
    %4353 = vmatpush1.xpose.msra.mxu0 0.0
    %4354 = vmatprep.subr.mxu0 0.0
    %4355 = vmatpush1.xpose.msra.mxu0 0.0
    %4356 = vmatprep.subr.mxu0 0.0
    %4357 = vmatpush1.xpose.msra.mxu0 0.0
    %4358 = vmatprep.subr.mxu0 0.0
    %4359 = vmatpush1.xpose.msra.mxu0 0.0
    %4360 = vmatprep.subr.mxu0 0.0
    %4361 = vmatpush1.xpose.msra.mxu0 0.0
    %4362 = vmatprep.subr.mxu0 0.0
    %4363 = vmatpush1.xpose.msra.mxu0 0.0
    %4364 = vmatprep.subr.mxu0 0.0
    %4365 = vmatpush1.xpose.msra.mxu0 0.0
    %4366 = vmatprep.subr.mxu0 0.0
    %4367 = vmatpush1.xpose.msra.mxu0 0.0
    %4368 = vmatprep.subr.mxu0 0.0
    %4369 = vmatpush1.xpose.msra.mxu0 0.0
    %4370 = vmatprep.subr.mxu0 0.0
    %4371 = vmatpush1.xpose.msra.mxu0 0.0
    %4372 = vmatprep.mubr.f32.mxu0 0.0
    %v4373 = vand.u32 %v4303, 4294901760
    %v4374 = vsub.f32 %v4303, %v4373
    %v4375 = vand.u32 %v4374, 4294901760
    %v4376 = vsub.f32 %v4374, %v4375
    %v4377 = vand.u32 %v4376, 4294901760
    %4378 = vmatmul.mubr.f32.gmra.mrb[0].mxu0 %v4377
    %v4379 = vpop.f32.mrb[0].mxu0
    %v4380 = vadd.f32 0.0, %v4379
    %v4381 = vpop.f32.mrb[0].mxu0
    %4382 = vdwg.mxu0
    %4383 = vmatprep.subr.mxu0 0.0
    %v4384 = vand.u32 %v4305, 4294901760
    %v4385 = vsub.f32 %v4305, %v4384
    %v4386 = vand.u32 %v4385, 4294901760
    %v4387 = vsub.f32 %v4385, %v4386
    %v4388 = vand.u32 %v4387, 4294901760
    %4389 = vmatpush1.xpose.msra.mxu0 %v4388
    %4390 = vmatprep.subr.mxu0 0.0
    %4391 = vmatpush1.xpose.msra.mxu0 0.0
    %4392 = vmatprep.subr.mxu0 0.0
    %4393 = vmatpush1.xpose.msra.mxu0 0.0
    %4394 = vmatprep.subr.mxu0 0.0
    %4395 = vmatpush1.xpose.msra.mxu0 0.0
    %4396 = vmatprep.subr.mxu0 0.0
    %4397 = vmatpush1.xpose.msra.mxu0 0.0
    %4398 = vmatprep.subr.mxu0 0.0
    %4399 = vmatpush1.xpose.msra.mxu0 0.0
    %4400 = vmatprep.subr.mxu0 0.0
    %4401 = vmatpush1.xpose.msra.mxu0 0.0
    %4402 = vmatprep.subr.mxu0 0.0
    %4403 = vmatpush1.xpose.msra.mxu0 0.0
    %4404 = vmatprep.subr.mxu0 0.0
    %4405 = vmatpush1.xpose.msra.mxu0 0.0
    %4406 = vmatprep.subr.mxu0 0.0
    %4407 = vmatpush1.xpose.msra.mxu0 0.0
    %4408 = vmatprep.subr.mxu0 0.0
    %4409 = vmatpush1.xpose.msra.mxu0 0.0
    %4410 = vmatprep.subr.mxu0 0.0
    %4411 = vmatpush1.xpose.msra.mxu0 0.0
    %4412 = vmatprep.subr.mxu0 0.0
    %4413 = vmatpush1.xpose.msra.mxu0 0.0
    %4414 = vmatprep.subr.mxu0 0.0
    %4415 = vmatpush1.xpose.msra.mxu0 0.0
    %4416 = vmatprep.subr.mxu0 0.0
    %4417 = vmatpush1.xpose.msra.mxu0 0.0
    %4418 = vmatprep.subr.mxu0 0.0
    %4419 = vmatpush1.xpose.msra.mxu0 0.0
    %4420 = vmatprep.subr.mxu0 0.0
    %4421 = vmatpush1.xpose.msra.mxu0 0.0
    %4422 = vmatprep.subr.mxu0 0.0
    %4423 = vmatpush1.xpose.msra.mxu0 0.0
    %4424 = vmatprep.subr.mxu0 0.0
    %4425 = vmatpush1.xpose.msra.mxu0 0.0
    %4426 = vmatprep.subr.mxu0 0.0
    %4427 = vmatpush1.xpose.msra.mxu0 0.0
    %4428 = vmatprep.subr.mxu0 0.0
    %4429 = vmatpush1.xpose.msra.mxu0 0.0
    %4430 = vmatprep.subr.mxu0 0.0
    %4431 = vmatpush1.xpose.msra.mxu0 0.0
    %4432 = vmatprep.subr.mxu0 0.0
    %4433 = vmatpush1.xpose.msra.mxu0 0.0
    %4434 = vmatprep.subr.mxu0 0.0
    %4435 = vmatpush1.xpose.msra.mxu0 0.0
    %4436 = vmatprep.subr.mxu0 0.0
    %4437 = vmatpush1.xpose.msra.mxu0 0.0
    %4438 = vmatprep.subr.mxu0 0.0
    %4439 = vmatpush1.xpose.msra.mxu0 0.0
    %4440 = vmatprep.subr.mxu0 0.0
    %4441 = vmatpush1.xpose.msra.mxu0 0.0
    %4442 = vmatprep.subr.mxu0 0.0
    %4443 = vmatpush1.xpose.msra.mxu0 0.0
    %4444 = vmatprep.subr.mxu0 0.0
    %4445 = vmatpush1.xpose.msra.mxu0 0.0
    %4446 = vmatprep.subr.mxu0 0.0
    %4447 = vmatpush1.xpose.msra.mxu0 0.0
    %4448 = vmatprep.subr.mxu0 0.0
    %4449 = vmatpush1.xpose.msra.mxu0 0.0
    %4450 = vmatprep.subr.mxu0 0.0
    %4451 = vmatpush1.xpose.msra.mxu0 0.0
    %4452 = vmatprep.mubr.f32.mxu0 0.0
    %v4453 = vand.u32 %v4303, 4294901760
    %4454 = vmatmul.mubr.f32.gmra.mrb[0].mxu0 %v4453
    %v4455 = vpop.f32.mrb[0].mxu0
    %v4456 = vadd.f32 %v4380, %v4455
    %v4457 = vpop.f32.mrb[0].mxu0
    %4458 = vdwg.mxu0
    %4459 = vmatprep.subr.mxu0 0.0
    %v4460 = vand.u32 %v4305, 4294901760
    %v4461 = vsub.f32 %v4305, %v4460
    %4462 = vmatpush1.xpose.msra.mxu0 %v4461
    %4463 = vmatprep.subr.mxu0 0.0
    %4464 = vmatpush1.xpose.msra.mxu0 0.0
    %4465 = vmatprep.subr.mxu0 0.0
    %4466 = vmatpush1.xpose.msra.mxu0 0.0
    %4467 = vmatprep.subr.mxu0 0.0
    %4468 = vmatpush1.xpose.msra.mxu0 0.0
    %4469 = vmatprep.subr.mxu0 0.0
    %4470 = vmatpush1.xpose.msra.mxu0 0.0
    %4471 = vmatprep.subr.mxu0 0.0
    %4472 = vmatpush1.xpose.msra.mxu0 0.0
    %4473 = vmatprep.subr.mxu0 0.0
    %4474 = vmatpush1.xpose.msra.mxu0 0.0
    %4475 = vmatprep.subr.mxu0 0.0
    %4476 = vmatpush1.xpose.msra.mxu0 0.0
    %4477 = vmatprep.subr.mxu0 0.0
    %4478 = vmatpush1.xpose.msra.mxu0 0.0
    %4479 = vmatprep.subr.mxu0 0.0
    %4480 = vmatpush1.xpose.msra.mxu0 0.0
    %4481 = vmatprep.subr.mxu0 0.0
    %4482 = vmatpush1.xpose.msra.mxu0 0.0
    %4483 = vmatprep.subr.mxu0 0.0
    %4484 = vmatpush1.xpose.msra.mxu0 0.0
    %4485 = vmatprep.subr.mxu0 0.0
    %4486 = vmatpush1.xpose.msra.mxu0 0.0
    %4487 = vmatprep.subr.mxu0 0.0
    %4488 = vmatpush1.xpose.msra.mxu0 0.0
    %4489 = vmatprep.subr.mxu0 0.0
    %4490 = vmatpush1.xpose.msra.mxu0 0.0
    %4491 = vmatprep.subr.mxu0 0.0
    %4492 = vmatpush1.xpose.msra.mxu0 0.0
    %4493 = vmatprep.subr.mxu0 0.0
    %4494 = vmatpush1.xpose.msra.mxu0 0.0
    %4495 = vmatprep.subr.mxu0 0.0
    %4496 = vmatpush1.xpose.msra.mxu0 0.0
    %4497 = vmatprep.subr.mxu0 0.0
    %4498 = vmatpush1.xpose.msra.mxu0 0.0
    %4499 = vmatprep.subr.mxu0 0.0
    %4500 = vmatpush1.xpose.msra.mxu0 0.0
    %4501 = vmatprep.subr.mxu0 0.0
    %4502 = vmatpush1.xpose.msra.mxu0 0.0
    %4503 = vmatprep.subr.mxu0 0.0
    %4504 = vmatpush1.xpose.msra.mxu0 0.0
    %4505 = vmatprep.subr.mxu0 0.0
    %4506 = vmatpush1.xpose.msra.mxu0 0.0
    %4507 = vmatprep.subr.mxu0 0.0
    %4508 = vmatpush1.xpose.msra.mxu0 0.0
    %4509 = vmatprep.subr.mxu0 0.0
    %4510 = vmatpush1.xpose.msra.mxu0 0.0
    %4511 = vmatprep.subr.mxu0 0.0
    %4512 = vmatpush1.xpose.msra.mxu0 0.0
    %4513 = vmatprep.subr.mxu0 0.0
    %4514 = vmatpush1.xpose.msra.mxu0 0.0
    %4515 = vmatprep.subr.mxu0 0.0
    %4516 = vmatpush1.xpose.msra.mxu0 0.0
    %4517 = vmatprep.subr.mxu0 0.0
    %4518 = vmatpush1.xpose.msra.mxu0 0.0
    %4519 = vmatprep.subr.mxu0 0.0
    %4520 = vmatpush1.xpose.msra.mxu0 0.0
    %4521 = vmatprep.subr.mxu0 0.0
    %4522 = vmatpush1.xpose.msra.mxu0 0.0
    %4523 = vmatprep.subr.mxu0 0.0
    %4524 = vmatpush1.xpose.msra.mxu0 0.0
    %4525 = vmatprep.mubr.f32.mxu0 0.0
    %v4526 = vand.u32 %v4303, 4294901760
    %v4527 = vsub.f32 %v4303, %v4526
    %4528 = vmatmul.mubr.f32.gmra.mrb[0].mxu0 %v4527
    %v4529 = vpop.f32.mrb[0].mxu0
    %v4530 = vadd.f32 %v4456, %v4529
    %v4531 = vpop.f32.mrb[0].mxu0
    %4532 = vdwg.mxu0
    %4533 = vmatprep.subr.mxu0 0.0
    %v4534 = vand.u32 %v4305, 4294901760
    %4535 = vmatpush1.xpose.msra.mxu0 %v4534
    %4536 = vmatprep.subr.mxu0 0.0
    %4537 = vmatpush1.xpose.msra.mxu0 0.0
    %4538 = vmatprep.subr.mxu0 0.0
    %4539 = vmatpush1.xpose.msra.mxu0 0.0
    %4540 = vmatprep.subr.mxu0 0.0
    %4541 = vmatpush1.xpose.msra.mxu0 0.0
    %4542 = vmatprep.subr.mxu0 0.0
    %4543 = vmatpush1.xpose.msra.mxu0 0.0
    %4544 = vmatprep.subr.mxu0 0.0
    %4545 = vmatpush1.xpose.msra.mxu0 0.0
    %4546 = vmatprep.subr.mxu0 0.0
    %4547 = vmatpush1.xpose.msra.mxu0 0.0
    %4548 = vmatprep.subr.mxu0 0.0
    %4549 = vmatpush1.xpose.msra.mxu0 0.0
    %4550 = vmatprep.subr.mxu0 0.0
    %4551 = vmatpush1.xpose.msra.mxu0 0.0
    %4552 = vmatprep.subr.mxu0 0.0
    %4553 = vmatpush1.xpose.msra.mxu0 0.0
    %4554 = vmatprep.subr.mxu0 0.0
    %4555 = vmatpush1.xpose.msra.mxu0 0.0
    %4556 = vmatprep.subr.mxu0 0.0
    %4557 = vmatpush1.xpose.msra.mxu0 0.0
    %4558 = vmatprep.subr.mxu0 0.0
    %4559 = vmatpush1.xpose.msra.mxu0 0.0
    %4560 = vmatprep.subr.mxu0 0.0
    %4561 = vmatpush1.xpose.msra.mxu0 0.0
    %4562 = vmatprep.subr.mxu0 0.0
    %4563 = vmatpush1.xpose.msra.mxu0 0.0
    %4564 = vmatprep.subr.mxu0 0.0
    %4565 = vmatpush1.xpose.msra.mxu0 0.0
    %4566 = vmatprep.subr.mxu0 0.0
    %4567 = vmatpush1.xpose.msra.mxu0 0.0
    %4568 = vmatprep.subr.mxu0 0.0
    %4569 = vmatpush1.xpose.msra.mxu0 0.0
    %4570 = vmatprep.subr.mxu0 0.0
    %4571 = vmatpush1.xpose.msra.mxu0 0.0
    %4572 = vmatprep.subr.mxu0 0.0
    %4573 = vmatpush1.xpose.msra.mxu0 0.0
    %4574 = vmatprep.subr.mxu0 0.0
    %4575 = vmatpush1.xpose.msra.mxu0 0.0
    %4576 = vmatprep.subr.mxu0 0.0
    %4577 = vmatpush1.xpose.msra.mxu0 0.0
    %4578 = vmatprep.subr.mxu0 0.0
    %4579 = vmatpush1.xpose.msra.mxu0 0.0
    %4580 = vmatprep.subr.mxu0 0.0
    %4581 = vmatpush1.xpose.msra.mxu0 0.0
    %4582 = vmatprep.subr.mxu0 0.0
    %4583 = vmatpush1.xpose.msra.mxu0 0.0
    %4584 = vmatprep.subr.mxu0 0.0
    %4585 = vmatpush1.xpose.msra.mxu0 0.0
    %4586 = vmatprep.subr.mxu0 0.0
    %4587 = vmatpush1.xpose.msra.mxu0 0.0
    %4588 = vmatprep.subr.mxu0 0.0
    %4589 = vmatpush1.xpose.msra.mxu0 0.0
    %4590 = vmatprep.subr.mxu0 0.0
    %4591 = vmatpush1.xpose.msra.mxu0 0.0
    %4592 = vmatprep.subr.mxu0 0.0
    %4593 = vmatpush1.xpose.msra.mxu0 0.0
    %4594 = vmatprep.subr.mxu0 0.0
    %4595 = vmatpush1.xpose.msra.mxu0 0.0
    %4596 = vmatprep.subr.mxu0 0.0
    %4597 = vmatpush1.xpose.msra.mxu0 0.0
    %4598 = vmatprep.mubr.f32.mxu0 0.0
    %v4599 = vand.u32 %v4303, 4294901760
    %v4600 = vsub.f32 %v4303, %v4599
    %v4601 = vand.u32 %v4600, 4294901760
    %4602 = vmatmul.mubr.f32.gmra.mrb[0].mxu0 %v4601
    %v4603 = vpop.f32.mrb[0].mxu0
    %v4604 = vadd.f32 %v4530, %v4603
    %v4605 = vpop.f32.mrb[0].mxu0
    %4606 = vdwg.mxu0
    %4607 = vmatprep.subr.mxu0 0.0
    %v4608 = vand.u32 %v4305, 4294901760
    %v4609 = vsub.f32 %v4305, %v4608
    %v4610 = vand.u32 %v4609, 4294901760
    %4611 = vmatpush1.xpose.msra.mxu0 %v4610
    %4612 = vmatprep.subr.mxu0 0.0
    %4613 = vmatpush1.xpose.msra.mxu0 0.0
    %4614 = vmatprep.subr.mxu0 0.0
    %4615 = vmatpush1.xpose.msra.mxu0 0.0
    %4616 = vmatprep.subr.mxu0 0.0
    %4617 = vmatpush1.xpose.msra.mxu0 0.0
    %4618 = vmatprep.subr.mxu0 0.0
    %4619 = vmatpush1.xpose.msra.mxu0 0.0
    %4620 = vmatprep.subr.mxu0 0.0
    %4621 = vmatpush1.xpose.msra.mxu0 0.0
    %4622 = vmatprep.subr.mxu0 0.0
    %4623 = vmatpush1.xpose.msra.mxu0 0.0
    %4624 = vmatprep.subr.mxu0 0.0
    %4625 = vmatpush1.xpose.msra.mxu0 0.0
    %4626 = vmatprep.subr.mxu0 0.0
    %4627 = vmatpush1.xpose.msra.mxu0 0.0
    %4628 = vmatprep.subr.mxu0 0.0
    %4629 = vmatpush1.xpose.msra.mxu0 0.0
    %4630 = vmatprep.subr.mxu0 0.0
    %4631 = vmatpush1.xpose.msra.mxu0 0.0
    %4632 = vmatprep.subr.mxu0 0.0
    %4633 = vmatpush1.xpose.msra.mxu0 0.0
    %4634 = vmatprep.subr.mxu0 0.0
    %4635 = vmatpush1.xpose.msra.mxu0 0.0
    %4636 = vmatprep.subr.mxu0 0.0
    %4637 = vmatpush1.xpose.msra.mxu0 0.0
    %4638 = vmatprep.subr.mxu0 0.0
    %4639 = vmatpush1.xpose.msra.mxu0 0.0
    %4640 = vmatprep.subr.mxu0 0.0
    %4641 = vmatpush1.xpose.msra.mxu0 0.0
    %4642 = vmatprep.subr.mxu0 0.0
    %4643 = vmatpush1.xpose.msra.mxu0 0.0
    %4644 = vmatprep.subr.mxu0 0.0
    %4645 = vmatpush1.xpose.msra.mxu0 0.0
    %4646 = vmatprep.subr.mxu0 0.0
    %4647 = vmatpush1.xpose.msra.mxu0 0.0
    %4648 = vmatprep.subr.mxu0 0.0
    %4649 = vmatpush1.xpose.msra.mxu0 0.0
    %4650 = vmatprep.subr.mxu0 0.0
    %4651 = vmatpush1.xpose.msra.mxu0 0.0
    %4652 = vmatprep.subr.mxu0 0.0
    %4653 = vmatpush1.xpose.msra.mxu0 0.0
    %4654 = vmatprep.subr.mxu0 0.0
    %4655 = vmatpush1.xpose.msra.mxu0 0.0
    %4656 = vmatprep.subr.mxu0 0.0
    %4657 = vmatpush1.xpose.msra.mxu0 0.0
    %4658 = vmatprep.subr.mxu0 0.0
    %4659 = vmatpush1.xpose.msra.mxu0 0.0
    %4660 = vmatprep.subr.mxu0 0.0
    %4661 = vmatpush1.xpose.msra.mxu0 0.0
    %4662 = vmatprep.subr.mxu0 0.0
    %4663 = vmatpush1.xpose.msra.mxu0 0.0
    %4664 = vmatprep.subr.mxu0 0.0
    %4665 = vmatpush1.xpose.msra.mxu0 0.0
    %4666 = vmatprep.subr.mxu0 0.0
    %4667 = vmatpush1.xpose.msra.mxu0 0.0
    %4668 = vmatprep.subr.mxu0 0.0
    %4669 = vmatpush1.xpose.msra.mxu0 0.0
    %4670 = vmatprep.subr.mxu0 0.0
    %4671 = vmatpush1.xpose.msra.mxu0 0.0
    %4672 = vmatprep.subr.mxu0 0.0
    %4673 = vmatpush1.xpose.msra.mxu0 0.0
    %4674 = vmatprep.mubr.f32.mxu0 0.0
    %v4675 = vand.u32 %v4303, 4294901760
    %4676 = vmatmul.mubr.f32.gmra.mrb[0].mxu0 %v4675
    %v4677 = vpop.f32.mrb[0].mxu0
    %v4678 = vadd.f32 %v4604, %v4677
    %v4679 = vpop.f32.mrb[0].mxu0
    %4680 = vdwg.mxu0
    %4681 = vmatprep.subr.mxu0 0.0
    %v4682 = vand.u32 %v4305, 4294901760
    %4683 = vmatpush1.xpose.msra.mxu0 %v4682
    %4684 = vmatprep.subr.mxu0 0.0
    %4685 = vmatpush1.xpose.msra.mxu0 0.0
    %4686 = vmatprep.subr.mxu0 0.0
    %4687 = vmatpush1.xpose.msra.mxu0 0.0
    %4688 = vmatprep.subr.mxu0 0.0
    %4689 = vmatpush1.xpose.msra.mxu0 0.0
    %4690 = vmatprep.subr.mxu0 0.0
    %4691 = vmatpush1.xpose.msra.mxu0 0.0
    %4692 = vmatprep.subr.mxu0 0.0
    %4693 = vmatpush1.xpose.msra.mxu0 0.0
    %4694 = vmatprep.subr.mxu0 0.0
    %4695 = vmatpush1.xpose.msra.mxu0 0.0
    %4696 = vmatprep.subr.mxu0 0.0
    %4697 = vmatpush1.xpose.msra.mxu0 0.0
    %4698 = vmatprep.subr.mxu0 0.0
    %4699 = vmatpush1.xpose.msra.mxu0 0.0
    %4700 = vmatprep.subr.mxu0 0.0
    %4701 = vmatpush1.xpose.msra.mxu0 0.0
    %4702 = vmatprep.subr.mxu0 0.0
    %4703 = vmatpush1.xpose.msra.mxu0 0.0
    %4704 = vmatprep.subr.mxu0 0.0
    %4705 = vmatpush1.xpose.msra.mxu0 0.0
    %4706 = vmatprep.subr.mxu0 0.0
    %4707 = vmatpush1.xpose.msra.mxu0 0.0
    %4708 = vmatprep.subr.mxu0 0.0
    %4709 = vmatpush1.xpose.msra.mxu0 0.0
    %4710 = vmatprep.subr.mxu0 0.0
    %4711 = vmatpush1.xpose.msra.mxu0 0.0
    %4712 = vmatprep.subr.mxu0 0.0
    %4713 = vmatpush1.xpose.msra.mxu0 0.0
    %4714 = vmatprep.subr.mxu0 0.0
    %4715 = vmatpush1.xpose.msra.mxu0 0.0
    %4716 = vmatprep.subr.mxu0 0.0
    %4717 = vmatpush1.xpose.msra.mxu0 0.0
    %4718 = vmatprep.subr.mxu0 0.0
    %4719 = vmatpush1.xpose.msra.mxu0 0.0
    %4720 = vmatprep.subr.mxu0 0.0
    %4721 = vmatpush1.xpose.msra.mxu0 0.0
    %4722 = vmatprep.subr.mxu0 0.0
    %4723 = vmatpush1.xpose.msra.mxu0 0.0
    %4724 = vmatprep.subr.mxu0 0.0
    %4725 = vmatpush1.xpose.msra.mxu0 0.0
    %4726 = vmatprep.subr.mxu0 0.0
    %4727 = vmatpush1.xpose.msra.mxu0 0.0
    %4728 = vmatprep.subr.mxu0 0.0
    %4729 = vmatpush1.xpose.msra.mxu0 0.0
    %4730 = vmatprep.subr.mxu0 0.0
    %4731 = vmatpush1.xpose.msra.mxu0 0.0
    %4732 = vmatprep.subr.mxu0 0.0
    %4733 = vmatpush1.xpose.msra.mxu0 0.0
    %4734 = vmatprep.subr.mxu0 0.0
    %4735 = vmatpush1.xpose.msra.mxu0 0.0
    %4736 = vmatprep.subr.mxu0 0.0
    %4737 = vmatpush1.xpose.msra.mxu0 0.0
    %4738 = vmatprep.subr.mxu0 0.0
    %4739 = vmatpush1.xpose.msra.mxu0 0.0
    %4740 = vmatprep.subr.mxu0 0.0
    %4741 = vmatpush1.xpose.msra.mxu0 0.0
    %4742 = vmatprep.subr.mxu0 0.0
    %4743 = vmatpush1.xpose.msra.mxu0 0.0
    %4744 = vmatprep.subr.mxu0 0.0
    %4745 = vmatpush1.xpose.msra.mxu0 0.0
    %4746 = vmatprep.mubr.f32.mxu0 0.0
    %v4747 = vand.u32 %v4303, 4294901760
    %4748 = vmatmul.mubr.f32.gmra.mrb[0].mxu0 %v4747
    %v4749 = vpop.f32.mrb[0].mxu0
    %v4750 = vadd.f32 %v4678, %v4749
    %v4751 = vpop.f32.mrb[0].mxu0
    %4752 = vdwg.mxu0
    %4753 = vrot.lane.b32.xlu0 %v629, 112
    %v4754 = vpop.permute.xlu0 %4753
    %4755 = vrot.lane.b32.xlu0 %v629, 80
    %v4756 = vpop.permute.xlu0 %4755
    %v4757 = vsel %vm635, %v4754, 0
    %v4759 = vsel %vm635, %v4756, 0
    %4761 = vmatprep.subr.mxu0 0.0
    %v4762 = vand.u32 %v4759, 4294901760
    %4763 = vmatpush1.xpose.msra.mxu0 %v4762
    %4764 = vmatprep.subr.mxu0 0.0
    %4765 = vmatpush1.xpose.msra.mxu0 0.0
    %4766 = vmatprep.subr.mxu0 0.0
    %4767 = vmatpush1.xpose.msra.mxu0 0.0
    %4768 = vmatprep.subr.mxu0 0.0
    %4769 = vmatpush1.xpose.msra.mxu0 0.0
    %4770 = vmatprep.subr.mxu0 0.0
    %4771 = vmatpush1.xpose.msra.mxu0 0.0
    %4772 = vmatprep.subr.mxu0 0.0
    %4773 = vmatpush1.xpose.msra.mxu0 0.0
    %4774 = vmatprep.subr.mxu0 0.0
    %4775 = vmatpush1.xpose.msra.mxu0 0.0
    %4776 = vmatprep.subr.mxu0 0.0
    %4777 = vmatpush1.xpose.msra.mxu0 0.0
    %4778 = vmatprep.subr.mxu0 0.0
    %4779 = vmatpush1.xpose.msra.mxu0 0.0
    %4780 = vmatprep.subr.mxu0 0.0
    %4781 = vmatpush1.xpose.msra.mxu0 0.0
    %4782 = vmatprep.subr.mxu0 0.0
    %4783 = vmatpush1.xpose.msra.mxu0 0.0
    %4784 = vmatprep.subr.mxu0 0.0
    %4785 = vmatpush1.xpose.msra.mxu0 0.0
    %4786 = vmatprep.subr.mxu0 0.0
    %4787 = vmatpush1.xpose.msra.mxu0 0.0
    %4788 = vmatprep.subr.mxu0 0.0
    %4789 = vmatpush1.xpose.msra.mxu0 0.0
    %4790 = vmatprep.subr.mxu0 0.0
    %4791 = vmatpush1.xpose.msra.mxu0 0.0
    %4792 = vmatprep.subr.mxu0 0.0
    %4793 = vmatpush1.xpose.msra.mxu0 0.0
    %4794 = vmatprep.subr.mxu0 0.0
    %4795 = vmatpush1.xpose.msra.mxu0 0.0
    %4796 = vmatprep.subr.mxu0 0.0
    %4797 = vmatpush1.xpose.msra.mxu0 0.0
    %4798 = vmatprep.subr.mxu0 0.0
    %4799 = vmatpush1.xpose.msra.mxu0 0.0
    %4800 = vmatprep.subr.mxu0 0.0
    %4801 = vmatpush1.xpose.msra.mxu0 0.0
    %4802 = vmatprep.subr.mxu0 0.0
    %4803 = vmatpush1.xpose.msra.mxu0 0.0
    %4804 = vmatprep.subr.mxu0 0.0
    %4805 = vmatpush1.xpose.msra.mxu0 0.0
    %4806 = vmatprep.subr.mxu0 0.0
    %4807 = vmatpush1.xpose.msra.mxu0 0.0
    %4808 = vmatprep.subr.mxu0 0.0
    %4809 = vmatpush1.xpose.msra.mxu0 0.0
    %4810 = vmatprep.subr.mxu0 0.0
    %4811 = vmatpush1.xpose.msra.mxu0 0.0
    %4812 = vmatprep.subr.mxu0 0.0
    %4813 = vmatpush1.xpose.msra.mxu0 0.0
    %4814 = vmatprep.subr.mxu0 0.0
    %4815 = vmatpush1.xpose.msra.mxu0 0.0
    %4816 = vmatprep.subr.mxu0 0.0
    %4817 = vmatpush1.xpose.msra.mxu0 0.0
    %4818 = vmatprep.subr.mxu0 0.0
    %4819 = vmatpush1.xpose.msra.mxu0 0.0
    %4820 = vmatprep.subr.mxu0 0.0
    %4821 = vmatpush1.xpose.msra.mxu0 0.0
    %4822 = vmatprep.subr.mxu0 0.0
    %4823 = vmatpush1.xpose.msra.mxu0 0.0
    %4824 = vmatprep.subr.mxu0 0.0
    %4825 = vmatpush1.xpose.msra.mxu0 0.0
    %4826 = vmatprep.mubr.f32.mxu0 0.0
    %v4827 = vand.u32 %v4757, 4294901760
    %v4828 = vsub.f32 %v4757, %v4827
    %v4829 = vand.u32 %v4828, 4294901760
    %v4830 = vsub.f32 %v4828, %v4829
    %v4831 = vand.u32 %v4830, 4294901760
    %4832 = vmatmul.mubr.f32.gmra.mrb[0].mxu0 %v4831
    %v4833 = vpop.f32.mrb[0].mxu0
    %v4834 = vadd.f32 0.0, %v4833
    %v4835 = vpop.f32.mrb[0].mxu0
    %4836 = vdwg.mxu0
    %4837 = vmatprep.subr.mxu0 0.0
    %v4838 = vand.u32 %v4759, 4294901760
    %v4839 = vsub.f32 %v4759, %v4838
    %v4840 = vand.u32 %v4839, 4294901760
    %v4841 = vsub.f32 %v4839, %v4840
    %v4842 = vand.u32 %v4841, 4294901760
    %4843 = vmatpush1.xpose.msra.mxu0 %v4842
    %4844 = vmatprep.subr.mxu0 0.0
    %4845 = vmatpush1.xpose.msra.mxu0 0.0
    %4846 = vmatprep.subr.mxu0 0.0
    %4847 = vmatpush1.xpose.msra.mxu0 0.0
    %4848 = vmatprep.subr.mxu0 0.0
    %4849 = vmatpush1.xpose.msra.mxu0 0.0
    %4850 = vmatprep.subr.mxu0 0.0
    %4851 = vmatpush1.xpose.msra.mxu0 0.0
    %4852 = vmatprep.subr.mxu0 0.0
    %4853 = vmatpush1.xpose.msra.mxu0 0.0
    %4854 = vmatprep.subr.mxu0 0.0
    %4855 = vmatpush1.xpose.msra.mxu0 0.0
    %4856 = vmatprep.subr.mxu0 0.0
    %4857 = vmatpush1.xpose.msra.mxu0 0.0
    %4858 = vmatprep.subr.mxu0 0.0
    %4859 = vmatpush1.xpose.msra.mxu0 0.0
    %4860 = vmatprep.subr.mxu0 0.0
    %4861 = vmatpush1.xpose.msra.mxu0 0.0
    %4862 = vmatprep.subr.mxu0 0.0
    %4863 = vmatpush1.xpose.msra.mxu0 0.0
    %4864 = vmatprep.subr.mxu0 0.0
    %4865 = vmatpush1.xpose.msra.mxu0 0.0
    %4866 = vmatprep.subr.mxu0 0.0
    %4867 = vmatpush1.xpose.msra.mxu0 0.0
    %4868 = vmatprep.subr.mxu0 0.0
    %4869 = vmatpush1.xpose.msra.mxu0 0.0
    %4870 = vmatprep.subr.mxu0 0.0
    %4871 = vmatpush1.xpose.msra.mxu0 0.0
    %4872 = vmatprep.subr.mxu0 0.0
    %4873 = vmatpush1.xpose.msra.mxu0 0.0
    %4874 = vmatprep.subr.mxu0 0.0
    %4875 = vmatpush1.xpose.msra.mxu0 0.0
    %4876 = vmatprep.subr.mxu0 0.0
    %4877 = vmatpush1.xpose.msra.mxu0 0.0
    %4878 = vmatprep.subr.mxu0 0.0
    %4879 = vmatpush1.xpose.msra.mxu0 0.0
    %4880 = vmatprep.subr.mxu0 0.0
    %4881 = vmatpush1.xpose.msra.mxu0 0.0
    %4882 = vmatprep.subr.mxu0 0.0
    %4883 = vmatpush1.xpose.msra.mxu0 0.0
    %4884 = vmatprep.subr.mxu0 0.0
    %4885 = vmatpush1.xpose.msra.mxu0 0.0
    %4886 = vmatprep.subr.mxu0 0.0
    %4887 = vmatpush1.xpose.msra.mxu0 0.0
    %4888 = vmatprep.subr.mxu0 0.0
    %4889 = vmatpush1.xpose.msra.mxu0 0.0
    %4890 = vmatprep.subr.mxu0 0.0
    %4891 = vmatpush1.xpose.msra.mxu0 0.0
    %4892 = vmatprep.subr.mxu0 0.0
    %4893 = vmatpush1.xpose.msra.mxu0 0.0
    %4894 = vmatprep.subr.mxu0 0.0
    %4895 = vmatpush1.xpose.msra.mxu0 0.0
    %4896 = vmatprep.subr.mxu0 0.0
    %4897 = vmatpush1.xpose.msra.mxu0 0.0
    %4898 = vmatprep.subr.mxu0 0.0
    %4899 = vmatpush1.xpose.msra.mxu0 0.0
    %4900 = vmatprep.subr.mxu0 0.0
    %4901 = vmatpush1.xpose.msra.mxu0 0.0
    %4902 = vmatprep.subr.mxu0 0.0
    %4903 = vmatpush1.xpose.msra.mxu0 0.0
    %4904 = vmatprep.subr.mxu0 0.0
    %4905 = vmatpush1.xpose.msra.mxu0 0.0
    %4906 = vmatprep.mubr.f32.mxu0 0.0
    %v4907 = vand.u32 %v4757, 4294901760
    %4908 = vmatmul.mubr.f32.gmra.mrb[0].mxu0 %v4907
    %v4909 = vpop.f32.mrb[0].mxu0
    %v4910 = vadd.f32 %v4834, %v4909
    %v4911 = vpop.f32.mrb[0].mxu0
    %4912 = vdwg.mxu0
    %4913 = vmatprep.subr.mxu0 0.0
    %v4914 = vand.u32 %v4759, 4294901760
    %v4915 = vsub.f32 %v4759, %v4914
    %4916 = vmatpush1.xpose.msra.mxu0 %v4915
    %4917 = vmatprep.subr.mxu0 0.0
    %4918 = vmatpush1.xpose.msra.mxu0 0.0
    %4919 = vmatprep.subr.mxu0 0.0
    %4920 = vmatpush1.xpose.msra.mxu0 0.0
    %4921 = vmatprep.subr.mxu0 0.0
    %4922 = vmatpush1.xpose.msra.mxu0 0.0
    %4923 = vmatprep.subr.mxu0 0.0
    %4924 = vmatpush1.xpose.msra.mxu0 0.0
    %4925 = vmatprep.subr.mxu0 0.0
    %4926 = vmatpush1.xpose.msra.mxu0 0.0
    %4927 = vmatprep.subr.mxu0 0.0
    %4928 = vmatpush1.xpose.msra.mxu0 0.0
    %4929 = vmatprep.subr.mxu0 0.0
    %4930 = vmatpush1.xpose.msra.mxu0 0.0
    %4931 = vmatprep.subr.mxu0 0.0
    %4932 = vmatpush1.xpose.msra.mxu0 0.0
    %4933 = vmatprep.subr.mxu0 0.0
    %4934 = vmatpush1.xpose.msra.mxu0 0.0
    %4935 = vmatprep.subr.mxu0 0.0
    %4936 = vmatpush1.xpose.msra.mxu0 0.0
    %4937 = vmatprep.subr.mxu0 0.0
    %4938 = vmatpush1.xpose.msra.mxu0 0.0
    %4939 = vmatprep.subr.mxu0 0.0
    %4940 = vmatpush1.xpose.msra.mxu0 0.0
    %4941 = vmatprep.subr.mxu0 0.0
    %4942 = vmatpush1.xpose.msra.mxu0 0.0
    %4943 = vmatprep.subr.mxu0 0.0
    %4944 = vmatpush1.xpose.msra.mxu0 0.0
    %4945 = vmatprep.subr.mxu0 0.0
    %4946 = vmatpush1.xpose.msra.mxu0 0.0
    %4947 = vmatprep.subr.mxu0 0.0
    %4948 = vmatpush1.xpose.msra.mxu0 0.0
    %4949 = vmatprep.subr.mxu0 0.0
    %4950 = vmatpush1.xpose.msra.mxu0 0.0
    %4951 = vmatprep.subr.mxu0 0.0
    %4952 = vmatpush1.xpose.msra.mxu0 0.0
    %4953 = vmatprep.subr.mxu0 0.0
    %4954 = vmatpush1.xpose.msra.mxu0 0.0
    %4955 = vmatprep.subr.mxu0 0.0
    %4956 = vmatpush1.xpose.msra.mxu0 0.0
    %4957 = vmatprep.subr.mxu0 0.0
    %4958 = vmatpush1.xpose.msra.mxu0 0.0
    %4959 = vmatprep.subr.mxu0 0.0
    %4960 = vmatpush1.xpose.msra.mxu0 0.0
    %4961 = vmatprep.subr.mxu0 0.0
    %4962 = vmatpush1.xpose.msra.mxu0 0.0
    %4963 = vmatprep.subr.mxu0 0.0
    %4964 = vmatpush1.xpose.msra.mxu0 0.0
    %4965 = vmatprep.subr.mxu0 0.0
    %4966 = vmatpush1.xpose.msra.mxu0 0.0
    %4967 = vmatprep.subr.mxu0 0.0
    %4968 = vmatpush1.xpose.msra.mxu0 0.0
    %4969 = vmatprep.subr.mxu0 0.0
    %4970 = vmatpush1.xpose.msra.mxu0 0.0
    %4971 = vmatprep.subr.mxu0 0.0
    %4972 = vmatpush1.xpose.msra.mxu0 0.0
    %4973 = vmatprep.subr.mxu0 0.0
    %4974 = vmatpush1.xpose.msra.mxu0 0.0
    %4975 = vmatprep.subr.mxu0 0.0
    %4976 = vmatpush1.xpose.msra.mxu0 0.0
    %4977 = vmatprep.subr.mxu0 0.0
    %4978 = vmatpush1.xpose.msra.mxu0 0.0
    %4979 = vmatprep.mubr.f32.mxu0 0.0
    %v4980 = vand.u32 %v4757, 4294901760
    %v4981 = vsub.f32 %v4757, %v4980
    %4982 = vmatmul.mubr.f32.gmra.mrb[0].mxu0 %v4981
    %v4983 = vpop.f32.mrb[0].mxu0
    %v4984 = vadd.f32 %v4910, %v4983
    %v4985 = vpop.f32.mrb[0].mxu0
    %4986 = vdwg.mxu0
    %4987 = vmatprep.subr.mxu0 0.0
    %v4988 = vand.u32 %v4759, 4294901760
    %4989 = vmatpush1.xpose.msra.mxu0 %v4988
    %4990 = vmatprep.subr.mxu0 0.0
    %4991 = vmatpush1.xpose.msra.mxu0 0.0
    %4992 = vmatprep.subr.mxu0 0.0
    %4993 = vmatpush1.xpose.msra.mxu0 0.0
    %4994 = vmatprep.subr.mxu0 0.0
    %4995 = vmatpush1.xpose.msra.mxu0 0.0
    %4996 = vmatprep.subr.mxu0 0.0
    %4997 = vmatpush1.xpose.msra.mxu0 0.0
    %4998 = vmatprep.subr.mxu0 0.0
    %4999 = vmatpush1.xpose.msra.mxu0 0.0
    %5000 = vmatprep.subr.mxu0 0.0
    %5001 = vmatpush1.xpose.msra.mxu0 0.0
    %5002 = vmatprep.subr.mxu0 0.0
    %5003 = vmatpush1.xpose.msra.mxu0 0.0
    %5004 = vmatprep.subr.mxu0 0.0
    %5005 = vmatpush1.xpose.msra.mxu0 0.0
    %5006 = vmatprep.subr.mxu0 0.0
    %5007 = vmatpush1.xpose.msra.mxu0 0.0
    %5008 = vmatprep.subr.mxu0 0.0
    %5009 = vmatpush1.xpose.msra.mxu0 0.0
    %5010 = vmatprep.subr.mxu0 0.0
    %5011 = vmatpush1.xpose.msra.mxu0 0.0
    %5012 = vmatprep.subr.mxu0 0.0
    %5013 = vmatpush1.xpose.msra.mxu0 0.0
    %5014 = vmatprep.subr.mxu0 0.0
    %5015 = vmatpush1.xpose.msra.mxu0 0.0
    %5016 = vmatprep.subr.mxu0 0.0
    %5017 = vmatpush1.xpose.msra.mxu0 0.0
    %5018 = vmatprep.subr.mxu0 0.0
    %5019 = vmatpush1.xpose.msra.mxu0 0.0
    %5020 = vmatprep.subr.mxu0 0.0
    %5021 = vmatpush1.xpose.msra.mxu0 0.0
    %5022 = vmatprep.subr.mxu0 0.0
    %5023 = vmatpush1.xpose.msra.mxu0 0.0
    %5024 = vmatprep.subr.mxu0 0.0
    %5025 = vmatpush1.xpose.msra.mxu0 0.0
    %5026 = vmatprep.subr.mxu0 0.0
    %5027 = vmatpush1.xpose.msra.mxu0 0.0
    %5028 = vmatprep.subr.mxu0 0.0
    %5029 = vmatpush1.xpose.msra.mxu0 0.0
    %5030 = vmatprep.subr.mxu0 0.0
    %5031 = vmatpush1.xpose.msra.mxu0 0.0
    %5032 = vmatprep.subr.mxu0 0.0
    %5033 = vmatpush1.xpose.msra.mxu0 0.0
    %5034 = vmatprep.subr.mxu0 0.0
    %5035 = vmatpush1.xpose.msra.mxu0 0.0
    %5036 = vmatprep.subr.mxu0 0.0
    %5037 = vmatpush1.xpose.msra.mxu0 0.0
    %5038 = vmatprep.subr.mxu0 0.0
    %5039 = vmatpush1.xpose.msra.mxu0 0.0
    %5040 = vmatprep.subr.mxu0 0.0
    %5041 = vmatpush1.xpose.msra.mxu0 0.0
    %5042 = vmatprep.subr.mxu0 0.0
    %5043 = vmatpush1.xpose.msra.mxu0 0.0
    %5044 = vmatprep.subr.mxu0 0.0
    %5045 = vmatpush1.xpose.msra.mxu0 0.0
    %5046 = vmatprep.subr.mxu0 0.0
    %5047 = vmatpush1.xpose.msra.mxu0 0.0
    %5048 = vmatprep.subr.mxu0 0.0
    %5049 = vmatpush1.xpose.msra.mxu0 0.0
    %5050 = vmatprep.subr.mxu0 0.0
    %5051 = vmatpush1.xpose.msra.mxu0 0.0
    %5052 = vmatprep.mubr.f32.mxu0 0.0
    %v5053 = vand.u32 %v4757, 4294901760
    %v5054 = vsub.f32 %v4757, %v5053
    %v5055 = vand.u32 %v5054, 4294901760
    %5056 = vmatmul.mubr.f32.gmra.mrb[0].mxu0 %v5055
    %v5057 = vpop.f32.mrb[0].mxu0
    %v5058 = vadd.f32 %v4984, %v5057
    %v5059 = vpop.f32.mrb[0].mxu0
    %5060 = vdwg.mxu0
    %5061 = vmatprep.subr.mxu0 0.0
    %v5062 = vand.u32 %v4759, 4294901760
    %v5063 = vsub.f32 %v4759, %v5062
    %v5064 = vand.u32 %v5063, 4294901760
    %5065 = vmatpush1.xpose.msra.mxu0 %v5064
    %5066 = vmatprep.subr.mxu0 0.0
    %5067 = vmatpush1.xpose.msra.mxu0 0.0
    %5068 = vmatprep.subr.mxu0 0.0
    %5069 = vmatpush1.xpose.msra.mxu0 0.0
    %5070 = vmatprep.subr.mxu0 0.0
    %5071 = vmatpush1.xpose.msra.mxu0 0.0
    %5072 = vmatprep.subr.mxu0 0.0
    %5073 = vmatpush1.xpose.msra.mxu0 0.0
    %5074 = vmatprep.subr.mxu0 0.0
    %5075 = vmatpush1.xpose.msra.mxu0 0.0
    %5076 = vmatprep.subr.mxu0 0.0
    %5077 = vmatpush1.xpose.msra.mxu0 0.0
    %5078 = vmatprep.subr.mxu0 0.0
    %5079 = vmatpush1.xpose.msra.mxu0 0.0
    %5080 = vmatprep.subr.mxu0 0.0
    %5081 = vmatpush1.xpose.msra.mxu0 0.0
    %5082 = vmatprep.subr.mxu0 0.0
    %5083 = vmatpush1.xpose.msra.mxu0 0.0
    %5084 = vmatprep.subr.mxu0 0.0
    %5085 = vmatpush1.xpose.msra.mxu0 0.0
    %5086 = vmatprep.subr.mxu0 0.0
    %5087 = vmatpush1.xpose.msra.mxu0 0.0
    %5088 = vmatprep.subr.mxu0 0.0
    %5089 = vmatpush1.xpose.msra.mxu0 0.0
    %5090 = vmatprep.subr.mxu0 0.0
    %5091 = vmatpush1.xpose.msra.mxu0 0.0
    %5092 = vmatprep.subr.mxu0 0.0
    %5093 = vmatpush1.xpose.msra.mxu0 0.0
    %5094 = vmatprep.subr.mxu0 0.0
    %5095 = vmatpush1.xpose.msra.mxu0 0.0
    %5096 = vmatprep.subr.mxu0 0.0
    %5097 = vmatpush1.xpose.msra.mxu0 0.0
    %5098 = vmatprep.subr.mxu0 0.0
    %5099 = vmatpush1.xpose.msra.mxu0 0.0
    %5100 = vmatprep.subr.mxu0 0.0
    %5101 = vmatpush1.xpose.msra.mxu0 0.0
    %5102 = vmatprep.subr.mxu0 0.0
    %5103 = vmatpush1.xpose.msra.mxu0 0.0
    %5104 = vmatprep.subr.mxu0 0.0
    %5105 = vmatpush1.xpose.msra.mxu0 0.0
    %5106 = vmatprep.subr.mxu0 0.0
    %5107 = vmatpush1.xpose.msra.mxu0 0.0
    %5108 = vmatprep.subr.mxu0 0.0
    %5109 = vmatpush1.xpose.msra.mxu0 0.0
    %5110 = vmatprep.subr.mxu0 0.0
    %5111 = vmatpush1.xpose.msra.mxu0 0.0
    %5112 = vmatprep.subr.mxu0 0.0
    %5113 = vmatpush1.xpose.msra.mxu0 0.0
    %5114 = vmatprep.subr.mxu0 0.0
    %5115 = vmatpush1.xpose.msra.mxu0 0.0
    %5116 = vmatprep.subr.mxu0 0.0
    %5117 = vmatpush1.xpose.msra.mxu0 0.0
    %5118 = vmatprep.subr.mxu0 0.0
    %5119 = vmatpush1.xpose.msra.mxu0 0.0
    %5120 = vmatprep.subr.mxu0 0.0
    %5121 = vmatpush1.xpose.msra.mxu0 0.0
    %5122 = vmatprep.subr.mxu0 0.0
    %5123 = vmatpush1.xpose.msra.mxu0 0.0
    %5124 = vmatprep.subr.mxu0 0.0
    %5125 = vmatpush1.xpose.msra.mxu0 0.0
    %5126 = vmatprep.subr.mxu0 0.0
    %5127 = vmatpush1.xpose.msra.mxu0 0.0
    %5128 = vmatprep.mubr.f32.mxu0 0.0
    %v5129 = vand.u32 %v4757, 4294901760
    %5130 = vmatmul.mubr.f32.gmra.mrb[0].mxu0 %v5129
    %v5131 = vpop.f32.mrb[0].mxu0
    %v5132 = vadd.f32 %v5058, %v5131
    %v5133 = vpop.f32.mrb[0].mxu0
    %5134 = vdwg.mxu0
    %5135 = vmatprep.subr.mxu0 0.0
    %v5136 = vand.u32 %v4759, 4294901760
    %5137 = vmatpush1.xpose.msra.mxu0 %v5136
    %5138 = vmatprep.subr.mxu0 0.0
    %5139 = vmatpush1.xpose.msra.mxu0 0.0
    %5140 = vmatprep.subr.mxu0 0.0
    %5141 = vmatpush1.xpose.msra.mxu0 0.0
    %5142 = vmatprep.subr.mxu0 0.0
    %5143 = vmatpush1.xpose.msra.mxu0 0.0
    %5144 = vmatprep.subr.mxu0 0.0
    %5145 = vmatpush1.xpose.msra.mxu0 0.0
    %5146 = vmatprep.subr.mxu0 0.0
    %5147 = vmatpush1.xpose.msra.mxu0 0.0
    %5148 = vmatprep.subr.mxu0 0.0
    %5149 = vmatpush1.xpose.msra.mxu0 0.0
    %5150 = vmatprep.subr.mxu0 0.0
    %5151 = vmatpush1.xpose.msra.mxu0 0.0
    %5152 = vmatprep.subr.mxu0 0.0
    %5153 = vmatpush1.xpose.msra.mxu0 0.0
    %5154 = vmatprep.subr.mxu0 0.0
    %5155 = vmatpush1.xpose.msra.mxu0 0.0
    %5156 = vmatprep.subr.mxu0 0.0
    %5157 = vmatpush1.xpose.msra.mxu0 0.0
    %5158 = vmatprep.subr.mxu0 0.0
    %5159 = vmatpush1.xpose.msra.mxu0 0.0
    %5160 = vmatprep.subr.mxu0 0.0
    %5161 = vmatpush1.xpose.msra.mxu0 0.0
    %5162 = vmatprep.subr.mxu0 0.0
    %5163 = vmatpush1.xpose.msra.mxu0 0.0
    %5164 = vmatprep.subr.mxu0 0.0
    %5165 = vmatpush1.xpose.msra.mxu0 0.0
    %5166 = vmatprep.subr.mxu0 0.0
    %5167 = vmatpush1.xpose.msra.mxu0 0.0
    %5168 = vmatprep.subr.mxu0 0.0
    %5169 = vmatpush1.xpose.msra.mxu0 0.0
    %5170 = vmatprep.subr.mxu0 0.0
    %5171 = vmatpush1.xpose.msra.mxu0 0.0
    %5172 = vmatprep.subr.mxu0 0.0
    %5173 = vmatpush1.xpose.msra.mxu0 0.0
    %5174 = vmatprep.subr.mxu0 0.0
    %5175 = vmatpush1.xpose.msra.mxu0 0.0
    %5176 = vmatprep.subr.mxu0 0.0
    %5177 = vmatpush1.xpose.msra.mxu0 0.0
    %5178 = vmatprep.subr.mxu0 0.0
    %5179 = vmatpush1.xpose.msra.mxu0 0.0
    %5180 = vmatprep.subr.mxu0 0.0
    %5181 = vmatpush1.xpose.msra.mxu0 0.0
    %5182 = vmatprep.subr.mxu0 0.0
    %5183 = vmatpush1.xpose.msra.mxu0 0.0
    %5184 = vmatprep.subr.mxu0 0.0
    %5185 = vmatpush1.xpose.msra.mxu0 0.0
    %5186 = vmatprep.subr.mxu0 0.0
    %5187 = vmatpush1.xpose.msra.mxu0 0.0
    %5188 = vmatprep.subr.mxu0 0.0
    %5189 = vmatpush1.xpose.msra.mxu0 0.0
    %5190 = vmatprep.subr.mxu0 0.0
    %5191 = vmatpush1.xpose.msra.mxu0 0.0
    %5192 = vmatprep.subr.mxu0 0.0
    %5193 = vmatpush1.xpose.msra.mxu0 0.0
    %5194 = vmatprep.subr.mxu0 0.0
    %5195 = vmatpush1.xpose.msra.mxu0 0.0
    %5196 = vmatprep.subr.mxu0 0.0
    %5197 = vmatpush1.xpose.msra.mxu0 0.0
    %5198 = vmatprep.subr.mxu0 0.0
    %5199 = vmatpush1.xpose.msra.mxu0 0.0
    %5200 = vmatprep.mubr.f32.mxu0 0.0
    %v5201 = vand.u32 %v4757, 4294901760
    %5202 = vmatmul.mubr.f32.gmra.mrb[0].mxu0 %v5201
    %v5203 = vpop.f32.mrb[0].mxu0
    %v5204 = vadd.f32 %v5132, %v5203
    %v5205 = vpop.f32.mrb[0].mxu0
    %5206 = vdwg.mxu0
    %v5207 = vsel %vm635, %v4750, -inf
    %5208 = vmax.xlane.f32.xlu0 %v5207
    %v5209 = vpop.xlane.xlu0 %5208
    %v5210 = vsel %vm635, %v5204, -inf
    %5211 = vmax.xlane.f32.xlu0 %v5210
    %v5212 = vpop.xlane.xlu0 %5211
    %v5213 = vsub.f32 %v4750, %v5209
    %v5214 = vsub.f32 %v5204, %v5212
    %v5215 = vmul.f32 %v5213, 1.442695
    %v5216 = vpow.pop %v5215
    %v5217 = vmul.f32 %v5214, 1.442695
    %v5218 = vpow.pop %v5217
    %v5219 = vsel %vm635, %v5216, 0.0
    %5220 = vadd.xlane.f32.xlu0 %v5219
    %v5221 = vpop.xlane.xlu0 %5220
    %v5222 = vsel %vm635, %v5218, 0.0
    %5223 = vadd.xlane.f32.xlu0 %v5222
    %v5224 = vpop.xlane.xlu0 %5223
    %v5225 = vrcp.pop %v5221
    %v5226 = vrcp.pop %v5224
    %v5227 = vmul.f32 %v5216, %v5225
    %v5228 = vmul.f32 %v5218, %v5226
    %5229 = vrot.lane.b32.xlu0 %v623, 48
    %v5230 = vpop.permute.xlu0 %5229
    %v5233 = vsel %vm635, %v5227, 0
    %5235 = vmatprep.subr.mxu0 0.0
    %v5236 = vand.u32 %v5230, 4294901760
    %5237 = vmatpush1.msra.mxu0 %v5236
    %5238 = vmatprep.subr.mxu0 0.0
    %5239 = vmatpush1.msra.mxu0 0.0
    %5240 = vmatprep.subr.mxu0 0.0
    %5241 = vmatpush1.msra.mxu0 0.0
    %5242 = vmatprep.subr.mxu0 0.0
    %5243 = vmatpush1.msra.mxu0 0.0
    %5244 = vmatprep.subr.mxu0 0.0
    %5245 = vmatpush1.msra.mxu0 0.0
    %5246 = vmatprep.subr.mxu0 0.0
    %5247 = vmatpush1.msra.mxu0 0.0
    %5248 = vmatprep.subr.mxu0 0.0
    %5249 = vmatpush1.msra.mxu0 0.0
    %5250 = vmatprep.subr.mxu0 0.0
    %5251 = vmatpush1.msra.mxu0 0.0
    %5252 = vmatprep.subr.mxu0 0.0
    %5253 = vmatpush1.msra.mxu0 0.0
    %5254 = vmatprep.subr.mxu0 0.0
    %5255 = vmatpush1.msra.mxu0 0.0
    %5256 = vmatprep.subr.mxu0 0.0
    %5257 = vmatpush1.msra.mxu0 0.0
    %5258 = vmatprep.subr.mxu0 0.0
    %5259 = vmatpush1.msra.mxu0 0.0
    %5260 = vmatprep.subr.mxu0 0.0
    %5261 = vmatpush1.msra.mxu0 0.0
    %5262 = vmatprep.subr.mxu0 0.0
    %5263 = vmatpush1.msra.mxu0 0.0
    %5264 = vmatprep.subr.mxu0 0.0
    %5265 = vmatpush1.msra.mxu0 0.0
    %5266 = vmatprep.subr.mxu0 0.0
    %5267 = vmatpush1.msra.mxu0 0.0
    %5268 = vmatprep.subr.mxu0 0.0
    %5269 = vmatpush1.msra.mxu0 0.0
    %5270 = vmatprep.subr.mxu0 0.0
    %5271 = vmatpush1.msra.mxu0 0.0
    %5272 = vmatprep.subr.mxu0 0.0
    %5273 = vmatpush1.msra.mxu0 0.0
    %5274 = vmatprep.subr.mxu0 0.0
    %5275 = vmatpush1.msra.mxu0 0.0
    %5276 = vmatprep.subr.mxu0 0.0
    %5277 = vmatpush1.msra.mxu0 0.0
    %5278 = vmatprep.subr.mxu0 0.0
    %5279 = vmatpush1.msra.mxu0 0.0
    %5280 = vmatprep.subr.mxu0 0.0
    %5281 = vmatpush1.msra.mxu0 0.0
    %5282 = vmatprep.subr.mxu0 0.0
    %5283 = vmatpush1.msra.mxu0 0.0
    %5284 = vmatprep.subr.mxu0 0.0
    %5285 = vmatpush1.msra.mxu0 0.0
    %5286 = vmatprep.subr.mxu0 0.0
    %5287 = vmatpush1.msra.mxu0 0.0
    %5288 = vmatprep.subr.mxu0 0.0
    %5289 = vmatpush1.msra.mxu0 0.0
    %5290 = vmatprep.subr.mxu0 0.0
    %5291 = vmatpush1.msra.mxu0 0.0
    %5292 = vmatprep.subr.mxu0 0.0
    %5293 = vmatpush1.msra.mxu0 0.0
    %5294 = vmatprep.subr.mxu0 0.0
    %5295 = vmatpush1.msra.mxu0 0.0
    %5296 = vmatprep.subr.mxu0 0.0
    %5297 = vmatpush1.msra.mxu0 0.0
    %5298 = vmatprep.subr.mxu0 0.0
    %5299 = vmatpush1.msra.mxu0 0.0
    %5300 = vmatprep.mubr.f32.mxu0 0.0
    %v5301 = vand.u32 %v5233, 4294901760
    %v5302 = vsub.f32 %v5233, %v5301
    %v5303 = vand.u32 %v5302, 4294901760
    %v5304 = vsub.f32 %v5302, %v5303
    %v5305 = vand.u32 %v5304, 4294901760
    %5306 = vmatmul.mubr.f32.gmra.mrb[0].mxu0 %v5305
    %v5307 = vpop.f32.mrb[0].mxu0
    %v5308 = vadd.f32 0.0, %v5307
    %v5309 = vpop.f32.mrb[0].mxu0
    %5310 = vdwg.mxu0
    %5311 = vmatprep.subr.mxu0 0.0
    %v5312 = vand.u32 %v5230, 4294901760
    %v5313 = vsub.f32 %v5230, %v5312
    %v5314 = vand.u32 %v5313, 4294901760
    %v5315 = vsub.f32 %v5313, %v5314
    %v5316 = vand.u32 %v5315, 4294901760
    %5317 = vmatpush1.msra.mxu0 %v5316
    %5318 = vmatprep.subr.mxu0 0.0
    %5319 = vmatpush1.msra.mxu0 0.0
    %5320 = vmatprep.subr.mxu0 0.0
    %5321 = vmatpush1.msra.mxu0 0.0
    %5322 = vmatprep.subr.mxu0 0.0
    %5323 = vmatpush1.msra.mxu0 0.0
    %5324 = vmatprep.subr.mxu0 0.0
    %5325 = vmatpush1.msra.mxu0 0.0
    %5326 = vmatprep.subr.mxu0 0.0
    %5327 = vmatpush1.msra.mxu0 0.0
    %5328 = vmatprep.subr.mxu0 0.0
    %5329 = vmatpush1.msra.mxu0 0.0
    %5330 = vmatprep.subr.mxu0 0.0
    %5331 = vmatpush1.msra.mxu0 0.0
    %5332 = vmatprep.subr.mxu0 0.0
    %5333 = vmatpush1.msra.mxu0 0.0
    %5334 = vmatprep.subr.mxu0 0.0
    %5335 = vmatpush1.msra.mxu0 0.0
    %5336 = vmatprep.subr.mxu0 0.0
    %5337 = vmatpush1.msra.mxu0 0.0
    %5338 = vmatprep.subr.mxu0 0.0
    %5339 = vmatpush1.msra.mxu0 0.0
    %5340 = vmatprep.subr.mxu0 0.0
    %5341 = vmatpush1.msra.mxu0 0.0
    %5342 = vmatprep.subr.mxu0 0.0
    %5343 = vmatpush1.msra.mxu0 0.0
    %5344 = vmatprep.subr.mxu0 0.0
    %5345 = vmatpush1.msra.mxu0 0.0
    %5346 = vmatprep.subr.mxu0 0.0
    %5347 = vmatpush1.msra.mxu0 0.0
    %5348 = vmatprep.subr.mxu0 0.0
    %5349 = vmatpush1.msra.mxu0 0.0
    %5350 = vmatprep.subr.mxu0 0.0
    %5351 = vmatpush1.msra.mxu0 0.0
    %5352 = vmatprep.subr.mxu0 0.0
    %5353 = vmatpush1.msra.mxu0 0.0
    %5354 = vmatprep.subr.mxu0 0.0
    %5355 = vmatpush1.msra.mxu0 0.0
    %5356 = vmatprep.subr.mxu0 0.0
    %5357 = vmatpush1.msra.mxu0 0.0
    %5358 = vmatprep.subr.mxu0 0.0
    %5359 = vmatpush1.msra.mxu0 0.0
    %5360 = vmatprep.subr.mxu0 0.0
    %5361 = vmatpush1.msra.mxu0 0.0
    %5362 = vmatprep.subr.mxu0 0.0
    %5363 = vmatpush1.msra.mxu0 0.0
    %5364 = vmatprep.subr.mxu0 0.0
    %5365 = vmatpush1.msra.mxu0 0.0
    %5366 = vmatprep.subr.mxu0 0.0
    %5367 = vmatpush1.msra.mxu0 0.0
    %5368 = vmatprep.subr.mxu0 0.0
    %5369 = vmatpush1.msra.mxu0 0.0
    %5370 = vmatprep.subr.mxu0 0.0
    %5371 = vmatpush1.msra.mxu0 0.0
    %5372 = vmatprep.subr.mxu0 0.0
    %5373 = vmatpush1.msra.mxu0 0.0
    %5374 = vmatprep.subr.mxu0 0.0
    %5375 = vmatpush1.msra.mxu0 0.0
    %5376 = vmatprep.subr.mxu0 0.0
    %5377 = vmatpush1.msra.mxu0 0.0
    %5378 = vmatprep.subr.mxu0 0.0
    %5379 = vmatpush1.msra.mxu0 0.0
    %5380 = vmatprep.mubr.f32.mxu0 0.0
    %v5381 = vand.u32 %v5233, 4294901760
    %5382 = vmatmul.mubr.f32.gmra.mrb[0].mxu0 %v5381
    %v5383 = vpop.f32.mrb[0].mxu0
    %v5384 = vadd.f32 %v5308, %v5383
    %v5385 = vpop.f32.mrb[0].mxu0
    %5386 = vdwg.mxu0
    %5387 = vmatprep.subr.mxu0 0.0
    %v5388 = vand.u32 %v5230, 4294901760
    %v5389 = vsub.f32 %v5230, %v5388
    %5390 = vmatpush1.msra.mxu0 %v5389
    %5391 = vmatprep.subr.mxu0 0.0
    %5392 = vmatpush1.msra.mxu0 0.0
    %5393 = vmatprep.subr.mxu0 0.0
    %5394 = vmatpush1.msra.mxu0 0.0
    %5395 = vmatprep.subr.mxu0 0.0
    %5396 = vmatpush1.msra.mxu0 0.0
    %5397 = vmatprep.subr.mxu0 0.0
    %5398 = vmatpush1.msra.mxu0 0.0
    %5399 = vmatprep.subr.mxu0 0.0
    %5400 = vmatpush1.msra.mxu0 0.0
    %5401 = vmatprep.subr.mxu0 0.0
    %5402 = vmatpush1.msra.mxu0 0.0
    %5403 = vmatprep.subr.mxu0 0.0
    %5404 = vmatpush1.msra.mxu0 0.0
    %5405 = vmatprep.subr.mxu0 0.0
    %5406 = vmatpush1.msra.mxu0 0.0
    %5407 = vmatprep.subr.mxu0 0.0
    %5408 = vmatpush1.msra.mxu0 0.0
    %5409 = vmatprep.subr.mxu0 0.0
    %5410 = vmatpush1.msra.mxu0 0.0
    %5411 = vmatprep.subr.mxu0 0.0
    %5412 = vmatpush1.msra.mxu0 0.0
    %5413 = vmatprep.subr.mxu0 0.0
    %5414 = vmatpush1.msra.mxu0 0.0
    %5415 = vmatprep.subr.mxu0 0.0
    %5416 = vmatpush1.msra.mxu0 0.0
    %5417 = vmatprep.subr.mxu0 0.0
    %5418 = vmatpush1.msra.mxu0 0.0
    %5419 = vmatprep.subr.mxu0 0.0
    %5420 = vmatpush1.msra.mxu0 0.0
    %5421 = vmatprep.subr.mxu0 0.0
    %5422 = vmatpush1.msra.mxu0 0.0
    %5423 = vmatprep.subr.mxu0 0.0
    %5424 = vmatpush1.msra.mxu0 0.0
    %5425 = vmatprep.subr.mxu0 0.0
    %5426 = vmatpush1.msra.mxu0 0.0
    %5427 = vmatprep.subr.mxu0 0.0
    %5428 = vmatpush1.msra.mxu0 0.0
    %5429 = vmatprep.subr.mxu0 0.0
    %5430 = vmatpush1.msra.mxu0 0.0
    %5431 = vmatprep.subr.mxu0 0.0
    %5432 = vmatpush1.msra.mxu0 0.0
    %5433 = vmatprep.subr.mxu0 0.0
    %5434 = vmatpush1.msra.mxu0 0.0
    %5435 = vmatprep.subr.mxu0 0.0
    %5436 = vmatpush1.msra.mxu0 0.0
    %5437 = vmatprep.subr.mxu0 0.0
    %5438 = vmatpush1.msra.mxu0 0.0
    %5439 = vmatprep.subr.mxu0 0.0
    %5440 = vmatpush1.msra.mxu0 0.0
    %5441 = vmatprep.subr.mxu0 0.0
    %5442 = vmatpush1.msra.mxu0 0.0
    %5443 = vmatprep.subr.mxu0 0.0
    %5444 = vmatpush1.msra.mxu0 0.0
    %5445 = vmatprep.subr.mxu0 0.0
    %5446 = vmatpush1.msra.mxu0 0.0
    %5447 = vmatprep.subr.mxu0 0.0
    %5448 = vmatpush1.msra.mxu0 0.0
    %5449 = vmatprep.subr.mxu0 0.0
    %5450 = vmatpush1.msra.mxu0 0.0
    %5451 = vmatprep.subr.mxu0 0.0
    %5452 = vmatpush1.msra.mxu0 0.0
    %5453 = vmatprep.mubr.f32.mxu0 0.0
    %v5454 = vand.u32 %v5233, 4294901760
    %v5455 = vsub.f32 %v5233, %v5454
    %5456 = vmatmul.mubr.f32.gmra.mrb[0].mxu0 %v5455
    %v5457 = vpop.f32.mrb[0].mxu0
    %v5458 = vadd.f32 %v5384, %v5457
    %v5459 = vpop.f32.mrb[0].mxu0
    %5460 = vdwg.mxu0
    %5461 = vmatprep.subr.mxu0 0.0
    %v5462 = vand.u32 %v5230, 4294901760
    %5463 = vmatpush1.msra.mxu0 %v5462
    %5464 = vmatprep.subr.mxu0 0.0
    %5465 = vmatpush1.msra.mxu0 0.0
    %5466 = vmatprep.subr.mxu0 0.0
    %5467 = vmatpush1.msra.mxu0 0.0
    %5468 = vmatprep.subr.mxu0 0.0
    %5469 = vmatpush1.msra.mxu0 0.0
    %5470 = vmatprep.subr.mxu0 0.0
    %5471 = vmatpush1.msra.mxu0 0.0
    %5472 = vmatprep.subr.mxu0 0.0
    %5473 = vmatpush1.msra.mxu0 0.0
    %5474 = vmatprep.subr.mxu0 0.0
    %5475 = vmatpush1.msra.mxu0 0.0
    %5476 = vmatprep.subr.mxu0 0.0
    %5477 = vmatpush1.msra.mxu0 0.0
    %5478 = vmatprep.subr.mxu0 0.0
    %5479 = vmatpush1.msra.mxu0 0.0
    %5480 = vmatprep.subr.mxu0 0.0
    %5481 = vmatpush1.msra.mxu0 0.0
    %5482 = vmatprep.subr.mxu0 0.0
    %5483 = vmatpush1.msra.mxu0 0.0
    %5484 = vmatprep.subr.mxu0 0.0
    %5485 = vmatpush1.msra.mxu0 0.0
    %5486 = vmatprep.subr.mxu0 0.0
    %5487 = vmatpush1.msra.mxu0 0.0
    %5488 = vmatprep.subr.mxu0 0.0
    %5489 = vmatpush1.msra.mxu0 0.0
    %5490 = vmatprep.subr.mxu0 0.0
    %5491 = vmatpush1.msra.mxu0 0.0
    %5492 = vmatprep.subr.mxu0 0.0
    %5493 = vmatpush1.msra.mxu0 0.0
    %5494 = vmatprep.subr.mxu0 0.0
    %5495 = vmatpush1.msra.mxu0 0.0
    %5496 = vmatprep.subr.mxu0 0.0
    %5497 = vmatpush1.msra.mxu0 0.0
    %5498 = vmatprep.subr.mxu0 0.0
    %5499 = vmatpush1.msra.mxu0 0.0
    %5500 = vmatprep.subr.mxu0 0.0
    %5501 = vmatpush1.msra.mxu0 0.0
    %5502 = vmatprep.subr.mxu0 0.0
    %5503 = vmatpush1.msra.mxu0 0.0
    %5504 = vmatprep.subr.mxu0 0.0
    %5505 = vmatpush1.msra.mxu0 0.0
    %5506 = vmatprep.subr.mxu0 0.0
    %5507 = vmatpush1.msra.mxu0 0.0
    %5508 = vmatprep.subr.mxu0 0.0
    %5509 = vmatpush1.msra.mxu0 0.0
    %5510 = vmatprep.subr.mxu0 0.0
    %5511 = vmatpush1.msra.mxu0 0.0
    %5512 = vmatprep.subr.mxu0 0.0
    %5513 = vmatpush1.msra.mxu0 0.0
    %5514 = vmatprep.subr.mxu0 0.0
    %5515 = vmatpush1.msra.mxu0 0.0
    %5516 = vmatprep.subr.mxu0 0.0
    %5517 = vmatpush1.msra.mxu0 0.0
    %5518 = vmatprep.subr.mxu0 0.0
    %5519 = vmatpush1.msra.mxu0 0.0
    %5520 = vmatprep.subr.mxu0 0.0
    %5521 = vmatpush1.msra.mxu0 0.0
    %5522 = vmatprep.subr.mxu0 0.0
    %5523 = vmatpush1.msra.mxu0 0.0
    %5524 = vmatprep.subr.mxu0 0.0
    %5525 = vmatpush1.msra.mxu0 0.0
    %5526 = vmatprep.mubr.f32.mxu0 0.0
    %v5527 = vand.u32 %v5233, 4294901760
    %v5528 = vsub.f32 %v5233, %v5527
    %v5529 = vand.u32 %v5528, 4294901760
    %5530 = vmatmul.mubr.f32.gmra.mrb[0].mxu0 %v5529
    %v5531 = vpop.f32.mrb[0].mxu0
    %v5532 = vadd.f32 %v5458, %v5531
    %v5533 = vpop.f32.mrb[0].mxu0
    %5534 = vdwg.mxu0
    %5535 = vmatprep.subr.mxu0 0.0
    %v5536 = vand.u32 %v5230, 4294901760
    %v5537 = vsub.f32 %v5230, %v5536
    %v5538 = vand.u32 %v5537, 4294901760
    %5539 = vmatpush1.msra.mxu0 %v5538
    %5540 = vmatprep.subr.mxu0 0.0
    %5541 = vmatpush1.msra.mxu0 0.0
    %5542 = vmatprep.subr.mxu0 0.0
    %5543 = vmatpush1.msra.mxu0 0.0
    %5544 = vmatprep.subr.mxu0 0.0
    %5545 = vmatpush1.msra.mxu0 0.0
    %5546 = vmatprep.subr.mxu0 0.0
    %5547 = vmatpush1.msra.mxu0 0.0
    %5548 = vmatprep.subr.mxu0 0.0
    %5549 = vmatpush1.msra.mxu0 0.0
    %5550 = vmatprep.subr.mxu0 0.0
    %5551 = vmatpush1.msra.mxu0 0.0
    %5552 = vmatprep.subr.mxu0 0.0
    %5553 = vmatpush1.msra.mxu0 0.0
    %5554 = vmatprep.subr.mxu0 0.0
    %5555 = vmatpush1.msra.mxu0 0.0
    %5556 = vmatprep.subr.mxu0 0.0
    %5557 = vmatpush1.msra.mxu0 0.0
    %5558 = vmatprep.subr.mxu0 0.0
    %5559 = vmatpush1.msra.mxu0 0.0
    %5560 = vmatprep.subr.mxu0 0.0
    %5561 = vmatpush1.msra.mxu0 0.0
    %5562 = vmatprep.subr.mxu0 0.0
    %5563 = vmatpush1.msra.mxu0 0.0
    %5564 = vmatprep.subr.mxu0 0.0
    %5565 = vmatpush1.msra.mxu0 0.0
    %5566 = vmatprep.subr.mxu0 0.0
    %5567 = vmatpush1.msra.mxu0 0.0
    %5568 = vmatprep.subr.mxu0 0.0
    %5569 = vmatpush1.msra.mxu0 0.0
    %5570 = vmatprep.subr.mxu0 0.0
    %5571 = vmatpush1.msra.mxu0 0.0
    %5572 = vmatprep.subr.mxu0 0.0
    %5573 = vmatpush1.msra.mxu0 0.0
    %5574 = vmatprep.subr.mxu0 0.0
    %5575 = vmatpush1.msra.mxu0 0.0
    %5576 = vmatprep.subr.mxu0 0.0
    %5577 = vmatpush1.msra.mxu0 0.0
    %5578 = vmatprep.subr.mxu0 0.0
    %5579 = vmatpush1.msra.mxu0 0.0
    %5580 = vmatprep.subr.mxu0 0.0
    %5581 = vmatpush1.msra.mxu0 0.0
    %5582 = vmatprep.subr.mxu0 0.0
    %5583 = vmatpush1.msra.mxu0 0.0
    %5584 = vmatprep.subr.mxu0 0.0
    %5585 = vmatpush1.msra.mxu0 0.0
    %5586 = vmatprep.subr.mxu0 0.0
    %5587 = vmatpush1.msra.mxu0 0.0
    %5588 = vmatprep.subr.mxu0 0.0
    %5589 = vmatpush1.msra.mxu0 0.0
    %5590 = vmatprep.subr.mxu0 0.0
    %5591 = vmatpush1.msra.mxu0 0.0
    %5592 = vmatprep.subr.mxu0 0.0
    %5593 = vmatpush1.msra.mxu0 0.0
    %5594 = vmatprep.subr.mxu0 0.0
    %5595 = vmatpush1.msra.mxu0 0.0
    %5596 = vmatprep.subr.mxu0 0.0
    %5597 = vmatpush1.msra.mxu0 0.0
    %5598 = vmatprep.subr.mxu0 0.0
    %5599 = vmatpush1.msra.mxu0 0.0
    %5600 = vmatprep.subr.mxu0 0.0
    %5601 = vmatpush1.msra.mxu0 0.0
    %5602 = vmatprep.mubr.f32.mxu0 0.0
    %v5603 = vand.u32 %v5233, 4294901760
    %5604 = vmatmul.mubr.f32.gmra.mrb[0].mxu0 %v5603
    %v5605 = vpop.f32.mrb[0].mxu0
    %v5606 = vadd.f32 %v5532, %v5605
    %v5607 = vpop.f32.mrb[0].mxu0
    %5608 = vdwg.mxu0
    %5609 = vmatprep.subr.mxu0 0.0
    %v5610 = vand.u32 %v5230, 4294901760
    %5611 = vmatpush1.msra.mxu0 %v5610
    %5612 = vmatprep.subr.mxu0 0.0
    %5613 = vmatpush1.msra.mxu0 0.0
    %5614 = vmatprep.subr.mxu0 0.0
    %5615 = vmatpush1.msra.mxu0 0.0
    %5616 = vmatprep.subr.mxu0 0.0
    %5617 = vmatpush1.msra.mxu0 0.0
    %5618 = vmatprep.subr.mxu0 0.0
    %5619 = vmatpush1.msra.mxu0 0.0
    %5620 = vmatprep.subr.mxu0 0.0
    %5621 = vmatpush1.msra.mxu0 0.0
    %5622 = vmatprep.subr.mxu0 0.0
    %5623 = vmatpush1.msra.mxu0 0.0
    %5624 = vmatprep.subr.mxu0 0.0
    %5625 = vmatpush1.msra.mxu0 0.0
    %5626 = vmatprep.subr.mxu0 0.0
    %5627 = vmatpush1.msra.mxu0 0.0
    %5628 = vmatprep.subr.mxu0 0.0
    %5629 = vmatpush1.msra.mxu0 0.0
    %5630 = vmatprep.subr.mxu0 0.0
    %5631 = vmatpush1.msra.mxu0 0.0
    %5632 = vmatprep.subr.mxu0 0.0
    %5633 = vmatpush1.msra.mxu0 0.0
    %5634 = vmatprep.subr.mxu0 0.0
    %5635 = vmatpush1.msra.mxu0 0.0
    %5636 = vmatprep.subr.mxu0 0.0
    %5637 = vmatpush1.msra.mxu0 0.0
    %5638 = vmatprep.subr.mxu0 0.0
    %5639 = vmatpush1.msra.mxu0 0.0
    %5640 = vmatprep.subr.mxu0 0.0
    %5641 = vmatpush1.msra.mxu0 0.0
    %5642 = vmatprep.subr.mxu0 0.0
    %5643 = vmatpush1.msra.mxu0 0.0
    %5644 = vmatprep.subr.mxu0 0.0
    %5645 = vmatpush1.msra.mxu0 0.0
    %5646 = vmatprep.subr.mxu0 0.0
    %5647 = vmatpush1.msra.mxu0 0.0
    %5648 = vmatprep.subr.mxu0 0.0
    %5649 = vmatpush1.msra.mxu0 0.0
    %5650 = vmatprep.subr.mxu0 0.0
    %5651 = vmatpush1.msra.mxu0 0.0
    %5652 = vmatprep.subr.mxu0 0.0
    %5653 = vmatpush1.msra.mxu0 0.0
    %5654 = vmatprep.subr.mxu0 0.0
    %5655 = vmatpush1.msra.mxu0 0.0
    %5656 = vmatprep.subr.mxu0 0.0
    %5657 = vmatpush1.msra.mxu0 0.0
    %5658 = vmatprep.subr.mxu0 0.0
    %5659 = vmatpush1.msra.mxu0 0.0
    %5660 = vmatprep.subr.mxu0 0.0
    %5661 = vmatpush1.msra.mxu0 0.0
    %5662 = vmatprep.subr.mxu0 0.0
    %5663 = vmatpush1.msra.mxu0 0.0
    %5664 = vmatprep.subr.mxu0 0.0
    %5665 = vmatpush1.msra.mxu0 0.0
    %5666 = vmatprep.subr.mxu0 0.0
    %5667 = vmatpush1.msra.mxu0 0.0
    %5668 = vmatprep.subr.mxu0 0.0
    %5669 = vmatpush1.msra.mxu0 0.0
    %5670 = vmatprep.subr.mxu0 0.0
    %5671 = vmatpush1.msra.mxu0 0.0
    %5672 = vmatprep.subr.mxu0 0.0
    %5673 = vmatpush1.msra.mxu0 0.0
    %5674 = vmatprep.mubr.f32.mxu0 0.0
    %v5675 = vand.u32 %v5233, 4294901760
    %5676 = vmatmul.mubr.f32.gmra.mrb[0].mxu0 %v5675
    %v5677 = vpop.f32.mrb[0].mxu0
    %v5678 = vadd.f32 %v5606, %v5677
    %v5679 = vpop.f32.mrb[0].mxu0
    %5680 = vdwg.mxu0
    %5681 = vrot.lane.b32.xlu0 %v629, 48
    %v5682 = vpop.permute.xlu0 %5681
    %v5685 = vsel %vm635, %v5228, 0
    %5687 = vmatprep.subr.mxu0 0.0
    %v5688 = vand.u32 %v5682, 4294901760
    %5689 = vmatpush1.msra.mxu0 %v5688
    %5690 = vmatprep.subr.mxu0 0.0
    %5691 = vmatpush1.msra.mxu0 0.0
    %5692 = vmatprep.subr.mxu0 0.0
    %5693 = vmatpush1.msra.mxu0 0.0
    %5694 = vmatprep.subr.mxu0 0.0
    %5695 = vmatpush1.msra.mxu0 0.0
    %5696 = vmatprep.subr.mxu0 0.0
    %5697 = vmatpush1.msra.mxu0 0.0
    %5698 = vmatprep.subr.mxu0 0.0
    %5699 = vmatpush1.msra.mxu0 0.0
    %5700 = vmatprep.subr.mxu0 0.0
    %5701 = vmatpush1.msra.mxu0 0.0
    %5702 = vmatprep.subr.mxu0 0.0
    %5703 = vmatpush1.msra.mxu0 0.0
    %5704 = vmatprep.subr.mxu0 0.0
    %5705 = vmatpush1.msra.mxu0 0.0
    %5706 = vmatprep.subr.mxu0 0.0
    %5707 = vmatpush1.msra.mxu0 0.0
    %5708 = vmatprep.subr.mxu0 0.0
    %5709 = vmatpush1.msra.mxu0 0.0
    %5710 = vmatprep.subr.mxu0 0.0
    %5711 = vmatpush1.msra.mxu0 0.0
    %5712 = vmatprep.subr.mxu0 0.0
    %5713 = vmatpush1.msra.mxu0 0.0
    %5714 = vmatprep.subr.mxu0 0.0
    %5715 = vmatpush1.msra.mxu0 0.0
    %5716 = vmatprep.subr.mxu0 0.0
    %5717 = vmatpush1.msra.mxu0 0.0
    %5718 = vmatprep.subr.mxu0 0.0
    %5719 = vmatpush1.msra.mxu0 0.0
    %5720 = vmatprep.subr.mxu0 0.0
    %5721 = vmatpush1.msra.mxu0 0.0
    %5722 = vmatprep.subr.mxu0 0.0
    %5723 = vmatpush1.msra.mxu0 0.0
    %5724 = vmatprep.subr.mxu0 0.0
    %5725 = vmatpush1.msra.mxu0 0.0
    %5726 = vmatprep.subr.mxu0 0.0
    %5727 = vmatpush1.msra.mxu0 0.0
    %5728 = vmatprep.subr.mxu0 0.0
    %5729 = vmatpush1.msra.mxu0 0.0
    %5730 = vmatprep.subr.mxu0 0.0
    %5731 = vmatpush1.msra.mxu0 0.0
    %5732 = vmatprep.subr.mxu0 0.0
    %5733 = vmatpush1.msra.mxu0 0.0
    %5734 = vmatprep.subr.mxu0 0.0
    %5735 = vmatpush1.msra.mxu0 0.0
    %5736 = vmatprep.subr.mxu0 0.0
    %5737 = vmatpush1.msra.mxu0 0.0
    %5738 = vmatprep.subr.mxu0 0.0
    %5739 = vmatpush1.msra.mxu0 0.0
    %5740 = vmatprep.subr.mxu0 0.0
    %5741 = vmatpush1.msra.mxu0 0.0
    %5742 = vmatprep.subr.mxu0 0.0
    %5743 = vmatpush1.msra.mxu0 0.0
    %5744 = vmatprep.subr.mxu0 0.0
    %5745 = vmatpush1.msra.mxu0 0.0
    %5746 = vmatprep.subr.mxu0 0.0
    %5747 = vmatpush1.msra.mxu0 0.0
    %5748 = vmatprep.subr.mxu0 0.0
    %5749 = vmatpush1.msra.mxu0 0.0
    %5750 = vmatprep.subr.mxu0 0.0
    %5751 = vmatpush1.msra.mxu0 0.0
    %5752 = vmatprep.mubr.f32.mxu0 0.0
    %v5753 = vand.u32 %v5685, 4294901760
    %v5754 = vsub.f32 %v5685, %v5753
    %v5755 = vand.u32 %v5754, 4294901760
    %v5756 = vsub.f32 %v5754, %v5755
    %v5757 = vand.u32 %v5756, 4294901760
    %5758 = vmatmul.mubr.f32.gmra.mrb[0].mxu0 %v5757
    %v5759 = vpop.f32.mrb[0].mxu0
    %v5760 = vadd.f32 0.0, %v5759
    %v5761 = vpop.f32.mrb[0].mxu0
    %5762 = vdwg.mxu0
    %5763 = vmatprep.subr.mxu0 0.0
    %v5764 = vand.u32 %v5682, 4294901760
    %v5765 = vsub.f32 %v5682, %v5764
    %v5766 = vand.u32 %v5765, 4294901760
    %v5767 = vsub.f32 %v5765, %v5766
    %v5768 = vand.u32 %v5767, 4294901760
    %5769 = vmatpush1.msra.mxu0 %v5768
    %5770 = vmatprep.subr.mxu0 0.0
    %5771 = vmatpush1.msra.mxu0 0.0
    %5772 = vmatprep.subr.mxu0 0.0
    %5773 = vmatpush1.msra.mxu0 0.0
    %5774 = vmatprep.subr.mxu0 0.0
    %5775 = vmatpush1.msra.mxu0 0.0
    %5776 = vmatprep.subr.mxu0 0.0
    %5777 = vmatpush1.msra.mxu0 0.0
    %5778 = vmatprep.subr.mxu0 0.0
    %5779 = vmatpush1.msra.mxu0 0.0
    %5780 = vmatprep.subr.mxu0 0.0
    %5781 = vmatpush1.msra.mxu0 0.0
    %5782 = vmatprep.subr.mxu0 0.0
    %5783 = vmatpush1.msra.mxu0 0.0
    %5784 = vmatprep.subr.mxu0 0.0
    %5785 = vmatpush1.msra.mxu0 0.0
    %5786 = vmatprep.subr.mxu0 0.0
    %5787 = vmatpush1.msra.mxu0 0.0
    %5788 = vmatprep.subr.mxu0 0.0
    %5789 = vmatpush1.msra.mxu0 0.0
    %5790 = vmatprep.subr.mxu0 0.0
    %5791 = vmatpush1.msra.mxu0 0.0
    %5792 = vmatprep.subr.mxu0 0.0
    %5793 = vmatpush1.msra.mxu0 0.0
    %5794 = vmatprep.subr.mxu0 0.0
    %5795 = vmatpush1.msra.mxu0 0.0
    %5796 = vmatprep.subr.mxu0 0.0
    %5797 = vmatpush1.msra.mxu0 0.0
    %5798 = vmatprep.subr.mxu0 0.0
    %5799 = vmatpush1.msra.mxu0 0.0
    %5800 = vmatprep.subr.mxu0 0.0
    %5801 = vmatpush1.msra.mxu0 0.0
    %5802 = vmatprep.subr.mxu0 0.0
    %5803 = vmatpush1.msra.mxu0 0.0
    %5804 = vmatprep.subr.mxu0 0.0
    %5805 = vmatpush1.msra.mxu0 0.0
    %5806 = vmatprep.subr.mxu0 0.0
    %5807 = vmatpush1.msra.mxu0 0.0
    %5808 = vmatprep.subr.mxu0 0.0
    %5809 = vmatpush1.msra.mxu0 0.0
    %5810 = vmatprep.subr.mxu0 0.0
    %5811 = vmatpush1.msra.mxu0 0.0
    %5812 = vmatprep.subr.mxu0 0.0
    %5813 = vmatpush1.msra.mxu0 0.0
    %5814 = vmatprep.subr.mxu0 0.0
    %5815 = vmatpush1.msra.mxu0 0.0
    %5816 = vmatprep.subr.mxu0 0.0
    %5817 = vmatpush1.msra.mxu0 0.0
    %5818 = vmatprep.subr.mxu0 0.0
    %5819 = vmatpush1.msra.mxu0 0.0
    %5820 = vmatprep.subr.mxu0 0.0
    %5821 = vmatpush1.msra.mxu0 0.0
    %5822 = vmatprep.subr.mxu0 0.0
    %5823 = vmatpush1.msra.mxu0 0.0
    %5824 = vmatprep.subr.mxu0 0.0
    %5825 = vmatpush1.msra.mxu0 0.0
    %5826 = vmatprep.subr.mxu0 0.0
    %5827 = vmatpush1.msra.mxu0 0.0
    %5828 = vmatprep.subr.mxu0 0.0
    %5829 = vmatpush1.msra.mxu0 0.0
    %5830 = vmatprep.subr.mxu0 0.0
    %5831 = vmatpush1.msra.mxu0 0.0
    %5832 = vmatprep.mubr.f32.mxu0 0.0
    %v5833 = vand.u32 %v5685, 4294901760
    %5834 = vmatmul.mubr.f32.gmra.mrb[0].mxu0 %v5833
    %v5835 = vpop.f32.mrb[0].mxu0
    %v5836 = vadd.f32 %v5760, %v5835
    %v5837 = vpop.f32.mrb[0].mxu0
    %5838 = vdwg.mxu0
    %5839 = vmatprep.subr.mxu0 0.0
    %v5840 = vand.u32 %v5682, 4294901760
    %v5841 = vsub.f32 %v5682, %v5840
    %5842 = vmatpush1.msra.mxu0 %v5841
    %5843 = vmatprep.subr.mxu0 0.0
    %5844 = vmatpush1.msra.mxu0 0.0
    %5845 = vmatprep.subr.mxu0 0.0
    %5846 = vmatpush1.msra.mxu0 0.0
    %5847 = vmatprep.subr.mxu0 0.0
    %5848 = vmatpush1.msra.mxu0 0.0
    %5849 = vmatprep.subr.mxu0 0.0
    %5850 = vmatpush1.msra.mxu0 0.0
    %5851 = vmatprep.subr.mxu0 0.0
    %5852 = vmatpush1.msra.mxu0 0.0
    %5853 = vmatprep.subr.mxu0 0.0
    %5854 = vmatpush1.msra.mxu0 0.0
    %5855 = vmatprep.subr.mxu0 0.0
    %5856 = vmatpush1.msra.mxu0 0.0
    %5857 = vmatprep.subr.mxu0 0.0
    %5858 = vmatpush1.msra.mxu0 0.0
    %5859 = vmatprep.subr.mxu0 0.0
    %5860 = vmatpush1.msra.mxu0 0.0
    %5861 = vmatprep.subr.mxu0 0.0
    %5862 = vmatpush1.msra.mxu0 0.0
    %5863 = vmatprep.subr.mxu0 0.0
    %5864 = vmatpush1.msra.mxu0 0.0
    %5865 = vmatprep.subr.mxu0 0.0
    %5866 = vmatpush1.msra.mxu0 0.0
    %5867 = vmatprep.subr.mxu0 0.0
    %5868 = vmatpush1.msra.mxu0 0.0
    %5869 = vmatprep.subr.mxu0 0.0
    %5870 = vmatpush1.msra.mxu0 0.0
    %5871 = vmatprep.subr.mxu0 0.0
    %5872 = vmatpush1.msra.mxu0 0.0
    %5873 = vmatprep.subr.mxu0 0.0
    %5874 = vmatpush1.msra.mxu0 0.0
    %5875 = vmatprep.subr.mxu0 0.0
    %5876 = vmatpush1.msra.mxu0 0.0
    %5877 = vmatprep.subr.mxu0 0.0
    %5878 = vmatpush1.msra.mxu0 0.0
    %5879 = vmatprep.subr.mxu0 0.0
    %5880 = vmatpush1.msra.mxu0 0.0
    %5881 = vmatprep.subr.mxu0 0.0
    %5882 = vmatpush1.msra.mxu0 0.0
    %5883 = vmatprep.subr.mxu0 0.0
    %5884 = vmatpush1.msra.mxu0 0.0
    %5885 = vmatprep.subr.mxu0 0.0
    %5886 = vmatpush1.msra.mxu0 0.0
    %5887 = vmatprep.subr.mxu0 0.0
    %5888 = vmatpush1.msra.mxu0 0.0
    %5889 = vmatprep.subr.mxu0 0.0
    %5890 = vmatpush1.msra.mxu0 0.0
    %5891 = vmatprep.subr.mxu0 0.0
    %5892 = vmatpush1.msra.mxu0 0.0
    %5893 = vmatprep.subr.mxu0 0.0
    %5894 = vmatpush1.msra.mxu0 0.0
    %5895 = vmatprep.subr.mxu0 0.0
    %5896 = vmatpush1.msra.mxu0 0.0
    %5897 = vmatprep.subr.mxu0 0.0
    %5898 = vmatpush1.msra.mxu0 0.0
    %5899 = vmatprep.subr.mxu0 0.0
    %5900 = vmatpush1.msra.mxu0 0.0
    %5901 = vmatprep.subr.mxu0 0.0
    %5902 = vmatpush1.msra.mxu0 0.0
    %5903 = vmatprep.subr.mxu0 0.0
    %5904 = vmatpush1.msra.mxu0 0.0
    %5905 = vmatprep.mubr.f32.mxu0 0.0
    %v5906 = vand.u32 %v5685, 4294901760
    %v5907 = vsub.f32 %v5685, %v5906
    %5908 = vmatmul.mubr.f32.gmra.mrb[0].mxu0 %v5907
    %v5909 = vpop.f32.mrb[0].mxu0
    %v5910 = vadd.f32 %v5836, %v5909
    %v5911 = vpop.f32.mrb[0].mxu0
    %5912 = vdwg.mxu0
    %5913 = vmatprep.subr.mxu0 0.0
    %v5914 = vand.u32 %v5682, 4294901760
    %5915 = vmatpush1.msra.mxu0 %v5914
    %5916 = vmatprep.subr.mxu0 0.0
    %5917 = vmatpush1.msra.mxu0 0.0
    %5918 = vmatprep.subr.mxu0 0.0
    %5919 = vmatpush1.msra.mxu0 0.0
    %5920 = vmatprep.subr.mxu0 0.0
    %5921 = vmatpush1.msra.mxu0 0.0
    %5922 = vmatprep.subr.mxu0 0.0
    %5923 = vmatpush1.msra.mxu0 0.0
    %5924 = vmatprep.subr.mxu0 0.0
    %5925 = vmatpush1.msra.mxu0 0.0
    %5926 = vmatprep.subr.mxu0 0.0
    %5927 = vmatpush1.msra.mxu0 0.0
    %5928 = vmatprep.subr.mxu0 0.0
    %5929 = vmatpush1.msra.mxu0 0.0
    %5930 = vmatprep.subr.mxu0 0.0
    %5931 = vmatpush1.msra.mxu0 0.0
    %5932 = vmatprep.subr.mxu0 0.0
    %5933 = vmatpush1.msra.mxu0 0.0
    %5934 = vmatprep.subr.mxu0 0.0
    %5935 = vmatpush1.msra.mxu0 0.0
    %5936 = vmatprep.subr.mxu0 0.0
    %5937 = vmatpush1.msra.mxu0 0.0
    %5938 = vmatprep.subr.mxu0 0.0
    %5939 = vmatpush1.msra.mxu0 0.0
    %5940 = vmatprep.subr.mxu0 0.0
    %5941 = vmatpush1.msra.mxu0 0.0
    %5942 = vmatprep.subr.mxu0 0.0
    %5943 = vmatpush1.msra.mxu0 0.0
    %5944 = vmatprep.subr.mxu0 0.0
    %5945 = vmatpush1.msra.mxu0 0.0
    %5946 = vmatprep.subr.mxu0 0.0
    %5947 = vmatpush1.msra.mxu0 0.0
    %5948 = vmatprep.subr.mxu0 0.0
    %5949 = vmatpush1.msra.mxu0 0.0
    %5950 = vmatprep.subr.mxu0 0.0
    %5951 = vmatpush1.msra.mxu0 0.0
    %5952 = vmatprep.subr.mxu0 0.0
    %5953 = vmatpush1.msra.mxu0 0.0
    %5954 = vmatprep.subr.mxu0 0.0
    %5955 = vmatpush1.msra.mxu0 0.0
    %5956 = vmatprep.subr.mxu0 0.0
    %5957 = vmatpush1.msra.mxu0 0.0
    %5958 = vmatprep.subr.mxu0 0.0
    %5959 = vmatpush1.msra.mxu0 0.0
    %5960 = vmatprep.subr.mxu0 0.0
    %5961 = vmatpush1.msra.mxu0 0.0
    %5962 = vmatprep.subr.mxu0 0.0
    %5963 = vmatpush1.msra.mxu0 0.0
    %5964 = vmatprep.subr.mxu0 0.0
    %5965 = vmatpush1.msra.mxu0 0.0
    %5966 = vmatprep.subr.mxu0 0.0
    %5967 = vmatpush1.msra.mxu0 0.0
    %5968 = vmatprep.subr.mxu0 0.0
    %5969 = vmatpush1.msra.mxu0 0.0
    %5970 = vmatprep.subr.mxu0 0.0
    %5971 = vmatpush1.msra.mxu0 0.0
    %5972 = vmatprep.subr.mxu0 0.0
    %5973 = vmatpush1.msra.mxu0 0.0
    %5974 = vmatprep.subr.mxu0 0.0
    %5975 = vmatpush1.msra.mxu0 0.0
    %5976 = vmatprep.subr.mxu0 0.0
    %5977 = vmatpush1.msra.mxu0 0.0
    %5978 = vmatprep.mubr.f32.mxu0 0.0
    %v5979 = vand.u32 %v5685, 4294901760
    %v5980 = vsub.f32 %v5685, %v5979
    %v5981 = vand.u32 %v5980, 4294901760
    %5982 = vmatmul.mubr.f32.gmra.mrb[0].mxu0 %v5981
    %v5983 = vpop.f32.mrb[0].mxu0
    %v5984 = vadd.f32 %v5910, %v5983
    %v5985 = vpop.f32.mrb[0].mxu0
    %5986 = vdwg.mxu0
    %5987 = vmatprep.subr.mxu0 0.0
    %v5988 = vand.u32 %v5682, 4294901760
    %v5989 = vsub.f32 %v5682, %v5988
    %v5990 = vand.u32 %v5989, 4294901760
    %5991 = vmatpush1.msra.mxu0 %v5990
    %5992 = vmatprep.subr.mxu0 0.0
    %5993 = vmatpush1.msra.mxu0 0.0
    %5994 = vmatprep.subr.mxu0 0.0
    %5995 = vmatpush1.msra.mxu0 0.0
    %5996 = vmatprep.subr.mxu0 0.0
    %5997 = vmatpush1.msra.mxu0 0.0
    %5998 = vmatprep.subr.mxu0 0.0
    %5999 = vmatpush1.msra.mxu0 0.0
    %6000 = vmatprep.subr.mxu0 0.0
    %6001 = vmatpush1.msra.mxu0 0.0
    %6002 = vmatprep.subr.mxu0 0.0
    %6003 = vmatpush1.msra.mxu0 0.0
    %6004 = vmatprep.subr.mxu0 0.0
    %6005 = vmatpush1.msra.mxu0 0.0
    %6006 = vmatprep.subr.mxu0 0.0
    %6007 = vmatpush1.msra.mxu0 0.0
    %6008 = vmatprep.subr.mxu0 0.0
    %6009 = vmatpush1.msra.mxu0 0.0
    %6010 = vmatprep.subr.mxu0 0.0
    %6011 = vmatpush1.msra.mxu0 0.0
    %6012 = vmatprep.subr.mxu0 0.0
    %6013 = vmatpush1.msra.mxu0 0.0
    %6014 = vmatprep.subr.mxu0 0.0
    %6015 = vmatpush1.msra.mxu0 0.0
    %6016 = vmatprep.subr.mxu0 0.0
    %6017 = vmatpush1.msra.mxu0 0.0
    %6018 = vmatprep.subr.mxu0 0.0
    %6019 = vmatpush1.msra.mxu0 0.0
    %6020 = vmatprep.subr.mxu0 0.0
    %6021 = vmatpush1.msra.mxu0 0.0
    %6022 = vmatprep.subr.mxu0 0.0
    %6023 = vmatpush1.msra.mxu0 0.0
    %6024 = vmatprep.subr.mxu0 0.0
    %6025 = vmatpush1.msra.mxu0 0.0
    %6026 = vmatprep.subr.mxu0 0.0
    %6027 = vmatpush1.msra.mxu0 0.0
    %6028 = vmatprep.subr.mxu0 0.0
    %6029 = vmatpush1.msra.mxu0 0.0
    %6030 = vmatprep.subr.mxu0 0.0
    %6031 = vmatpush1.msra.mxu0 0.0
    %6032 = vmatprep.subr.mxu0 0.0
    %6033 = vmatpush1.msra.mxu0 0.0
    %6034 = vmatprep.subr.mxu0 0.0
    %6035 = vmatpush1.msra.mxu0 0.0
    %6036 = vmatprep.subr.mxu0 0.0
    %6037 = vmatpush1.msra.mxu0 0.0
    %6038 = vmatprep.subr.mxu0 0.0
    %6039 = vmatpush1.msra.mxu0 0.0
    %6040 = vmatprep.subr.mxu0 0.0
    %6041 = vmatpush1.msra.mxu0 0.0
    %6042 = vmatprep.subr.mxu0 0.0
    %6043 = vmatpush1.msra.mxu0 0.0
    %6044 = vmatprep.subr.mxu0 0.0
    %6045 = vmatpush1.msra.mxu0 0.0
    %6046 = vmatprep.subr.mxu0 0.0
    %6047 = vmatpush1.msra.mxu0 0.0
    %6048 = vmatprep.subr.mxu0 0.0
    %6049 = vmatpush1.msra.mxu0 0.0
    %6050 = vmatprep.subr.mxu0 0.0
    %6051 = vmatpush1.msra.mxu0 0.0
    %6052 = vmatprep.subr.mxu0 0.0
    %6053 = vmatpush1.msra.mxu0 0.0
    %6054 = vmatprep.mubr.f32.mxu0 0.0
    %v6055 = vand.u32 %v5685, 4294901760
    %6056 = vmatmul.mubr.f32.gmra.mrb[0].mxu0 %v6055
    %v6057 = vpop.f32.mrb[0].mxu0
    %v6058 = vadd.f32 %v5984, %v6057
    %v6059 = vpop.f32.mrb[0].mxu0
    %6060 = vdwg.mxu0
    %6061 = vmatprep.subr.mxu0 0.0
    %v6062 = vand.u32 %v5682, 4294901760
    %6063 = vmatpush1.msra.mxu0 %v6062
    %6064 = vmatprep.subr.mxu0 0.0
    %6065 = vmatpush1.msra.mxu0 0.0
    %6066 = vmatprep.subr.mxu0 0.0
    %6067 = vmatpush1.msra.mxu0 0.0
    %6068 = vmatprep.subr.mxu0 0.0
    %6069 = vmatpush1.msra.mxu0 0.0
    %6070 = vmatprep.subr.mxu0 0.0
    %6071 = vmatpush1.msra.mxu0 0.0
    %6072 = vmatprep.subr.mxu0 0.0
    %6073 = vmatpush1.msra.mxu0 0.0
    %6074 = vmatprep.subr.mxu0 0.0
    %6075 = vmatpush1.msra.mxu0 0.0
    %6076 = vmatprep.subr.mxu0 0.0
    %6077 = vmatpush1.msra.mxu0 0.0
    %6078 = vmatprep.subr.mxu0 0.0
    %6079 = vmatpush1.msra.mxu0 0.0
    %6080 = vmatprep.subr.mxu0 0.0
    %6081 = vmatpush1.msra.mxu0 0.0
    %6082 = vmatprep.subr.mxu0 0.0
    %6083 = vmatpush1.msra.mxu0 0.0
    %6084 = vmatprep.subr.mxu0 0.0
    %6085 = vmatpush1.msra.mxu0 0.0
    %6086 = vmatprep.subr.mxu0 0.0
    %6087 = vmatpush1.msra.mxu0 0.0
    %6088 = vmatprep.subr.mxu0 0.0
    %6089 = vmatpush1.msra.mxu0 0.0
    %6090 = vmatprep.subr.mxu0 0.0
    %6091 = vmatpush1.msra.mxu0 0.0
    %6092 = vmatprep.subr.mxu0 0.0
    %6093 = vmatpush1.msra.mxu0 0.0
    %6094 = vmatprep.subr.mxu0 0.0
    %6095 = vmatpush1.msra.mxu0 0.0
    %6096 = vmatprep.subr.mxu0 0.0
    %6097 = vmatpush1.msra.mxu0 0.0
    %6098 = vmatprep.subr.mxu0 0.0
    %6099 = vmatpush1.msra.mxu0 0.0
    %6100 = vmatprep.subr.mxu0 0.0
    %6101 = vmatpush1.msra.mxu0 0.0
    %6102 = vmatprep.subr.mxu0 0.0
    %6103 = vmatpush1.msra.mxu0 0.0
    %6104 = vmatprep.subr.mxu0 0.0
    %6105 = vmatpush1.msra.mxu0 0.0
    %6106 = vmatprep.subr.mxu0 0.0
    %6107 = vmatpush1.msra.mxu0 0.0
    %6108 = vmatprep.subr.mxu0 0.0
    %6109 = vmatpush1.msra.mxu0 0.0
    %6110 = vmatprep.subr.mxu0 0.0
    %6111 = vmatpush1.msra.mxu0 0.0
    %6112 = vmatprep.subr.mxu0 0.0
    %6113 = vmatpush1.msra.mxu0 0.0
    %6114 = vmatprep.subr.mxu0 0.0
    %6115 = vmatpush1.msra.mxu0 0.0
    %6116 = vmatprep.subr.mxu0 0.0
    %6117 = vmatpush1.msra.mxu0 0.0
    %6118 = vmatprep.subr.mxu0 0.0
    %6119 = vmatpush1.msra.mxu0 0.0
    %6120 = vmatprep.subr.mxu0 0.0
    %6121 = vmatpush1.msra.mxu0 0.0
    %6122 = vmatprep.subr.mxu0 0.0
    %6123 = vmatpush1.msra.mxu0 0.0
    %6124 = vmatprep.subr.mxu0 0.0
    %6125 = vmatpush1.msra.mxu0 0.0
    %6126 = vmatprep.mubr.f32.mxu0 0.0
    %v6127 = vand.u32 %v5685, 4294901760
    %6128 = vmatmul.mubr.f32.gmra.mrb[0].mxu0 %v6127
    %v6129 = vpop.f32.mrb[0].mxu0
    %v6130 = vadd.f32 %v6058, %v6129
    %v6131 = vpop.f32.mrb[0].mxu0
    %6132 = vdwg.mxu0
    %6133 = vrot.lane.b32.xlu0 %v623, 104
    %v6134 = vpop.permute.xlu0 %6133
    %6135 = vrot.lane.b32.xlu0 %v623, 72
    %v6136 = vpop.permute.xlu0 %6135
    %v6137 = vsel %vm635, %v6134, 0
    %v6139 = vsel %vm635, %v6136, 0
    %6141 = vmatprep.subr.mxu0 0.0
    %v6142 = vand.u32 %v6139, 4294901760
    %6143 = vmatpush1.xpose.msra.mxu0 %v6142
    %6144 = vmatprep.subr.mxu0 0.0
    %6145 = vmatpush1.xpose.msra.mxu0 0.0
    %6146 = vmatprep.subr.mxu0 0.0
    %6147 = vmatpush1.xpose.msra.mxu0 0.0
    %6148 = vmatprep.subr.mxu0 0.0
    %6149 = vmatpush1.xpose.msra.mxu0 0.0
    %6150 = vmatprep.subr.mxu0 0.0
    %6151 = vmatpush1.xpose.msra.mxu0 0.0
    %6152 = vmatprep.subr.mxu0 0.0
    %6153 = vmatpush1.xpose.msra.mxu0 0.0
    %6154 = vmatprep.subr.mxu0 0.0
    %6155 = vmatpush1.xpose.msra.mxu0 0.0
    %6156 = vmatprep.subr.mxu0 0.0
    %6157 = vmatpush1.xpose.msra.mxu0 0.0
    %6158 = vmatprep.subr.mxu0 0.0
    %6159 = vmatpush1.xpose.msra.mxu0 0.0
    %6160 = vmatprep.subr.mxu0 0.0
    %6161 = vmatpush1.xpose.msra.mxu0 0.0
    %6162 = vmatprep.subr.mxu0 0.0
    %6163 = vmatpush1.xpose.msra.mxu0 0.0
    %6164 = vmatprep.subr.mxu0 0.0
    %6165 = vmatpush1.xpose.msra.mxu0 0.0
    %6166 = vmatprep.subr.mxu0 0.0
    %6167 = vmatpush1.xpose.msra.mxu0 0.0
    %6168 = vmatprep.subr.mxu0 0.0
    %6169 = vmatpush1.xpose.msra.mxu0 0.0
    %6170 = vmatprep.subr.mxu0 0.0
    %6171 = vmatpush1.xpose.msra.mxu0 0.0
    %6172 = vmatprep.subr.mxu0 0.0
    %6173 = vmatpush1.xpose.msra.mxu0 0.0
    %6174 = vmatprep.subr.mxu0 0.0
    %6175 = vmatpush1.xpose.msra.mxu0 0.0
    %6176 = vmatprep.subr.mxu0 0.0
    %6177 = vmatpush1.xpose.msra.mxu0 0.0
    %6178 = vmatprep.subr.mxu0 0.0
    %6179 = vmatpush1.xpose.msra.mxu0 0.0
    %6180 = vmatprep.subr.mxu0 0.0
    %6181 = vmatpush1.xpose.msra.mxu0 0.0
    %6182 = vmatprep.subr.mxu0 0.0
    %6183 = vmatpush1.xpose.msra.mxu0 0.0
    %6184 = vmatprep.subr.mxu0 0.0
    %6185 = vmatpush1.xpose.msra.mxu0 0.0
    %6186 = vmatprep.subr.mxu0 0.0
    %6187 = vmatpush1.xpose.msra.mxu0 0.0
    %6188 = vmatprep.subr.mxu0 0.0
    %6189 = vmatpush1.xpose.msra.mxu0 0.0
    %6190 = vmatprep.subr.mxu0 0.0
    %6191 = vmatpush1.xpose.msra.mxu0 0.0
    %6192 = vmatprep.subr.mxu0 0.0
    %6193 = vmatpush1.xpose.msra.mxu0 0.0
    %6194 = vmatprep.subr.mxu0 0.0
    %6195 = vmatpush1.xpose.msra.mxu0 0.0
    %6196 = vmatprep.subr.mxu0 0.0
    %6197 = vmatpush1.xpose.msra.mxu0 0.0
    %6198 = vmatprep.subr.mxu0 0.0
    %6199 = vmatpush1.xpose.msra.mxu0 0.0
    %6200 = vmatprep.subr.mxu0 0.0
    %6201 = vmatpush1.xpose.msra.mxu0 0.0
    %6202 = vmatprep.subr.mxu0 0.0
    %6203 = vmatpush1.xpose.msra.mxu0 0.0
    %6204 = vmatprep.subr.mxu0 0.0
    %6205 = vmatpush1.xpose.msra.mxu0 0.0
    %6206 = vmatprep.mubr.f32.mxu0 0.0
    %v6207 = vand.u32 %v6137, 4294901760
    %v6208 = vsub.f32 %v6137, %v6207
    %v6209 = vand.u32 %v6208, 4294901760
    %v6210 = vsub.f32 %v6208, %v6209
    %v6211 = vand.u32 %v6210, 4294901760
    %6212 = vmatmul.mubr.f32.gmra.mrb[0].mxu0 %v6211
    %v6213 = vpop.f32.mrb[0].mxu0
    %v6214 = vadd.f32 0.0, %v6213
    %v6215 = vpop.f32.mrb[0].mxu0
    %6216 = vdwg.mxu0
    %6217 = vmatprep.subr.mxu0 0.0
    %v6218 = vand.u32 %v6139, 4294901760
    %v6219 = vsub.f32 %v6139, %v6218
    %v6220 = vand.u32 %v6219, 4294901760
    %v6221 = vsub.f32 %v6219, %v6220
    %v6222 = vand.u32 %v6221, 4294901760
    %6223 = vmatpush1.xpose.msra.mxu0 %v6222
    %6224 = vmatprep.subr.mxu0 0.0
    %6225 = vmatpush1.xpose.msra.mxu0 0.0
    %6226 = vmatprep.subr.mxu0 0.0
    %6227 = vmatpush1.xpose.msra.mxu0 0.0
    %6228 = vmatprep.subr.mxu0 0.0
    %6229 = vmatpush1.xpose.msra.mxu0 0.0
    %6230 = vmatprep.subr.mxu0 0.0
    %6231 = vmatpush1.xpose.msra.mxu0 0.0
    %6232 = vmatprep.subr.mxu0 0.0
    %6233 = vmatpush1.xpose.msra.mxu0 0.0
    %6234 = vmatprep.subr.mxu0 0.0
    %6235 = vmatpush1.xpose.msra.mxu0 0.0
    %6236 = vmatprep.subr.mxu0 0.0
    %6237 = vmatpush1.xpose.msra.mxu0 0.0
    %6238 = vmatprep.subr.mxu0 0.0
    %6239 = vmatpush1.xpose.msra.mxu0 0.0
    %6240 = vmatprep.subr.mxu0 0.0
    %6241 = vmatpush1.xpose.msra.mxu0 0.0
    %6242 = vmatprep.subr.mxu0 0.0
    %6243 = vmatpush1.xpose.msra.mxu0 0.0
    %6244 = vmatprep.subr.mxu0 0.0
    %6245 = vmatpush1.xpose.msra.mxu0 0.0
    %6246 = vmatprep.subr.mxu0 0.0
    %6247 = vmatpush1.xpose.msra.mxu0 0.0
    %6248 = vmatprep.subr.mxu0 0.0
    %6249 = vmatpush1.xpose.msra.mxu0 0.0
    %6250 = vmatprep.subr.mxu0 0.0
    %6251 = vmatpush1.xpose.msra.mxu0 0.0
    %6252 = vmatprep.subr.mxu0 0.0
    %6253 = vmatpush1.xpose.msra.mxu0 0.0
    %6254 = vmatprep.subr.mxu0 0.0
    %6255 = vmatpush1.xpose.msra.mxu0 0.0
    %6256 = vmatprep.subr.mxu0 0.0
    %6257 = vmatpush1.xpose.msra.mxu0 0.0
    %6258 = vmatprep.subr.mxu0 0.0
    %6259 = vmatpush1.xpose.msra.mxu0 0.0
    %6260 = vmatprep.subr.mxu0 0.0
    %6261 = vmatpush1.xpose.msra.mxu0 0.0
    %6262 = vmatprep.subr.mxu0 0.0
    %6263 = vmatpush1.xpose.msra.mxu0 0.0
    %6264 = vmatprep.subr.mxu0 0.0
    %6265 = vmatpush1.xpose.msra.mxu0 0.0
    %6266 = vmatprep.subr.mxu0 0.0
    %6267 = vmatpush1.xpose.msra.mxu0 0.0
    %6268 = vmatprep.subr.mxu0 0.0
    %6269 = vmatpush1.xpose.msra.mxu0 0.0
    %6270 = vmatprep.subr.mxu0 0.0
    %6271 = vmatpush1.xpose.msra.mxu0 0.0
    %6272 = vmatprep.subr.mxu0 0.0
    %6273 = vmatpush1.xpose.msra.mxu0 0.0
    %6274 = vmatprep.subr.mxu0 0.0
    %6275 = vmatpush1.xpose.msra.mxu0 0.0
    %6276 = vmatprep.subr.mxu0 0.0
    %6277 = vmatpush1.xpose.msra.mxu0 0.0
    %6278 = vmatprep.subr.mxu0 0.0
    %6279 = vmatpush1.xpose.msra.mxu0 0.0
    %6280 = vmatprep.subr.mxu0 0.0
    %6281 = vmatpush1.xpose.msra.mxu0 0.0
    %6282 = vmatprep.subr.mxu0 0.0
    %6283 = vmatpush1.xpose.msra.mxu0 0.0
    %6284 = vmatprep.subr.mxu0 0.0
    %6285 = vmatpush1.xpose.msra.mxu0 0.0
    %6286 = vmatprep.mubr.f32.mxu0 0.0
    %v6287 = vand.u32 %v6137, 4294901760
    %6288 = vmatmul.mubr.f32.gmra.mrb[0].mxu0 %v6287
    %v6289 = vpop.f32.mrb[0].mxu0
    %v6290 = vadd.f32 %v6214, %v6289
    %v6291 = vpop.f32.mrb[0].mxu0
    %6292 = vdwg.mxu0
    %6293 = vmatprep.subr.mxu0 0.0
    %v6294 = vand.u32 %v6139, 4294901760
    %v6295 = vsub.f32 %v6139, %v6294
    %6296 = vmatpush1.xpose.msra.mxu0 %v6295
    %6297 = vmatprep.subr.mxu0 0.0
    %6298 = vmatpush1.xpose.msra.mxu0 0.0
    %6299 = vmatprep.subr.mxu0 0.0
    %6300 = vmatpush1.xpose.msra.mxu0 0.0
    %6301 = vmatprep.subr.mxu0 0.0
    %6302 = vmatpush1.xpose.msra.mxu0 0.0
    %6303 = vmatprep.subr.mxu0 0.0
    %6304 = vmatpush1.xpose.msra.mxu0 0.0
    %6305 = vmatprep.subr.mxu0 0.0
    %6306 = vmatpush1.xpose.msra.mxu0 0.0
    %6307 = vmatprep.subr.mxu0 0.0
    %6308 = vmatpush1.xpose.msra.mxu0 0.0
    %6309 = vmatprep.subr.mxu0 0.0
    %6310 = vmatpush1.xpose.msra.mxu0 0.0
    %6311 = vmatprep.subr.mxu0 0.0
    %6312 = vmatpush1.xpose.msra.mxu0 0.0
    %6313 = vmatprep.subr.mxu0 0.0
    %6314 = vmatpush1.xpose.msra.mxu0 0.0
    %6315 = vmatprep.subr.mxu0 0.0
    %6316 = vmatpush1.xpose.msra.mxu0 0.0
    %6317 = vmatprep.subr.mxu0 0.0
    %6318 = vmatpush1.xpose.msra.mxu0 0.0
    %6319 = vmatprep.subr.mxu0 0.0
    %6320 = vmatpush1.xpose.msra.mxu0 0.0
    %6321 = vmatprep.subr.mxu0 0.0
    %6322 = vmatpush1.xpose.msra.mxu0 0.0
    %6323 = vmatprep.subr.mxu0 0.0
    %6324 = vmatpush1.xpose.msra.mxu0 0.0
    %6325 = vmatprep.subr.mxu0 0.0
    %6326 = vmatpush1.xpose.msra.mxu0 0.0
    %6327 = vmatprep.subr.mxu0 0.0
    %6328 = vmatpush1.xpose.msra.mxu0 0.0
    %6329 = vmatprep.subr.mxu0 0.0
    %6330 = vmatpush1.xpose.msra.mxu0 0.0
    %6331 = vmatprep.subr.mxu0 0.0
    %6332 = vmatpush1.xpose.msra.mxu0 0.0
    %6333 = vmatprep.subr.mxu0 0.0
    %6334 = vmatpush1.xpose.msra.mxu0 0.0
    %6335 = vmatprep.subr.mxu0 0.0
    %6336 = vmatpush1.xpose.msra.mxu0 0.0
    %6337 = vmatprep.subr.mxu0 0.0
    %6338 = vmatpush1.xpose.msra.mxu0 0.0
    %6339 = vmatprep.subr.mxu0 0.0
    %6340 = vmatpush1.xpose.msra.mxu0 0.0
    %6341 = vmatprep.subr.mxu0 0.0
    %6342 = vmatpush1.xpose.msra.mxu0 0.0
    %6343 = vmatprep.subr.mxu0 0.0
    %6344 = vmatpush1.xpose.msra.mxu0 0.0
    %6345 = vmatprep.subr.mxu0 0.0
    %6346 = vmatpush1.xpose.msra.mxu0 0.0
    %6347 = vmatprep.subr.mxu0 0.0
    %6348 = vmatpush1.xpose.msra.mxu0 0.0
    %6349 = vmatprep.subr.mxu0 0.0
    %6350 = vmatpush1.xpose.msra.mxu0 0.0
    %6351 = vmatprep.subr.mxu0 0.0
    %6352 = vmatpush1.xpose.msra.mxu0 0.0
    %6353 = vmatprep.subr.mxu0 0.0
    %6354 = vmatpush1.xpose.msra.mxu0 0.0
    %6355 = vmatprep.subr.mxu0 0.0
    %6356 = vmatpush1.xpose.msra.mxu0 0.0
    %6357 = vmatprep.subr.mxu0 0.0
    %6358 = vmatpush1.xpose.msra.mxu0 0.0
    %6359 = vmatprep.mubr.f32.mxu0 0.0
    %v6360 = vand.u32 %v6137, 4294901760
    %v6361 = vsub.f32 %v6137, %v6360
    %6362 = vmatmul.mubr.f32.gmra.mrb[0].mxu0 %v6361
    %v6363 = vpop.f32.mrb[0].mxu0
    %v6364 = vadd.f32 %v6290, %v6363
    %v6365 = vpop.f32.mrb[0].mxu0
    %6366 = vdwg.mxu0
    %6367 = vmatprep.subr.mxu0 0.0
    %v6368 = vand.u32 %v6139, 4294901760
    %6369 = vmatpush1.xpose.msra.mxu0 %v6368
    %6370 = vmatprep.subr.mxu0 0.0
    %6371 = vmatpush1.xpose.msra.mxu0 0.0
    %6372 = vmatprep.subr.mxu0 0.0
    %6373 = vmatpush1.xpose.msra.mxu0 0.0
    %6374 = vmatprep.subr.mxu0 0.0
    %6375 = vmatpush1.xpose.msra.mxu0 0.0
    %6376 = vmatprep.subr.mxu0 0.0
    %6377 = vmatpush1.xpose.msra.mxu0 0.0
    %6378 = vmatprep.subr.mxu0 0.0
    %6379 = vmatpush1.xpose.msra.mxu0 0.0
    %6380 = vmatprep.subr.mxu0 0.0
    %6381 = vmatpush1.xpose.msra.mxu0 0.0
    %6382 = vmatprep.subr.mxu0 0.0
    %6383 = vmatpush1.xpose.msra.mxu0 0.0
    %6384 = vmatprep.subr.mxu0 0.0
    %6385 = vmatpush1.xpose.msra.mxu0 0.0
    %6386 = vmatprep.subr.mxu0 0.0
    %6387 = vmatpush1.xpose.msra.mxu0 0.0
    %6388 = vmatprep.subr.mxu0 0.0
    %6389 = vmatpush1.xpose.msra.mxu0 0.0
    %6390 = vmatprep.subr.mxu0 0.0
    %6391 = vmatpush1.xpose.msra.mxu0 0.0
    %6392 = vmatprep.subr.mxu0 0.0
    %6393 = vmatpush1.xpose.msra.mxu0 0.0
    %6394 = vmatprep.subr.mxu0 0.0
    %6395 = vmatpush1.xpose.msra.mxu0 0.0
    %6396 = vmatprep.subr.mxu0 0.0
    %6397 = vmatpush1.xpose.msra.mxu0 0.0
    %6398 = vmatprep.subr.mxu0 0.0
    %6399 = vmatpush1.xpose.msra.mxu0 0.0
    %6400 = vmatprep.subr.mxu0 0.0
    %6401 = vmatpush1.xpose.msra.mxu0 0.0
    %6402 = vmatprep.subr.mxu0 0.0
    %6403 = vmatpush1.xpose.msra.mxu0 0.0
    %6404 = vmatprep.subr.mxu0 0.0
    %6405 = vmatpush1.xpose.msra.mxu0 0.0
    %6406 = vmatprep.subr.mxu0 0.0
    %6407 = vmatpush1.xpose.msra.mxu0 0.0
    %6408 = vmatprep.subr.mxu0 0.0
    %6409 = vmatpush1.xpose.msra.mxu0 0.0
    %6410 = vmatprep.subr.mxu0 0.0
    %6411 = vmatpush1.xpose.msra.mxu0 0.0
    %6412 = vmatprep.subr.mxu0 0.0
    %6413 = vmatpush1.xpose.msra.mxu0 0.0
    %6414 = vmatprep.subr.mxu0 0.0
    %6415 = vmatpush1.xpose.msra.mxu0 0.0
    %6416 = vmatprep.subr.mxu0 0.0
    %6417 = vmatpush1.xpose.msra.mxu0 0.0
    %6418 = vmatprep.subr.mxu0 0.0
    %6419 = vmatpush1.xpose.msra.mxu0 0.0
    %6420 = vmatprep.subr.mxu0 0.0
    %6421 = vmatpush1.xpose.msra.mxu0 0.0
    %6422 = vmatprep.subr.mxu0 0.0
    %6423 = vmatpush1.xpose.msra.mxu0 0.0
    %6424 = vmatprep.subr.mxu0 0.0
    %6425 = vmatpush1.xpose.msra.mxu0 0.0
    %6426 = vmatprep.subr.mxu0 0.0
    %6427 = vmatpush1.xpose.msra.mxu0 0.0
    %6428 = vmatprep.subr.mxu0 0.0
    %6429 = vmatpush1.xpose.msra.mxu0 0.0
    %6430 = vmatprep.subr.mxu0 0.0
    %6431 = vmatpush1.xpose.msra.mxu0 0.0
    %6432 = vmatprep.mubr.f32.mxu0 0.0
    %v6433 = vand.u32 %v6137, 4294901760
    %v6434 = vsub.f32 %v6137, %v6433
    %v6435 = vand.u32 %v6434, 4294901760
    %6436 = vmatmul.mubr.f32.gmra.mrb[0].mxu0 %v6435
    %v6437 = vpop.f32.mrb[0].mxu0
    %v6438 = vadd.f32 %v6364, %v6437
    %v6439 = vpop.f32.mrb[0].mxu0
    %6440 = vdwg.mxu0
    %6441 = vmatprep.subr.mxu0 0.0
    %v6442 = vand.u32 %v6139, 4294901760
    %v6443 = vsub.f32 %v6139, %v6442
    %v6444 = vand.u32 %v6443, 4294901760
    %6445 = vmatpush1.xpose.msra.mxu0 %v6444
    %6446 = vmatprep.subr.mxu0 0.0
    %6447 = vmatpush1.xpose.msra.mxu0 0.0
    %6448 = vmatprep.subr.mxu0 0.0
    %6449 = vmatpush1.xpose.msra.mxu0 0.0
    %6450 = vmatprep.subr.mxu0 0.0
    %6451 = vmatpush1.xpose.msra.mxu0 0.0
    %6452 = vmatprep.subr.mxu0 0.0
    %6453 = vmatpush1.xpose.msra.mxu0 0.0
    %6454 = vmatprep.subr.mxu0 0.0
    %6455 = vmatpush1.xpose.msra.mxu0 0.0
    %6456 = vmatprep.subr.mxu0 0.0
    %6457 = vmatpush1.xpose.msra.mxu0 0.0
    %6458 = vmatprep.subr.mxu0 0.0
    %6459 = vmatpush1.xpose.msra.mxu0 0.0
    %6460 = vmatprep.subr.mxu0 0.0
    %6461 = vmatpush1.xpose.msra.mxu0 0.0
    %6462 = vmatprep.subr.mxu0 0.0
    %6463 = vmatpush1.xpose.msra.mxu0 0.0
    %6464 = vmatprep.subr.mxu0 0.0
    %6465 = vmatpush1.xpose.msra.mxu0 0.0
    %6466 = vmatprep.subr.mxu0 0.0
    %6467 = vmatpush1.xpose.msra.mxu0 0.0
    %6468 = vmatprep.subr.mxu0 0.0
    %6469 = vmatpush1.xpose.msra.mxu0 0.0
    %6470 = vmatprep.subr.mxu0 0.0
    %6471 = vmatpush1.xpose.msra.mxu0 0.0
    %6472 = vmatprep.subr.mxu0 0.0
    %6473 = vmatpush1.xpose.msra.mxu0 0.0
    %6474 = vmatprep.subr.mxu0 0.0
    %6475 = vmatpush1.xpose.msra.mxu0 0.0
    %6476 = vmatprep.subr.mxu0 0.0
    %6477 = vmatpush1.xpose.msra.mxu0 0.0
    %6478 = vmatprep.subr.mxu0 0.0
    %6479 = vmatpush1.xpose.msra.mxu0 0.0
    %6480 = vmatprep.subr.mxu0 0.0
    %6481 = vmatpush1.xpose.msra.mxu0 0.0
    %6482 = vmatprep.subr.mxu0 0.0
    %6483 = vmatpush1.xpose.msra.mxu0 0.0
    %6484 = vmatprep.subr.mxu0 0.0
    %6485 = vmatpush1.xpose.msra.mxu0 0.0
    %6486 = vmatprep.subr.mxu0 0.0
    %6487 = vmatpush1.xpose.msra.mxu0 0.0
    %6488 = vmatprep.subr.mxu0 0.0
    %6489 = vmatpush1.xpose.msra.mxu0 0.0
    %6490 = vmatprep.subr.mxu0 0.0
    %6491 = vmatpush1.xpose.msra.mxu0 0.0
    %6492 = vmatprep.subr.mxu0 0.0
    %6493 = vmatpush1.xpose.msra.mxu0 0.0
    %6494 = vmatprep.subr.mxu0 0.0
    %6495 = vmatpush1.xpose.msra.mxu0 0.0
    %6496 = vmatprep.subr.mxu0 0.0
    %6497 = vmatpush1.xpose.msra.mxu0 0.0
    %6498 = vmatprep.subr.mxu0 0.0
    %6499 = vmatpush1.xpose.msra.mxu0 0.0
    %6500 = vmatprep.subr.mxu0 0.0
    %6501 = vmatpush1.xpose.msra.mxu0 0.0
    %6502 = vmatprep.subr.mxu0 0.0
    %6503 = vmatpush1.xpose.msra.mxu0 0.0
    %6504 = vmatprep.subr.mxu0 0.0
    %6505 = vmatpush1.xpose.msra.mxu0 0.0
    %6506 = vmatprep.subr.mxu0 0.0
    %6507 = vmatpush1.xpose.msra.mxu0 0.0
    %6508 = vmatprep.mubr.f32.mxu0 0.0
    %v6509 = vand.u32 %v6137, 4294901760
    %6510 = vmatmul.mubr.f32.gmra.mrb[0].mxu0 %v6509
    %v6511 = vpop.f32.mrb[0].mxu0
    %v6512 = vadd.f32 %v6438, %v6511
    %v6513 = vpop.f32.mrb[0].mxu0
    %6514 = vdwg.mxu0
    %6515 = vmatprep.subr.mxu0 0.0
    %v6516 = vand.u32 %v6139, 4294901760
    %6517 = vmatpush1.xpose.msra.mxu0 %v6516
    %6518 = vmatprep.subr.mxu0 0.0
    %6519 = vmatpush1.xpose.msra.mxu0 0.0
    %6520 = vmatprep.subr.mxu0 0.0
    %6521 = vmatpush1.xpose.msra.mxu0 0.0
    %6522 = vmatprep.subr.mxu0 0.0
    %6523 = vmatpush1.xpose.msra.mxu0 0.0
    %6524 = vmatprep.subr.mxu0 0.0
    %6525 = vmatpush1.xpose.msra.mxu0 0.0
    %6526 = vmatprep.subr.mxu0 0.0
    %6527 = vmatpush1.xpose.msra.mxu0 0.0
    %6528 = vmatprep.subr.mxu0 0.0
    %6529 = vmatpush1.xpose.msra.mxu0 0.0
    %6530 = vmatprep.subr.mxu0 0.0
    %6531 = vmatpush1.xpose.msra.mxu0 0.0
    %6532 = vmatprep.subr.mxu0 0.0
    %6533 = vmatpush1.xpose.msra.mxu0 0.0
    %6534 = vmatprep.subr.mxu0 0.0
    %6535 = vmatpush1.xpose.msra.mxu0 0.0
    %6536 = vmatprep.subr.mxu0 0.0
    %6537 = vmatpush1.xpose.msra.mxu0 0.0
    %6538 = vmatprep.subr.mxu0 0.0
    %6539 = vmatpush1.xpose.msra.mxu0 0.0
    %6540 = vmatprep.subr.mxu0 0.0
    %6541 = vmatpush1.xpose.msra.mxu0 0.0
    %6542 = vmatprep.subr.mxu0 0.0
    %6543 = vmatpush1.xpose.msra.mxu0 0.0
    %6544 = vmatprep.subr.mxu0 0.0
    %6545 = vmatpush1.xpose.msra.mxu0 0.0
    %6546 = vmatprep.subr.mxu0 0.0
    %6547 = vmatpush1.xpose.msra.mxu0 0.0
    %6548 = vmatprep.subr.mxu0 0.0
    %6549 = vmatpush1.xpose.msra.mxu0 0.0
    %6550 = vmatprep.subr.mxu0 0.0
    %6551 = vmatpush1.xpose.msra.mxu0 0.0
    %6552 = vmatprep.subr.mxu0 0.0
    %6553 = vmatpush1.xpose.msra.mxu0 0.0
    %6554 = vmatprep.subr.mxu0 0.0
    %6555 = vmatpush1.xpose.msra.mxu0 0.0
    %6556 = vmatprep.subr.mxu0 0.0
    %6557 = vmatpush1.xpose.msra.mxu0 0.0
    %6558 = vmatprep.subr.mxu0 0.0
    %6559 = vmatpush1.xpose.msra.mxu0 0.0
    %6560 = vmatprep.subr.mxu0 0.0
    %6561 = vmatpush1.xpose.msra.mxu0 0.0
    %6562 = vmatprep.subr.mxu0 0.0
    %6563 = vmatpush1.xpose.msra.mxu0 0.0
    %6564 = vmatprep.subr.mxu0 0.0
    %6565 = vmatpush1.xpose.msra.mxu0 0.0
    %6566 = vmatprep.subr.mxu0 0.0
    %6567 = vmatpush1.xpose.msra.mxu0 0.0
    %6568 = vmatprep.subr.mxu0 0.0
    %6569 = vmatpush1.xpose.msra.mxu0 0.0
    %6570 = vmatprep.subr.mxu0 0.0
    %6571 = vmatpush1.xpose.msra.mxu0 0.0
    %6572 = vmatprep.subr.mxu0 0.0
    %6573 = vmatpush1.xpose.msra.mxu0 0.0
    %6574 = vmatprep.subr.mxu0 0.0
    %6575 = vmatpush1.xpose.msra.mxu0 0.0
    %6576 = vmatprep.subr.mxu0 0.0
    %6577 = vmatpush1.xpose.msra.mxu0 0.0
    %6578 = vmatprep.subr.mxu0 0.0
    %6579 = vmatpush1.xpose.msra.mxu0 0.0
    %6580 = vmatprep.mubr.f32.mxu0 0.0
    %v6581 = vand.u32 %v6137, 4294901760
    %6582 = vmatmul.mubr.f32.gmra.mrb[0].mxu0 %v6581
    %v6583 = vpop.f32.mrb[0].mxu0
    %v6584 = vadd.f32 %v6512, %v6583
    %v6585 = vpop.f32.mrb[0].mxu0
    %6586 = vdwg.mxu0
    %6587 = vrot.lane.b32.xlu0 %v629, 104
    %v6588 = vpop.permute.xlu0 %6587
    %6589 = vrot.lane.b32.xlu0 %v629, 72
    %v6590 = vpop.permute.xlu0 %6589
    %v6591 = vsel %vm635, %v6588, 0
    %v6593 = vsel %vm635, %v6590, 0
    %6595 = vmatprep.subr.mxu0 0.0
    %v6596 = vand.u32 %v6593, 4294901760
    %6597 = vmatpush1.xpose.msra.mxu0 %v6596
    %6598 = vmatprep.subr.mxu0 0.0
    %6599 = vmatpush1.xpose.msra.mxu0 0.0
    %6600 = vmatprep.subr.mxu0 0.0
    %6601 = vmatpush1.xpose.msra.mxu0 0.0
    %6602 = vmatprep.subr.mxu0 0.0
    %6603 = vmatpush1.xpose.msra.mxu0 0.0
    %6604 = vmatprep.subr.mxu0 0.0
    %6605 = vmatpush1.xpose.msra.mxu0 0.0
    %6606 = vmatprep.subr.mxu0 0.0
    %6607 = vmatpush1.xpose.msra.mxu0 0.0
    %6608 = vmatprep.subr.mxu0 0.0
    %6609 = vmatpush1.xpose.msra.mxu0 0.0
    %6610 = vmatprep.subr.mxu0 0.0
    %6611 = vmatpush1.xpose.msra.mxu0 0.0
    %6612 = vmatprep.subr.mxu0 0.0
    %6613 = vmatpush1.xpose.msra.mxu0 0.0
    %6614 = vmatprep.subr.mxu0 0.0
    %6615 = vmatpush1.xpose.msra.mxu0 0.0
    %6616 = vmatprep.subr.mxu0 0.0
    %6617 = vmatpush1.xpose.msra.mxu0 0.0
    %6618 = vmatprep.subr.mxu0 0.0
    %6619 = vmatpush1.xpose.msra.mxu0 0.0
    %6620 = vmatprep.subr.mxu0 0.0
    %6621 = vmatpush1.xpose.msra.mxu0 0.0
    %6622 = vmatprep.subr.mxu0 0.0
    %6623 = vmatpush1.xpose.msra.mxu0 0.0
    %6624 = vmatprep.subr.mxu0 0.0
    %6625 = vmatpush1.xpose.msra.mxu0 0.0
    %6626 = vmatprep.subr.mxu0 0.0
    %6627 = vmatpush1.xpose.msra.mxu0 0.0
    %6628 = vmatprep.subr.mxu0 0.0
    %6629 = vmatpush1.xpose.msra.mxu0 0.0
    %6630 = vmatprep.subr.mxu0 0.0
    %6631 = vmatpush1.xpose.msra.mxu0 0.0
    %6632 = vmatprep.subr.mxu0 0.0
    %6633 = vmatpush1.xpose.msra.mxu0 0.0
    %6634 = vmatprep.subr.mxu0 0.0
    %6635 = vmatpush1.xpose.msra.mxu0 0.0
    %6636 = vmatprep.subr.mxu0 0.0
    %6637 = vmatpush1.xpose.msra.mxu0 0.0
    %6638 = vmatprep.subr.mxu0 0.0
    %6639 = vmatpush1.xpose.msra.mxu0 0.0
    %6640 = vmatprep.subr.mxu0 0.0
    %6641 = vmatpush1.xpose.msra.mxu0 0.0
    %6642 = vmatprep.subr.mxu0 0.0
    %6643 = vmatpush1.xpose.msra.mxu0 0.0
    %6644 = vmatprep.subr.mxu0 0.0
    %6645 = vmatpush1.xpose.msra.mxu0 0.0
    %6646 = vmatprep.subr.mxu0 0.0
    %6647 = vmatpush1.xpose.msra.mxu0 0.0
    %6648 = vmatprep.subr.mxu0 0.0
    %6649 = vmatpush1.xpose.msra.mxu0 0.0
    %6650 = vmatprep.subr.mxu0 0.0
    %6651 = vmatpush1.xpose.msra.mxu0 0.0
    %6652 = vmatprep.subr.mxu0 0.0
    %6653 = vmatpush1.xpose.msra.mxu0 0.0
    %6654 = vmatprep.subr.mxu0 0.0
    %6655 = vmatpush1.xpose.msra.mxu0 0.0
    %6656 = vmatprep.subr.mxu0 0.0
    %6657 = vmatpush1.xpose.msra.mxu0 0.0
    %6658 = vmatprep.subr.mxu0 0.0
    %6659 = vmatpush1.xpose.msra.mxu0 0.0
    %6660 = vmatprep.mubr.f32.mxu0 0.0
    %v6661 = vand.u32 %v6591, 4294901760
    %v6662 = vsub.f32 %v6591, %v6661
    %v6663 = vand.u32 %v6662, 4294901760
    %v6664 = vsub.f32 %v6662, %v6663
    %v6665 = vand.u32 %v6664, 4294901760
    %6666 = vmatmul.mubr.f32.gmra.mrb[0].mxu0 %v6665
    %v6667 = vpop.f32.mrb[0].mxu0
    %v6668 = vadd.f32 0.0, %v6667
    %v6669 = vpop.f32.mrb[0].mxu0
    %6670 = vdwg.mxu0
    %6671 = vmatprep.subr.mxu0 0.0
    %v6672 = vand.u32 %v6593, 4294901760
    %v6673 = vsub.f32 %v6593, %v6672
    %v6674 = vand.u32 %v6673, 4294901760
    %v6675 = vsub.f32 %v6673, %v6674
    %v6676 = vand.u32 %v6675, 4294901760
    %6677 = vmatpush1.xpose.msra.mxu0 %v6676
    %6678 = vmatprep.subr.mxu0 0.0
    %6679 = vmatpush1.xpose.msra.mxu0 0.0
    %6680 = vmatprep.subr.mxu0 0.0
    %6681 = vmatpush1.xpose.msra.mxu0 0.0
    %6682 = vmatprep.subr.mxu0 0.0
    %6683 = vmatpush1.xpose.msra.mxu0 0.0
    %6684 = vmatprep.subr.mxu0 0.0
    %6685 = vmatpush1.xpose.msra.mxu0 0.0
    %6686 = vmatprep.subr.mxu0 0.0
    %6687 = vmatpush1.xpose.msra.mxu0 0.0
    %6688 = vmatprep.subr.mxu0 0.0
    %6689 = vmatpush1.xpose.msra.mxu0 0.0
    %6690 = vmatprep.subr.mxu0 0.0
    %6691 = vmatpush1.xpose.msra.mxu0 0.0
    %6692 = vmatprep.subr.mxu0 0.0
    %6693 = vmatpush1.xpose.msra.mxu0 0.0
    %6694 = vmatprep.subr.mxu0 0.0
    %6695 = vmatpush1.xpose.msra.mxu0 0.0
    %6696 = vmatprep.subr.mxu0 0.0
    %6697 = vmatpush1.xpose.msra.mxu0 0.0
    %6698 = vmatprep.subr.mxu0 0.0
    %6699 = vmatpush1.xpose.msra.mxu0 0.0
    %6700 = vmatprep.subr.mxu0 0.0
    %6701 = vmatpush1.xpose.msra.mxu0 0.0
    %6702 = vmatprep.subr.mxu0 0.0
    %6703 = vmatpush1.xpose.msra.mxu0 0.0
    %6704 = vmatprep.subr.mxu0 0.0
    %6705 = vmatpush1.xpose.msra.mxu0 0.0
    %6706 = vmatprep.subr.mxu0 0.0
    %6707 = vmatpush1.xpose.msra.mxu0 0.0
    %6708 = vmatprep.subr.mxu0 0.0
    %6709 = vmatpush1.xpose.msra.mxu0 0.0
    %6710 = vmatprep.subr.mxu0 0.0
    %6711 = vmatpush1.xpose.msra.mxu0 0.0
    %6712 = vmatprep.subr.mxu0 0.0
    %6713 = vmatpush1.xpose.msra.mxu0 0.0
    %6714 = vmatprep.subr.mxu0 0.0
    %6715 = vmatpush1.xpose.msra.mxu0 0.0
    %6716 = vmatprep.subr.mxu0 0.0
    %6717 = vmatpush1.xpose.msra.mxu0 0.0
    %6718 = vmatprep.subr.mxu0 0.0
    %6719 = vmatpush1.xpose.msra.mxu0 0.0
    %6720 = vmatprep.subr.mxu0 0.0
    %6721 = vmatpush1.xpose.msra.mxu0 0.0
    %6722 = vmatprep.subr.mxu0 0.0
    %6723 = vmatpush1.xpose.msra.mxu0 0.0
    %6724 = vmatprep.subr.mxu0 0.0
    %6725 = vmatpush1.xpose.msra.mxu0 0.0
    %6726 = vmatprep.subr.mxu0 0.0
    %6727 = vmatpush1.xpose.msra.mxu0 0.0
    %6728 = vmatprep.subr.mxu0 0.0
    %6729 = vmatpush1.xpose.msra.mxu0 0.0
    %6730 = vmatprep.subr.mxu0 0.0
    %6731 = vmatpush1.xpose.msra.mxu0 0.0
    %6732 = vmatprep.subr.mxu0 0.0
    %6733 = vmatpush1.xpose.msra.mxu0 0.0
    %6734 = vmatprep.subr.mxu0 0.0
    %6735 = vmatpush1.xpose.msra.mxu0 0.0
    %6736 = vmatprep.subr.mxu0 0.0
    %6737 = vmatpush1.xpose.msra.mxu0 0.0
    %6738 = vmatprep.subr.mxu0 0.0
    %6739 = vmatpush1.xpose.msra.mxu0 0.0
    %6740 = vmatprep.mubr.f32.mxu0 0.0
    %v6741 = vand.u32 %v6591, 4294901760
    %6742 = vmatmul.mubr.f32.gmra.mrb[0].mxu0 %v6741
    %v6743 = vpop.f32.mrb[0].mxu0
    %v6744 = vadd.f32 %v6668, %v6743
    %v6745 = vpop.f32.mrb[0].mxu0
    %6746 = vdwg.mxu0
    %6747 = vmatprep.subr.mxu0 0.0
    %v6748 = vand.u32 %v6593, 4294901760
    %v6749 = vsub.f32 %v6593, %v6748
    %6750 = vmatpush1.xpose.msra.mxu0 %v6749
    %6751 = vmatprep.subr.mxu0 0.0
    %6752 = vmatpush1.xpose.msra.mxu0 0.0
    %6753 = vmatprep.subr.mxu0 0.0
    %6754 = vmatpush1.xpose.msra.mxu0 0.0
    %6755 = vmatprep.subr.mxu0 0.0
    %6756 = vmatpush1.xpose.msra.mxu0 0.0
    %6757 = vmatprep.subr.mxu0 0.0
    %6758 = vmatpush1.xpose.msra.mxu0 0.0
    %6759 = vmatprep.subr.mxu0 0.0
    %6760 = vmatpush1.xpose.msra.mxu0 0.0
    %6761 = vmatprep.subr.mxu0 0.0
    %6762 = vmatpush1.xpose.msra.mxu0 0.0
    %6763 = vmatprep.subr.mxu0 0.0
    %6764 = vmatpush1.xpose.msra.mxu0 0.0
    %6765 = vmatprep.subr.mxu0 0.0
    %6766 = vmatpush1.xpose.msra.mxu0 0.0
    %6767 = vmatprep.subr.mxu0 0.0
    %6768 = vmatpush1.xpose.msra.mxu0 0.0
    %6769 = vmatprep.subr.mxu0 0.0
    %6770 = vmatpush1.xpose.msra.mxu0 0.0
    %6771 = vmatprep.subr.mxu0 0.0
    %6772 = vmatpush1.xpose.msra.mxu0 0.0
    %6773 = vmatprep.subr.mxu0 0.0
    %6774 = vmatpush1.xpose.msra.mxu0 0.0
    %6775 = vmatprep.subr.mxu0 0.0
    %6776 = vmatpush1.xpose.msra.mxu0 0.0
    %6777 = vmatprep.subr.mxu0 0.0
    %6778 = vmatpush1.xpose.msra.mxu0 0.0
    %6779 = vmatprep.subr.mxu0 0.0
    %6780 = vmatpush1.xpose.msra.mxu0 0.0
    %6781 = vmatprep.subr.mxu0 0.0
    %6782 = vmatpush1.xpose.msra.mxu0 0.0
    %6783 = vmatprep.subr.mxu0 0.0
    %6784 = vmatpush1.xpose.msra.mxu0 0.0
    %6785 = vmatprep.subr.mxu0 0.0
    %6786 = vmatpush1.xpose.msra.mxu0 0.0
    %6787 = vmatprep.subr.mxu0 0.0
    %6788 = vmatpush1.xpose.msra.mxu0 0.0
    %6789 = vmatprep.subr.mxu0 0.0
    %6790 = vmatpush1.xpose.msra.mxu0 0.0
    %6791 = vmatprep.subr.mxu0 0.0
    %6792 = vmatpush1.xpose.msra.mxu0 0.0
    %6793 = vmatprep.subr.mxu0 0.0
    %6794 = vmatpush1.xpose.msra.mxu0 0.0
    %6795 = vmatprep.subr.mxu0 0.0
    %6796 = vmatpush1.xpose.msra.mxu0 0.0
    %6797 = vmatprep.subr.mxu0 0.0
    %6798 = vmatpush1.xpose.msra.mxu0 0.0
    %6799 = vmatprep.subr.mxu0 0.0
    %6800 = vmatpush1.xpose.msra.mxu0 0.0
    %6801 = vmatprep.subr.mxu0 0.0
    %6802 = vmatpush1.xpose.msra.mxu0 0.0
    %6803 = vmatprep.subr.mxu0 0.0
    %6804 = vmatpush1.xpose.msra.mxu0 0.0
    %6805 = vmatprep.subr.mxu0 0.0
    %6806 = vmatpush1.xpose.msra.mxu0 0.0
    %6807 = vmatprep.subr.mxu0 0.0
    %6808 = vmatpush1.xpose.msra.mxu0 0.0
    %6809 = vmatprep.subr.mxu0 0.0
    %6810 = vmatpush1.xpose.msra.mxu0 0.0
    %6811 = vmatprep.subr.mxu0 0.0
    %6812 = vmatpush1.xpose.msra.mxu0 0.0
    %6813 = vmatprep.mubr.f32.mxu0 0.0
    %v6814 = vand.u32 %v6591, 4294901760
    %v6815 = vsub.f32 %v6591, %v6814
    %6816 = vmatmul.mubr.f32.gmra.mrb[0].mxu0 %v6815
    %v6817 = vpop.f32.mrb[0].mxu0
    %v6818 = vadd.f32 %v6744, %v6817
    %v6819 = vpop.f32.mrb[0].mxu0
    %6820 = vdwg.mxu0
    %6821 = vmatprep.subr.mxu0 0.0
    %v6822 = vand.u32 %v6593, 4294901760
    %6823 = vmatpush1.xpose.msra.mxu0 %v6822
    %6824 = vmatprep.subr.mxu0 0.0
    %6825 = vmatpush1.xpose.msra.mxu0 0.0
    %6826 = vmatprep.subr.mxu0 0.0
    %6827 = vmatpush1.xpose.msra.mxu0 0.0
    %6828 = vmatprep.subr.mxu0 0.0
    %6829 = vmatpush1.xpose.msra.mxu0 0.0
    %6830 = vmatprep.subr.mxu0 0.0
    %6831 = vmatpush1.xpose.msra.mxu0 0.0
    %6832 = vmatprep.subr.mxu0 0.0
    %6833 = vmatpush1.xpose.msra.mxu0 0.0
    %6834 = vmatprep.subr.mxu0 0.0
    %6835 = vmatpush1.xpose.msra.mxu0 0.0
    %6836 = vmatprep.subr.mxu0 0.0
    %6837 = vmatpush1.xpose.msra.mxu0 0.0
    %6838 = vmatprep.subr.mxu0 0.0
    %6839 = vmatpush1.xpose.msra.mxu0 0.0
    %6840 = vmatprep.subr.mxu0 0.0
    %6841 = vmatpush1.xpose.msra.mxu0 0.0
    %6842 = vmatprep.subr.mxu0 0.0
    %6843 = vmatpush1.xpose.msra.mxu0 0.0
    %6844 = vmatprep.subr.mxu0 0.0
    %6845 = vmatpush1.xpose.msra.mxu0 0.0
    %6846 = vmatprep.subr.mxu0 0.0
    %6847 = vmatpush1.xpose.msra.mxu0 0.0
    %6848 = vmatprep.subr.mxu0 0.0
    %6849 = vmatpush1.xpose.msra.mxu0 0.0
    %6850 = vmatprep.subr.mxu0 0.0
    %6851 = vmatpush1.xpose.msra.mxu0 0.0
    %6852 = vmatprep.subr.mxu0 0.0
    %6853 = vmatpush1.xpose.msra.mxu0 0.0
    %6854 = vmatprep.subr.mxu0 0.0
    %6855 = vmatpush1.xpose.msra.mxu0 0.0
    %6856 = vmatprep.subr.mxu0 0.0
    %6857 = vmatpush1.xpose.msra.mxu0 0.0
    %6858 = vmatprep.subr.mxu0 0.0
    %6859 = vmatpush1.xpose.msra.mxu0 0.0
    %6860 = vmatprep.subr.mxu0 0.0
    %6861 = vmatpush1.xpose.msra.mxu0 0.0
    %6862 = vmatprep.subr.mxu0 0.0
    %6863 = vmatpush1.xpose.msra.mxu0 0.0
    %6864 = vmatprep.subr.mxu0 0.0
    %6865 = vmatpush1.xpose.msra.mxu0 0.0
    %6866 = vmatprep.subr.mxu0 0.0
    %6867 = vmatpush1.xpose.msra.mxu0 0.0
    %6868 = vmatprep.subr.mxu0 0.0
    %6869 = vmatpush1.xpose.msra.mxu0 0.0
    %6870 = vmatprep.subr.mxu0 0.0
    %6871 = vmatpush1.xpose.msra.mxu0 0.0
    %6872 = vmatprep.subr.mxu0 0.0
    %6873 = vmatpush1.xpose.msra.mxu0 0.0
    %6874 = vmatprep.subr.mxu0 0.0
    %6875 = vmatpush1.xpose.msra.mxu0 0.0
    %6876 = vmatprep.subr.mxu0 0.0
    %6877 = vmatpush1.xpose.msra.mxu0 0.0
    %6878 = vmatprep.subr.mxu0 0.0
    %6879 = vmatpush1.xpose.msra.mxu0 0.0
    %6880 = vmatprep.subr.mxu0 0.0
    %6881 = vmatpush1.xpose.msra.mxu0 0.0
    %6882 = vmatprep.subr.mxu0 0.0
    %6883 = vmatpush1.xpose.msra.mxu0 0.0
    %6884 = vmatprep.subr.mxu0 0.0
    %6885 = vmatpush1.xpose.msra.mxu0 0.0
    %6886 = vmatprep.mubr.f32.mxu0 0.0
    %v6887 = vand.u32 %v6591, 4294901760
    %v6888 = vsub.f32 %v6591, %v6887
    %v6889 = vand.u32 %v6888, 4294901760
    %6890 = vmatmul.mubr.f32.gmra.mrb[0].mxu0 %v6889
    %v6891 = vpop.f32.mrb[0].mxu0
    %v6892 = vadd.f32 %v6818, %v6891
    %v6893 = vpop.f32.mrb[0].mxu0
    %6894 = vdwg.mxu0
    %6895 = vmatprep.subr.mxu0 0.0
    %v6896 = vand.u32 %v6593, 4294901760
    %v6897 = vsub.f32 %v6593, %v6896
    %v6898 = vand.u32 %v6897, 4294901760
    %6899 = vmatpush1.xpose.msra.mxu0 %v6898
    %6900 = vmatprep.subr.mxu0 0.0
    %6901 = vmatpush1.xpose.msra.mxu0 0.0
    %6902 = vmatprep.subr.mxu0 0.0
    %6903 = vmatpush1.xpose.msra.mxu0 0.0
    %6904 = vmatprep.subr.mxu0 0.0
    %6905 = vmatpush1.xpose.msra.mxu0 0.0
    %6906 = vmatprep.subr.mxu0 0.0
    %6907 = vmatpush1.xpose.msra.mxu0 0.0
    %6908 = vmatprep.subr.mxu0 0.0
    %6909 = vmatpush1.xpose.msra.mxu0 0.0
    %6910 = vmatprep.subr.mxu0 0.0
    %6911 = vmatpush1.xpose.msra.mxu0 0.0
    %6912 = vmatprep.subr.mxu0 0.0
    %6913 = vmatpush1.xpose.msra.mxu0 0.0
    %6914 = vmatprep.subr.mxu0 0.0
    %6915 = vmatpush1.xpose.msra.mxu0 0.0
    %6916 = vmatprep.subr.mxu0 0.0
    %6917 = vmatpush1.xpose.msra.mxu0 0.0
    %6918 = vmatprep.subr.mxu0 0.0
    %6919 = vmatpush1.xpose.msra.mxu0 0.0
    %6920 = vmatprep.subr.mxu0 0.0
    %6921 = vmatpush1.xpose.msra.mxu0 0.0
    %6922 = vmatprep.subr.mxu0 0.0
    %6923 = vmatpush1.xpose.msra.mxu0 0.0
    %6924 = vmatprep.subr.mxu0 0.0
    %6925 = vmatpush1.xpose.msra.mxu0 0.0
    %6926 = vmatprep.subr.mxu0 0.0
    %6927 = vmatpush1.xpose.msra.mxu0 0.0
    %6928 = vmatprep.subr.mxu0 0.0
    %6929 = vmatpush1.xpose.msra.mxu0 0.0
    %6930 = vmatprep.subr.mxu0 0.0
    %6931 = vmatpush1.xpose.msra.mxu0 0.0
    %6932 = vmatprep.subr.mxu0 0.0
    %6933 = vmatpush1.xpose.msra.mxu0 0.0
    %6934 = vmatprep.subr.mxu0 0.0
    %6935 = vmatpush1.xpose.msra.mxu0 0.0
    %6936 = vmatprep.subr.mxu0 0.0
    %6937 = vmatpush1.xpose.msra.mxu0 0.0
    %6938 = vmatprep.subr.mxu0 0.0
    %6939 = vmatpush1.xpose.msra.mxu0 0.0
    %6940 = vmatprep.subr.mxu0 0.0
    %6941 = vmatpush1.xpose.msra.mxu0 0.0
    %6942 = vmatprep.subr.mxu0 0.0
    %6943 = vmatpush1.xpose.msra.mxu0 0.0
    %6944 = vmatprep.subr.mxu0 0.0
    %6945 = vmatpush1.xpose.msra.mxu0 0.0
    %6946 = vmatprep.subr.mxu0 0.0
    %6947 = vmatpush1.xpose.msra.mxu0 0.0
    %6948 = vmatprep.subr.mxu0 0.0
    %6949 = vmatpush1.xpose.msra.mxu0 0.0
    %6950 = vmatprep.subr.mxu0 0.0
    %6951 = vmatpush1.xpose.msra.mxu0 0.0
    %6952 = vmatprep.subr.mxu0 0.0
    %6953 = vmatpush1.xpose.msra.mxu0 0.0
    %6954 = vmatprep.subr.mxu0 0.0
    %6955 = vmatpush1.xpose.msra.mxu0 0.0
    %6956 = vmatprep.subr.mxu0 0.0
    %6957 = vmatpush1.xpose.msra.mxu0 0.0
    %6958 = vmatprep.subr.mxu0 0.0
    %6959 = vmatpush1.xpose.msra.mxu0 0.0
    %6960 = vmatprep.subr.mxu0 0.0
    %6961 = vmatpush1.xpose.msra.mxu0 0.0
    %6962 = vmatprep.mubr.f32.mxu0 0.0
    %v6963 = vand.u32 %v6591, 4294901760
    %6964 = vmatmul.mubr.f32.gmra.mrb[0].mxu0 %v6963
    %v6965 = vpop.f32.mrb[0].mxu0
    %v6966 = vadd.f32 %v6892, %v6965
    %v6967 = vpop.f32.mrb[0].mxu0
    %6968 = vdwg.mxu0
    %6969 = vmatprep.subr.mxu0 0.0
    %v6970 = vand.u32 %v6593, 4294901760
    %6971 = vmatpush1.xpose.msra.mxu0 %v6970
    %6972 = vmatprep.subr.mxu0 0.0
    %6973 = vmatpush1.xpose.msra.mxu0 0.0
    %6974 = vmatprep.subr.mxu0 0.0
    %6975 = vmatpush1.xpose.msra.mxu0 0.0
    %6976 = vmatprep.subr.mxu0 0.0
    %6977 = vmatpush1.xpose.msra.mxu0 0.0
    %6978 = vmatprep.subr.mxu0 0.0
    %6979 = vmatpush1.xpose.msra.mxu0 0.0
    %6980 = vmatprep.subr.mxu0 0.0
    %6981 = vmatpush1.xpose.msra.mxu0 0.0
    %6982 = vmatprep.subr.mxu0 0.0
    %6983 = vmatpush1.xpose.msra.mxu0 0.0
    %6984 = vmatprep.subr.mxu0 0.0
    %6985 = vmatpush1.xpose.msra.mxu0 0.0
    %6986 = vmatprep.subr.mxu0 0.0
    %6987 = vmatpush1.xpose.msra.mxu0 0.0
    %6988 = vmatprep.subr.mxu0 0.0
    %6989 = vmatpush1.xpose.msra.mxu0 0.0
    %6990 = vmatprep.subr.mxu0 0.0
    %6991 = vmatpush1.xpose.msra.mxu0 0.0
    %6992 = vmatprep.subr.mxu0 0.0
    %6993 = vmatpush1.xpose.msra.mxu0 0.0
    %6994 = vmatprep.subr.mxu0 0.0
    %6995 = vmatpush1.xpose.msra.mxu0 0.0
    %6996 = vmatprep.subr.mxu0 0.0
    %6997 = vmatpush1.xpose.msra.mxu0 0.0
    %6998 = vmatprep.subr.mxu0 0.0
    %6999 = vmatpush1.xpose.msra.mxu0 0.0
    %7000 = vmatprep.subr.mxu0 0.0
    %7001 = vmatpush1.xpose.msra.mxu0 0.0
    %7002 = vmatprep.subr.mxu0 0.0
    %7003 = vmatpush1.xpose.msra.mxu0 0.0
    %7004 = vmatprep.subr.mxu0 0.0
    %7005 = vmatpush1.xpose.msra.mxu0 0.0
    %7006 = vmatprep.subr.mxu0 0.0
    %7007 = vmatpush1.xpose.msra.mxu0 0.0
    %7008 = vmatprep.subr.mxu0 0.0
    %7009 = vmatpush1.xpose.msra.mxu0 0.0
    %7010 = vmatprep.subr.mxu0 0.0
    %7011 = vmatpush1.xpose.msra.mxu0 0.0
    %7012 = vmatprep.subr.mxu0 0.0
    %7013 = vmatpush1.xpose.msra.mxu0 0.0
    %7014 = vmatprep.subr.mxu0 0.0
    %7015 = vmatpush1.xpose.msra.mxu0 0.0
    %7016 = vmatprep.subr.mxu0 0.0
    %7017 = vmatpush1.xpose.msra.mxu0 0.0
    %7018 = vmatprep.subr.mxu0 0.0
    %7019 = vmatpush1.xpose.msra.mxu0 0.0
    %7020 = vmatprep.subr.mxu0 0.0
    %7021 = vmatpush1.xpose.msra.mxu0 0.0
    %7022 = vmatprep.subr.mxu0 0.0
    %7023 = vmatpush1.xpose.msra.mxu0 0.0
    %7024 = vmatprep.subr.mxu0 0.0
    %7025 = vmatpush1.xpose.msra.mxu0 0.0
    %7026 = vmatprep.subr.mxu0 0.0
    %7027 = vmatpush1.xpose.msra.mxu0 0.0
    %7028 = vmatprep.subr.mxu0 0.0
    %7029 = vmatpush1.xpose.msra.mxu0 0.0
    %7030 = vmatprep.subr.mxu0 0.0
    %7031 = vmatpush1.xpose.msra.mxu0 0.0
    %7032 = vmatprep.subr.mxu0 0.0
    %7033 = vmatpush1.xpose.msra.mxu0 0.0
    %7034 = vmatprep.mubr.f32.mxu0 0.0
    %v7035 = vand.u32 %v6591, 4294901760
    %7036 = vmatmul.mubr.f32.gmra.mrb[0].mxu0 %v7035
    %v7037 = vpop.f32.mrb[0].mxu0
    %v7038 = vadd.f32 %v6966, %v7037
    %v7039 = vpop.f32.mrb[0].mxu0
    %7040 = vdwg.mxu0
    %v7041 = vsel %vm635, %v6584, -inf
    %7042 = vmax.xlane.f32.xlu0 %v7041
    %v7043 = vpop.xlane.xlu0 %7042
    %v7044 = vsel %vm635, %v7038, -inf
    %7045 = vmax.xlane.f32.xlu0 %v7044
    %v7046 = vpop.xlane.xlu0 %7045
    %v7047 = vsub.f32 %v6584, %v7043
    %v7048 = vsub.f32 %v7038, %v7046
    %v7049 = vmul.f32 %v7047, 1.442695
    %v7050 = vpow.pop %v7049
    %v7051 = vmul.f32 %v7048, 1.442695
    %v7052 = vpow.pop %v7051
    %v7053 = vsel %vm635, %v7050, 0.0
    %7054 = vadd.xlane.f32.xlu0 %v7053
    %v7055 = vpop.xlane.xlu0 %7054
    %v7056 = vsel %vm635, %v7052, 0.0
    %7057 = vadd.xlane.f32.xlu0 %v7056
    %v7058 = vpop.xlane.xlu0 %7057
    %v7059 = vrcp.pop %v7055
    %v7060 = vrcp.pop %v7058
    %v7061 = vmul.f32 %v7050, %v7059
    %v7062 = vmul.f32 %v7052, %v7060
    %7063 = vrot.lane.b32.xlu0 %v623, 40
    %v7064 = vpop.permute.xlu0 %7063
    %v7067 = vsel %vm635, %v7061, 0
    %7069 = vmatprep.subr.mxu0 0.0
    %v7070 = vand.u32 %v7064, 4294901760
    %7071 = vmatpush1.msra.mxu0 %v7070
    %7072 = vmatprep.subr.mxu0 0.0
    %7073 = vmatpush1.msra.mxu0 0.0
    %7074 = vmatprep.subr.mxu0 0.0
    %7075 = vmatpush1.msra.mxu0 0.0
    %7076 = vmatprep.subr.mxu0 0.0
    %7077 = vmatpush1.msra.mxu0 0.0
    %7078 = vmatprep.subr.mxu0 0.0
    %7079 = vmatpush1.msra.mxu0 0.0
    %7080 = vmatprep.subr.mxu0 0.0
    %7081 = vmatpush1.msra.mxu0 0.0
    %7082 = vmatprep.subr.mxu0 0.0
    %7083 = vmatpush1.msra.mxu0 0.0
    %7084 = vmatprep.subr.mxu0 0.0
    %7085 = vmatpush1.msra.mxu0 0.0
    %7086 = vmatprep.subr.mxu0 0.0
    %7087 = vmatpush1.msra.mxu0 0.0
    %7088 = vmatprep.subr.mxu0 0.0
    %7089 = vmatpush1.msra.mxu0 0.0
    %7090 = vmatprep.subr.mxu0 0.0
    %7091 = vmatpush1.msra.mxu0 0.0
    %7092 = vmatprep.subr.mxu0 0.0
    %7093 = vmatpush1.msra.mxu0 0.0
    %7094 = vmatprep.subr.mxu0 0.0
    %7095 = vmatpush1.msra.mxu0 0.0
    %7096 = vmatprep.subr.mxu0 0.0
    %7097 = vmatpush1.msra.mxu0 0.0
    %7098 = vmatprep.subr.mxu0 0.0
    %7099 = vmatpush1.msra.mxu0 0.0
    %7100 = vmatprep.subr.mxu0 0.0
    %7101 = vmatpush1.msra.mxu0 0.0
    %7102 = vmatprep.subr.mxu0 0.0
    %7103 = vmatpush1.msra.mxu0 0.0
    %7104 = vmatprep.subr.mxu0 0.0
    %7105 = vmatpush1.msra.mxu0 0.0
    %7106 = vmatprep.subr.mxu0 0.0
    %7107 = vmatpush1.msra.mxu0 0.0
    %7108 = vmatprep.subr.mxu0 0.0
    %7109 = vmatpush1.msra.mxu0 0.0
    %7110 = vmatprep.subr.mxu0 0.0
    %7111 = vmatpush1.msra.mxu0 0.0
    %7112 = vmatprep.subr.mxu0 0.0
    %7113 = vmatpush1.msra.mxu0 0.0
    %7114 = vmatprep.subr.mxu0 0.0
    %7115 = vmatpush1.msra.mxu0 0.0
    %7116 = vmatprep.subr.mxu0 0.0
    %7117 = vmatpush1.msra.mxu0 0.0
    %7118 = vmatprep.subr.mxu0 0.0
    %7119 = vmatpush1.msra.mxu0 0.0
    %7120 = vmatprep.subr.mxu0 0.0
    %7121 = vmatpush1.msra.mxu0 0.0
    %7122 = vmatprep.subr.mxu0 0.0
    %7123 = vmatpush1.msra.mxu0 0.0
    %7124 = vmatprep.subr.mxu0 0.0
    %7125 = vmatpush1.msra.mxu0 0.0
    %7126 = vmatprep.subr.mxu0 0.0
    %7127 = vmatpush1.msra.mxu0 0.0
    %7128 = vmatprep.subr.mxu0 0.0
    %7129 = vmatpush1.msra.mxu0 0.0
    %7130 = vmatprep.subr.mxu0 0.0
    %7131 = vmatpush1.msra.mxu0 0.0
    %7132 = vmatprep.subr.mxu0 0.0
    %7133 = vmatpush1.msra.mxu0 0.0
    %7134 = vmatprep.mubr.f32.mxu0 0.0
    %v7135 = vand.u32 %v7067, 4294901760
    %v7136 = vsub.f32 %v7067, %v7135
    %v7137 = vand.u32 %v7136, 4294901760
    %v7138 = vsub.f32 %v7136, %v7137
    %v7139 = vand.u32 %v7138, 4294901760
    %7140 = vmatmul.mubr.f32.gmra.mrb[0].mxu0 %v7139
    %v7141 = vpop.f32.mrb[0].mxu0
    %v7142 = vadd.f32 0.0, %v7141
    %v7143 = vpop.f32.mrb[0].mxu0
    %7144 = vdwg.mxu0
    %7145 = vmatprep.subr.mxu0 0.0
    %v7146 = vand.u32 %v7064, 4294901760
    %v7147 = vsub.f32 %v7064, %v7146
    %v7148 = vand.u32 %v7147, 4294901760
    %v7149 = vsub.f32 %v7147, %v7148
    %v7150 = vand.u32 %v7149, 4294901760
    %7151 = vmatpush1.msra.mxu0 %v7150
    %7152 = vmatprep.subr.mxu0 0.0
    %7153 = vmatpush1.msra.mxu0 0.0
    %7154 = vmatprep.subr.mxu0 0.0
    %7155 = vmatpush1.msra.mxu0 0.0
    %7156 = vmatprep.subr.mxu0 0.0
    %7157 = vmatpush1.msra.mxu0 0.0
    %7158 = vmatprep.subr.mxu0 0.0
    %7159 = vmatpush1.msra.mxu0 0.0
    %7160 = vmatprep.subr.mxu0 0.0
    %7161 = vmatpush1.msra.mxu0 0.0
    %7162 = vmatprep.subr.mxu0 0.0
    %7163 = vmatpush1.msra.mxu0 0.0
    %7164 = vmatprep.subr.mxu0 0.0
    %7165 = vmatpush1.msra.mxu0 0.0
    %7166 = vmatprep.subr.mxu0 0.0
    %7167 = vmatpush1.msra.mxu0 0.0
    %7168 = vmatprep.subr.mxu0 0.0
    %7169 = vmatpush1.msra.mxu0 0.0
    %7170 = vmatprep.subr.mxu0 0.0
    %7171 = vmatpush1.msra.mxu0 0.0
    %7172 = vmatprep.subr.mxu0 0.0
    %7173 = vmatpush1.msra.mxu0 0.0
    %7174 = vmatprep.subr.mxu0 0.0
    %7175 = vmatpush1.msra.mxu0 0.0
    %7176 = vmatprep.subr.mxu0 0.0
    %7177 = vmatpush1.msra.mxu0 0.0
    %7178 = vmatprep.subr.mxu0 0.0
    %7179 = vmatpush1.msra.mxu0 0.0
    %7180 = vmatprep.subr.mxu0 0.0
    %7181 = vmatpush1.msra.mxu0 0.0
    %7182 = vmatprep.subr.mxu0 0.0
    %7183 = vmatpush1.msra.mxu0 0.0
    %7184 = vmatprep.subr.mxu0 0.0
    %7185 = vmatpush1.msra.mxu0 0.0
    %7186 = vmatprep.subr.mxu0 0.0
    %7187 = vmatpush1.msra.mxu0 0.0
    %7188 = vmatprep.subr.mxu0 0.0
    %7189 = vmatpush1.msra.mxu0 0.0
    %7190 = vmatprep.subr.mxu0 0.0
    %7191 = vmatpush1.msra.mxu0 0.0
    %7192 = vmatprep.subr.mxu0 0.0
    %7193 = vmatpush1.msra.mxu0 0.0
    %7194 = vmatprep.subr.mxu0 0.0
    %7195 = vmatpush1.msra.mxu0 0.0
    %7196 = vmatprep.subr.mxu0 0.0
    %7197 = vmatpush1.msra.mxu0 0.0
    %7198 = vmatprep.subr.mxu0 0.0
    %7199 = vmatpush1.msra.mxu0 0.0
    %7200 = vmatprep.subr.mxu0 0.0
    %7201 = vmatpush1.msra.mxu0 0.0
    %7202 = vmatprep.subr.mxu0 0.0
    %7203 = vmatpush1.msra.mxu0 0.0
    %7204 = vmatprep.subr.mxu0 0.0
    %7205 = vmatpush1.msra.mxu0 0.0
    %7206 = vmatprep.subr.mxu0 0.0
    %7207 = vmatpush1.msra.mxu0 0.0
    %7208 = vmatprep.subr.mxu0 0.0
    %7209 = vmatpush1.msra.mxu0 0.0
    %7210 = vmatprep.subr.mxu0 0.0
    %7211 = vmatpush1.msra.mxu0 0.0
    %7212 = vmatprep.subr.mxu0 0.0
    %7213 = vmatpush1.msra.mxu0 0.0
    %7214 = vmatprep.mubr.f32.mxu0 0.0
    %v7215 = vand.u32 %v7067, 4294901760
    %7216 = vmatmul.mubr.f32.gmra.mrb[0].mxu0 %v7215
    %v7217 = vpop.f32.mrb[0].mxu0
    %v7218 = vadd.f32 %v7142, %v7217
    %v7219 = vpop.f32.mrb[0].mxu0
    %7220 = vdwg.mxu0
    %7221 = vmatprep.subr.mxu0 0.0
    %v7222 = vand.u32 %v7064, 4294901760
    %v7223 = vsub.f32 %v7064, %v7222
    %7224 = vmatpush1.msra.mxu0 %v7223
    %7225 = vmatprep.subr.mxu0 0.0
    %7226 = vmatpush1.msra.mxu0 0.0
    %7227 = vmatprep.subr.mxu0 0.0
    %7228 = vmatpush1.msra.mxu0 0.0
    %7229 = vmatprep.subr.mxu0 0.0
    %7230 = vmatpush1.msra.mxu0 0.0
    %7231 = vmatprep.subr.mxu0 0.0
    %7232 = vmatpush1.msra.mxu0 0.0
    %7233 = vmatprep.subr.mxu0 0.0
    %7234 = vmatpush1.msra.mxu0 0.0
    %7235 = vmatprep.subr.mxu0 0.0
    %7236 = vmatpush1.msra.mxu0 0.0
    %7237 = vmatprep.subr.mxu0 0.0
    %7238 = vmatpush1.msra.mxu0 0.0
    %7239 = vmatprep.subr.mxu0 0.0
    %7240 = vmatpush1.msra.mxu0 0.0
    %7241 = vmatprep.subr.mxu0 0.0
    %7242 = vmatpush1.msra.mxu0 0.0
    %7243 = vmatprep.subr.mxu0 0.0
    %7244 = vmatpush1.msra.mxu0 0.0
    %7245 = vmatprep.subr.mxu0 0.0
    %7246 = vmatpush1.msra.mxu0 0.0
    %7247 = vmatprep.subr.mxu0 0.0
    %7248 = vmatpush1.msra.mxu0 0.0
    %7249 = vmatprep.subr.mxu0 0.0
    %7250 = vmatpush1.msra.mxu0 0.0
    %7251 = vmatprep.subr.mxu0 0.0
    %7252 = vmatpush1.msra.mxu0 0.0
    %7253 = vmatprep.subr.mxu0 0.0
    %7254 = vmatpush1.msra.mxu0 0.0
    %7255 = vmatprep.subr.mxu0 0.0
    %7256 = vmatpush1.msra.mxu0 0.0
    %7257 = vmatprep.subr.mxu0 0.0
    %7258 = vmatpush1.msra.mxu0 0.0
    %7259 = vmatprep.subr.mxu0 0.0
    %7260 = vmatpush1.msra.mxu0 0.0
    %7261 = vmatprep.subr.mxu0 0.0
    %7262 = vmatpush1.msra.mxu0 0.0
    %7263 = vmatprep.subr.mxu0 0.0
    %7264 = vmatpush1.msra.mxu0 0.0
    %7265 = vmatprep.subr.mxu0 0.0
    %7266 = vmatpush1.msra.mxu0 0.0
    %7267 = vmatprep.subr.mxu0 0.0
    %7268 = vmatpush1.msra.mxu0 0.0
    %7269 = vmatprep.subr.mxu0 0.0
    %7270 = vmatpush1.msra.mxu0 0.0
    %7271 = vmatprep.subr.mxu0 0.0
    %7272 = vmatpush1.msra.mxu0 0.0
    %7273 = vmatprep.subr.mxu0 0.0
    %7274 = vmatpush1.msra.mxu0 0.0
    %7275 = vmatprep.subr.mxu0 0.0
    %7276 = vmatpush1.msra.mxu0 0.0
    %7277 = vmatprep.subr.mxu0 0.0
    %7278 = vmatpush1.msra.mxu0 0.0
    %7279 = vmatprep.subr.mxu0 0.0
    %7280 = vmatpush1.msra.mxu0 0.0
    %7281 = vmatprep.subr.mxu0 0.0
    %7282 = vmatpush1.msra.mxu0 0.0
    %7283 = vmatprep.subr.mxu0 0.0
    %7284 = vmatpush1.msra.mxu0 0.0
    %7285 = vmatprep.subr.mxu0 0.0
    %7286 = vmatpush1.msra.mxu0 0.0
    %7287 = vmatprep.mubr.f32.mxu0 0.0
    %v7288 = vand.u32 %v7067, 4294901760
    %v7289 = vsub.f32 %v7067, %v7288
    %7290 = vmatmul.mubr.f32.gmra.mrb[0].mxu0 %v7289
    %v7291 = vpop.f32.mrb[0].mxu0
    %v7292 = vadd.f32 %v7218, %v7291
    %v7293 = vpop.f32.mrb[0].mxu0
    %7294 = vdwg.mxu0
    %7295 = vmatprep.subr.mxu0 0.0
    %v7296 = vand.u32 %v7064, 4294901760
    %7297 = vmatpush1.msra.mxu0 %v7296
    %7298 = vmatprep.subr.mxu0 0.0
    %7299 = vmatpush1.msra.mxu0 0.0
    %7300 = vmatprep.subr.mxu0 0.0
    %7301 = vmatpush1.msra.mxu0 0.0
    %7302 = vmatprep.subr.mxu0 0.0
    %7303 = vmatpush1.msra.mxu0 0.0
    %7304 = vmatprep.subr.mxu0 0.0
    %7305 = vmatpush1.msra.mxu0 0.0
    %7306 = vmatprep.subr.mxu0 0.0
    %7307 = vmatpush1.msra.mxu0 0.0
    %7308 = vmatprep.subr.mxu0 0.0
    %7309 = vmatpush1.msra.mxu0 0.0
    %7310 = vmatprep.subr.mxu0 0.0
    %7311 = vmatpush1.msra.mxu0 0.0
    %7312 = vmatprep.subr.mxu0 0.0
    %7313 = vmatpush1.msra.mxu0 0.0
    %7314 = vmatprep.subr.mxu0 0.0
    %7315 = vmatpush1.msra.mxu0 0.0
    %7316 = vmatprep.subr.mxu0 0.0
    %7317 = vmatpush1.msra.mxu0 0.0
    %7318 = vmatprep.subr.mxu0 0.0
    %7319 = vmatpush1.msra.mxu0 0.0
    %7320 = vmatprep.subr.mxu0 0.0
    %7321 = vmatpush1.msra.mxu0 0.0
    %7322 = vmatprep.subr.mxu0 0.0
    %7323 = vmatpush1.msra.mxu0 0.0
    %7324 = vmatprep.subr.mxu0 0.0
    %7325 = vmatpush1.msra.mxu0 0.0
    %7326 = vmatprep.subr.mxu0 0.0
    %7327 = vmatpush1.msra.mxu0 0.0
    %7328 = vmatprep.subr.mxu0 0.0
    %7329 = vmatpush1.msra.mxu0 0.0
    %7330 = vmatprep.subr.mxu0 0.0
    %7331 = vmatpush1.msra.mxu0 0.0
    %7332 = vmatprep.subr.mxu0 0.0
    %7333 = vmatpush1.msra.mxu0 0.0
    %7334 = vmatprep.subr.mxu0 0.0
    %7335 = vmatpush1.msra.mxu0 0.0
    %7336 = vmatprep.subr.mxu0 0.0
    %7337 = vmatpush1.msra.mxu0 0.0
    %7338 = vmatprep.subr.mxu0 0.0
    %7339 = vmatpush1.msra.mxu0 0.0
    %7340 = vmatprep.subr.mxu0 0.0
    %7341 = vmatpush1.msra.mxu0 0.0
    %7342 = vmatprep.subr.mxu0 0.0
    %7343 = vmatpush1.msra.mxu0 0.0
    %7344 = vmatprep.subr.mxu0 0.0
    %7345 = vmatpush1.msra.mxu0 0.0
    %7346 = vmatprep.subr.mxu0 0.0
    %7347 = vmatpush1.msra.mxu0 0.0
    %7348 = vmatprep.subr.mxu0 0.0
    %7349 = vmatpush1.msra.mxu0 0.0
    %7350 = vmatprep.subr.mxu0 0.0
    %7351 = vmatpush1.msra.mxu0 0.0
    %7352 = vmatprep.subr.mxu0 0.0
    %7353 = vmatpush1.msra.mxu0 0.0
    %7354 = vmatprep.subr.mxu0 0.0
    %7355 = vmatpush1.msra.mxu0 0.0
    %7356 = vmatprep.subr.mxu0 0.0
    %7357 = vmatpush1.msra.mxu0 0.0
    %7358 = vmatprep.subr.mxu0 0.0
    %7359 = vmatpush1.msra.mxu0 0.0
    %7360 = vmatprep.mubr.f32.mxu0 0.0
    %v7361 = vand.u32 %v7067, 4294901760
    %v7362 = vsub.f32 %v7067, %v7361
    %v7363 = vand.u32 %v7362, 4294901760
    %7364 = vmatmul.mubr.f32.gmra.mrb[0].mxu0 %v7363
    %v7365 = vpop.f32.mrb[0].mxu0
    %v7366 = vadd.f32 %v7292, %v7365
    %v7367 = vpop.f32.mrb[0].mxu0
    %7368 = vdwg.mxu0
    %7369 = vmatprep.subr.mxu0 0.0
    %v7370 = vand.u32 %v7064, 4294901760
    %v7371 = vsub.f32 %v7064, %v7370
    %v7372 = vand.u32 %v7371, 4294901760
    %7373 = vmatpush1.msra.mxu0 %v7372
    %7374 = vmatprep.subr.mxu0 0.0
    %7375 = vmatpush1.msra.mxu0 0.0
    %7376 = vmatprep.subr.mxu0 0.0
    %7377 = vmatpush1.msra.mxu0 0.0
    %7378 = vmatprep.subr.mxu0 0.0
    %7379 = vmatpush1.msra.mxu0 0.0
    %7380 = vmatprep.subr.mxu0 0.0
    %7381 = vmatpush1.msra.mxu0 0.0
    %7382 = vmatprep.subr.mxu0 0.0
    %7383 = vmatpush1.msra.mxu0 0.0
    %7384 = vmatprep.subr.mxu0 0.0
    %7385 = vmatpush1.msra.mxu0 0.0
    %7386 = vmatprep.subr.mxu0 0.0
    %7387 = vmatpush1.msra.mxu0 0.0
    %7388 = vmatprep.subr.mxu0 0.0
    %7389 = vmatpush1.msra.mxu0 0.0
    %7390 = vmatprep.subr.mxu0 0.0
    %7391 = vmatpush1.msra.mxu0 0.0
    %7392 = vmatprep.subr.mxu0 0.0
    %7393 = vmatpush1.msra.mxu0 0.0
    %7394 = vmatprep.subr.mxu0 0.0
    %7395 = vmatpush1.msra.mxu0 0.0
    %7396 = vmatprep.subr.mxu0 0.0
    %7397 = vmatpush1.msra.mxu0 0.0
    %7398 = vmatprep.subr.mxu0 0.0
    %7399 = vmatpush1.msra.mxu0 0.0
    %7400 = vmatprep.subr.mxu0 0.0
    %7401 = vmatpush1.msra.mxu0 0.0
    %7402 = vmatprep.subr.mxu0 0.0
    %7403 = vmatpush1.msra.mxu0 0.0
    %7404 = vmatprep.subr.mxu0 0.0
    %7405 = vmatpush1.msra.mxu0 0.0
    %7406 = vmatprep.subr.mxu0 0.0
    %7407 = vmatpush1.msra.mxu0 0.0
    %7408 = vmatprep.subr.mxu0 0.0
    %7409 = vmatpush1.msra.mxu0 0.0
    %7410 = vmatprep.subr.mxu0 0.0
    %7411 = vmatpush1.msra.mxu0 0.0
    %7412 = vmatprep.subr.mxu0 0.0
    %7413 = vmatpush1.msra.mxu0 0.0
    %7414 = vmatprep.subr.mxu0 0.0
    %7415 = vmatpush1.msra.mxu0 0.0
    %7416 = vmatprep.subr.mxu0 0.0
    %7417 = vmatpush1.msra.mxu0 0.0
    %7418 = vmatprep.subr.mxu0 0.0
    %7419 = vmatpush1.msra.mxu0 0.0
    %7420 = vmatprep.subr.mxu0 0.0
    %7421 = vmatpush1.msra.mxu0 0.0
    %7422 = vmatprep.subr.mxu0 0.0
    %7423 = vmatpush1.msra.mxu0 0.0
    %7424 = vmatprep.subr.mxu0 0.0
    %7425 = vmatpush1.msra.mxu0 0.0
    %7426 = vmatprep.subr.mxu0 0.0
    %7427 = vmatpush1.msra.mxu0 0.0
    %7428 = vmatprep.subr.mxu0 0.0
    %7429 = vmatpush1.msra.mxu0 0.0
    %7430 = vmatprep.subr.mxu0 0.0
    %7431 = vmatpush1.msra.mxu0 0.0
    %7432 = vmatprep.subr.mxu0 0.0
    %7433 = vmatpush1.msra.mxu0 0.0
    %7434 = vmatprep.subr.mxu0 0.0
    %7435 = vmatpush1.msra.mxu0 0.0
    %7436 = vmatprep.mubr.f32.mxu0 0.0
    %v7437 = vand.u32 %v7067, 4294901760
    %7438 = vmatmul.mubr.f32.gmra.mrb[0].mxu0 %v7437
    %v7439 = vpop.f32.mrb[0].mxu0
    %v7440 = vadd.f32 %v7366, %v7439
    %v7441 = vpop.f32.mrb[0].mxu0
    %7442 = vdwg.mxu0
    %7443 = vmatprep.subr.mxu0 0.0
    %v7444 = vand.u32 %v7064, 4294901760
    %7445 = vmatpush1.msra.mxu0 %v7444
    %7446 = vmatprep.subr.mxu0 0.0
    %7447 = vmatpush1.msra.mxu0 0.0
    %7448 = vmatprep.subr.mxu0 0.0
    %7449 = vmatpush1.msra.mxu0 0.0
    %7450 = vmatprep.subr.mxu0 0.0
    %7451 = vmatpush1.msra.mxu0 0.0
    %7452 = vmatprep.subr.mxu0 0.0
    %7453 = vmatpush1.msra.mxu0 0.0
    %7454 = vmatprep.subr.mxu0 0.0
    %7455 = vmatpush1.msra.mxu0 0.0
    %7456 = vmatprep.subr.mxu0 0.0
    %7457 = vmatpush1.msra.mxu0 0.0
    %7458 = vmatprep.subr.mxu0 0.0
    %7459 = vmatpush1.msra.mxu0 0.0
    %7460 = vmatprep.subr.mxu0 0.0
    %7461 = vmatpush1.msra.mxu0 0.0
    %7462 = vmatprep.subr.mxu0 0.0
    %7463 = vmatpush1.msra.mxu0 0.0
    %7464 = vmatprep.subr.mxu0 0.0
    %7465 = vmatpush1.msra.mxu0 0.0
    %7466 = vmatprep.subr.mxu0 0.0
    %7467 = vmatpush1.msra.mxu0 0.0
    %7468 = vmatprep.subr.mxu0 0.0
    %7469 = vmatpush1.msra.mxu0 0.0
    %7470 = vmatprep.subr.mxu0 0.0
    %7471 = vmatpush1.msra.mxu0 0.0
    %7472 = vmatprep.subr.mxu0 0.0
    %7473 = vmatpush1.msra.mxu0 0.0
    %7474 = vmatprep.subr.mxu0 0.0
    %7475 = vmatpush1.msra.mxu0 0.0
    %7476 = vmatprep.subr.mxu0 0.0
    %7477 = vmatpush1.msra.mxu0 0.0
    %7478 = vmatprep.subr.mxu0 0.0
    %7479 = vmatpush1.msra.mxu0 0.0
    %7480 = vmatprep.subr.mxu0 0.0
    %7481 = vmatpush1.msra.mxu0 0.0
    %7482 = vmatprep.subr.mxu0 0.0
    %7483 = vmatpush1.msra.mxu0 0.0
    %7484 = vmatprep.subr.mxu0 0.0
    %7485 = vmatpush1.msra.mxu0 0.0
    %7486 = vmatprep.subr.mxu0 0.0
    %7487 = vmatpush1.msra.mxu0 0.0
    %7488 = vmatprep.subr.mxu0 0.0
    %7489 = vmatpush1.msra.mxu0 0.0
    %7490 = vmatprep.subr.mxu0 0.0
    %7491 = vmatpush1.msra.mxu0 0.0
    %7492 = vmatprep.subr.mxu0 0.0
    %7493 = vmatpush1.msra.mxu0 0.0
    %7494 = vmatprep.subr.mxu0 0.0
    %7495 = vmatpush1.msra.mxu0 0.0
    %7496 = vmatprep.subr.mxu0 0.0
    %7497 = vmatpush1.msra.mxu0 0.0
    %7498 = vmatprep.subr.mxu0 0.0
    %7499 = vmatpush1.msra.mxu0 0.0
    %7500 = vmatprep.subr.mxu0 0.0
    %7501 = vmatpush1.msra.mxu0 0.0
    %7502 = vmatprep.subr.mxu0 0.0
    %7503 = vmatpush1.msra.mxu0 0.0
    %7504 = vmatprep.subr.mxu0 0.0
    %7505 = vmatpush1.msra.mxu0 0.0
    %7506 = vmatprep.subr.mxu0 0.0
    %7507 = vmatpush1.msra.mxu0 0.0
    %7508 = vmatprep.mubr.f32.mxu0 0.0
    %v7509 = vand.u32 %v7067, 4294901760
    %7510 = vmatmul.mubr.f32.gmra.mrb[0].mxu0 %v7509
    %v7511 = vpop.f32.mrb[0].mxu0
    %v7512 = vadd.f32 %v7440, %v7511
    %v7513 = vpop.f32.mrb[0].mxu0
    %7514 = vdwg.mxu0
    %7515 = vrot.lane.b32.xlu0 %v629, 40
    %v7516 = vpop.permute.xlu0 %7515
    %v7519 = vsel %vm635, %v7062, 0
    %7521 = vmatprep.subr.mxu0 0.0
    %v7522 = vand.u32 %v7516, 4294901760
    %7523 = vmatpush1.msra.mxu0 %v7522
    %7524 = vmatprep.subr.mxu0 0.0
    %7525 = vmatpush1.msra.mxu0 0.0
    %7526 = vmatprep.subr.mxu0 0.0
    %7527 = vmatpush1.msra.mxu0 0.0
    %7528 = vmatprep.subr.mxu0 0.0
    %7529 = vmatpush1.msra.mxu0 0.0
    %7530 = vmatprep.subr.mxu0 0.0
    %7531 = vmatpush1.msra.mxu0 0.0
    %7532 = vmatprep.subr.mxu0 0.0
    %7533 = vmatpush1.msra.mxu0 0.0
    %7534 = vmatprep.subr.mxu0 0.0
    %7535 = vmatpush1.msra.mxu0 0.0
    %7536 = vmatprep.subr.mxu0 0.0
    %7537 = vmatpush1.msra.mxu0 0.0
    %7538 = vmatprep.subr.mxu0 0.0
    %7539 = vmatpush1.msra.mxu0 0.0
    %7540 = vmatprep.subr.mxu0 0.0
    %7541 = vmatpush1.msra.mxu0 0.0
    %7542 = vmatprep.subr.mxu0 0.0
    %7543 = vmatpush1.msra.mxu0 0.0
    %7544 = vmatprep.subr.mxu0 0.0
    %7545 = vmatpush1.msra.mxu0 0.0
    %7546 = vmatprep.subr.mxu0 0.0
    %7547 = vmatpush1.msra.mxu0 0.0
    %7548 = vmatprep.subr.mxu0 0.0
    %7549 = vmatpush1.msra.mxu0 0.0
    %7550 = vmatprep.subr.mxu0 0.0
    %7551 = vmatpush1.msra.mxu0 0.0
    %7552 = vmatprep.subr.mxu0 0.0
    %7553 = vmatpush1.msra.mxu0 0.0
    %7554 = vmatprep.subr.mxu0 0.0
    %7555 = vmatpush1.msra.mxu0 0.0
    %7556 = vmatprep.subr.mxu0 0.0
    %7557 = vmatpush1.msra.mxu0 0.0
    %7558 = vmatprep.subr.mxu0 0.0
    %7559 = vmatpush1.msra.mxu0 0.0
    %7560 = vmatprep.subr.mxu0 0.0
    %7561 = vmatpush1.msra.mxu0 0.0
    %7562 = vmatprep.subr.mxu0 0.0
    %7563 = vmatpush1.msra.mxu0 0.0
    %7564 = vmatprep.subr.mxu0 0.0
    %7565 = vmatpush1.msra.mxu0 0.0
    %7566 = vmatprep.subr.mxu0 0.0
    %7567 = vmatpush1.msra.mxu0 0.0
    %7568 = vmatprep.subr.mxu0 0.0
    %7569 = vmatpush1.msra.mxu0 0.0
    %7570 = vmatprep.subr.mxu0 0.0
    %7571 = vmatpush1.msra.mxu0 0.0
    %7572 = vmatprep.subr.mxu0 0.0
    %7573 = vmatpush1.msra.mxu0 0.0
    %7574 = vmatprep.subr.mxu0 0.0
    %7575 = vmatpush1.msra.mxu0 0.0
    %7576 = vmatprep.subr.mxu0 0.0
    %7577 = vmatpush1.msra.mxu0 0.0
    %7578 = vmatprep.subr.mxu0 0.0
    %7579 = vmatpush1.msra.mxu0 0.0
    %7580 = vmatprep.subr.mxu0 0.0
    %7581 = vmatpush1.msra.mxu0 0.0
    %7582 = vmatprep.subr.mxu0 0.0
    %7583 = vmatpush1.msra.mxu0 0.0
    %7584 = vmatprep.subr.mxu0 0.0
    %7585 = vmatpush1.msra.mxu0 0.0
    %7586 = vmatprep.mubr.f32.mxu0 0.0
    %v7587 = vand.u32 %v7519, 4294901760
    %v7588 = vsub.f32 %v7519, %v7587
    %v7589 = vand.u32 %v7588, 4294901760
    %v7590 = vsub.f32 %v7588, %v7589
    %v7591 = vand.u32 %v7590, 4294901760
    %7592 = vmatmul.mubr.f32.gmra.mrb[0].mxu0 %v7591
    %v7593 = vpop.f32.mrb[0].mxu0
    %v7594 = vadd.f32 0.0, %v7593
    %v7595 = vpop.f32.mrb[0].mxu0
    %7596 = vdwg.mxu0
    %7597 = vmatprep.subr.mxu0 0.0
    %v7598 = vand.u32 %v7516, 4294901760
    %v7599 = vsub.f32 %v7516, %v7598
    %v7600 = vand.u32 %v7599, 4294901760
    %v7601 = vsub.f32 %v7599, %v7600
    %v7602 = vand.u32 %v7601, 4294901760
    %7603 = vmatpush1.msra.mxu0 %v7602
    %7604 = vmatprep.subr.mxu0 0.0
    %7605 = vmatpush1.msra.mxu0 0.0
    %7606 = vmatprep.subr.mxu0 0.0
    %7607 = vmatpush1.msra.mxu0 0.0
    %7608 = vmatprep.subr.mxu0 0.0
    %7609 = vmatpush1.msra.mxu0 0.0
    %7610 = vmatprep.subr.mxu0 0.0
    %7611 = vmatpush1.msra.mxu0 0.0
    %7612 = vmatprep.subr.mxu0 0.0
    %7613 = vmatpush1.msra.mxu0 0.0
    %7614 = vmatprep.subr.mxu0 0.0
    %7615 = vmatpush1.msra.mxu0 0.0
    %7616 = vmatprep.subr.mxu0 0.0
    %7617 = vmatpush1.msra.mxu0 0.0
    %7618 = vmatprep.subr.mxu0 0.0
    %7619 = vmatpush1.msra.mxu0 0.0
    %7620 = vmatprep.subr.mxu0 0.0
    %7621 = vmatpush1.msra.mxu0 0.0
    %7622 = vmatprep.subr.mxu0 0.0
    %7623 = vmatpush1.msra.mxu0 0.0
    %7624 = vmatprep.subr.mxu0 0.0
    %7625 = vmatpush1.msra.mxu0 0.0
    %7626 = vmatprep.subr.mxu0 0.0
    %7627 = vmatpush1.msra.mxu0 0.0
    %7628 = vmatprep.subr.mxu0 0.0
    %7629 = vmatpush1.msra.mxu0 0.0
    %7630 = vmatprep.subr.mxu0 0.0
    %7631 = vmatpush1.msra.mxu0 0.0
    %7632 = vmatprep.subr.mxu0 0.0
    %7633 = vmatpush1.msra.mxu0 0.0
    %7634 = vmatprep.subr.mxu0 0.0
    %7635 = vmatpush1.msra.mxu0 0.0
    %7636 = vmatprep.subr.mxu0 0.0
    %7637 = vmatpush1.msra.mxu0 0.0
    %7638 = vmatprep.subr.mxu0 0.0
    %7639 = vmatpush1.msra.mxu0 0.0
    %7640 = vmatprep.subr.mxu0 0.0
    %7641 = vmatpush1.msra.mxu0 0.0
    %7642 = vmatprep.subr.mxu0 0.0
    %7643 = vmatpush1.msra.mxu0 0.0
    %7644 = vmatprep.subr.mxu0 0.0
    %7645 = vmatpush1.msra.mxu0 0.0
    %7646 = vmatprep.subr.mxu0 0.0
    %7647 = vmatpush1.msra.mxu0 0.0
    %7648 = vmatprep.subr.mxu0 0.0
    %7649 = vmatpush1.msra.mxu0 0.0
    %7650 = vmatprep.subr.mxu0 0.0
    %7651 = vmatpush1.msra.mxu0 0.0
    %7652 = vmatprep.subr.mxu0 0.0
    %7653 = vmatpush1.msra.mxu0 0.0
    %7654 = vmatprep.subr.mxu0 0.0
    %7655 = vmatpush1.msra.mxu0 0.0
    %7656 = vmatprep.subr.mxu0 0.0
    %7657 = vmatpush1.msra.mxu0 0.0
    %7658 = vmatprep.subr.mxu0 0.0
    %7659 = vmatpush1.msra.mxu0 0.0
    %7660 = vmatprep.subr.mxu0 0.0
    %7661 = vmatpush1.msra.mxu0 0.0
    %7662 = vmatprep.subr.mxu0 0.0
    %7663 = vmatpush1.msra.mxu0 0.0
    %7664 = vmatprep.subr.mxu0 0.0
    %7665 = vmatpush1.msra.mxu0 0.0
    %7666 = vmatprep.mubr.f32.mxu0 0.0
    %v7667 = vand.u32 %v7519, 4294901760
    %7668 = vmatmul.mubr.f32.gmra.mrb[0].mxu0 %v7667
    %v7669 = vpop.f32.mrb[0].mxu0
    %v7670 = vadd.f32 %v7594, %v7669
    %v7671 = vpop.f32.mrb[0].mxu0
    %7672 = vdwg.mxu0
    %7673 = vmatprep.subr.mxu0 0.0
    %v7674 = vand.u32 %v7516, 4294901760
    %v7675 = vsub.f32 %v7516, %v7674
    %7676 = vmatpush1.msra.mxu0 %v7675
    %7677 = vmatprep.subr.mxu0 0.0
    %7678 = vmatpush1.msra.mxu0 0.0
    %7679 = vmatprep.subr.mxu0 0.0
    %7680 = vmatpush1.msra.mxu0 0.0
    %7681 = vmatprep.subr.mxu0 0.0
    %7682 = vmatpush1.msra.mxu0 0.0
    %7683 = vmatprep.subr.mxu0 0.0
    %7684 = vmatpush1.msra.mxu0 0.0
    %7685 = vmatprep.subr.mxu0 0.0
    %7686 = vmatpush1.msra.mxu0 0.0
    %7687 = vmatprep.subr.mxu0 0.0
    %7688 = vmatpush1.msra.mxu0 0.0
    %7689 = vmatprep.subr.mxu0 0.0
    %7690 = vmatpush1.msra.mxu0 0.0
    %7691 = vmatprep.subr.mxu0 0.0
    %7692 = vmatpush1.msra.mxu0 0.0
    %7693 = vmatprep.subr.mxu0 0.0
    %7694 = vmatpush1.msra.mxu0 0.0
    %7695 = vmatprep.subr.mxu0 0.0
    %7696 = vmatpush1.msra.mxu0 0.0
    %7697 = vmatprep.subr.mxu0 0.0
    %7698 = vmatpush1.msra.mxu0 0.0
    %7699 = vmatprep.subr.mxu0 0.0
    %7700 = vmatpush1.msra.mxu0 0.0
    %7701 = vmatprep.subr.mxu0 0.0
    %7702 = vmatpush1.msra.mxu0 0.0
    %7703 = vmatprep.subr.mxu0 0.0
    %7704 = vmatpush1.msra.mxu0 0.0
    %7705 = vmatprep.subr.mxu0 0.0
    %7706 = vmatpush1.msra.mxu0 0.0
    %7707 = vmatprep.subr.mxu0 0.0
    %7708 = vmatpush1.msra.mxu0 0.0
    %7709 = vmatprep.subr.mxu0 0.0
    %7710 = vmatpush1.msra.mxu0 0.0
    %7711 = vmatprep.subr.mxu0 0.0
    %7712 = vmatpush1.msra.mxu0 0.0
    %7713 = vmatprep.subr.mxu0 0.0
    %7714 = vmatpush1.msra.mxu0 0.0
    %7715 = vmatprep.subr.mxu0 0.0
    %7716 = vmatpush1.msra.mxu0 0.0
    %7717 = vmatprep.subr.mxu0 0.0
    %7718 = vmatpush1.msra.mxu0 0.0
    %7719 = vmatprep.subr.mxu0 0.0
    %7720 = vmatpush1.msra.mxu0 0.0
    %7721 = vmatprep.subr.mxu0 0.0
    %7722 = vmatpush1.msra.mxu0 0.0
    %7723 = vmatprep.subr.mxu0 0.0
    %7724 = vmatpush1.msra.mxu0 0.0
    %7725 = vmatprep.subr.mxu0 0.0
    %7726 = vmatpush1.msra.mxu0 0.0
    %7727 = vmatprep.subr.mxu0 0.0
    %7728 = vmatpush1.msra.mxu0 0.0
    %7729 = vmatprep.subr.mxu0 0.0
    %7730 = vmatpush1.msra.mxu0 0.0
    %7731 = vmatprep.subr.mxu0 0.0
    %7732 = vmatpush1.msra.mxu0 0.0
    %7733 = vmatprep.subr.mxu0 0.0
    %7734 = vmatpush1.msra.mxu0 0.0
    %7735 = vmatprep.subr.mxu0 0.0
    %7736 = vmatpush1.msra.mxu0 0.0
    %7737 = vmatprep.subr.mxu0 0.0
    %7738 = vmatpush1.msra.mxu0 0.0
    %7739 = vmatprep.mubr.f32.mxu0 0.0
    %v7740 = vand.u32 %v7519, 4294901760
    %v7741 = vsub.f32 %v7519, %v7740
    %7742 = vmatmul.mubr.f32.gmra.mrb[0].mxu0 %v7741
    %v7743 = vpop.f32.mrb[0].mxu0
    %v7744 = vadd.f32 %v7670, %v7743
    %v7745 = vpop.f32.mrb[0].mxu0
    %7746 = vdwg.mxu0
    %7747 = vmatprep.subr.mxu0 0.0
    %v7748 = vand.u32 %v7516, 4294901760
    %7749 = vmatpush1.msra.mxu0 %v7748
    %7750 = vmatprep.subr.mxu0 0.0
    %7751 = vmatpush1.msra.mxu0 0.0
    %7752 = vmatprep.subr.mxu0 0.0
    %7753 = vmatpush1.msra.mxu0 0.0
    %7754 = vmatprep.subr.mxu0 0.0
    %7755 = vmatpush1.msra.mxu0 0.0
    %7756 = vmatprep.subr.mxu0 0.0
    %7757 = vmatpush1.msra.mxu0 0.0
    %7758 = vmatprep.subr.mxu0 0.0
    %7759 = vmatpush1.msra.mxu0 0.0
    %7760 = vmatprep.subr.mxu0 0.0
    %7761 = vmatpush1.msra.mxu0 0.0
    %7762 = vmatprep.subr.mxu0 0.0
    %7763 = vmatpush1.msra.mxu0 0.0
    %7764 = vmatprep.subr.mxu0 0.0
    %7765 = vmatpush1.msra.mxu0 0.0
    %7766 = vmatprep.subr.mxu0 0.0
    %7767 = vmatpush1.msra.mxu0 0.0
    %7768 = vmatprep.subr.mxu0 0.0
    %7769 = vmatpush1.msra.mxu0 0.0
    %7770 = vmatprep.subr.mxu0 0.0
    %7771 = vmatpush1.msra.mxu0 0.0
    %7772 = vmatprep.subr.mxu0 0.0
    %7773 = vmatpush1.msra.mxu0 0.0
    %7774 = vmatprep.subr.mxu0 0.0
    %7775 = vmatpush1.msra.mxu0 0.0
    %7776 = vmatprep.subr.mxu0 0.0
    %7777 = vmatpush1.msra.mxu0 0.0
    %7778 = vmatprep.subr.mxu0 0.0
    %7779 = vmatpush1.msra.mxu0 0.0
    %7780 = vmatprep.subr.mxu0 0.0
    %7781 = vmatpush1.msra.mxu0 0.0
    %7782 = vmatprep.subr.mxu0 0.0
    %7783 = vmatpush1.msra.mxu0 0.0
    %7784 = vmatprep.subr.mxu0 0.0
    %7785 = vmatpush1.msra.mxu0 0.0
    %7786 = vmatprep.subr.mxu0 0.0
    %7787 = vmatpush1.msra.mxu0 0.0
    %7788 = vmatprep.subr.mxu0 0.0
    %7789 = vmatpush1.msra.mxu0 0.0
    %7790 = vmatprep.subr.mxu0 0.0
    %7791 = vmatpush1.msra.mxu0 0.0
    %7792 = vmatprep.subr.mxu0 0.0
    %7793 = vmatpush1.msra.mxu0 0.0
    %7794 = vmatprep.subr.mxu0 0.0
    %7795 = vmatpush1.msra.mxu0 0.0
    %7796 = vmatprep.subr.mxu0 0.0
    %7797 = vmatpush1.msra.mxu0 0.0
    %7798 = vmatprep.subr.mxu0 0.0
    %7799 = vmatpush1.msra.mxu0 0.0
    %7800 = vmatprep.subr.mxu0 0.0
    %7801 = vmatpush1.msra.mxu0 0.0
    %7802 = vmatprep.subr.mxu0 0.0
    %7803 = vmatpush1.msra.mxu0 0.0
    %7804 = vmatprep.subr.mxu0 0.0
    %7805 = vmatpush1.msra.mxu0 0.0
    %7806 = vmatprep.subr.mxu0 0.0
    %7807 = vmatpush1.msra.mxu0 0.0
    %7808 = vmatprep.subr.mxu0 0.0
    %7809 = vmatpush1.msra.mxu0 0.0
    %7810 = vmatprep.subr.mxu0 0.0
    %7811 = vmatpush1.msra.mxu0 0.0
    %7812 = vmatprep.mubr.f32.mxu0 0.0
    %v7813 = vand.u32 %v7519, 4294901760
    %v7814 = vsub.f32 %v7519, %v7813
    %v7815 = vand.u32 %v7814, 4294901760
    %7816 = vmatmul.mubr.f32.gmra.mrb[0].mxu0 %v7815
    %v7817 = vpop.f32.mrb[0].mxu0
    %v7818 = vadd.f32 %v7744, %v7817
    %v7819 = vpop.f32.mrb[0].mxu0
    %7820 = vdwg.mxu0
    %7821 = vmatprep.subr.mxu0 0.0
    %v7822 = vand.u32 %v7516, 4294901760
    %v7823 = vsub.f32 %v7516, %v7822
    %v7824 = vand.u32 %v7823, 4294901760
    %7825 = vmatpush1.msra.mxu0 %v7824
    %7826 = vmatprep.subr.mxu0 0.0
    %7827 = vmatpush1.msra.mxu0 0.0
    %7828 = vmatprep.subr.mxu0 0.0
    %7829 = vmatpush1.msra.mxu0 0.0
    %7830 = vmatprep.subr.mxu0 0.0
    %7831 = vmatpush1.msra.mxu0 0.0
    %7832 = vmatprep.subr.mxu0 0.0
    %7833 = vmatpush1.msra.mxu0 0.0
    %7834 = vmatprep.subr.mxu0 0.0
    %7835 = vmatpush1.msra.mxu0 0.0
    %7836 = vmatprep.subr.mxu0 0.0
    %7837 = vmatpush1.msra.mxu0 0.0
    %7838 = vmatprep.subr.mxu0 0.0
    %7839 = vmatpush1.msra.mxu0 0.0
    %7840 = vmatprep.subr.mxu0 0.0
    %7841 = vmatpush1.msra.mxu0 0.0
    %7842 = vmatprep.subr.mxu0 0.0
    %7843 = vmatpush1.msra.mxu0 0.0
    %7844 = vmatprep.subr.mxu0 0.0
    %7845 = vmatpush1.msra.mxu0 0.0
    %7846 = vmatprep.subr.mxu0 0.0
    %7847 = vmatpush1.msra.mxu0 0.0
    %7848 = vmatprep.subr.mxu0 0.0
    %7849 = vmatpush1.msra.mxu0 0.0
    %7850 = vmatprep.subr.mxu0 0.0
    %7851 = vmatpush1.msra.mxu0 0.0
    %7852 = vmatprep.subr.mxu0 0.0
    %7853 = vmatpush1.msra.mxu0 0.0
    %7854 = vmatprep.subr.mxu0 0.0
    %7855 = vmatpush1.msra.mxu0 0.0
    %7856 = vmatprep.subr.mxu0 0.0
    %7857 = vmatpush1.msra.mxu0 0.0
    %7858 = vmatprep.subr.mxu0 0.0
    %7859 = vmatpush1.msra.mxu0 0.0
    %7860 = vmatprep.subr.mxu0 0.0
    %7861 = vmatpush1.msra.mxu0 0.0
    %7862 = vmatprep.subr.mxu0 0.0
    %7863 = vmatpush1.msra.mxu0 0.0
    %7864 = vmatprep.subr.mxu0 0.0
    %7865 = vmatpush1.msra.mxu0 0.0
    %7866 = vmatprep.subr.mxu0 0.0
    %7867 = vmatpush1.msra.mxu0 0.0
    %7868 = vmatprep.subr.mxu0 0.0
    %7869 = vmatpush1.msra.mxu0 0.0
    %7870 = vmatprep.subr.mxu0 0.0
    %7871 = vmatpush1.msra.mxu0 0.0
    %7872 = vmatprep.subr.mxu0 0.0
    %7873 = vmatpush1.msra.mxu0 0.0
    %7874 = vmatprep.subr.mxu0 0.0
    %7875 = vmatpush1.msra.mxu0 0.0
    %7876 = vmatprep.subr.mxu0 0.0
    %7877 = vmatpush1.msra.mxu0 0.0
    %7878 = vmatprep.subr.mxu0 0.0
    %7879 = vmatpush1.msra.mxu0 0.0
    %7880 = vmatprep.subr.mxu0 0.0
    %7881 = vmatpush1.msra.mxu0 0.0
    %7882 = vmatprep.subr.mxu0 0.0
    %7883 = vmatpush1.msra.mxu0 0.0
    %7884 = vmatprep.subr.mxu0 0.0
    %7885 = vmatpush1.msra.mxu0 0.0
    %7886 = vmatprep.subr.mxu0 0.0
    %7887 = vmatpush1.msra.mxu0 0.0
    %7888 = vmatprep.mubr.f32.mxu0 0.0
    %v7889 = vand.u32 %v7519, 4294901760
    %7890 = vmatmul.mubr.f32.gmra.mrb[0].mxu0 %v7889
    %v7891 = vpop.f32.mrb[0].mxu0
    %v7892 = vadd.f32 %v7818, %v7891
    %v7893 = vpop.f32.mrb[0].mxu0
    %7894 = vdwg.mxu0
    %7895 = vmatprep.subr.mxu0 0.0
    %v7896 = vand.u32 %v7516, 4294901760
    %7897 = vmatpush1.msra.mxu0 %v7896
    %7898 = vmatprep.subr.mxu0 0.0
    %7899 = vmatpush1.msra.mxu0 0.0
    %7900 = vmatprep.subr.mxu0 0.0
    %7901 = vmatpush1.msra.mxu0 0.0
    %7902 = vmatprep.subr.mxu0 0.0
    %7903 = vmatpush1.msra.mxu0 0.0
    %7904 = vmatprep.subr.mxu0 0.0
    %7905 = vmatpush1.msra.mxu0 0.0
    %7906 = vmatprep.subr.mxu0 0.0
    %7907 = vmatpush1.msra.mxu0 0.0
    %7908 = vmatprep.subr.mxu0 0.0
    %7909 = vmatpush1.msra.mxu0 0.0
    %7910 = vmatprep.subr.mxu0 0.0
    %7911 = vmatpush1.msra.mxu0 0.0
    %7912 = vmatprep.subr.mxu0 0.0
    %7913 = vmatpush1.msra.mxu0 0.0
    %7914 = vmatprep.subr.mxu0 0.0
    %7915 = vmatpush1.msra.mxu0 0.0
    %7916 = vmatprep.subr.mxu0 0.0
    %7917 = vmatpush1.msra.mxu0 0.0
    %7918 = vmatprep.subr.mxu0 0.0
    %7919 = vmatpush1.msra.mxu0 0.0
    %7920 = vmatprep.subr.mxu0 0.0
    %7921 = vmatpush1.msra.mxu0 0.0
    %7922 = vmatprep.subr.mxu0 0.0
    %7923 = vmatpush1.msra.mxu0 0.0
    %7924 = vmatprep.subr.mxu0 0.0
    %7925 = vmatpush1.msra.mxu0 0.0
    %7926 = vmatprep.subr.mxu0 0.0
    %7927 = vmatpush1.msra.mxu0 0.0
    %7928 = vmatprep.subr.mxu0 0.0
    %7929 = vmatpush1.msra.mxu0 0.0
    %7930 = vmatprep.subr.mxu0 0.0
    %7931 = vmatpush1.msra.mxu0 0.0
    %7932 = vmatprep.subr.mxu0 0.0
    %7933 = vmatpush1.msra.mxu0 0.0
    %7934 = vmatprep.subr.mxu0 0.0
    %7935 = vmatpush1.msra.mxu0 0.0
    %7936 = vmatprep.subr.mxu0 0.0
    %7937 = vmatpush1.msra.mxu0 0.0
    %7938 = vmatprep.subr.mxu0 0.0
    %7939 = vmatpush1.msra.mxu0 0.0
    %7940 = vmatprep.subr.mxu0 0.0
    %7941 = vmatpush1.msra.mxu0 0.0
    %7942 = vmatprep.subr.mxu0 0.0
    %7943 = vmatpush1.msra.mxu0 0.0
    %7944 = vmatprep.subr.mxu0 0.0
    %7945 = vmatpush1.msra.mxu0 0.0
    %7946 = vmatprep.subr.mxu0 0.0
    %7947 = vmatpush1.msra.mxu0 0.0
    %7948 = vmatprep.subr.mxu0 0.0
    %7949 = vmatpush1.msra.mxu0 0.0
    %7950 = vmatprep.subr.mxu0 0.0
    %7951 = vmatpush1.msra.mxu0 0.0
    %7952 = vmatprep.subr.mxu0 0.0
    %7953 = vmatpush1.msra.mxu0 0.0
    %7954 = vmatprep.subr.mxu0 0.0
    %7955 = vmatpush1.msra.mxu0 0.0
    %7956 = vmatprep.subr.mxu0 0.0
    %7957 = vmatpush1.msra.mxu0 0.0
    %7958 = vmatprep.subr.mxu0 0.0
    %7959 = vmatpush1.msra.mxu0 0.0
    %7960 = vmatprep.mubr.f32.mxu0 0.0
    %v7961 = vand.u32 %v7519, 4294901760
    %7962 = vmatmul.mubr.f32.gmra.mrb[0].mxu0 %v7961
    %v7963 = vpop.f32.mrb[0].mxu0
    %v7964 = vadd.f32 %v7892, %v7963
    %v7965 = vpop.f32.mrb[0].mxu0
    %7966 = vdwg.mxu0
    %7969 = vrot.lane.b32.xlu0 %v3844, 8
    %v7970 = vpop.permute.xlu0 %7969
    %7971 = vrot.lane.b32.xlu0 %v4296, 8
    %v7972 = vpop.permute.xlu0 %7971
    %7977 = vrot.lane.b32.xlu0 %v5678, 16
    %v7978 = vpop.permute.xlu0 %7977
    %7979 = vrot.lane.b32.xlu0 %v6130, 16
    %v7980 = vpop.permute.xlu0 %7979
    %7985 = vrot.lane.b32.xlu0 %v7512, 24
    %v7986 = vpop.permute.xlu0 %7985
    %7987 = vrot.lane.b32.xlu0 %v7964, 24
    %v7988 = vpop.permute.xlu0 %7987
    %v7991 = vsel %vm635, %v2010, %v7970
    %v7992 = vsel %vm635, %v2462, %v7972
    %vm7993 = vcmask 130048
    %v7994 = vsel %vm7993, %v7991, %v7978
    %v7995 = vsel %vm7993, %v7992, %v7980
    %vm7996 = vcmask 195584
    %v7997 = vsel %vm7996, %v7994, %v7986
    %v7998 = vsel %vm7996, %v7995, %v7988
    %v7999 = vld [vmem:[%s3] sm:$0xff]
    %v8000 = vld [vmem:[%s3 + $0x8] sm:$0xff]
    %v8001 = vld [vmem:[%s3 + $0x10] sm:$0xff]
    %v8002 = vld [vmem:[%s3 + $0x18] sm:$0xff]
    %v8003 = vlaneseq
    %v8004 = vshrl.u32 %v8003, 7
    %v8005 = vsub.s32 4, %v8004
    %v8006 = vrot.slane %v46, %v8005
    %v8008 = vsel %vm47, %v7997, 0
    %v8011 = vsel %vm47, %v7998, 0
    %8013 = vmatprep.subr.mxu0 0.0
    %v8014 = vand.u32 %v7999, 4294901760
    %8015 = vmatpush1.msra.mxu0 %v8014
    %8016 = vmatprep.subr.mxu0 0.0
    %v8017 = vand.u32 %v8000, 4294901760
    %8018 = vmatpush1.msra.mxu0 %v8017
    %8019 = vmatprep.subr.mxu0 0.0
    %v8020 = vand.u32 %v8001, 4294901760
    %8021 = vmatpush1.msra.mxu0 %v8020
    %8022 = vmatprep.subr.mxu0 0.0
    %v8023 = vand.u32 %v8002, 4294901760
    %8024 = vmatpush1.msra.mxu0 %v8023
    %8025 = vmatprep.subr.mxu0 0.0
    %8026 = vmatpush1.msra.mxu0 0.0
    %8027 = vmatprep.subr.mxu0 0.0
    %8028 = vmatpush1.msra.mxu0 0.0
    %8029 = vmatprep.subr.mxu0 0.0
    %8030 = vmatpush1.msra.mxu0 0.0
    %8031 = vmatprep.subr.mxu0 0.0
    %8032 = vmatpush1.msra.mxu0 0.0
    %8033 = vmatprep.subr.mxu0 0.0
    %8034 = vmatpush1.msra.mxu0 0.0
    %8035 = vmatprep.subr.mxu0 0.0
    %8036 = vmatpush1.msra.mxu0 0.0
    %8037 = vmatprep.subr.mxu0 0.0
    %8038 = vmatpush1.msra.mxu0 0.0
    %8039 = vmatprep.subr.mxu0 0.0
    %8040 = vmatpush1.msra.mxu0 0.0
    %8041 = vmatprep.subr.mxu0 0.0
    %8042 = vmatpush1.msra.mxu0 0.0
    %8043 = vmatprep.subr.mxu0 0.0
    %8044 = vmatpush1.msra.mxu0 0.0
    %8045 = vmatprep.subr.mxu0 0.0
    %8046 = vmatpush1.msra.mxu0 0.0
    %8047 = vmatprep.subr.mxu0 0.0
    %8048 = vmatpush1.msra.mxu0 0.0
    %8049 = vmatprep.subr.mxu0 0.0
    %8050 = vmatpush1.msra.mxu0 0.0
    %8051 = vmatprep.subr.mxu0 0.0
    %8052 = vmatpush1.msra.mxu0 0.0
    %8053 = vmatprep.subr.mxu0 0.0
    %8054 = vmatpush1.msra.mxu0 0.0
    %8055 = vmatprep.subr.mxu0 0.0
    %8056 = vmatpush1.msra.mxu0 0.0
    %8057 = vmatprep.subr.mxu0 0.0
    %8058 = vmatpush1.msra.mxu0 0.0
    %8059 = vmatprep.subr.mxu0 0.0
    %8060 = vmatpush1.msra.mxu0 0.0
    %8061 = vmatprep.subr.mxu0 0.0
    %8062 = vmatpush1.msra.mxu0 0.0
    %8063 = vmatprep.subr.mxu0 0.0
    %8064 = vmatpush1.msra.mxu0 0.0
    %8065 = vmatprep.subr.mxu0 0.0
    %8066 = vmatpush1.msra.mxu0 0.0
    %8067 = vmatprep.subr.mxu0 0.0
    %8068 = vmatpush1.msra.mxu0 0.0
    %8069 = vmatprep.subr.mxu0 0.0
    %8070 = vmatpush1.msra.mxu0 0.0
    %8071 = vmatprep.subr.mxu0 0.0
    %8072 = vmatpush1.msra.mxu0 0.0
    %8073 = vmatprep.subr.mxu0 0.0
    %8074 = vmatpush1.msra.mxu0 0.0
    %8075 = vmatprep.subr.mxu0 0.0
    %8076 = vmatpush1.msra.mxu0 0.0
    %8077 = vmatprep.subr.mxu0 0.0
    %8078 = vmatpush1.msra.mxu0 0.0
    %8079 = vmatprep.subr.mxu0 0.0
    %8080 = vmatpush1.msra.mxu0 0.0
    %8081 = vmatprep.mubr.f32.mxu0 0.0
    %v8082 = vand.u32 %v8008, 4294901760
    %v8083 = vsub.f32 %v8008, %v8082
    %v8084 = vand.u32 %v8083, 4294901760
    %v8085 = vsub.f32 %v8083, %v8084
    %v8086 = vand.u32 %v8085, 4294901760
    %8087 = vmatmul.mubr.f32.gmra.mrb[0].mxu0 %v8086
    %v8088 = vpop.f32.mrb[0].mxu0
    %v8089 = vadd.f32 %v8006, %v8088
    %v8090 = vpop.f32.mrb[0].mxu0
    %8091 = vmatprep.mubr.f32.mxu0 0.0
    %v8092 = vand.u32 %v8011, 4294901760
    %v8093 = vsub.f32 %v8011, %v8092
    %v8094 = vand.u32 %v8093, 4294901760
    %v8095 = vsub.f32 %v8093, %v8094
    %v8096 = vand.u32 %v8095, 4294901760
    %8097 = vmatmul.mubr.f32.gmra.mrb[0].mxu0 %v8096
    %v8098 = vpop.f32.mrb[0].mxu0
    %v8099 = vadd.f32 %v8006, %v8098
    %v8100 = vpop.f32.mrb[0].mxu0
    %8101 = vdwg.mxu0
    %8102 = vmatprep.subr.mxu0 0.0
    %v8103 = vand.u32 %v7999, 4294901760
    %v8104 = vsub.f32 %v7999, %v8103
    %v8105 = vand.u32 %v8104, 4294901760
    %v8106 = vsub.f32 %v8104, %v8105
    %v8107 = vand.u32 %v8106, 4294901760
    %8108 = vmatpush1.msra.mxu0 %v8107
    %8109 = vmatprep.subr.mxu0 0.0
    %v8110 = vand.u32 %v8000, 4294901760
    %v8111 = vsub.f32 %v8000, %v8110
    %v8112 = vand.u32 %v8111, 4294901760
    %v8113 = vsub.f32 %v8111, %v8112
    %v8114 = vand.u32 %v8113, 4294901760
    %8115 = vmatpush1.msra.mxu0 %v8114
    %8116 = vmatprep.subr.mxu0 0.0
    %v8117 = vand.u32 %v8001, 4294901760
    %v8118 = vsub.f32 %v8001, %v8117
    %v8119 = vand.u32 %v8118, 4294901760
    %v8120 = vsub.f32 %v8118, %v8119
    %v8121 = vand.u32 %v8120, 4294901760
    %8122 = vmatpush1.msra.mxu0 %v8121
    %8123 = vmatprep.subr.mxu0 0.0
    %v8124 = vand.u32 %v8002, 4294901760
    %v8125 = vsub.f32 %v8002, %v8124
    %v8126 = vand.u32 %v8125, 4294901760
    %v8127 = vsub.f32 %v8125, %v8126
    %v8128 = vand.u32 %v8127, 4294901760
    %8129 = vmatpush1.msra.mxu0 %v8128
    %8130 = vmatprep.subr.mxu0 0.0
    %8131 = vmatpush1.msra.mxu0 0.0
    %8132 = vmatprep.subr.mxu0 0.0
    %8133 = vmatpush1.msra.mxu0 0.0
    %8134 = vmatprep.subr.mxu0 0.0
    %8135 = vmatpush1.msra.mxu0 0.0
    %8136 = vmatprep.subr.mxu0 0.0
    %8137 = vmatpush1.msra.mxu0 0.0
    %8138 = vmatprep.subr.mxu0 0.0
    %8139 = vmatpush1.msra.mxu0 0.0
    %8140 = vmatprep.subr.mxu0 0.0
    %8141 = vmatpush1.msra.mxu0 0.0
    %8142 = vmatprep.subr.mxu0 0.0
    %8143 = vmatpush1.msra.mxu0 0.0
    %8144 = vmatprep.subr.mxu0 0.0
    %8145 = vmatpush1.msra.mxu0 0.0
    %8146 = vmatprep.subr.mxu0 0.0
    %8147 = vmatpush1.msra.mxu0 0.0
    %8148 = vmatprep.subr.mxu0 0.0
    %8149 = vmatpush1.msra.mxu0 0.0
    %8150 = vmatprep.subr.mxu0 0.0
    %8151 = vmatpush1.msra.mxu0 0.0
    %8152 = vmatprep.subr.mxu0 0.0
    %8153 = vmatpush1.msra.mxu0 0.0
    %8154 = vmatprep.subr.mxu0 0.0
    %8155 = vmatpush1.msra.mxu0 0.0
    %8156 = vmatprep.subr.mxu0 0.0
    %8157 = vmatpush1.msra.mxu0 0.0
    %8158 = vmatprep.subr.mxu0 0.0
    %8159 = vmatpush1.msra.mxu0 0.0
    %8160 = vmatprep.subr.mxu0 0.0
    %8161 = vmatpush1.msra.mxu0 0.0
    %8162 = vmatprep.subr.mxu0 0.0
    %8163 = vmatpush1.msra.mxu0 0.0
    %8164 = vmatprep.subr.mxu0 0.0
    %8165 = vmatpush1.msra.mxu0 0.0
    %8166 = vmatprep.subr.mxu0 0.0
    %8167 = vmatpush1.msra.mxu0 0.0
    %8168 = vmatprep.subr.mxu0 0.0
    %8169 = vmatpush1.msra.mxu0 0.0
    %8170 = vmatprep.subr.mxu0 0.0
    %8171 = vmatpush1.msra.mxu0 0.0
    %8172 = vmatprep.subr.mxu0 0.0
    %8173 = vmatpush1.msra.mxu0 0.0
    %8174 = vmatprep.subr.mxu0 0.0
    %8175 = vmatpush1.msra.mxu0 0.0
    %8176 = vmatprep.subr.mxu0 0.0
    %8177 = vmatpush1.msra.mxu0 0.0
    %8178 = vmatprep.subr.mxu0 0.0
    %8179 = vmatpush1.msra.mxu0 0.0
    %8180 = vmatprep.subr.mxu0 0.0
    %8181 = vmatpush1.msra.mxu0 0.0
    %8182 = vmatprep.subr.mxu0 0.0
    %8183 = vmatpush1.msra.mxu0 0.0
    %8184 = vmatprep.subr.mxu0 0.0
    %8185 = vmatpush1.msra.mxu0 0.0
    %8186 = vmatprep.mubr.f32.mxu0 0.0
    %v8187 = vand.u32 %v8008, 4294901760
    %8188 = vmatmul.mubr.f32.gmra.mrb[0].mxu0 %v8187
    %v8189 = vpop.f32.mrb[0].mxu0
    %v8190 = vadd.f32 %v8089, %v8189
    %v8191 = vpop.f32.mrb[0].mxu0
    %8192 = vmatprep.mubr.f32.mxu0 0.0
    %v8193 = vand.u32 %v8011, 4294901760
    %8194 = vmatmul.mubr.f32.gmra.mrb[0].mxu0 %v8193
    %v8195 = vpop.f32.mrb[0].mxu0
    %v8196 = vadd.f32 %v8099, %v8195
    %v8197 = vpop.f32.mrb[0].mxu0
    %8198 = vdwg.mxu0
    %8199 = vmatprep.subr.mxu0 0.0
    %v8200 = vand.u32 %v7999, 4294901760
    %v8201 = vsub.f32 %v7999, %v8200
    %8202 = vmatpush1.msra.mxu0 %v8201
    %8203 = vmatprep.subr.mxu0 0.0
    %v8204 = vand.u32 %v8000, 4294901760
    %v8205 = vsub.f32 %v8000, %v8204
    %8206 = vmatpush1.msra.mxu0 %v8205
    %8207 = vmatprep.subr.mxu0 0.0
    %v8208 = vand.u32 %v8001, 4294901760
    %v8209 = vsub.f32 %v8001, %v8208
    %8210 = vmatpush1.msra.mxu0 %v8209
    %8211 = vmatprep.subr.mxu0 0.0
    %v8212 = vand.u32 %v8002, 4294901760
    %v8213 = vsub.f32 %v8002, %v8212
    %8214 = vmatpush1.msra.mxu0 %v8213
    %8215 = vmatprep.subr.mxu0 0.0
    %8216 = vmatpush1.msra.mxu0 0.0
    %8217 = vmatprep.subr.mxu0 0.0
    %8218 = vmatpush1.msra.mxu0 0.0
    %8219 = vmatprep.subr.mxu0 0.0
    %8220 = vmatpush1.msra.mxu0 0.0
    %8221 = vmatprep.subr.mxu0 0.0
    %8222 = vmatpush1.msra.mxu0 0.0
    %8223 = vmatprep.subr.mxu0 0.0
    %8224 = vmatpush1.msra.mxu0 0.0
    %8225 = vmatprep.subr.mxu0 0.0
    %8226 = vmatpush1.msra.mxu0 0.0
    %8227 = vmatprep.subr.mxu0 0.0
    %8228 = vmatpush1.msra.mxu0 0.0
    %8229 = vmatprep.subr.mxu0 0.0
    %8230 = vmatpush1.msra.mxu0 0.0
    %8231 = vmatprep.subr.mxu0 0.0
    %8232 = vmatpush1.msra.mxu0 0.0
    %8233 = vmatprep.subr.mxu0 0.0
    %8234 = vmatpush1.msra.mxu0 0.0
    %8235 = vmatprep.subr.mxu0 0.0
    %8236 = vmatpush1.msra.mxu0 0.0
    %8237 = vmatprep.subr.mxu0 0.0
    %8238 = vmatpush1.msra.mxu0 0.0
    %8239 = vmatprep.subr.mxu0 0.0
    %8240 = vmatpush1.msra.mxu0 0.0
    %8241 = vmatprep.subr.mxu0 0.0
    %8242 = vmatpush1.msra.mxu0 0.0
    %8243 = vmatprep.subr.mxu0 0.0
    %8244 = vmatpush1.msra.mxu0 0.0
    %8245 = vmatprep.subr.mxu0 0.0
    %8246 = vmatpush1.msra.mxu0 0.0
    %8247 = vmatprep.subr.mxu0 0.0
    %8248 = vmatpush1.msra.mxu0 0.0
    %8249 = vmatprep.subr.mxu0 0.0
    %8250 = vmatpush1.msra.mxu0 0.0
    %8251 = vmatprep.subr.mxu0 0.0
    %8252 = vmatpush1.msra.mxu0 0.0
    %8253 = vmatprep.subr.mxu0 0.0
    %8254 = vmatpush1.msra.mxu0 0.0
    %8255 = vmatprep.subr.mxu0 0.0
    %8256 = vmatpush1.msra.mxu0 0.0
    %8257 = vmatprep.subr.mxu0 0.0
    %8258 = vmatpush1.msra.mxu0 0.0
    %8259 = vmatprep.subr.mxu0 0.0
    %8260 = vmatpush1.msra.mxu0 0.0
    %8261 = vmatprep.subr.mxu0 0.0
    %8262 = vmatpush1.msra.mxu0 0.0
    %8263 = vmatprep.subr.mxu0 0.0
    %8264 = vmatpush1.msra.mxu0 0.0
    %8265 = vmatprep.subr.mxu0 0.0
    %8266 = vmatpush1.msra.mxu0 0.0
    %8267 = vmatprep.subr.mxu0 0.0
    %8268 = vmatpush1.msra.mxu0 0.0
    %8269 = vmatprep.subr.mxu0 0.0
    %8270 = vmatpush1.msra.mxu0 0.0
    %8271 = vmatprep.mubr.f32.mxu0 0.0
    %v8272 = vand.u32 %v8008, 4294901760
    %v8273 = vsub.f32 %v8008, %v8272
    %8274 = vmatmul.mubr.f32.gmra.mrb[0].mxu0 %v8273
    %v8275 = vpop.f32.mrb[0].mxu0
    %v8276 = vadd.f32 %v8190, %v8275
    %v8277 = vpop.f32.mrb[0].mxu0
    %8278 = vmatprep.mubr.f32.mxu0 0.0
    %v8279 = vand.u32 %v8011, 4294901760
    %v8280 = vsub.f32 %v8011, %v8279
    %8281 = vmatmul.mubr.f32.gmra.mrb[0].mxu0 %v8280
    %v8282 = vpop.f32.mrb[0].mxu0
    %v8283 = vadd.f32 %v8196, %v8282
    %v8284 = vpop.f32.mrb[0].mxu0
    %8285 = vdwg.mxu0
    %8286 = vmatprep.subr.mxu0 0.0
    %v8287 = vand.u32 %v7999, 4294901760
    %8288 = vmatpush1.msra.mxu0 %v8287
    %8289 = vmatprep.subr.mxu0 0.0
    %v8290 = vand.u32 %v8000, 4294901760
    %8291 = vmatpush1.msra.mxu0 %v8290
    %8292 = vmatprep.subr.mxu0 0.0
    %v8293 = vand.u32 %v8001, 4294901760
    %8294 = vmatpush1.msra.mxu0 %v8293
    %8295 = vmatprep.subr.mxu0 0.0
    %v8296 = vand.u32 %v8002, 4294901760
    %8297 = vmatpush1.msra.mxu0 %v8296
    %8298 = vmatprep.subr.mxu0 0.0
    %8299 = vmatpush1.msra.mxu0 0.0
    %8300 = vmatprep.subr.mxu0 0.0
    %8301 = vmatpush1.msra.mxu0 0.0
    %8302 = vmatprep.subr.mxu0 0.0
    %8303 = vmatpush1.msra.mxu0 0.0
    %8304 = vmatprep.subr.mxu0 0.0
    %8305 = vmatpush1.msra.mxu0 0.0
    %8306 = vmatprep.subr.mxu0 0.0
    %8307 = vmatpush1.msra.mxu0 0.0
    %8308 = vmatprep.subr.mxu0 0.0
    %8309 = vmatpush1.msra.mxu0 0.0
    %8310 = vmatprep.subr.mxu0 0.0
    %8311 = vmatpush1.msra.mxu0 0.0
    %8312 = vmatprep.subr.mxu0 0.0
    %8313 = vmatpush1.msra.mxu0 0.0
    %8314 = vmatprep.subr.mxu0 0.0
    %8315 = vmatpush1.msra.mxu0 0.0
    %8316 = vmatprep.subr.mxu0 0.0
    %8317 = vmatpush1.msra.mxu0 0.0
    %8318 = vmatprep.subr.mxu0 0.0
    %8319 = vmatpush1.msra.mxu0 0.0
    %8320 = vmatprep.subr.mxu0 0.0
    %8321 = vmatpush1.msra.mxu0 0.0
    %8322 = vmatprep.subr.mxu0 0.0
    %8323 = vmatpush1.msra.mxu0 0.0
    %8324 = vmatprep.subr.mxu0 0.0
    %8325 = vmatpush1.msra.mxu0 0.0
    %8326 = vmatprep.subr.mxu0 0.0
    %8327 = vmatpush1.msra.mxu0 0.0
    %8328 = vmatprep.subr.mxu0 0.0
    %8329 = vmatpush1.msra.mxu0 0.0
    %8330 = vmatprep.subr.mxu0 0.0
    %8331 = vmatpush1.msra.mxu0 0.0
    %8332 = vmatprep.subr.mxu0 0.0
    %8333 = vmatpush1.msra.mxu0 0.0
    %8334 = vmatprep.subr.mxu0 0.0
    %8335 = vmatpush1.msra.mxu0 0.0
    %8336 = vmatprep.subr.mxu0 0.0
    %8337 = vmatpush1.msra.mxu0 0.0
    %8338 = vmatprep.subr.mxu0 0.0
    %8339 = vmatpush1.msra.mxu0 0.0
    %8340 = vmatprep.subr.mxu0 0.0
    %8341 = vmatpush1.msra.mxu0 0.0
    %8342 = vmatprep.subr.mxu0 0.0
    %8343 = vmatpush1.msra.mxu0 0.0
    %8344 = vmatprep.subr.mxu0 0.0
    %8345 = vmatpush1.msra.mxu0 0.0
    %8346 = vmatprep.subr.mxu0 0.0
    %8347 = vmatpush1.msra.mxu0 0.0
    %8348 = vmatprep.subr.mxu0 0.0
    %8349 = vmatpush1.msra.mxu0 0.0
    %8350 = vmatprep.subr.mxu0 0.0
    %8351 = vmatpush1.msra.mxu0 0.0
    %8352 = vmatprep.subr.mxu0 0.0
    %8353 = vmatpush1.msra.mxu0 0.0
    %8354 = vmatprep.mubr.f32.mxu0 0.0
    %v8355 = vand.u32 %v8008, 4294901760
    %v8356 = vsub.f32 %v8008, %v8355
    %v8357 = vand.u32 %v8356, 4294901760
    %8358 = vmatmul.mubr.f32.gmra.mrb[0].mxu0 %v8357
    %v8359 = vpop.f32.mrb[0].mxu0
    %v8360 = vadd.f32 %v8276, %v8359
    %v8361 = vpop.f32.mrb[0].mxu0
    %8362 = vmatprep.mubr.f32.mxu0 0.0
    %v8363 = vand.u32 %v8011, 4294901760
    %v8364 = vsub.f32 %v8011, %v8363
    %v8365 = vand.u32 %v8364, 4294901760
    %8366 = vmatmul.mubr.f32.gmra.mrb[0].mxu0 %v8365
    %v8367 = vpop.f32.mrb[0].mxu0
    %v8368 = vadd.f32 %v8283, %v8367
    %v8369 = vpop.f32.mrb[0].mxu0
    %8370 = vdwg.mxu0
    %8371 = vmatprep.subr.mxu0 0.0
    %v8372 = vand.u32 %v7999, 4294901760
    %v8373 = vsub.f32 %v7999, %v8372
    %v8374 = vand.u32 %v8373, 4294901760
    %8375 = vmatpush1.msra.mxu0 %v8374
    %8376 = vmatprep.subr.mxu0 0.0
    %v8377 = vand.u32 %v8000, 4294901760
    %v8378 = vsub.f32 %v8000, %v8377
    %v8379 = vand.u32 %v8378, 4294901760
    %8380 = vmatpush1.msra.mxu0 %v8379
    %8381 = vmatprep.subr.mxu0 0.0
    %v8382 = vand.u32 %v8001, 4294901760
    %v8383 = vsub.f32 %v8001, %v8382
    %v8384 = vand.u32 %v8383, 4294901760
    %8385 = vmatpush1.msra.mxu0 %v8384
    %8386 = vmatprep.subr.mxu0 0.0
    %v8387 = vand.u32 %v8002, 4294901760
    %v8388 = vsub.f32 %v8002, %v8387
    %v8389 = vand.u32 %v8388, 4294901760
    %8390 = vmatpush1.msra.mxu0 %v8389
    %8391 = vmatprep.subr.mxu0 0.0
    %8392 = vmatpush1.msra.mxu0 0.0
    %8393 = vmatprep.subr.mxu0 0.0
    %8394 = vmatpush1.msra.mxu0 0.0
    %8395 = vmatprep.subr.mxu0 0.0
    %8396 = vmatpush1.msra.mxu0 0.0
    %8397 = vmatprep.subr.mxu0 0.0
    %8398 = vmatpush1.msra.mxu0 0.0
    %8399 = vmatprep.subr.mxu0 0.0
    %8400 = vmatpush1.msra.mxu0 0.0
    %8401 = vmatprep.subr.mxu0 0.0
    %8402 = vmatpush1.msra.mxu0 0.0
    %8403 = vmatprep.subr.mxu0 0.0
    %8404 = vmatpush1.msra.mxu0 0.0
    %8405 = vmatprep.subr.mxu0 0.0
    %8406 = vmatpush1.msra.mxu0 0.0
    %8407 = vmatprep.subr.mxu0 0.0
    %8408 = vmatpush1.msra.mxu0 0.0
    %8409 = vmatprep.subr.mxu0 0.0
    %8410 = vmatpush1.msra.mxu0 0.0
    %8411 = vmatprep.subr.mxu0 0.0
    %8412 = vmatpush1.msra.mxu0 0.0
    %8413 = vmatprep.subr.mxu0 0.0
    %8414 = vmatpush1.msra.mxu0 0.0
    %8415 = vmatprep.subr.mxu0 0.0
    %8416 = vmatpush1.msra.mxu0 0.0
    %8417 = vmatprep.subr.mxu0 0.0
    %8418 = vmatpush1.msra.mxu0 0.0
    %8419 = vmatprep.subr.mxu0 0.0
    %8420 = vmatpush1.msra.mxu0 0.0
    %8421 = vmatprep.subr.mxu0 0.0
    %8422 = vmatpush1.msra.mxu0 0.0
    %8423 = vmatprep.subr.mxu0 0.0
    %8424 = vmatpush1.msra.mxu0 0.0
    %8425 = vmatprep.subr.mxu0 0.0
    %8426 = vmatpush1.msra.mxu0 0.0
    %8427 = vmatprep.subr.mxu0 0.0
    %8428 = vmatpush1.msra.mxu0 0.0
    %8429 = vmatprep.subr.mxu0 0.0
    %8430 = vmatpush1.msra.mxu0 0.0
    %8431 = vmatprep.subr.mxu0 0.0
    %8432 = vmatpush1.msra.mxu0 0.0
    %8433 = vmatprep.subr.mxu0 0.0
    %8434 = vmatpush1.msra.mxu0 0.0
    %8435 = vmatprep.subr.mxu0 0.0
    %8436 = vmatpush1.msra.mxu0 0.0
    %8437 = vmatprep.subr.mxu0 0.0
    %8438 = vmatpush1.msra.mxu0 0.0
    %8439 = vmatprep.subr.mxu0 0.0
    %8440 = vmatpush1.msra.mxu0 0.0
    %8441 = vmatprep.subr.mxu0 0.0
    %8442 = vmatpush1.msra.mxu0 0.0
    %8443 = vmatprep.subr.mxu0 0.0
    %8444 = vmatpush1.msra.mxu0 0.0
    %8445 = vmatprep.subr.mxu0 0.0
    %8446 = vmatpush1.msra.mxu0 0.0
    %8447 = vmatprep.mubr.f32.mxu0 0.0
    %v8448 = vand.u32 %v8008, 4294901760
    %8449 = vmatmul.mubr.f32.gmra.mrb[0].mxu0 %v8448
    %v8450 = vpop.f32.mrb[0].mxu0
    %v8451 = vadd.f32 %v8360, %v8450
    %v8452 = vpop.f32.mrb[0].mxu0
    %8453 = vmatprep.mubr.f32.mxu0 0.0
    %v8454 = vand.u32 %v8011, 4294901760
    %8455 = vmatmul.mubr.f32.gmra.mrb[0].mxu0 %v8454
    %v8456 = vpop.f32.mrb[0].mxu0
    %v8457 = vadd.f32 %v8368, %v8456
    %v8458 = vpop.f32.mrb[0].mxu0
    %8459 = vdwg.mxu0
    %8460 = vmatprep.subr.mxu0 0.0
    %v8461 = vand.u32 %v7999, 4294901760
    %8462 = vmatpush1.msra.mxu0 %v8461
    %8463 = vmatprep.subr.mxu0 0.0
    %v8464 = vand.u32 %v8000, 4294901760
    %8465 = vmatpush1.msra.mxu0 %v8464
    %8466 = vmatprep.subr.mxu0 0.0
    %v8467 = vand.u32 %v8001, 4294901760
    %8468 = vmatpush1.msra.mxu0 %v8467
    %8469 = vmatprep.subr.mxu0 0.0
    %v8470 = vand.u32 %v8002, 4294901760
    %8471 = vmatpush1.msra.mxu0 %v8470
    %8472 = vmatprep.subr.mxu0 0.0
    %8473 = vmatpush1.msra.mxu0 0.0
    %8474 = vmatprep.subr.mxu0 0.0
    %8475 = vmatpush1.msra.mxu0 0.0
    %8476 = vmatprep.subr.mxu0 0.0
    %8477 = vmatpush1.msra.mxu0 0.0
    %8478 = vmatprep.subr.mxu0 0.0
    %8479 = vmatpush1.msra.mxu0 0.0
    %8480 = vmatprep.subr.mxu0 0.0
    %8481 = vmatpush1.msra.mxu0 0.0
    %8482 = vmatprep.subr.mxu0 0.0
    %8483 = vmatpush1.msra.mxu0 0.0
    %8484 = vmatprep.subr.mxu0 0.0
    %8485 = vmatpush1.msra.mxu0 0.0
    %8486 = vmatprep.subr.mxu0 0.0
    %8487 = vmatpush1.msra.mxu0 0.0
    %8488 = vmatprep.subr.mxu0 0.0
    %8489 = vmatpush1.msra.mxu0 0.0
    %8490 = vmatprep.subr.mxu0 0.0
    %8491 = vmatpush1.msra.mxu0 0.0
    %8492 = vmatprep.subr.mxu0 0.0
    %8493 = vmatpush1.msra.mxu0 0.0
    %8494 = vmatprep.subr.mxu0 0.0
    %8495 = vmatpush1.msra.mxu0 0.0
    %8496 = vmatprep.subr.mxu0 0.0
    %8497 = vmatpush1.msra.mxu0 0.0
    %8498 = vmatprep.subr.mxu0 0.0
    %8499 = vmatpush1.msra.mxu0 0.0
    %8500 = vmatprep.subr.mxu0 0.0
    %8501 = vmatpush1.msra.mxu0 0.0
    %8502 = vmatprep.subr.mxu0 0.0
    %8503 = vmatpush1.msra.mxu0 0.0
    %8504 = vmatprep.subr.mxu0 0.0
    %8505 = vmatpush1.msra.mxu0 0.0
    %8506 = vmatprep.subr.mxu0 0.0
    %8507 = vmatpush1.msra.mxu0 0.0
    %8508 = vmatprep.subr.mxu0 0.0
    %8509 = vmatpush1.msra.mxu0 0.0
    %8510 = vmatprep.subr.mxu0 0.0
    %8511 = vmatpush1.msra.mxu0 0.0
    %8512 = vmatprep.subr.mxu0 0.0
    %8513 = vmatpush1.msra.mxu0 0.0
    %8514 = vmatprep.subr.mxu0 0.0
    %8515 = vmatpush1.msra.mxu0 0.0
    %8516 = vmatprep.subr.mxu0 0.0
    %8517 = vmatpush1.msra.mxu0 0.0
    %8518 = vmatprep.subr.mxu0 0.0
    %8519 = vmatpush1.msra.mxu0 0.0
    %8520 = vmatprep.subr.mxu0 0.0
    %8521 = vmatpush1.msra.mxu0 0.0
    %8522 = vmatprep.subr.mxu0 0.0
    %8523 = vmatpush1.msra.mxu0 0.0
    %8524 = vmatprep.subr.mxu0 0.0
    %8525 = vmatpush1.msra.mxu0 0.0
    %8526 = vmatprep.subr.mxu0 0.0
    %8527 = vmatpush1.msra.mxu0 0.0
    %8528 = vmatprep.mubr.f32.mxu0 0.0
    %v8529 = vand.u32 %v8008, 4294901760
    %8530 = vmatmul.mubr.f32.gmra.mrb[0].mxu0 %v8529
    %v8531 = vpop.f32.mrb[0].mxu0
    %v8532 = vadd.f32 %v8451, %v8531
    %v8533 = vpop.f32.mrb[0].mxu0
    %8534 = vmatprep.mubr.f32.mxu0 0.0
    %v8535 = vand.u32 %v8011, 4294901760
    %8536 = vmatmul.mubr.f32.gmra.mrb[0].mxu0 %v8535
    %v8537 = vpop.f32.mrb[0].mxu0
    %v8538 = vadd.f32 %v8457, %v8537
    %v8539 = vpop.f32.mrb[0].mxu0
    %8540 = vdwg.mxu0
    %v8541 = vadd.f32 %v8532, %v44
    %v8542 = vadd.f32 %v8538, %v45
    %v8543 = vsel %vm47, %v8541, 0.0
    %8544 = vadd.xlane.f32.xlu0 %v8543
    %v8545 = vpop.xlane.xlu0 %8544
    %v8546 = vsel %vm47, %v8542, 0.0
    %8547 = vadd.xlane.f32.xlu0 %v8546
    %v8548 = vpop.xlane.xlu0 %8547
    %v8549 = vmul.f32 %v8545, %v54
    %v8550 = vmul.f32 %v8548, %v54
    %v8551 = vsub.f32 %v8541, %v8549
    %v8552 = vsub.f32 %v8542, %v8550
    %v8553 = vmul.f32 %v8551, %v8551
    %v8554 = vmul.f32 %v8552, %v8552
    %v8555 = vsel %vm47, %v8553, 0.0
    %8556 = vadd.xlane.f32.xlu0 %v8555
    %v8557 = vpop.xlane.xlu0 %8556
    %v8558 = vsel %vm47, %v8554, 0.0
    %8559 = vadd.xlane.f32.xlu0 %v8558
    %v8560 = vpop.xlane.xlu0 %8559
    %v8561 = vmul.f32 %v8557, %v54
    %v8562 = vmul.f32 %v8560, %v54
    %v8563 = vadd.f32 %v8561, 1e-06
    %v8564 = vadd.f32 %v8562, 1e-06
    %v8565 = vrsqrt.pop %v8563
    %v8566 = vrsqrt.pop %v8564
    %v8567 = vmul.f32 %v8551, %v8565
    %v8568 = vmul.f32 %v8552, %v8566
    %v8569 = vlaneseq
    %v8570 = vshrl.u32 %v8569, 7
    %v8571 = vsub.s32 2, %v8570
    %v8572 = vrot.slane %v46, %v8571
    %v8573 = vmul.f32 %v8567, %v8572
    %v8574 = vmul.f32 %v8568, %v8572
    %v8575 = vlaneseq
    %v8576 = vshrl.u32 %v8575, 7
    %v8577 = vsub.s32 3, %v8576
    %v8578 = vrot.slane %v46, %v8577
    %v8579 = vadd.f32 %v8573, %v8578
    %v8580 = vadd.f32 %v8574, %v8578
    %v8581 = vld [vmem:[%s4] sm:$0xff]
    %v8582 = vld [vmem:[%s4 + $0x8] sm:$0xff]
    %v8583 = vld [vmem:[%s4 + $0x10] sm:$0xff]
    %v8584 = vld [vmem:[%s4 + $0x18] sm:$0xff]
    %v8585 = vld [vmem:[%s7] sm:$0x1]
    %v8587 = vlaneseq
    %v8588 = vshrl.u32 %v8587, 7
    %v8589 = vsub.s32 0, %v8588
    %v8590 = vrot.slane %v8585, %v8589
    %v8593 = vsel %vm47, %v8579, 0
    %v8596 = vsel %vm47, %v8580, 0
    %8598 = vmatprep.subr.mxu0 0.0
    %v8599 = vand.u32 %v8581, 4294901760
    %8600 = vmatpush1.msra.mxu0 %v8599
    %8601 = vmatprep.subr.mxu0 0.0
    %v8602 = vand.u32 %v8582, 4294901760
    %8603 = vmatpush1.msra.mxu0 %v8602
    %8604 = vmatprep.subr.mxu0 0.0
    %v8605 = vand.u32 %v8583, 4294901760
    %8606 = vmatpush1.msra.mxu0 %v8605
    %8607 = vmatprep.subr.mxu0 0.0
    %v8608 = vand.u32 %v8584, 4294901760
    %8609 = vmatpush1.msra.mxu0 %v8608
    %8610 = vmatprep.subr.mxu0 0.0
    %8611 = vmatpush1.msra.mxu0 0.0
    %8612 = vmatprep.subr.mxu0 0.0
    %8613 = vmatpush1.msra.mxu0 0.0
    %8614 = vmatprep.subr.mxu0 0.0
    %8615 = vmatpush1.msra.mxu0 0.0
    %8616 = vmatprep.subr.mxu0 0.0
    %8617 = vmatpush1.msra.mxu0 0.0
    %8618 = vmatprep.subr.mxu0 0.0
    %8619 = vmatpush1.msra.mxu0 0.0
    %8620 = vmatprep.subr.mxu0 0.0
    %8621 = vmatpush1.msra.mxu0 0.0
    %8622 = vmatprep.subr.mxu0 0.0
    %8623 = vmatpush1.msra.mxu0 0.0
    %8624 = vmatprep.subr.mxu0 0.0
    %8625 = vmatpush1.msra.mxu0 0.0
    %8626 = vmatprep.subr.mxu0 0.0
    %8627 = vmatpush1.msra.mxu0 0.0
    %8628 = vmatprep.subr.mxu0 0.0
    %8629 = vmatpush1.msra.mxu0 0.0
    %8630 = vmatprep.subr.mxu0 0.0
    %8631 = vmatpush1.msra.mxu0 0.0
    %8632 = vmatprep.subr.mxu0 0.0
    %8633 = vmatpush1.msra.mxu0 0.0
    %8634 = vmatprep.subr.mxu0 0.0
    %8635 = vmatpush1.msra.mxu0 0.0
    %8636 = vmatprep.subr.mxu0 0.0
    %8637 = vmatpush1.msra.mxu0 0.0
    %8638 = vmatprep.subr.mxu0 0.0
    %8639 = vmatpush1.msra.mxu0 0.0
    %8640 = vmatprep.subr.mxu0 0.0
    %8641 = vmatpush1.msra.mxu0 0.0
    %8642 = vmatprep.subr.mxu0 0.0
    %8643 = vmatpush1.msra.mxu0 0.0
    %8644 = vmatprep.subr.mxu0 0.0
    %8645 = vmatpush1.msra.mxu0 0.0
    %8646 = vmatprep.subr.mxu0 0.0
    %8647 = vmatpush1.msra.mxu0 0.0
    %8648 = vmatprep.subr.mxu0 0.0
    %8649 = vmatpush1.msra.mxu0 0.0
    %8650 = vmatprep.subr.mxu0 0.0
    %8651 = vmatpush1.msra.mxu0 0.0
    %8652 = vmatprep.subr.mxu0 0.0
    %8653 = vmatpush1.msra.mxu0 0.0
    %8654 = vmatprep.subr.mxu0 0.0
    %8655 = vmatpush1.msra.mxu0 0.0
    %8656 = vmatprep.subr.mxu0 0.0
    %8657 = vmatpush1.msra.mxu0 0.0
    %8658 = vmatprep.subr.mxu0 0.0
    %8659 = vmatpush1.msra.mxu0 0.0
    %8660 = vmatprep.subr.mxu0 0.0
    %8661 = vmatpush1.msra.mxu0 0.0
    %8662 = vmatprep.subr.mxu0 0.0
    %8663 = vmatpush1.msra.mxu0 0.0
    %8664 = vmatprep.subr.mxu0 0.0
    %8665 = vmatpush1.msra.mxu0 0.0
    %8666 = vmatprep.mubr.f32.mxu0 0.0
    %v8667 = vand.u32 %v8593, 4294901760
    %v8668 = vsub.f32 %v8593, %v8667
    %v8669 = vand.u32 %v8668, 4294901760
    %v8670 = vsub.f32 %v8668, %v8669
    %v8671 = vand.u32 %v8670, 4294901760
    %8672 = vmatmul.mubr.f32.gmra.mrb[0].mxu0 %v8671
    %v8673 = vpop.f32.mrb[0].mxu0
    %v8674 = vadd.f32 %v8590, %v8673
    %v8675 = vpop.f32.mrb[0].mxu0
    %8676 = vmatprep.mubr.f32.mxu0 0.0
    %v8677 = vand.u32 %v8596, 4294901760
    %v8678 = vsub.f32 %v8596, %v8677
    %v8679 = vand.u32 %v8678, 4294901760
    %v8680 = vsub.f32 %v8678, %v8679
    %v8681 = vand.u32 %v8680, 4294901760
    %8682 = vmatmul.mubr.f32.gmra.mrb[0].mxu0 %v8681
    %v8683 = vpop.f32.mrb[0].mxu0
    %v8684 = vadd.f32 %v8590, %v8683
    %v8685 = vpop.f32.mrb[0].mxu0
    %8686 = vdwg.mxu0
    %8687 = vmatprep.subr.mxu0 0.0
    %v8688 = vand.u32 %v8581, 4294901760
    %v8689 = vsub.f32 %v8581, %v8688
    %v8690 = vand.u32 %v8689, 4294901760
    %v8691 = vsub.f32 %v8689, %v8690
    %v8692 = vand.u32 %v8691, 4294901760
    %8693 = vmatpush1.msra.mxu0 %v8692
    %8694 = vmatprep.subr.mxu0 0.0
    %v8695 = vand.u32 %v8582, 4294901760
    %v8696 = vsub.f32 %v8582, %v8695
    %v8697 = vand.u32 %v8696, 4294901760
    %v8698 = vsub.f32 %v8696, %v8697
    %v8699 = vand.u32 %v8698, 4294901760
    %8700 = vmatpush1.msra.mxu0 %v8699
    %8701 = vmatprep.subr.mxu0 0.0
    %v8702 = vand.u32 %v8583, 4294901760
    %v8703 = vsub.f32 %v8583, %v8702
    %v8704 = vand.u32 %v8703, 4294901760
    %v8705 = vsub.f32 %v8703, %v8704
    %v8706 = vand.u32 %v8705, 4294901760
    %8707 = vmatpush1.msra.mxu0 %v8706
    %8708 = vmatprep.subr.mxu0 0.0
    %v8709 = vand.u32 %v8584, 4294901760
    %v8710 = vsub.f32 %v8584, %v8709
    %v8711 = vand.u32 %v8710, 4294901760
    %v8712 = vsub.f32 %v8710, %v8711
    %v8713 = vand.u32 %v8712, 4294901760
    %8714 = vmatpush1.msra.mxu0 %v8713
    %8715 = vmatprep.subr.mxu0 0.0
    %8716 = vmatpush1.msra.mxu0 0.0
    %8717 = vmatprep.subr.mxu0 0.0
    %8718 = vmatpush1.msra.mxu0 0.0
    %8719 = vmatprep.subr.mxu0 0.0
    %8720 = vmatpush1.msra.mxu0 0.0
    %8721 = vmatprep.subr.mxu0 0.0
    %8722 = vmatpush1.msra.mxu0 0.0
    %8723 = vmatprep.subr.mxu0 0.0
    %8724 = vmatpush1.msra.mxu0 0.0
    %8725 = vmatprep.subr.mxu0 0.0
    %8726 = vmatpush1.msra.mxu0 0.0
    %8727 = vmatprep.subr.mxu0 0.0
    %8728 = vmatpush1.msra.mxu0 0.0
    %8729 = vmatprep.subr.mxu0 0.0
    %8730 = vmatpush1.msra.mxu0 0.0
    %8731 = vmatprep.subr.mxu0 0.0
    %8732 = vmatpush1.msra.mxu0 0.0
    %8733 = vmatprep.subr.mxu0 0.0
    %8734 = vmatpush1.msra.mxu0 0.0
    %8735 = vmatprep.subr.mxu0 0.0
    %8736 = vmatpush1.msra.mxu0 0.0
    %8737 = vmatprep.subr.mxu0 0.0
    %8738 = vmatpush1.msra.mxu0 0.0
    %8739 = vmatprep.subr.mxu0 0.0
    %8740 = vmatpush1.msra.mxu0 0.0
    %8741 = vmatprep.subr.mxu0 0.0
    %8742 = vmatpush1.msra.mxu0 0.0
    %8743 = vmatprep.subr.mxu0 0.0
    %8744 = vmatpush1.msra.mxu0 0.0
    %8745 = vmatprep.subr.mxu0 0.0
    %8746 = vmatpush1.msra.mxu0 0.0
    %8747 = vmatprep.subr.mxu0 0.0
    %8748 = vmatpush1.msra.mxu0 0.0
    %8749 = vmatprep.subr.mxu0 0.0
    %8750 = vmatpush1.msra.mxu0 0.0
    %8751 = vmatprep.subr.mxu0 0.0
    %8752 = vmatpush1.msra.mxu0 0.0
    %8753 = vmatprep.subr.mxu0 0.0
    %8754 = vmatpush1.msra.mxu0 0.0
    %8755 = vmatprep.subr.mxu0 0.0
    %8756 = vmatpush1.msra.mxu0 0.0
    %8757 = vmatprep.subr.mxu0 0.0
    %8758 = vmatpush1.msra.mxu0 0.0
    %8759 = vmatprep.subr.mxu0 0.0
    %8760 = vmatpush1.msra.mxu0 0.0
    %8761 = vmatprep.subr.mxu0 0.0
    %8762 = vmatpush1.msra.mxu0 0.0
    %8763 = vmatprep.subr.mxu0 0.0
    %8764 = vmatpush1.msra.mxu0 0.0
    %8765 = vmatprep.subr.mxu0 0.0
    %8766 = vmatpush1.msra.mxu0 0.0
    %8767 = vmatprep.subr.mxu0 0.0
    %8768 = vmatpush1.msra.mxu0 0.0
    %8769 = vmatprep.subr.mxu0 0.0
    %8770 = vmatpush1.msra.mxu0 0.0
    %8771 = vmatprep.mubr.f32.mxu0 0.0
    %v8772 = vand.u32 %v8593, 4294901760
    %8773 = vmatmul.mubr.f32.gmra.mrb[0].mxu0 %v8772
    %v8774 = vpop.f32.mrb[0].mxu0
    %v8775 = vadd.f32 %v8674, %v8774
    %v8776 = vpop.f32.mrb[0].mxu0
    %8777 = vmatprep.mubr.f32.mxu0 0.0
    %v8778 = vand.u32 %v8596, 4294901760
    %8779 = vmatmul.mubr.f32.gmra.mrb[0].mxu0 %v8778
    %v8780 = vpop.f32.mrb[0].mxu0
    %v8781 = vadd.f32 %v8684, %v8780
    %v8782 = vpop.f32.mrb[0].mxu0
    %8783 = vdwg.mxu0
    %8784 = vmatprep.subr.mxu0 0.0
    %v8785 = vand.u32 %v8581, 4294901760
    %v8786 = vsub.f32 %v8581, %v8785
    %8787 = vmatpush1.msra.mxu0 %v8786
    %8788 = vmatprep.subr.mxu0 0.0
    %v8789 = vand.u32 %v8582, 4294901760
    %v8790 = vsub.f32 %v8582, %v8789
    %8791 = vmatpush1.msra.mxu0 %v8790
    %8792 = vmatprep.subr.mxu0 0.0
    %v8793 = vand.u32 %v8583, 4294901760
    %v8794 = vsub.f32 %v8583, %v8793
    %8795 = vmatpush1.msra.mxu0 %v8794
    %8796 = vmatprep.subr.mxu0 0.0
    %v8797 = vand.u32 %v8584, 4294901760
    %v8798 = vsub.f32 %v8584, %v8797
    %8799 = vmatpush1.msra.mxu0 %v8798
    %8800 = vmatprep.subr.mxu0 0.0
    %8801 = vmatpush1.msra.mxu0 0.0
    %8802 = vmatprep.subr.mxu0 0.0
    %8803 = vmatpush1.msra.mxu0 0.0
    %8804 = vmatprep.subr.mxu0 0.0
    %8805 = vmatpush1.msra.mxu0 0.0
    %8806 = vmatprep.subr.mxu0 0.0
    %8807 = vmatpush1.msra.mxu0 0.0
    %8808 = vmatprep.subr.mxu0 0.0
    %8809 = vmatpush1.msra.mxu0 0.0
    %8810 = vmatprep.subr.mxu0 0.0
    %8811 = vmatpush1.msra.mxu0 0.0
    %8812 = vmatprep.subr.mxu0 0.0
    %8813 = vmatpush1.msra.mxu0 0.0
    %8814 = vmatprep.subr.mxu0 0.0
    %8815 = vmatpush1.msra.mxu0 0.0
    %8816 = vmatprep.subr.mxu0 0.0
    %8817 = vmatpush1.msra.mxu0 0.0
    %8818 = vmatprep.subr.mxu0 0.0
    %8819 = vmatpush1.msra.mxu0 0.0
    %8820 = vmatprep.subr.mxu0 0.0
    %8821 = vmatpush1.msra.mxu0 0.0
    %8822 = vmatprep.subr.mxu0 0.0
    %8823 = vmatpush1.msra.mxu0 0.0
    %8824 = vmatprep.subr.mxu0 0.0
    %8825 = vmatpush1.msra.mxu0 0.0
    %8826 = vmatprep.subr.mxu0 0.0
    %8827 = vmatpush1.msra.mxu0 0.0
    %8828 = vmatprep.subr.mxu0 0.0
    %8829 = vmatpush1.msra.mxu0 0.0
    %8830 = vmatprep.subr.mxu0 0.0
    %8831 = vmatpush1.msra.mxu0 0.0
    %8832 = vmatprep.subr.mxu0 0.0
    %8833 = vmatpush1.msra.mxu0 0.0
    %8834 = vmatprep.subr.mxu0 0.0
    %8835 = vmatpush1.msra.mxu0 0.0
    %8836 = vmatprep.subr.mxu0 0.0
    %8837 = vmatpush1.msra.mxu0 0.0
    %8838 = vmatprep.subr.mxu0 0.0
    %8839 = vmatpush1.msra.mxu0 0.0
    %8840 = vmatprep.subr.mxu0 0.0
    %8841 = vmatpush1.msra.mxu0 0.0
    %8842 = vmatprep.subr.mxu0 0.0
    %8843 = vmatpush1.msra.mxu0 0.0
    %8844 = vmatprep.subr.mxu0 0.0
    %8845 = vmatpush1.msra.mxu0 0.0
    %8846 = vmatprep.subr.mxu0 0.0
    %8847 = vmatpush1.msra.mxu0 0.0
    %8848 = vmatprep.subr.mxu0 0.0
    %8849 = vmatpush1.msra.mxu0 0.0
    %8850 = vmatprep.subr.mxu0 0.0
    %8851 = vmatpush1.msra.mxu0 0.0
    %8852 = vmatprep.subr.mxu0 0.0
    %8853 = vmatpush1.msra.mxu0 0.0
    %8854 = vmatprep.subr.mxu0 0.0
    %8855 = vmatpush1.msra.mxu0 0.0
    %8856 = vmatprep.mubr.f32.mxu0 0.0
    %v8857 = vand.u32 %v8593, 4294901760
    %v8858 = vsub.f32 %v8593, %v8857
    %8859 = vmatmul.mubr.f32.gmra.mrb[0].mxu0 %v8858
    %v8860 = vpop.f32.mrb[0].mxu0
    %v8861 = vadd.f32 %v8775, %v8860
    %v8862 = vpop.f32.mrb[0].mxu0
    %8863 = vmatprep.mubr.f32.mxu0 0.0
    %v8864 = vand.u32 %v8596, 4294901760
    %v8865 = vsub.f32 %v8596, %v8864
    %8866 = vmatmul.mubr.f32.gmra.mrb[0].mxu0 %v8865
    %v8867 = vpop.f32.mrb[0].mxu0
    %v8868 = vadd.f32 %v8781, %v8867
    %v8869 = vpop.f32.mrb[0].mxu0
    %8870 = vdwg.mxu0
    %8871 = vmatprep.subr.mxu0 0.0
    %v8872 = vand.u32 %v8581, 4294901760
    %8873 = vmatpush1.msra.mxu0 %v8872
    %8874 = vmatprep.subr.mxu0 0.0
    %v8875 = vand.u32 %v8582, 4294901760
    %8876 = vmatpush1.msra.mxu0 %v8875
    %8877 = vmatprep.subr.mxu0 0.0
    %v8878 = vand.u32 %v8583, 4294901760
    %8879 = vmatpush1.msra.mxu0 %v8878
    %8880 = vmatprep.subr.mxu0 0.0
    %v8881 = vand.u32 %v8584, 4294901760
    %8882 = vmatpush1.msra.mxu0 %v8881
    %8883 = vmatprep.subr.mxu0 0.0
    %8884 = vmatpush1.msra.mxu0 0.0
    %8885 = vmatprep.subr.mxu0 0.0
    %8886 = vmatpush1.msra.mxu0 0.0
    %8887 = vmatprep.subr.mxu0 0.0
    %8888 = vmatpush1.msra.mxu0 0.0
    %8889 = vmatprep.subr.mxu0 0.0
    %8890 = vmatpush1.msra.mxu0 0.0
    %8891 = vmatprep.subr.mxu0 0.0
    %8892 = vmatpush1.msra.mxu0 0.0
    %8893 = vmatprep.subr.mxu0 0.0
    %8894 = vmatpush1.msra.mxu0 0.0
    %8895 = vmatprep.subr.mxu0 0.0
    %8896 = vmatpush1.msra.mxu0 0.0
    %8897 = vmatprep.subr.mxu0 0.0
    %8898 = vmatpush1.msra.mxu0 0.0
    %8899 = vmatprep.subr.mxu0 0.0
    %8900 = vmatpush1.msra.mxu0 0.0
    %8901 = vmatprep.subr.mxu0 0.0
    %8902 = vmatpush1.msra.mxu0 0.0
    %8903 = vmatprep.subr.mxu0 0.0
    %8904 = vmatpush1.msra.mxu0 0.0
    %8905 = vmatprep.subr.mxu0 0.0
    %8906 = vmatpush1.msra.mxu0 0.0
    %8907 = vmatprep.subr.mxu0 0.0
    %8908 = vmatpush1.msra.mxu0 0.0
    %8909 = vmatprep.subr.mxu0 0.0
    %8910 = vmatpush1.msra.mxu0 0.0
    %8911 = vmatprep.subr.mxu0 0.0
    %8912 = vmatpush1.msra.mxu0 0.0
    %8913 = vmatprep.subr.mxu0 0.0
    %8914 = vmatpush1.msra.mxu0 0.0
    %8915 = vmatprep.subr.mxu0 0.0
    %8916 = vmatpush1.msra.mxu0 0.0
    %8917 = vmatprep.subr.mxu0 0.0
    %8918 = vmatpush1.msra.mxu0 0.0
    %8919 = vmatprep.subr.mxu0 0.0
    %8920 = vmatpush1.msra.mxu0 0.0
    %8921 = vmatprep.subr.mxu0 0.0
    %8922 = vmatpush1.msra.mxu0 0.0
    %8923 = vmatprep.subr.mxu0 0.0
    %8924 = vmatpush1.msra.mxu0 0.0
    %8925 = vmatprep.subr.mxu0 0.0
    %8926 = vmatpush1.msra.mxu0 0.0
    %8927 = vmatprep.subr.mxu0 0.0
    %8928 = vmatpush1.msra.mxu0 0.0
    %8929 = vmatprep.subr.mxu0 0.0
    %8930 = vmatpush1.msra.mxu0 0.0
    %8931 = vmatprep.subr.mxu0 0.0
    %8932 = vmatpush1.msra.mxu0 0.0
    %8933 = vmatprep.subr.mxu0 0.0
    %8934 = vmatpush1.msra.mxu0 0.0
    %8935 = vmatprep.subr.mxu0 0.0
    %8936 = vmatpush1.msra.mxu0 0.0
    %8937 = vmatprep.subr.mxu0 0.0
    %8938 = vmatpush1.msra.mxu0 0.0
    %8939 = vmatprep.mubr.f32.mxu0 0.0
    %v8940 = vand.u32 %v8593, 4294901760
    %v8941 = vsub.f32 %v8593, %v8940
    %v8942 = vand.u32 %v8941, 4294901760
    %8943 = vmatmul.mubr.f32.gmra.mrb[0].mxu0 %v8942
    %v8944 = vpop.f32.mrb[0].mxu0
    %v8945 = vadd.f32 %v8861, %v8944
    %v8946 = vpop.f32.mrb[0].mxu0
    %8947 = vmatprep.mubr.f32.mxu0 0.0
    %v8948 = vand.u32 %v8596, 4294901760
    %v8949 = vsub.f32 %v8596, %v8948
    %v8950 = vand.u32 %v8949, 4294901760
    %8951 = vmatmul.mubr.f32.gmra.mrb[0].mxu0 %v8950
    %v8952 = vpop.f32.mrb[0].mxu0
    %v8953 = vadd.f32 %v8868, %v8952
    %v8954 = vpop.f32.mrb[0].mxu0
    %8955 = vdwg.mxu0
    %8956 = vmatprep.subr.mxu0 0.0
    %v8957 = vand.u32 %v8581, 4294901760
    %v8958 = vsub.f32 %v8581, %v8957
    %v8959 = vand.u32 %v8958, 4294901760
    %8960 = vmatpush1.msra.mxu0 %v8959
    %8961 = vmatprep.subr.mxu0 0.0
    %v8962 = vand.u32 %v8582, 4294901760
    %v8963 = vsub.f32 %v8582, %v8962
    %v8964 = vand.u32 %v8963, 4294901760
    %8965 = vmatpush1.msra.mxu0 %v8964
    %8966 = vmatprep.subr.mxu0 0.0
    %v8967 = vand.u32 %v8583, 4294901760
    %v8968 = vsub.f32 %v8583, %v8967
    %v8969 = vand.u32 %v8968, 4294901760
    %8970 = vmatpush1.msra.mxu0 %v8969
    %8971 = vmatprep.subr.mxu0 0.0
    %v8972 = vand.u32 %v8584, 4294901760
    %v8973 = vsub.f32 %v8584, %v8972
    %v8974 = vand.u32 %v8973, 4294901760
    %8975 = vmatpush1.msra.mxu0 %v8974
    %8976 = vmatprep.subr.mxu0 0.0
    %8977 = vmatpush1.msra.mxu0 0.0
    %8978 = vmatprep.subr.mxu0 0.0
    %8979 = vmatpush1.msra.mxu0 0.0
    %8980 = vmatprep.subr.mxu0 0.0
    %8981 = vmatpush1.msra.mxu0 0.0
    %8982 = vmatprep.subr.mxu0 0.0
    %8983 = vmatpush1.msra.mxu0 0.0
    %8984 = vmatprep.subr.mxu0 0.0
    %8985 = vmatpush1.msra.mxu0 0.0
    %8986 = vmatprep.subr.mxu0 0.0
    %8987 = vmatpush1.msra.mxu0 0.0
    %8988 = vmatprep.subr.mxu0 0.0
    %8989 = vmatpush1.msra.mxu0 0.0
    %8990 = vmatprep.subr.mxu0 0.0
    %8991 = vmatpush1.msra.mxu0 0.0
    %8992 = vmatprep.subr.mxu0 0.0
    %8993 = vmatpush1.msra.mxu0 0.0
    %8994 = vmatprep.subr.mxu0 0.0
    %8995 = vmatpush1.msra.mxu0 0.0
    %8996 = vmatprep.subr.mxu0 0.0
    %8997 = vmatpush1.msra.mxu0 0.0
    %8998 = vmatprep.subr.mxu0 0.0
    %8999 = vmatpush1.msra.mxu0 0.0
    %9000 = vmatprep.subr.mxu0 0.0
    %9001 = vmatpush1.msra.mxu0 0.0
    %9002 = vmatprep.subr.mxu0 0.0
    %9003 = vmatpush1.msra.mxu0 0.0
    %9004 = vmatprep.subr.mxu0 0.0
    %9005 = vmatpush1.msra.mxu0 0.0
    %9006 = vmatprep.subr.mxu0 0.0
    %9007 = vmatpush1.msra.mxu0 0.0
    %9008 = vmatprep.subr.mxu0 0.0
    %9009 = vmatpush1.msra.mxu0 0.0
    %9010 = vmatprep.subr.mxu0 0.0
    %9011 = vmatpush1.msra.mxu0 0.0
    %9012 = vmatprep.subr.mxu0 0.0
    %9013 = vmatpush1.msra.mxu0 0.0
    %9014 = vmatprep.subr.mxu0 0.0
    %9015 = vmatpush1.msra.mxu0 0.0
    %9016 = vmatprep.subr.mxu0 0.0
    %9017 = vmatpush1.msra.mxu0 0.0
    %9018 = vmatprep.subr.mxu0 0.0
    %9019 = vmatpush1.msra.mxu0 0.0
    %9020 = vmatprep.subr.mxu0 0.0
    %9021 = vmatpush1.msra.mxu0 0.0
    %9022 = vmatprep.subr.mxu0 0.0
    %9023 = vmatpush1.msra.mxu0 0.0
    %9024 = vmatprep.subr.mxu0 0.0
    %9025 = vmatpush1.msra.mxu0 0.0
    %9026 = vmatprep.subr.mxu0 0.0
    %9027 = vmatpush1.msra.mxu0 0.0
    %9028 = vmatprep.subr.mxu0 0.0
    %9029 = vmatpush1.msra.mxu0 0.0
    %9030 = vmatprep.subr.mxu0 0.0
    %9031 = vmatpush1.msra.mxu0 0.0
    %9032 = vmatprep.mubr.f32.mxu0 0.0
    %v9033 = vand.u32 %v8593, 4294901760
    %9034 = vmatmul.mubr.f32.gmra.mrb[0].mxu0 %v9033
    %v9035 = vpop.f32.mrb[0].mxu0
    %v9036 = vadd.f32 %v8945, %v9035
    %v9037 = vpop.f32.mrb[0].mxu0
    %9038 = vmatprep.mubr.f32.mxu0 0.0
    %v9039 = vand.u32 %v8596, 4294901760
    %9040 = vmatmul.mubr.f32.gmra.mrb[0].mxu0 %v9039
    %v9041 = vpop.f32.mrb[0].mxu0
    %v9042 = vadd.f32 %v8953, %v9041
    %v9043 = vpop.f32.mrb[0].mxu0
    %9044 = vdwg.mxu0
    %9045 = vmatprep.subr.mxu0 0.0
    %v9046 = vand.u32 %v8581, 4294901760
    %9047 = vmatpush1.msra.mxu0 %v9046
    %9048 = vmatprep.subr.mxu0 0.0
    %v9049 = vand.u32 %v8582, 4294901760
    %9050 = vmatpush1.msra.mxu0 %v9049
    %9051 = vmatprep.subr.mxu0 0.0
    %v9052 = vand.u32 %v8583, 4294901760
    %9053 = vmatpush1.msra.mxu0 %v9052
    %9054 = vmatprep.subr.mxu0 0.0
    %v9055 = vand.u32 %v8584, 4294901760
    %9056 = vmatpush1.msra.mxu0 %v9055
    %9057 = vmatprep.subr.mxu0 0.0
    %9058 = vmatpush1.msra.mxu0 0.0
    %9059 = vmatprep.subr.mxu0 0.0
    %9060 = vmatpush1.msra.mxu0 0.0
    %9061 = vmatprep.subr.mxu0 0.0
    %9062 = vmatpush1.msra.mxu0 0.0
    %9063 = vmatprep.subr.mxu0 0.0
    %9064 = vmatpush1.msra.mxu0 0.0
    %9065 = vmatprep.subr.mxu0 0.0
    %9066 = vmatpush1.msra.mxu0 0.0
    %9067 = vmatprep.subr.mxu0 0.0
    %9068 = vmatpush1.msra.mxu0 0.0
    %9069 = vmatprep.subr.mxu0 0.0
    %9070 = vmatpush1.msra.mxu0 0.0
    %9071 = vmatprep.subr.mxu0 0.0
    %9072 = vmatpush1.msra.mxu0 0.0
    %9073 = vmatprep.subr.mxu0 0.0
    %9074 = vmatpush1.msra.mxu0 0.0
    %9075 = vmatprep.subr.mxu0 0.0
    %9076 = vmatpush1.msra.mxu0 0.0
    %9077 = vmatprep.subr.mxu0 0.0
    %9078 = vmatpush1.msra.mxu0 0.0
    %9079 = vmatprep.subr.mxu0 0.0
    %9080 = vmatpush1.msra.mxu0 0.0
    %9081 = vmatprep.subr.mxu0 0.0
    %9082 = vmatpush1.msra.mxu0 0.0
    %9083 = vmatprep.subr.mxu0 0.0
    %9084 = vmatpush1.msra.mxu0 0.0
    %9085 = vmatprep.subr.mxu0 0.0
    %9086 = vmatpush1.msra.mxu0 0.0
    %9087 = vmatprep.subr.mxu0 0.0
    %9088 = vmatpush1.msra.mxu0 0.0
    %9089 = vmatprep.subr.mxu0 0.0
    %9090 = vmatpush1.msra.mxu0 0.0
    %9091 = vmatprep.subr.mxu0 0.0
    %9092 = vmatpush1.msra.mxu0 0.0
    %9093 = vmatprep.subr.mxu0 0.0
    %9094 = vmatpush1.msra.mxu0 0.0
    %9095 = vmatprep.subr.mxu0 0.0
    %9096 = vmatpush1.msra.mxu0 0.0
    %9097 = vmatprep.subr.mxu0 0.0
    %9098 = vmatpush1.msra.mxu0 0.0
    %9099 = vmatprep.subr.mxu0 0.0
    %9100 = vmatpush1.msra.mxu0 0.0
    %9101 = vmatprep.subr.mxu0 0.0
    %9102 = vmatpush1.msra.mxu0 0.0
    %9103 = vmatprep.subr.mxu0 0.0
    %9104 = vmatpush1.msra.mxu0 0.0
    %9105 = vmatprep.subr.mxu0 0.0
    %9106 = vmatpush1.msra.mxu0 0.0
    %9107 = vmatprep.subr.mxu0 0.0
    %9108 = vmatpush1.msra.mxu0 0.0
    %9109 = vmatprep.subr.mxu0 0.0
    %9110 = vmatpush1.msra.mxu0 0.0
    %9111 = vmatprep.subr.mxu0 0.0
    %9112 = vmatpush1.msra.mxu0 0.0
    %9113 = vmatprep.mubr.f32.mxu0 0.0
    %v9114 = vand.u32 %v8593, 4294901760
    %9115 = vmatmul.mubr.f32.gmra.mrb[0].mxu0 %v9114
    %v9116 = vpop.f32.mrb[0].mxu0
    %v9117 = vadd.f32 %v9036, %v9116
    %v9118 = vpop.f32.mrb[0].mxu0
    %9119 = vmatprep.mubr.f32.mxu0 0.0
    %v9120 = vand.u32 %v8596, 4294901760
    %9121 = vmatmul.mubr.f32.gmra.mrb[0].mxu0 %v9120
    %v9122 = vpop.f32.mrb[0].mxu0
    %v9123 = vadd.f32 %v9042, %v9122
    %v9124 = vpop.f32.mrb[0].mxu0
    %9125 = vdwg.mxu0
    %v9126 = vmul.f32 %v9117, 0.5
    %v9127 = vmul.f32 %v9123, 0.5
    %v9128 = vmul.f32 %v9117, 0.7978846
    %v9129 = vmul.f32 %v9123, 0.7978846
    %v9130 = vmul.f32 %v9117, 0.044715
    %v9131 = vmul.f32 %v9123, 0.044715
    %v9132 = vmul.f32 %v9130, %v9117
    %v9133 = vmul.f32 %v9131, %v9123
    %v9134 = vadd.f32 %v9132, 1.0
    %v9135 = vadd.f32 %v9133, 1.0
    %v9136 = vmul.f32 %v9128, %v9134
    %v9137 = vmul.f32 %v9129, %v9135
    %v9138 = vtanh.pop %v9136
    %v9139 = vtanh.pop %v9137
    %v9140 = vadd.f32 %v9138, 1.0
    %v9141 = vadd.f32 %v9139, 1.0
    %v9142 = vmul.f32 %v9126, %v9140
    %v9143 = vmul.f32 %v9127, %v9141
    %v9144 = vld [vmem:[%s5] sm:$0xff]
    %v9145 = vld [vmem:[%s5 + $0x8] sm:$0xff]
    %v9146 = vld [vmem:[%s5 + $0x10] sm:$0xff]
    %v9147 = vld [vmem:[%s5 + $0x18] sm:$0xff]
    %v9148 = vld [vmem:[%s5 + $0x20] sm:$0xff]
    %v9149 = vld [vmem:[%s5 + $0x28] sm:$0xff]
    %v9150 = vld [vmem:[%s5 + $0x30] sm:$0xff]
    %v9151 = vld [vmem:[%s5 + $0x38] sm:$0xff]
    %v9152 = vlaneseq
    %v9153 = vshrl.u32 %v9152, 7
    %v9154 = vsub.s32 5, %v9153
    %v9155 = vrot.slane %v46, %v9154
    %vm9156 = vcmask 523264
    %v9158 = vsel %vm9156, %v9142, 0
    %v9161 = vsel %vm9156, %v9143, 0
    %9163 = vmatprep.subr.mxu0 0.0
    %v9164 = vand.u32 %v9144, 4294901760
    %9165 = vmatpush1.msra.mxu0 %v9164
    %9166 = vmatprep.subr.mxu0 0.0
    %v9167 = vand.u32 %v9145, 4294901760
    %9168 = vmatpush1.msra.mxu0 %v9167
    %9169 = vmatprep.subr.mxu0 0.0
    %v9170 = vand.u32 %v9146, 4294901760
    %9171 = vmatpush1.msra.mxu0 %v9170
    %9172 = vmatprep.subr.mxu0 0.0
    %v9173 = vand.u32 %v9147, 4294901760
    %9174 = vmatpush1.msra.mxu0 %v9173
    %9175 = vmatprep.subr.mxu0 0.0
    %v9176 = vand.u32 %v9148, 4294901760
    %9177 = vmatpush1.msra.mxu0 %v9176
    %9178 = vmatprep.subr.mxu0 0.0
    %v9179 = vand.u32 %v9149, 4294901760
    %9180 = vmatpush1.msra.mxu0 %v9179
    %9181 = vmatprep.subr.mxu0 0.0
    %v9182 = vand.u32 %v9150, 4294901760
    %9183 = vmatpush1.msra.mxu0 %v9182
    %9184 = vmatprep.subr.mxu0 0.0
    %v9185 = vand.u32 %v9151, 4294901760
    %9186 = vmatpush1.msra.mxu0 %v9185
    %9187 = vmatprep.subr.mxu0 0.0
    %9188 = vmatpush1.msra.mxu0 0.0
    %9189 = vmatprep.subr.mxu0 0.0
    %9190 = vmatpush1.msra.mxu0 0.0
    %9191 = vmatprep.subr.mxu0 0.0
    %9192 = vmatpush1.msra.mxu0 0.0
    %9193 = vmatprep.subr.mxu0 0.0
    %9194 = vmatpush1.msra.mxu0 0.0
    %9195 = vmatprep.subr.mxu0 0.0
    %9196 = vmatpush1.msra.mxu0 0.0
    %9197 = vmatprep.subr.mxu0 0.0
    %9198 = vmatpush1.msra.mxu0 0.0
    %9199 = vmatprep.subr.mxu0 0.0
    %9200 = vmatpush1.msra.mxu0 0.0
    %9201 = vmatprep.subr.mxu0 0.0
    %9202 = vmatpush1.msra.mxu0 0.0
    %9203 = vmatprep.subr.mxu0 0.0
    %9204 = vmatpush1.msra.mxu0 0.0
    %9205 = vmatprep.subr.mxu0 0.0
    %9206 = vmatpush1.msra.mxu0 0.0
    %9207 = vmatprep.subr.mxu0 0.0
    %9208 = vmatpush1.msra.mxu0 0.0
    %9209 = vmatprep.subr.mxu0 0.0
    %9210 = vmatpush1.msra.mxu0 0.0
    %9211 = vmatprep.subr.mxu0 0.0
    %9212 = vmatpush1.msra.mxu0 0.0
    %9213 = vmatprep.subr.mxu0 0.0
    %9214 = vmatpush1.msra.mxu0 0.0
    %9215 = vmatprep.subr.mxu0 0.0
    %9216 = vmatpush1.msra.mxu0 0.0
    %9217 = vmatprep.subr.mxu0 0.0
    %9218 = vmatpush1.msra.mxu0 0.0
    %9219 = vmatprep.subr.mxu0 0.0
    %9220 = vmatpush1.msra.mxu0 0.0
    %9221 = vmatprep.subr.mxu0 0.0
    %9222 = vmatpush1.msra.mxu0 0.0
    %9223 = vmatprep.subr.mxu0 0.0
    %9224 = vmatpush1.msra.mxu0 0.0
    %9225 = vmatprep.subr.mxu0 0.0
    %9226 = vmatpush1.msra.mxu0 0.0
    %9227 = vmatprep.subr.mxu0 0.0
    %9228 = vmatpush1.msra.mxu0 0.0
    %9229 = vmatprep.subr.mxu0 0.0
    %9230 = vmatpush1.msra.mxu0 0.0
    %9231 = vmatprep.subr.mxu0 0.0
    %9232 = vmatpush1.msra.mxu0 0.0
    %9233 = vmatprep.subr.mxu0 0.0
    %9234 = vmatpush1.msra.mxu0 0.0
    %9235 = vmatprep.mubr.f32.mxu0 0.0
    %v9236 = vand.u32 %v9158, 4294901760
    %v9237 = vsub.f32 %v9158, %v9236
    %v9238 = vand.u32 %v9237, 4294901760
    %v9239 = vsub.f32 %v9237, %v9238
    %v9240 = vand.u32 %v9239, 4294901760
    %9241 = vmatmul.mubr.f32.gmra.mrb[0].mxu0 %v9240
    %v9242 = vpop.f32.mrb[0].mxu0
    %v9243 = vadd.f32 %v9155, %v9242
    %v9244 = vpop.f32.mrb[0].mxu0
    %9245 = vmatprep.mubr.f32.mxu0 0.0
    %v9246 = vand.u32 %v9161, 4294901760
    %v9247 = vsub.f32 %v9161, %v9246
    %v9248 = vand.u32 %v9247, 4294901760
    %v9249 = vsub.f32 %v9247, %v9248
    %v9250 = vand.u32 %v9249, 4294901760
    %9251 = vmatmul.mubr.f32.gmra.mrb[0].mxu0 %v9250
    %v9252 = vpop.f32.mrb[0].mxu0
    %v9253 = vadd.f32 %v9155, %v9252
    %v9254 = vpop.f32.mrb[0].mxu0
    %9255 = vdwg.mxu0
    %9256 = vmatprep.subr.mxu0 0.0
    %v9257 = vand.u32 %v9144, 4294901760
    %v9258 = vsub.f32 %v9144, %v9257
    %v9259 = vand.u32 %v9258, 4294901760
    %v9260 = vsub.f32 %v9258, %v9259
    %v9261 = vand.u32 %v9260, 4294901760
    %9262 = vmatpush1.msra.mxu0 %v9261
    %9263 = vmatprep.subr.mxu0 0.0
    %v9264 = vand.u32 %v9145, 4294901760
    %v9265 = vsub.f32 %v9145, %v9264
    %v9266 = vand.u32 %v9265, 4294901760
    %v9267 = vsub.f32 %v9265, %v9266
    %v9268 = vand.u32 %v9267, 4294901760
    %9269 = vmatpush1.msra.mxu0 %v9268
    %9270 = vmatprep.subr.mxu0 0.0
    %v9271 = vand.u32 %v9146, 4294901760
    %v9272 = vsub.f32 %v9146, %v9271
    %v9273 = vand.u32 %v9272, 4294901760
    %v9274 = vsub.f32 %v9272, %v9273
    %v9275 = vand.u32 %v9274, 4294901760
    %9276 = vmatpush1.msra.mxu0 %v9275
    %9277 = vmatprep.subr.mxu0 0.0
    %v9278 = vand.u32 %v9147, 4294901760
    %v9279 = vsub.f32 %v9147, %v9278
    %v9280 = vand.u32 %v9279, 4294901760
    %v9281 = vsub.f32 %v9279, %v9280
    %v9282 = vand.u32 %v9281, 4294901760
    %9283 = vmatpush1.msra.mxu0 %v9282
    %9284 = vmatprep.subr.mxu0 0.0
    %v9285 = vand.u32 %v9148, 4294901760
    %v9286 = vsub.f32 %v9148, %v9285
    %v9287 = vand.u32 %v9286, 4294901760
    %v9288 = vsub.f32 %v9286, %v9287
    %v9289 = vand.u32 %v9288, 4294901760
    %9290 = vmatpush1.msra.mxu0 %v9289
    %9291 = vmatprep.subr.mxu0 0.0
    %v9292 = vand.u32 %v9149, 4294901760
    %v9293 = vsub.f32 %v9149, %v9292
    %v9294 = vand.u32 %v9293, 4294901760
    %v9295 = vsub.f32 %v9293, %v9294
    %v9296 = vand.u32 %v9295, 4294901760
    %9297 = vmatpush1.msra.mxu0 %v9296
    %9298 = vmatprep.subr.mxu0 0.0
    %v9299 = vand.u32 %v9150, 4294901760
    %v9300 = vsub.f32 %v9150, %v9299
    %v9301 = vand.u32 %v9300, 4294901760
    %v9302 = vsub.f32 %v9300, %v9301
    %v9303 = vand.u32 %v9302, 4294901760
    %9304 = vmatpush1.msra.mxu0 %v9303
    %9305 = vmatprep.subr.mxu0 0.0
    %v9306 = vand.u32 %v9151, 4294901760
    %v9307 = vsub.f32 %v9151, %v9306
    %v9308 = vand.u32 %v9307, 4294901760
    %v9309 = vsub.f32 %v9307, %v9308
    %v9310 = vand.u32 %v9309, 4294901760
    %9311 = vmatpush1.msra.mxu0 %v9310
    %9312 = vmatprep.subr.mxu0 0.0
    %9313 = vmatpush1.msra.mxu0 0.0
    %9314 = vmatprep.subr.mxu0 0.0
    %9315 = vmatpush1.msra.mxu0 0.0
    %9316 = vmatprep.subr.mxu0 0.0
    %9317 = vmatpush1.msra.mxu0 0.0
    %9318 = vmatprep.subr.mxu0 0.0
    %9319 = vmatpush1.msra.mxu0 0.0
    %9320 = vmatprep.subr.mxu0 0.0
    %9321 = vmatpush1.msra.mxu0 0.0
    %9322 = vmatprep.subr.mxu0 0.0
    %9323 = vmatpush1.msra.mxu0 0.0
    %9324 = vmatprep.subr.mxu0 0.0
    %9325 = vmatpush1.msra.mxu0 0.0
    %9326 = vmatprep.subr.mxu0 0.0
    %9327 = vmatpush1.msra.mxu0 0.0
    %9328 = vmatprep.subr.mxu0 0.0
    %9329 = vmatpush1.msra.mxu0 0.0
    %9330 = vmatprep.subr.mxu0 0.0
    %9331 = vmatpush1.msra.mxu0 0.0
    %9332 = vmatprep.subr.mxu0 0.0
    %9333 = vmatpush1.msra.mxu0 0.0
    %9334 = vmatprep.subr.mxu0 0.0
    %9335 = vmatpush1.msra.mxu0 0.0
    %9336 = vmatprep.subr.mxu0 0.0
    %9337 = vmatpush1.msra.mxu0 0.0
    %9338 = vmatprep.subr.mxu0 0.0
    %9339 = vmatpush1.msra.mxu0 0.0
    %9340 = vmatprep.subr.mxu0 0.0
    %9341 = vmatpush1.msra.mxu0 0.0
    %9342 = vmatprep.subr.mxu0 0.0
    %9343 = vmatpush1.msra.mxu0 0.0
    %9344 = vmatprep.subr.mxu0 0.0
    %9345 = vmatpush1.msra.mxu0 0.0
    %9346 = vmatprep.subr.mxu0 0.0
    %9347 = vmatpush1.msra.mxu0 0.0
    %9348 = vmatprep.subr.mxu0 0.0
    %9349 = vmatpush1.msra.mxu0 0.0
    %9350 = vmatprep.subr.mxu0 0.0
    %9351 = vmatpush1.msra.mxu0 0.0
    %9352 = vmatprep.subr.mxu0 0.0
    %9353 = vmatpush1.msra.mxu0 0.0
    %9354 = vmatprep.subr.mxu0 0.0
    %9355 = vmatpush1.msra.mxu0 0.0
    %9356 = vmatprep.subr.mxu0 0.0
    %9357 = vmatpush1.msra.mxu0 0.0
    %9358 = vmatprep.subr.mxu0 0.0
    %9359 = vmatpush1.msra.mxu0 0.0
    %9360 = vmatprep.mubr.f32.mxu0 0.0
    %v9361 = vand.u32 %v9158, 4294901760
    %9362 = vmatmul.mubr.f32.gmra.mrb[0].mxu0 %v9361
    %v9363 = vpop.f32.mrb[0].mxu0
    %v9364 = vadd.f32 %v9243, %v9363
    %v9365 = vpop.f32.mrb[0].mxu0
    %9366 = vmatprep.mubr.f32.mxu0 0.0
    %v9367 = vand.u32 %v9161, 4294901760
    %9368 = vmatmul.mubr.f32.gmra.mrb[0].mxu0 %v9367
    %v9369 = vpop.f32.mrb[0].mxu0
    %v9370 = vadd.f32 %v9253, %v9369
    %v9371 = vpop.f32.mrb[0].mxu0
    %9372 = vdwg.mxu0
    %9373 = vmatprep.subr.mxu0 0.0
    %v9374 = vand.u32 %v9144, 4294901760
    %v9375 = vsub.f32 %v9144, %v9374
    %9376 = vmatpush1.msra.mxu0 %v9375
    %9377 = vmatprep.subr.mxu0 0.0
    %v9378 = vand.u32 %v9145, 4294901760
    %v9379 = vsub.f32 %v9145, %v9378
    %9380 = vmatpush1.msra.mxu0 %v9379
    %9381 = vmatprep.subr.mxu0 0.0
    %v9382 = vand.u32 %v9146, 4294901760
    %v9383 = vsub.f32 %v9146, %v9382
    %9384 = vmatpush1.msra.mxu0 %v9383
    %9385 = vmatprep.subr.mxu0 0.0
    %v9386 = vand.u32 %v9147, 4294901760
    %v9387 = vsub.f32 %v9147, %v9386
    %9388 = vmatpush1.msra.mxu0 %v9387
    %9389 = vmatprep.subr.mxu0 0.0
    %v9390 = vand.u32 %v9148, 4294901760
    %v9391 = vsub.f32 %v9148, %v9390
    %9392 = vmatpush1.msra.mxu0 %v9391
    %9393 = vmatprep.subr.mxu0 0.0
    %v9394 = vand.u32 %v9149, 4294901760
    %v9395 = vsub.f32 %v9149, %v9394
    %9396 = vmatpush1.msra.mxu0 %v9395
    %9397 = vmatprep.subr.mxu0 0.0
    %v9398 = vand.u32 %v9150, 4294901760
    %v9399 = vsub.f32 %v9150, %v9398
    %9400 = vmatpush1.msra.mxu0 %v9399
    %9401 = vmatprep.subr.mxu0 0.0
    %v9402 = vand.u32 %v9151, 4294901760
    %v9403 = vsub.f32 %v9151, %v9402
    %9404 = vmatpush1.msra.mxu0 %v9403
    %9405 = vmatprep.subr.mxu0 0.0
    %9406 = vmatpush1.msra.mxu0 0.0
    %9407 = vmatprep.subr.mxu0 0.0
    %9408 = vmatpush1.msra.mxu0 0.0
    %9409 = vmatprep.subr.mxu0 0.0
    %9410 = vmatpush1.msra.mxu0 0.0
    %9411 = vmatprep.subr.mxu0 0.0
    %9412 = vmatpush1.msra.mxu0 0.0
    %9413 = vmatprep.subr.mxu0 0.0
    %9414 = vmatpush1.msra.mxu0 0.0
    %9415 = vmatprep.subr.mxu0 0.0
    %9416 = vmatpush1.msra.mxu0 0.0
    %9417 = vmatprep.subr.mxu0 0.0
    %9418 = vmatpush1.msra.mxu0 0.0
    %9419 = vmatprep.subr.mxu0 0.0
    %9420 = vmatpush1.msra.mxu0 0.0
    %9421 = vmatprep.subr.mxu0 0.0
    %9422 = vmatpush1.msra.mxu0 0.0
    %9423 = vmatprep.subr.mxu0 0.0
    %9424 = vmatpush1.msra.mxu0 0.0
    %9425 = vmatprep.subr.mxu0 0.0
    %9426 = vmatpush1.msra.mxu0 0.0
    %9427 = vmatprep.subr.mxu0 0.0
    %9428 = vmatpush1.msra.mxu0 0.0
    %9429 = vmatprep.subr.mxu0 0.0
    %9430 = vmatpush1.msra.mxu0 0.0
    %9431 = vmatprep.subr.mxu0 0.0
    %9432 = vmatpush1.msra.mxu0 0.0
    %9433 = vmatprep.subr.mxu0 0.0
    %9434 = vmatpush1.msra.mxu0 0.0
    %9435 = vmatprep.subr.mxu0 0.0
    %9436 = vmatpush1.msra.mxu0 0.0
    %9437 = vmatprep.subr.mxu0 0.0
    %9438 = vmatpush1.msra.mxu0 0.0
    %9439 = vmatprep.subr.mxu0 0.0
    %9440 = vmatpush1.msra.mxu0 0.0
    %9441 = vmatprep.subr.mxu0 0.0
    %9442 = vmatpush1.msra.mxu0 0.0
    %9443 = vmatprep.subr.mxu0 0.0
    %9444 = vmatpush1.msra.mxu0 0.0
    %9445 = vmatprep.subr.mxu0 0.0
    %9446 = vmatpush1.msra.mxu0 0.0
    %9447 = vmatprep.subr.mxu0 0.0
    %9448 = vmatpush1.msra.mxu0 0.0
    %9449 = vmatprep.subr.mxu0 0.0
    %9450 = vmatpush1.msra.mxu0 0.0
    %9451 = vmatprep.subr.mxu0 0.0
    %9452 = vmatpush1.msra.mxu0 0.0
    %9453 = vmatprep.mubr.f32.mxu0 0.0
    %v9454 = vand.u32 %v9158, 4294901760
    %v9455 = vsub.f32 %v9158, %v9454
    %9456 = vmatmul.mubr.f32.gmra.mrb[0].mxu0 %v9455
    %v9457 = vpop.f32.mrb[0].mxu0
    %v9458 = vadd.f32 %v9364, %v9457
    %v9459 = vpop.f32.mrb[0].mxu0
    %9460 = vmatprep.mubr.f32.mxu0 0.0
    %v9461 = vand.u32 %v9161, 4294901760
    %v9462 = vsub.f32 %v9161, %v9461
    %9463 = vmatmul.mubr.f32.gmra.mrb[0].mxu0 %v9462
    %v9464 = vpop.f32.mrb[0].mxu0
    %v9465 = vadd.f32 %v9370, %v9464
    %v9466 = vpop.f32.mrb[0].mxu0
    %9467 = vdwg.mxu0
    %9468 = vmatprep.subr.mxu0 0.0
    %v9469 = vand.u32 %v9144, 4294901760
    %9470 = vmatpush1.msra.mxu0 %v9469
    %9471 = vmatprep.subr.mxu0 0.0
    %v9472 = vand.u32 %v9145, 4294901760
    %9473 = vmatpush1.msra.mxu0 %v9472
    %9474 = vmatprep.subr.mxu0 0.0
    %v9475 = vand.u32 %v9146, 4294901760
    %9476 = vmatpush1.msra.mxu0 %v9475
    %9477 = vmatprep.subr.mxu0 0.0
    %v9478 = vand.u32 %v9147, 4294901760
    %9479 = vmatpush1.msra.mxu0 %v9478
    %9480 = vmatprep.subr.mxu0 0.0
    %v9481 = vand.u32 %v9148, 4294901760
    %9482 = vmatpush1.msra.mxu0 %v9481
    %9483 = vmatprep.subr.mxu0 0.0
    %v9484 = vand.u32 %v9149, 4294901760
    %9485 = vmatpush1.msra.mxu0 %v9484
    %9486 = vmatprep.subr.mxu0 0.0
    %v9487 = vand.u32 %v9150, 4294901760
    %9488 = vmatpush1.msra.mxu0 %v9487
    %9489 = vmatprep.subr.mxu0 0.0
    %v9490 = vand.u32 %v9151, 4294901760
    %9491 = vmatpush1.msra.mxu0 %v9490
    %9492 = vmatprep.subr.mxu0 0.0
    %9493 = vmatpush1.msra.mxu0 0.0
    %9494 = vmatprep.subr.mxu0 0.0
    %9495 = vmatpush1.msra.mxu0 0.0
    %9496 = vmatprep.subr.mxu0 0.0
    %9497 = vmatpush1.msra.mxu0 0.0
    %9498 = vmatprep.subr.mxu0 0.0
    %9499 = vmatpush1.msra.mxu0 0.0
    %9500 = vmatprep.subr.mxu0 0.0
    %9501 = vmatpush1.msra.mxu0 0.0
    %9502 = vmatprep.subr.mxu0 0.0
    %9503 = vmatpush1.msra.mxu0 0.0
    %9504 = vmatprep.subr.mxu0 0.0
    %9505 = vmatpush1.msra.mxu0 0.0
    %9506 = vmatprep.subr.mxu0 0.0
    %9507 = vmatpush1.msra.mxu0 0.0
    %9508 = vmatprep.subr.mxu0 0.0
    %9509 = vmatpush1.msra.mxu0 0.0
    %9510 = vmatprep.subr.mxu0 0.0
    %9511 = vmatpush1.msra.mxu0 0.0
    %9512 = vmatprep.subr.mxu0 0.0
    %9513 = vmatpush1.msra.mxu0 0.0
    %9514 = vmatprep.subr.mxu0 0.0
    %9515 = vmatpush1.msra.mxu0 0.0
    %9516 = vmatprep.subr.mxu0 0.0
    %9517 = vmatpush1.msra.mxu0 0.0
    %9518 = vmatprep.subr.mxu0 0.0
    %9519 = vmatpush1.msra.mxu0 0.0
    %9520 = vmatprep.subr.mxu0 0.0
    %9521 = vmatpush1.msra.mxu0 0.0
    %9522 = vmatprep.subr.mxu0 0.0
    %9523 = vmatpush1.msra.mxu0 0.0
    %9524 = vmatprep.subr.mxu0 0.0
    %9525 = vmatpush1.msra.mxu0 0.0
    %9526 = vmatprep.subr.mxu0 0.0
    %9527 = vmatpush1.msra.mxu0 0.0
    %9528 = vmatprep.subr.mxu0 0.0
    %9529 = vmatpush1.msra.mxu0 0.0
    %9530 = vmatprep.subr.mxu0 0.0
    %9531 = vmatpush1.msra.mxu0 0.0
    %9532 = vmatprep.subr.mxu0 0.0
    %9533 = vmatpush1.msra.mxu0 0.0
    %9534 = vmatprep.subr.mxu0 0.0
    %9535 = vmatpush1.msra.mxu0 0.0
    %9536 = vmatprep.subr.mxu0 0.0
    %9537 = vmatpush1.msra.mxu0 0.0
    %9538 = vmatprep.subr.mxu0 0.0
    %9539 = vmatpush1.msra.mxu0 0.0
    %9540 = vmatprep.mubr.f32.mxu0 0.0
    %v9541 = vand.u32 %v9158, 4294901760
    %v9542 = vsub.f32 %v9158, %v9541
    %v9543 = vand.u32 %v9542, 4294901760
    %9544 = vmatmul.mubr.f32.gmra.mrb[0].mxu0 %v9543
    %v9545 = vpop.f32.mrb[0].mxu0
    %v9546 = vadd.f32 %v9458, %v9545
    %v9547 = vpop.f32.mrb[0].mxu0
    %9548 = vmatprep.mubr.f32.mxu0 0.0
    %v9549 = vand.u32 %v9161, 4294901760
    %v9550 = vsub.f32 %v9161, %v9549
    %v9551 = vand.u32 %v9550, 4294901760
    %9552 = vmatmul.mubr.f32.gmra.mrb[0].mxu0 %v9551
    %v9553 = vpop.f32.mrb[0].mxu0
    %v9554 = vadd.f32 %v9465, %v9553
    %v9555 = vpop.f32.mrb[0].mxu0
    %9556 = vdwg.mxu0
    %9557 = vmatprep.subr.mxu0 0.0
    %v9558 = vand.u32 %v9144, 4294901760
    %v9559 = vsub.f32 %v9144, %v9558
    %v9560 = vand.u32 %v9559, 4294901760
    %9561 = vmatpush1.msra.mxu0 %v9560
    %9562 = vmatprep.subr.mxu0 0.0
    %v9563 = vand.u32 %v9145, 4294901760
    %v9564 = vsub.f32 %v9145, %v9563
    %v9565 = vand.u32 %v9564, 4294901760
    %9566 = vmatpush1.msra.mxu0 %v9565
    %9567 = vmatprep.subr.mxu0 0.0
    %v9568 = vand.u32 %v9146, 4294901760
    %v9569 = vsub.f32 %v9146, %v9568
    %v9570 = vand.u32 %v9569, 4294901760
    %9571 = vmatpush1.msra.mxu0 %v9570
    %9572 = vmatprep.subr.mxu0 0.0
    %v9573 = vand.u32 %v9147, 4294901760
    %v9574 = vsub.f32 %v9147, %v9573
    %v9575 = vand.u32 %v9574, 4294901760
    %9576 = vmatpush1.msra.mxu0 %v9575
    %9577 = vmatprep.subr.mxu0 0.0
    %v9578 = vand.u32 %v9148, 4294901760
    %v9579 = vsub.f32 %v9148, %v9578
    %v9580 = vand.u32 %v9579, 4294901760
    %9581 = vmatpush1.msra.mxu0 %v9580
    %9582 = vmatprep.subr.mxu0 0.0
    %v9583 = vand.u32 %v9149, 4294901760
    %v9584 = vsub.f32 %v9149, %v9583
    %v9585 = vand.u32 %v9584, 4294901760
    %9586 = vmatpush1.msra.mxu0 %v9585
    %9587 = vmatprep.subr.mxu0 0.0
    %v9588 = vand.u32 %v9150, 4294901760
    %v9589 = vsub.f32 %v9150, %v9588
    %v9590 = vand.u32 %v9589, 4294901760
    %9591 = vmatpush1.msra.mxu0 %v9590
    %9592 = vmatprep.subr.mxu0 0.0
    %v9593 = vand.u32 %v9151, 4294901760
    %v9594 = vsub.f32 %v9151, %v9593
    %v9595 = vand.u32 %v9594, 4294901760
    %9596 = vmatpush1.msra.mxu0 %v9595
    %9597 = vmatprep.subr.mxu0 0.0
    %9598 = vmatpush1.msra.mxu0 0.0
    %9599 = vmatprep.subr.mxu0 0.0
    %9600 = vmatpush1.msra.mxu0 0.0
    %9601 = vmatprep.subr.mxu0 0.0
    %9602 = vmatpush1.msra.mxu0 0.0
    %9603 = vmatprep.subr.mxu0 0.0
    %9604 = vmatpush1.msra.mxu0 0.0
    %9605 = vmatprep.subr.mxu0 0.0
    %9606 = vmatpush1.msra.mxu0 0.0
    %9607 = vmatprep.subr.mxu0 0.0
    %9608 = vmatpush1.msra.mxu0 0.0
    %9609 = vmatprep.subr.mxu0 0.0
    %9610 = vmatpush1.msra.mxu0 0.0
    %9611 = vmatprep.subr.mxu0 0.0
    %9612 = vmatpush1.msra.mxu0 0.0
    %9613 = vmatprep.subr.mxu0 0.0
    %9614 = vmatpush1.msra.mxu0 0.0
    %9615 = vmatprep.subr.mxu0 0.0
    %9616 = vmatpush1.msra.mxu0 0.0
    %9617 = vmatprep.subr.mxu0 0.0
    %9618 = vmatpush1.msra.mxu0 0.0
    %9619 = vmatprep.subr.mxu0 0.0
    %9620 = vmatpush1.msra.mxu0 0.0
    %9621 = vmatprep.subr.mxu0 0.0
    %9622 = vmatpush1.msra.mxu0 0.0
    %9623 = vmatprep.subr.mxu0 0.0
    %9624 = vmatpush1.msra.mxu0 0.0
    %9625 = vmatprep.subr.mxu0 0.0
    %9626 = vmatpush1.msra.mxu0 0.0
    %9627 = vmatprep.subr.mxu0 0.0
    %9628 = vmatpush1.msra.mxu0 0.0
    %9629 = vmatprep.subr.mxu0 0.0
    %9630 = vmatpush1.msra.mxu0 0.0
    %9631 = vmatprep.subr.mxu0 0.0
    %9632 = vmatpush1.msra.mxu0 0.0
    %9633 = vmatprep.subr.mxu0 0.0
    %9634 = vmatpush1.msra.mxu0 0.0
    %9635 = vmatprep.subr.mxu0 0.0
    %9636 = vmatpush1.msra.mxu0 0.0
    %9637 = vmatprep.subr.mxu0 0.0
    %9638 = vmatpush1.msra.mxu0 0.0
    %9639 = vmatprep.subr.mxu0 0.0
    %9640 = vmatpush1.msra.mxu0 0.0
    %9641 = vmatprep.subr.mxu0 0.0
    %9642 = vmatpush1.msra.mxu0 0.0
    %9643 = vmatprep.subr.mxu0 0.0
    %9644 = vmatpush1.msra.mxu0 0.0
    %9645 = vmatprep.mubr.f32.mxu0 0.0
    %v9646 = vand.u32 %v9158, 4294901760
    %9647 = vmatmul.mubr.f32.gmra.mrb[0].mxu0 %v9646
    %v9648 = vpop.f32.mrb[0].mxu0
    %v9649 = vadd.f32 %v9546, %v9648
    %v9650 = vpop.f32.mrb[0].mxu0
    %9651 = vmatprep.mubr.f32.mxu0 0.0
    %v9652 = vand.u32 %v9161, 4294901760
    %9653 = vmatmul.mubr.f32.gmra.mrb[0].mxu0 %v9652
    %v9654 = vpop.f32.mrb[0].mxu0
    %v9655 = vadd.f32 %v9554, %v9654
    %v9656 = vpop.f32.mrb[0].mxu0
    %9657 = vdwg.mxu0
    %9658 = vmatprep.subr.mxu0 0.0
    %v9659 = vand.u32 %v9144, 4294901760
    %9660 = vmatpush1.msra.mxu0 %v9659
    %9661 = vmatprep.subr.mxu0 0.0
    %v9662 = vand.u32 %v9145, 4294901760
    %9663 = vmatpush1.msra.mxu0 %v9662
    %9664 = vmatprep.subr.mxu0 0.0
    %v9665 = vand.u32 %v9146, 4294901760
    %9666 = vmatpush1.msra.mxu0 %v9665
    %9667 = vmatprep.subr.mxu0 0.0
    %v9668 = vand.u32 %v9147, 4294901760
    %9669 = vmatpush1.msra.mxu0 %v9668
    %9670 = vmatprep.subr.mxu0 0.0
    %v9671 = vand.u32 %v9148, 4294901760
    %9672 = vmatpush1.msra.mxu0 %v9671
    %9673 = vmatprep.subr.mxu0 0.0
    %v9674 = vand.u32 %v9149, 4294901760
    %9675 = vmatpush1.msra.mxu0 %v9674
    %9676 = vmatprep.subr.mxu0 0.0
    %v9677 = vand.u32 %v9150, 4294901760
    %9678 = vmatpush1.msra.mxu0 %v9677
    %9679 = vmatprep.subr.mxu0 0.0
    %v9680 = vand.u32 %v9151, 4294901760
    %9681 = vmatpush1.msra.mxu0 %v9680
    %9682 = vmatprep.subr.mxu0 0.0
    %9683 = vmatpush1.msra.mxu0 0.0
    %9684 = vmatprep.subr.mxu0 0.0
    %9685 = vmatpush1.msra.mxu0 0.0
    %9686 = vmatprep.subr.mxu0 0.0
    %9687 = vmatpush1.msra.mxu0 0.0
    %9688 = vmatprep.subr.mxu0 0.0
    %9689 = vmatpush1.msra.mxu0 0.0
    %9690 = vmatprep.subr.mxu0 0.0
    %9691 = vmatpush1.msra.mxu0 0.0
    %9692 = vmatprep.subr.mxu0 0.0
    %9693 = vmatpush1.msra.mxu0 0.0
    %9694 = vmatprep.subr.mxu0 0.0
    %9695 = vmatpush1.msra.mxu0 0.0
    %9696 = vmatprep.subr.mxu0 0.0
    %9697 = vmatpush1.msra.mxu0 0.0
    %9698 = vmatprep.subr.mxu0 0.0
    %9699 = vmatpush1.msra.mxu0 0.0
    %9700 = vmatprep.subr.mxu0 0.0
    %9701 = vmatpush1.msra.mxu0 0.0
    %9702 = vmatprep.subr.mxu0 0.0
    %9703 = vmatpush1.msra.mxu0 0.0
    %9704 = vmatprep.subr.mxu0 0.0
    %9705 = vmatpush1.msra.mxu0 0.0
    %9706 = vmatprep.subr.mxu0 0.0
    %9707 = vmatpush1.msra.mxu0 0.0
    %9708 = vmatprep.subr.mxu0 0.0
    %9709 = vmatpush1.msra.mxu0 0.0
    %9710 = vmatprep.subr.mxu0 0.0
    %9711 = vmatpush1.msra.mxu0 0.0
    %9712 = vmatprep.subr.mxu0 0.0
    %9713 = vmatpush1.msra.mxu0 0.0
    %9714 = vmatprep.subr.mxu0 0.0
    %9715 = vmatpush1.msra.mxu0 0.0
    %9716 = vmatprep.subr.mxu0 0.0
    %9717 = vmatpush1.msra.mxu0 0.0
    %9718 = vmatprep.subr.mxu0 0.0
    %9719 = vmatpush1.msra.mxu0 0.0
    %9720 = vmatprep.subr.mxu0 0.0
    %9721 = vmatpush1.msra.mxu0 0.0
    %9722 = vmatprep.subr.mxu0 0.0
    %9723 = vmatpush1.msra.mxu0 0.0
    %9724 = vmatprep.subr.mxu0 0.0
    %9725 = vmatpush1.msra.mxu0 0.0
    %9726 = vmatprep.subr.mxu0 0.0
    %9727 = vmatpush1.msra.mxu0 0.0
    %9728 = vmatprep.subr.mxu0 0.0
    %9729 = vmatpush1.msra.mxu0 0.0
    %9730 = vmatprep.mubr.f32.mxu0 0.0
    %v9731 = vand.u32 %v9158, 4294901760
    %9732 = vmatmul.mubr.f32.gmra.mrb[0].mxu0 %v9731
    %v9733 = vpop.f32.mrb[0].mxu0
    %v9734 = vadd.f32 %v9649, %v9733
    %v9735 = vpop.f32.mrb[0].mxu0
    %9736 = vmatprep.mubr.f32.mxu0 0.0
    %v9737 = vand.u32 %v9161, 4294901760
    %9738 = vmatmul.mubr.f32.gmra.mrb[0].mxu0 %v9737
    %v9739 = vpop.f32.mrb[0].mxu0
    %v9740 = vadd.f32 %v9655, %v9739
    %v9741 = vpop.f32.mrb[0].mxu0
    %9742 = vdwg.mxu0
    %v9743 = vadd.f32 %v9734, %v8541
    %v9744 = vadd.f32 %v9740, %v8542
    %9745 = vst.msk [vmem:[#allocation5] sm:$0xff] %vm47, %v9743
    %9746 = vst.msk [vmem:[#allocation5 + $0x8] sm:$0xff] %vm47, %v9744
    // Predicated region
    $region38: #{tpu_custom_call.1} parent=1 // pred_check
      _
    $region39: #{tpu_custom_call.1} parent=1 // pred_check_branch
      %9748 = sbr.rel (0) target = $region41
    $region40: #{tpu_custom_call.1} parent=1 // pred_region
      %s9750 = ssub.s32 256, 256
      %9751 = vsyncadd [#allocation4], %s9750
      %s9752 = sshll.u32 [#allocation5], 4
      %s9753 = int_to_ptr.vmem [resolvable:$true] %s9752
      %9758 = dma.vmem_to_hbm [thread:$0]  %s9753, 256, %s8, [#allocation4], 128, 128, 8
    $region41: #{tpu_custom_call.1} parent=1 // pred_fallthru
      _
    // Predicated region
    $region42: #{tpu_custom_call.1} parent=1 // pred_check
      _
    $region43: #{tpu_custom_call.1} parent=1 // pred_check_branch
      %9760 = sbr.rel (0) target = $region45
    $region44: #{tpu_custom_call.1} parent=1 // pred_region
      %9761 = dma.done [#allocation4], 256
    $region45: #{tpu_custom_call.1} parent=1 // pred_fallthru
      _
    %9762 = vsyncpa [#allocation3], 1
    %9763 = vsyncpa [#allocation4], 1

</llo_original>
